<compile_context>
chip_gen: v7x
topology: tpu7x:2x2x1
jax: 0.10.0
libtpu: 0.0.40
codegen_flags: <defaults>
</compile_context>

<pallas_src>
import jax
import jax.numpy as jnp
from jax import lax
from jax.experimental import pallas as pl
from jax.experimental.pallas import tpu as pltpu

BN_EPS = 1e-5
NEG_SLOPE = 0.1
LANE = 128


def _round_up(x, m):
    return (x + m - 1) // m * m


def _choose_tile_m(m):
    # Bigger tiles amortize the per-grid-step overhead; 512 keeps the
    # double-buffered x_cols / y tiles well inside v7x's 64 MiB VMEM even at
    # 640 channels, and is also a good size for v5e/v6e.
    if m >= 4096:
        return 512
    if m >= 512:
        return 256
    return max(8, _round_up(m, 8))


def _mosaic_params():
    return pltpu.CompilerParams(
        dimension_semantics=("parallel",),          # megacore-friendly (v7x: 2 TCs)
        vmem_limit_bytes=48 * 1024 * 1024,          # explicit, v7x-safe (<64 MiB)
    )


# ---------------------------------------------------------------------------
# Pass 1 kernels: bf16 matmul (f32 accum) + per-tile BN partial statistics.
# ---------------------------------------------------------------------------
def _mm_stats(x_ref, w_ref, y_ref, st_ref):
    # (TILE_M, K) bf16 @ (K, C) bf16 -> f32 accumulator on the MXU.
    y = jnp.dot(x_ref[...], w_ref[...], preferred_element_type=jnp.float32)
    # Pre-BN activations go back to HBM in bf16 (stats below stay f32).
    y_ref[...] = y.astype(y_ref.dtype)
    # Per-tile partial stats: row 0 = sum(y), row 1 = sum(y*y), rows 2..7 pad.
    # Assembled once so the (8, C) store is a single unmasked vst.
    c = y.shape[1]
    st_ref[...] = jnp.concatenate(
        [jnp.sum(y, axis=0, keepdims=True),
         jnp.sum(y * y, axis=0, keepdims=True),
         jnp.zeros((6, c), jnp.float32)],
        axis=0)


def _conv_stats_kernel(x_ref, w_ref, y_ref, st_ref):
    _mm_stats(x_ref, w_ref, y_ref, st_ref)


def _conv_stats_sc_kernel(x_ref, w_ref, xsc_ref, wsc_ref,
                          y_ref, st_ref, ysc_ref, stsc_ref):
    # conv3 main branch + fused 1x1 shortcut branch (same M tiling).
    _mm_stats(x_ref, w_ref, y_ref, st_ref)
    _mm_stats(xsc_ref, wsc_ref, ysc_ref, stsc_ref)


def _conv_bn_stats(x_cols, w2d, *, sc_x=None, sc_w=None, tile_m):
    """Tiled (M, K) @ (K, C) with per-tile BN partial sums.

    Returns (y_pre_bf16, stats_f32[, y_sc_pre_bf16, stats_sc_f32]).
    """
    m_pad, k = x_cols.shape
    c = w2d.shape[1]
    nt = m_pad // tile_m

    row_in = pl.BlockSpec((tile_m, k), lambda i: (i, 0))
    w_in = pl.BlockSpec((k, c), lambda i: (0, 0))
    row_out = pl.BlockSpec((tile_m, c), lambda i: (i, 0))
    st_out = pl.BlockSpec((8, c), lambda i: (i, 0))
    y_shape = jax.ShapeDtypeStruct((m_pad, c), jnp.bfloat16)
    st_shape = jax.ShapeDtypeStruct((nt * 8, c), jnp.float32)

    if sc_x is None:
        return pl.pallas_call(
            _conv_stats_kernel,
            grid=(nt,),
            in_specs=[row_in, w_in],
            out_specs=[row_out, st_out],
            out_shape=(y_shape, st_shape),
            compiler_params=_mosaic_params(),
        )(x_cols, w2d)

    ksc = sc_x.shape[1]
    sc_row_in = pl.BlockSpec((tile_m, ksc), lambda i: (i, 0))
    sc_w_in = pl.BlockSpec((ksc, c), lambda i: (0, 0))
    return pl.pallas_call(
        _conv_stats_sc_kernel,
        grid=(nt,),
        in_specs=[row_in, w_in, sc_row_in, sc_w_in],
        out_specs=[row_out, st_out, row_out, st_out],
        out_shape=(y_shape, st_shape, y_shape, st_shape),
        compiler_params=_mosaic_params(),
    )(x_cols, w2d, sc_x, sc_w)


# ---------------------------------------------------------------------------
# Pass 2 kernels: apply BN scale/shift (+ fused residual) + leaky_relu(0.1).
# ---------------------------------------------------------------------------
def _bn_apply_kernel(y_ref, s_ref, b_ref, o_ref):
    y = y_ref[...] * s_ref[...] + b_ref[...]
    o_ref[...] = jnp.where(y > 0, y, NEG_SLOPE * y).astype(o_ref.dtype)


def _bn_apply_res_kernel(y_ref, s_ref, b_ref, r_ref, rs_ref, rb_ref, o_ref):
    y = y_ref[...] * s_ref[...] + b_ref[...]
    y = y + (r_ref[...] * rs_ref[...] + rb_ref[...])
    o_ref[...] = jnp.where(y > 0, y, NEG_SLOPE * y).astype(o_ref.dtype)


def _bn_act_apply(y_pre, scale, shift, *, residual=None, r_scale=None,
                  r_shift=None, out_dtype=jnp.float32, tile_m):
    m_pad, c = y_pre.shape
    nt = m_pad // tile_m
    row = pl.BlockSpec((tile_m, c), lambda i: (i, 0))
    vec = pl.BlockSpec((1, c), lambda i: (0, 0))

    if residual is None:
        kernel = _bn_apply_kernel
        inputs = [y_pre, scale, shift]
        specs = [row, vec, vec]
    else:
        kernel = _bn_apply_res_kernel
        inputs = [y_pre, scale, shift, residual, r_scale, r_shift]
        specs = [row, vec, vec, row, vec, vec]

    return pl.pallas_call(
        kernel,
        grid=(nt,),
        in_specs=specs,
        out_specs=row,
        out_shape=jax.ShapeDtypeStruct((m_pad, c), out_dtype),
        compiler_params=_mosaic_params(),
    )(*inputs)


# ---------------------------------------------------------------------------
# Plain-JAX glue: im2col / weight & BN-param prep / BN affine from partials.
# ---------------------------------------------------------------------------
def im2col_3x3(x_nhwc):
    """3x3, stride 1, pad 1 -> (N*H*W, 9*C); column order [(dy,dx) major, c minor]."""
    n, h, w, c = x_nhwc.shape
    xp = jnp.pad(x_nhwc, ((0, 0), (1, 1), (1, 1), (0, 0)))
    cols = []
    for dy in range(3):
        for dx in range(3):
            cols.append(xp[:, dy:dy + h, dx:dx + w, :])
    cols = jnp.concatenate(cols, axis=-1)
    return cols.reshape(n * h * w, 9 * c)


def _prep_w3x3(w_oihw, cin_pad, cout_pad):
    """(O, I, 3, 3) -> (9*cin_pad, cout_pad) bf16, matching im2col column order."""
    o, i, kh, kw = w_oihw.shape
    w = jnp.transpose(w_oihw, (2, 3, 1, 0))                       # (3,3,I,O)
    w = jnp.pad(w, ((0, 0), (0, 0), (0, cin_pad - i), (0, cout_pad - o)))
    return w.reshape(kh * kw * cin_pad, cout_pad).astype(jnp.bfloat16)


def _prep_w1x1(w_oihw, cout_pad):
    o, i, _, _ = w_oihw.shape
    w = jnp.transpose(w_oihw[:, :, 0, 0], (1, 0))                 # (I, O)
    return jnp.pad(w, ((0, 0), (0, cout_pad - o))).astype(jnp.bfloat16)


def _pad_vec(v, cpad):
    return jnp.pad(v.astype(jnp.float32), (0, cpad - v.shape[0]))


def _bn_affine(stats, gamma_p, beta_p, m_real):
    """Combine per-tile partial sums -> per-channel (scale, shift) for BN."""
    c = stats.shape[-1]
    st = stats.reshape(-1, 8, c)
    s = jnp.sum(st[:, 0, :], axis=0)
    ss = jnp.sum(st[:, 1, :], axis=0)
    mean = s / m_real
    var = jnp.maximum(ss / m_real - mean * mean, 0.0)
    scale = gamma_p * lax.rsqrt(var + BN_EPS)
    shift = beta_p - mean * scale
    return (scale.reshape(1, c).astype(jnp.float32),
            shift.reshape(1, c).astype(jnp.float32))


# ---------------------------------------------------------------------------
# Parameter init (deterministic; kaiming-normal fan_out, leaky_relu-style init)
# ---------------------------------------------------------------------------
def init_params(key, in_f, out_f):
    ks = jax.random.split(key, 4)

    def kaiming(k, shape):  # shape = (O, I, KH, KW), mode='fan_out'
        fan_out = shape[0] * shape[2] * shape[3]
        std = (2.0 / fan_out) ** 0.5
        return std * jax.random.normal(k, shape, dtype=jnp.float32)

    params = {
        "conv1_w": kaiming(ks[0], (out_f, in_f, 3, 3)),
        "conv2_w": kaiming(ks[1], (out_f, out_f, 3, 3)),
        "conv3_w": kaiming(ks[2], (out_f, out_f, 3, 3)),
        "sc_w": kaiming(ks[3], (out_f, in_f, 1, 1)),
    }
    for name in ("conv1", "conv2", "conv3", "sc"):
        params[f"{name}_gamma"] = jnp.ones((out_f,), jnp.float32)
        params[f"{name}_beta"] = jnp.zeros((out_f,), jnp.float32)
    return params


# ---------------------------------------------------------------------------
# BasicBlockRN12 forward (use_strides=False, training-mode BatchNorm)
# ---------------------------------------------------------------------------
@jax.jit
def basic_block_rn12(x_nchw, params):
    n, cin, h, w = x_nchw.shape
    cout = params["conv1_w"].shape[0]
    cop = _round_up(cout, LANE)          # lane-dense (padded) channel count
    m = n * h * w
    tile_m = _choose_tile_m(m)
    m_pad = _round_up(m, tile_m)

    # NCHW -> NHWC once at the block boundary.  (If blocks are stacked, keep
    # activations NHWC between blocks and drop these transposes.)
    x_nhwc = jnp.transpose(x_nchw, (0, 2, 3, 1)).astype(jnp.bfloat16)

    def pad_rows(a):
        return jnp.pad(a, ((0, m_pad - m), (0, 0)))   # zero rows: no BN pollution

    # ---- conv1: 3x3 + BN + leaky ----
    xc1 = pad_rows(im2col_3x3(x_nhwc))
    w1 = _prep_w3x3(params["conv1_w"], cin, cop)
    y1, st1 = _conv_bn_stats(xc1, w1, tile_m=tile_m)
    s1, t1 = _bn_affine(st1, _pad_vec(params["conv1_gamma"], cop),
                        _pad_vec(params["conv1_beta"], cop), m)
    a1 = _bn_act_apply(y1, s1, t1, out_dtype=jnp.bfloat16, tile_m=tile_m)
    a1_img = a1[:m].reshape(n, h, w, cop)

    # ---- conv2: 3x3 + BN + leaky ----
    xc2 = pad_rows(im2col_3x3(a1_img))
    w2 = _prep_w3x3(params["conv2_w"], cop, cop)
    y2, st2 = _conv_bn_stats(xc2, w2, tile_m=tile_m)
    s2, t2 = _bn_affine(st2, _pad_vec(params["conv2_gamma"], cop),
                        _pad_vec(params["conv2_beta"], cop), m)
    a2 = _bn_act_apply(y2, s2, t2, out_dtype=jnp.bfloat16, tile_m=tile_m)
    a2_img = a2[:m].reshape(n, h, w, cop)

    # ---- conv3 (3x3 + BN) with the 1x1 shortcut (conv + BN) fused into the
    #      same two tiled passes, then residual add + leaky ----
    xc3 = pad_rows(im2col_3x3(a2_img))
    x2d = pad_rows(x_nhwc.reshape(m, cin))
    w3 = _prep_w3x3(params["conv3_w"], cop, cop)
    wsc = _prep_w1x1(params["sc_w"], cop)
    y3, st3, ysc, stsc = _conv_bn_stats(xc3, w3, sc_x=x2d, sc_w=wsc,
                                        tile_m=tile_m)
    s3, t3 = _bn_affine(st3, _pad_vec(params["conv3_gamma"], cop),
                        _pad_vec(params["conv3_beta"], cop), m)
    ssc, tsc = _bn_affine(stsc, _pad_vec(params["sc_gamma"], cop),
                          _pad_vec(params["sc_beta"], cop), m)
    out2d = _bn_act_apply(y3, s3, t3, residual=ysc, r_scale=ssc, r_shift=tsc,
                          out_dtype=jnp.float32, tile_m=tile_m)

    out = out2d[:m, :cout].reshape(n, h, w, cout)
    return jnp.transpose(out, (0, 3, 1, 2))            # NHWC -> NCHW


# ---------------------------------------------------------------------------
# Pure-JAX f32 reference (mirrors the PyTorch module in training mode)
# ---------------------------------------------------------------------------
def _convbn_ref(x, w, gamma, beta, padding, relu):
    y = lax.conv_general_dilated(
        x, w, window_strides=(1, 1), padding=[(padding, padding)] * 2,
        dimension_numbers=("NCHW", "OIHW", "NCHW"))
    mean = jnp.mean(y, axis=(0, 2, 3), keepdims=True)
    var = jnp.mean((y - mean) ** 2, axis=(0, 2, 3), keepdims=True)
    y = (y - mean) / jnp.sqrt(var + BN_EPS) * gamma.reshape(1, -1, 1, 1) \
        + beta.reshape(1, -1, 1, 1)
    if relu:
        y = jnp.where(y > 0, y, NEG_SLOPE * y)
    return y


def basic_block_rn12_ref(x, p):
    y = _convbn_ref(x, p["conv1_w"], p["conv1_gamma"], p["conv1_beta"], 1, True)
    y = _convbn_ref(y, p["conv2_w"], p["conv2_gamma"], p["conv2_beta"], 1, True)
    y = _convbn_ref(y, p["conv3_w"], p["conv3_gamma"], p["conv3_beta"], 1, False)
    y = y + _convbn_ref(x, p["sc_w"], p["sc_gamma"], p["sc_beta"], 0, False)
    return jnp.where(y > 0, y, NEG_SLOPE * y)


# ---------------------------------------------------------------------------
if __name__ == "__main__":
    key = jax.random.PRNGKey(0)
    k_x, k_p = jax.random.split(key)

    N, in_f, out_f, H, W = 2, 4, 8, 16, 16
    x = jax.random.normal(k_x, (N, in_f, H, W), dtype=jnp.float32)
    params = init_params(k_p, in_f, out_f)

    out = jax.block_until_ready(basic_block_rn12(x, params))
    ref = jax.block_until_ready(basic_block_rn12_ref(x, params))

    assert out.shape == (N, out_f, H, W), out.shape
    # bf16 MXU inputs + bf16 pre-BN intermediates -> looser tolerance vs f32 ref.
    max_err = float(jnp.max(jnp.abs(out - ref)))
    assert jnp.allclose(out, ref, atol=5e-2, rtol=5e-2), max_err

    print("KERNEL_OK")
</pallas_src>

<mosaic_0001>
module attributes {stable_mosaic.version = 11 : i64} {
  func.func @_conv_stats_kernel(%arg0: i32, %arg1: memref<256x36xbf16, #tpu.memory_space<vmem>>, %arg2: memref<36x128xbf16, #tpu.memory_space<vmem>>, %arg3: memref<256x128xbf16, #tpu.memory_space<vmem>>, %arg4: memref<8x128xf32, #tpu.memory_space<vmem>>) attributes {dimension_semantics = [#tpu.dimension_semantics<parallel>], iteration_bounds = array<i64: 2>, scalar_prefetch = 0 : i64, scratch_operands = 0 : i64, tpu.core_type = #tpu.core_type<tc>, window_params = [{transform_indices = @transform_0, window_bounds = array<i64: 256, 36>}, {pipeline_mode = #tpu.pipeline_mode<synchronous>, transform_indices = @transform_1, window_bounds = array<i64: 36, 128>}, {transform_indices = @transform_2, window_bounds = array<i64: 256, 128>}, {transform_indices = @transform_3, window_bounds = array<i64: 8, 128>}]} {
    %c0 = arith.constant 0 : index
    %c0_0 = arith.constant 0 : index
    %0 = vector.load %arg1[%c0, %c0_0] : memref<256x36xbf16, #tpu.memory_space<vmem>>, vector<256x36xbf16>
    %c0_1 = arith.constant 0 : index
    %c0_2 = arith.constant 0 : index
    %1 = vector.load %arg2[%c0_1, %c0_2] : memref<36x128xbf16, #tpu.memory_space<vmem>>, vector<36x128xbf16>
    %cst = arith.constant dense<0.000000e+00> : vector<256x128xf32>
    %2 = tpu.matmul %0, %1, %cst {dimension_numbers = #tpu.dot_dimension_numbers<[1], [0], [0], [1], [0, 0, 1, 1], [], []>} : vector<256x36xbf16>, vector<36x128xbf16>, vector<256x128xf32> -> vector<256x128xf32>
    %3 = arith.truncf %2 : vector<256x128xf32> to vector<256x128xbf16>
    %c0_3 = arith.constant 0 : index
    %c0_4 = arith.constant 0 : index
    %4 = vector.load %arg3[%c0_3, %c0_4] : memref<256x128xbf16, #tpu.memory_space<vmem>>, vector<256x128xbf16>
    tpu.vector_store %arg3[%c0_3, %c0_4], %3 {strides = array<i32>} : memref<256x128xbf16, #tpu.memory_space<vmem>>, vector<256x128xbf16>,
    %cst_5 = arith.constant dense<0.000000e+00> : vector<128xf32>
    %5 = vector.multi_reduction <add>, %2, %cst_5 [0] : vector<256x128xf32> to vector<128xf32>
    %6 = vector.shape_cast %5 : vector<128xf32> to vector<1x128xf32>
    %7 = arith.mulf %2, %2 : vector<256x128xf32>
    %cst_6 = arith.constant dense<0.000000e+00> : vector<128xf32>
    %8 = vector.multi_reduction <add>, %7, %cst_6 [0] : vector<256x128xf32> to vector<128xf32>
    %9 = vector.shape_cast %8 : vector<128xf32> to vector<1x128xf32>
    %cst_7 = arith.constant 0.000000e+00 : f32
    %10 = vector.broadcast %cst_7 : f32 to vector<6x128xf32>
    %11 = tpu.concatenate %6, %9, %10 in 0 : vector<1x128xf32>, vector<1x128xf32>, vector<6x128xf32> -> vector<8x128xf32>
    %c0_8 = arith.constant 0 : index
    %c0_9 = arith.constant 0 : index
    %12 = vector.load %arg4[%c0_8, %c0_9] : memref<8x128xf32, #tpu.memory_space<vmem>>, vector<8x128xf32>
    tpu.vector_store %arg4[%c0_8, %c0_9], %11 {strides = array<i32>} : memref<8x128xf32, #tpu.memory_space<vmem>>, vector<8x128xf32>,
    return
  }
  func.func @transform_0(%arg0: i32) -> (i32, i32) {
    %c0_i32 = arith.constant 0 : i32
    %c0_i32_0 = arith.constant 0 : i32
    return %arg0, %c0_i32 : i32, i32
  }
  func.func @transform_1(%arg0: i32) -> (i32, i32) {
    %c0_i32 = arith.constant 0 : i32
    %c0_i32_0 = arith.constant 0 : i32
    %c0_i32_1 = arith.constant 0 : i32
    return %c0_i32, %c0_i32_0 : i32, i32
  }
  func.func @transform_2(%arg0: i32) -> (i32, i32) {
    %c0_i32 = arith.constant 0 : i32
    %c0_i32_0 = arith.constant 0 : i32
    return %arg0, %c0_i32 : i32, i32
  }
  func.func @transform_3(%arg0: i32) -> (i32, i32) {
    %c0_i32 = arith.constant 0 : i32
    %c0_i32_0 = arith.constant 0 : i32
    return %arg0, %c0_i32 : i32, i32
  }
}

module attributes {stable_mosaic.version = 11 : i64} {
  func.func @_bn_apply_kernel(%arg0: i32, %arg1: memref<256x128xbf16, #tpu.memory_space<vmem>>, %arg2: memref<1x128xf32, #tpu.memory_space<vmem>>, %arg3: memref<1x128xf32, #tpu.memory_space<vmem>>, %arg4: memref<256x128xbf16, #tpu.memory_space<vmem>>) attributes {dimension_semantics = [#tpu.dimension_semantics<parallel>], iteration_bounds = array<i64: 2>, scalar_prefetch = 0 : i64, scratch_operands = 0 : i64, tpu.core_type = #tpu.core_type<tc>, window_params = [{transform_indices = @transform_0, window_bounds = array<i64: 256, 128>}, {pipeline_mode = #tpu.pipeline_mode<synchronous>, transform_indices = @transform_1, window_bounds = array<i64: 1, 128>}, {pipeline_mode = #tpu.pipeline_mode<synchronous>, transform_indices = @transform_2, window_bounds = array<i64: 1, 128>}, {transform_indices = @transform_3, window_bounds = array<i64: 256, 128>}]} {
    %c0 = arith.constant 0 : index
    %c0_0 = arith.constant 0 : index
    %0 = vector.load %arg1[%c0, %c0_0] : memref<256x128xbf16, #tpu.memory_space<vmem>>, vector<256x128xbf16>
    %c0_1 = arith.constant 0 : index
    %c0_2 = arith.constant 0 : index
    %1 = vector.load %arg2[%c0_1, %c0_2] : memref<1x128xf32, #tpu.memory_space<vmem>>, vector<1x128xf32>
    %2 = arith.extf %0 : vector<256x128xbf16> to vector<256x128xf32>
    %3 = vector.broadcast %1 : vector<1x128xf32> to vector<256x128xf32>
    %4 = arith.mulf %2, %3 : vector<256x128xf32>
    %c0_3 = arith.constant 0 : index
    %c0_4 = arith.constant 0 : index
    %5 = vector.load %arg3[%c0_3, %c0_4] : memref<1x128xf32, #tpu.memory_space<vmem>>, vector<1x128xf32>
    %6 = vector.broadcast %5 : vector<1x128xf32> to vector<256x128xf32>
    %7 = arith.addf %4, %6 : vector<256x128xf32>
    %cst = arith.constant 0.000000e+00 : f32
    %8 = vector.broadcast %cst : f32 to vector<256x128xf32>
    %9 = arith.cmpf ogt, %7, %8 : vector<256x128xf32>
    %cst_5 = arith.constant 1.000000e-01 : f32
    %10 = vector.broadcast %cst_5 : f32 to vector<256x128xf32>
    %11 = arith.mulf %10, %7 : vector<256x128xf32>
    %12 = arith.select %9, %7, %11 : vector<256x128xi1>, vector<256x128xf32>
    %13 = arith.truncf %12 : vector<256x128xf32> to vector<256x128xbf16>
    %c0_6 = arith.constant 0 : index
    %c0_7 = arith.constant 0 : index
    %14 = vector.load %arg4[%c0_6, %c0_7] : memref<256x128xbf16, #tpu.memory_space<vmem>>, vector<256x128xbf16>
    tpu.vector_store %arg4[%c0_6, %c0_7], %13 {strides = array<i32>} : memref<256x128xbf16, #tpu.memory_space<vmem>>, vector<256x128xbf16>,
    return
  }
  func.func @transform_0(%arg0: i32) -> (i32, i32) {
    %c0_i32 = arith.constant 0 : i32
    %c0_i32_0 = arith.constant 0 : i32
    return %arg0, %c0_i32 : i32, i32
  }
  func.func @transform_1(%arg0: i32) -> (i32, i32) {
    %c0_i32 = arith.constant 0 : i32
    %c0_i32_0 = arith.constant 0 : i32
    %c0_i32_1 = arith.constant 0 : i32
    return %c0_i32, %c0_i32_0 : i32, i32
  }
  func.func @transform_2(%arg0: i32) -> (i32, i32) {
    %c0_i32 = arith.constant 0 : i32
    %c0_i32_0 = arith.constant 0 : i32
    %c0_i32_1 = arith.constant 0 : i32
    return %c0_i32, %c0_i32_0 : i32, i32
  }
  func.func @transform_3(%arg0: i32) -> (i32, i32) {
    %c0_i32 = arith.constant 0 : i32
    %c0_i32_0 = arith.constant 0 : i32
    return %arg0, %c0_i32 : i32, i32
  }
}

module attributes {stable_mosaic.version = 11 : i64} {
  func.func @_conv_stats_kernel(%arg0: i32, %arg1: memref<256x1152xbf16, #tpu.memory_space<vmem>>, %arg2: memref<1152x128xbf16, #tpu.memory_space<vmem>>, %arg3: memref<256x128xbf16, #tpu.memory_space<vmem>>, %arg4: memref<8x128xf32, #tpu.memory_space<vmem>>) attributes {dimension_semantics = [#tpu.dimension_semantics<parallel>], iteration_bounds = array<i64: 2>, scalar_prefetch = 0 : i64, scratch_operands = 0 : i64, tpu.core_type = #tpu.core_type<tc>, window_params = [{transform_indices = @transform_0, window_bounds = array<i64: 256, 1152>}, {pipeline_mode = #tpu.pipeline_mode<synchronous>, transform_indices = @transform_1, window_bounds = array<i64: 1152, 128>}, {transform_indices = @transform_2, window_bounds = array<i64: 256, 128>}, {transform_indices = @transform_3, window_bounds = array<i64: 8, 128>}]} {
    %c0 = arith.constant 0 : index
    %c0_0 = arith.constant 0 : index
    %0 = vector.load %arg1[%c0, %c0_0] : memref<256x1152xbf16, #tpu.memory_space<vmem>>, vector<256x1152xbf16>
    %c0_1 = arith.constant 0 : index
    %c0_2 = arith.constant 0 : index
    %1 = vector.load %arg2[%c0_1, %c0_2] : memref<1152x128xbf16, #tpu.memory_space<vmem>>, vector<1152x128xbf16>
    %cst = arith.constant dense<0.000000e+00> : vector<256x128xf32>
    %2 = tpu.matmul %0, %1, %cst {dimension_numbers = #tpu.dot_dimension_numbers<[1], [0], [0], [1], [0, 0, 1, 1], [], []>} : vector<256x1152xbf16>, vector<1152x128xbf16>, vector<256x128xf32> -> vector<256x128xf32>
    %3 = arith.truncf %2 : vector<256x128xf32> to vector<256x128xbf16>
    %c0_3 = arith.constant 0 : index
    %c0_4 = arith.constant 0 : index
    %4 = vector.load %arg3[%c0_3, %c0_4] : memref<256x128xbf16, #tpu.memory_space<vmem>>, vector<256x128xbf16>
    tpu.vector_store %arg3[%c0_3, %c0_4], %3 {strides = array<i32>} : memref<256x128xbf16, #tpu.memory_space<vmem>>, vector<256x128xbf16>,
    %cst_5 = arith.constant dense<0.000000e+00> : vector<128xf32>
    %5 = vector.multi_reduction <add>, %2, %cst_5 [0] : vector<256x128xf32> to vector<128xf32>
    %6 = vector.shape_cast %5 : vector<128xf32> to vector<1x128xf32>
    %7 = arith.mulf %2, %2 : vector<256x128xf32>
    %cst_6 = arith.constant dense<0.000000e+00> : vector<128xf32>
    %8 = vector.multi_reduction <add>, %7, %cst_6 [0] : vector<256x128xf32> to vector<128xf32>
    %9 = vector.shape_cast %8 : vector<128xf32> to vector<1x128xf32>
    %cst_7 = arith.constant 0.000000e+00 : f32
    %10 = vector.broadcast %cst_7 : f32 to vector<6x128xf32>
    %11 = tpu.concatenate %6, %9, %10 in 0 : vector<1x128xf32>, vector<1x128xf32>, vector<6x128xf32> -> vector<8x128xf32>
    %c0_8 = arith.constant 0 : index
    %c0_9 = arith.constant 0 : index
    %12 = vector.load %arg4[%c0_8, %c0_9] : memref<8x128xf32, #tpu.memory_space<vmem>>, vector<8x128xf32>
    tpu.vector_store %arg4[%c0_8, %c0_9], %11 {strides = array<i32>} : memref<8x128xf32, #tpu.memory_space<vmem>>, vector<8x128xf32>,
    return
  }
  func.func @transform_0(%arg0: i32) -> (i32, i32) {
    %c0_i32 = arith.constant 0 : i32
    %c0_i32_0 = arith.constant 0 : i32
    return %arg0, %c0_i32 : i32, i32
  }
  func.func @transform_1(%arg0: i32) -> (i32, i32) {
    %c0_i32 = arith.constant 0 : i32
    %c0_i32_0 = arith.constant 0 : i32
    %c0_i32_1 = arith.constant 0 : i32
    return %c0_i32, %c0_i32_0 : i32, i32
  }
  func.func @transform_2(%arg0: i32) -> (i32, i32) {
    %c0_i32 = arith.constant 0 : i32
    %c0_i32_0 = arith.constant 0 : i32
    return %arg0, %c0_i32 : i32, i32
  }
  func.func @transform_3(%arg0: i32) -> (i32, i32) {
    %c0_i32 = arith.constant 0 : i32
    %c0_i32_0 = arith.constant 0 : i32
    return %arg0, %c0_i32 : i32, i32
  }
}

module attributes {stable_mosaic.version = 11 : i64} {
  func.func @_conv_stats_sc_kernel(%arg0: i32, %arg1: memref<256x1152xbf16, #tpu.memory_space<vmem>>, %arg2: memref<1152x128xbf16, #tpu.memory_space<vmem>>, %arg3: memref<256x4xbf16, #tpu.memory_space<vmem>>, %arg4: memref<4x128xbf16, #tpu.memory_space<vmem>>, %arg5: memref<256x128xbf16, #tpu.memory_space<vmem>>, %arg6: memref<8x128xf32, #tpu.memory_space<vmem>>, %arg7: memref<256x128xbf16, #tpu.memory_space<vmem>>, %arg8: memref<8x128xf32, #tpu.memory_space<vmem>>) attributes {dimension_semantics = [#tpu.dimension_semantics<parallel>], iteration_bounds = array<i64: 2>, scalar_prefetch = 0 : i64, scratch_operands = 0 : i64, tpu.core_type = #tpu.core_type<tc>, window_params = [{transform_indices = @transform_0, window_bounds = array<i64: 256, 1152>}, {pipeline_mode = #tpu.pipeline_mode<synchronous>, transform_indices = @transform_1, window_bounds = array<i64: 1152, 128>}, {transform_indices = @transform_2, window_bounds = array<i64: 256, 4>}, {pipeline_mode = #tpu.pipeline_mode<synchronous>, transform_indices = @transform_3, window_bounds = array<i64: 4, 128>}, {transform_indices = @transform_4, window_bounds = array<i64: 256, 128>}, {transform_indices = @transform_5, window_bounds = array<i64: 8, 128>}, {transform_indices = @transform_6, window_bounds = array<i64: 256, 128>}, {transform_indices = @transform_7, window_bounds = array<i64: 8, 128>}]} {
    %c0 = arith.constant 0 : index
    %c0_0 = arith.constant 0 : index
    %0 = vector.load %arg1[%c0, %c0_0] : memref<256x1152xbf16, #tpu.memory_space<vmem>>, vector<256x1152xbf16>
    %c0_1 = arith.constant 0 : index
    %c0_2 = arith.constant 0 : index
    %1 = vector.load %arg2[%c0_1, %c0_2] : memref<1152x128xbf16, #tpu.memory_space<vmem>>, vector<1152x128xbf16>
    %cst = arith.constant dense<0.000000e+00> : vector<256x128xf32>
    %2 = tpu.matmul %0, %1, %cst {dimension_numbers = #tpu.dot_dimension_numbers<[1], [0], [0], [1], [0, 0, 1, 1], [], []>} : vector<256x1152xbf16>, vector<1152x128xbf16>, vector<256x128xf32> -> vector<256x128xf32>
    %3 = arith.truncf %2 : vector<256x128xf32> to vector<256x128xbf16>
    %c0_3 = arith.constant 0 : index
    %c0_4 = arith.constant 0 : index
    %4 = vector.load %arg5[%c0_3, %c0_4] : memref<256x128xbf16, #tpu.memory_space<vmem>>, vector<256x128xbf16>
    tpu.vector_store %arg5[%c0_3, %c0_4], %3 {strides = array<i32>} : memref<256x128xbf16, #tpu.memory_space<vmem>>, vector<256x128xbf16>,
    %cst_5 = arith.constant dense<0.000000e+00> : vector<128xf32>
    %5 = vector.multi_reduction <add>, %2, %cst_5 [0] : vector<256x128xf32> to vector<128xf32>
    %6 = vector.shape_cast %5 : vector<128xf32> to vector<1x128xf32>
    %7 = arith.mulf %2, %2 : vector<256x128xf32>
    %cst_6 = arith.constant dense<0.000000e+00> : vector<128xf32>
    %8 = vector.multi_reduction <add>, %7, %cst_6 [0] : vector<256x128xf32> to vector<128xf32>
    %9 = vector.shape_cast %8 : vector<128xf32> to vector<1x128xf32>
    %cst_7 = arith.constant 0.000000e+00 : f32
    %10 = vector.broadcast %cst_7 : f32 to vector<6x128xf32>
    %11 = tpu.concatenate %6, %9, %10 in 0 : vector<1x128xf32>, vector<1x128xf32>, vector<6x128xf32> -> vector<8x128xf32>
    %c0_8 = arith.constant 0 : index
    %c0_9 = arith.constant 0 : index
    %12 = vector.load %arg6[%c0_8, %c0_9] : memref<8x128xf32, #tpu.memory_space<vmem>>, vector<8x128xf32>
    tpu.vector_store %arg6[%c0_8, %c0_9], %11 {strides = array<i32>} : memref<8x128xf32, #tpu.memory_space<vmem>>, vector<8x128xf32>,
    %c0_10 = arith.constant 0 : index
    %c0_11 = arith.constant 0 : index
    %13 = vector.load %arg3[%c0_10, %c0_11] : memref<256x4xbf16, #tpu.memory_space<vmem>>, vector<256x4xbf16>
    %c0_12 = arith.constant 0 : index
    %c0_13 = arith.constant 0 : index
    %14 = vector.load %arg4[%c0_12, %c0_13] : memref<4x128xbf16, #tpu.memory_space<vmem>>, vector<4x128xbf16>
    %cst_14 = arith.constant dense<0.000000e+00> : vector<256x128xf32>
    %15 = tpu.matmul %13, %14, %cst_14 {dimension_numbers = #tpu.dot_dimension_numbers<[1], [0], [0], [1], [0, 0, 1, 1], [], []>} : vector<256x4xbf16>, vector<4x128xbf16>, vector<256x128xf32> -> vector<256x128xf32>
    %16 = arith.truncf %15 : vector<256x128xf32> to vector<256x128xbf16>
    %c0_15 = arith.constant 0 : index
    %c0_16 = arith.constant 0 : index
    %17 = vector.load %arg7[%c0_15, %c0_16] : memref<256x128xbf16, #tpu.memory_space<vmem>>, vector<256x128xbf16>
    tpu.vector_store %arg7[%c0_15, %c0_16], %16 {strides = array<i32>} : memref<256x128xbf16, #tpu.memory_space<vmem>>, vector<256x128xbf16>,
    %cst_17 = arith.constant dense<0.000000e+00> : vector<128xf32>
    %18 = vector.multi_reduction <add>, %15, %cst_17 [0] : vector<256x128xf32> to vector<128xf32>
    %19 = vector.shape_cast %18 : vector<128xf32> to vector<1x128xf32>
    %20 = arith.mulf %15, %15 : vector<256x128xf32>
    %cst_18 = arith.constant dense<0.000000e+00> : vector<128xf32>
    %21 = vector.multi_reduction <add>, %20, %cst_18 [0] : vector<256x128xf32> to vector<128xf32>
    %22 = vector.shape_cast %21 : vector<128xf32> to vector<1x128xf32>
    %cst_19 = arith.constant 0.000000e+00 : f32
    %23 = vector.broadcast %cst_19 : f32 to vector<6x128xf32>
    %24 = tpu.concatenate %19, %22, %23 in 0 : vector<1x128xf32>, vector<1x128xf32>, vector<6x128xf32> -> vector<8x128xf32>
    %c0_20 = arith.constant 0 : index
    %c0_21 = arith.constant 0 : index
    %25 = vector.load %arg8[%c0_20, %c0_21] : memref<8x128xf32, #tpu.memory_space<vmem>>, vector<8x128xf32>
    tpu.vector_store %arg8[%c0_20, %c0_21], %24 {strides = array<i32>} : memref<8x128xf32, #tpu.memory_space<vmem>>, vector<8x128xf32>,
    return
  }
  func.func @transform_0(%arg0: i32) -> (i32, i32) {
    %c0_i32 = arith.constant 0 : i32
    %c0_i32_0 = arith.constant 0 : i32
    return %arg0, %c0_i32 : i32, i32
  }
  func.func @transform_1(%arg0: i32) -> (i32, i32) {
    %c0_i32 = arith.constant 0 : i32
    %c0_i32_0 = arith.constant 0 : i32
    %c0_i32_1 = arith.constant 0 : i32
    return %c0_i32, %c0_i32_0 : i32, i32
  }
  func.func @transform_2(%arg0: i32) -> (i32, i32) {
    %c0_i32 = arith.constant 0 : i32
    %c0_i32_0 = arith.constant 0 : i32
    return %arg0, %c0_i32 : i32, i32
  }
  func.func @transform_3(%arg0: i32) -> (i32, i32) {
    %c0_i32 = arith.constant 0 : i32
    %c0_i32_0 = arith.constant 0 : i32
    %c0_i32_1 = arith.constant 0 : i32
    return %c0_i32, %c0_i32_0 : i32, i32
  }
  func.func @transform_4(%arg0: i32) -> (i32, i32) {
    %c0_i32 = arith.constant 0 : i32
    %c0_i32_0 = arith.constant 0 : i32
    return %arg0, %c0_i32 : i32, i32
  }
  func.func @transform_5(%arg0: i32) -> (i32, i32) {
    %c0_i32 = arith.constant 0 : i32
    %c0_i32_0 = arith.constant 0 : i32
    return %arg0, %c0_i32 : i32, i32
  }
  func.func @transform_6(%arg0: i32) -> (i32, i32) {
    %c0_i32 = arith.constant 0 : i32
    %c0_i32_0 = arith.constant 0 : i32
    return %arg0, %c0_i32 : i32, i32
  }
  func.func @transform_7(%arg0: i32) -> (i32, i32) {
    %c0_i32 = arith.constant 0 : i32
    %c0_i32_0 = arith.constant 0 : i32
    return %arg0, %c0_i32 : i32, i32
  }
}

module attributes {stable_mosaic.version = 11 : i64} {
  func.func @_bn_apply_res_kernel(%arg0: i32, %arg1: memref<256x128xbf16, #tpu.memory_space<vmem>>, %arg2: memref<1x128xf32, #tpu.memory_space<vmem>>, %arg3: memref<1x128xf32, #tpu.memory_space<vmem>>, %arg4: memref<256x128xbf16, #tpu.memory_space<vmem>>, %arg5: memref<1x128xf32, #tpu.memory_space<vmem>>, %arg6: memref<1x128xf32, #tpu.memory_space<vmem>>, %arg7: memref<256x128xf32, #tpu.memory_space<vmem>>) attributes {dimension_semantics = [#tpu.dimension_semantics<parallel>], iteration_bounds = array<i64: 2>, scalar_prefetch = 0 : i64, scratch_operands = 0 : i64, tpu.core_type = #tpu.core_type<tc>, window_params = [{transform_indices = @transform_0, window_bounds = array<i64: 256, 128>}, {pipeline_mode = #tpu.pipeline_mode<synchronous>, transform_indices = @transform_1, window_bounds = array<i64: 1, 128>}, {pipeline_mode = #tpu.pipeline_mode<synchronous>, transform_indices = @transform_2, window_bounds = array<i64: 1, 128>}, {transform_indices = @transform_3, window_bounds = array<i64: 256, 128>}, {pipeline_mode = #tpu.pipeline_mode<synchronous>, transform_indices = @transform_4, window_bounds = array<i64: 1, 128>}, {pipeline_mode = #tpu.pipeline_mode<synchronous>, transform_indices = @transform_5, window_bounds = array<i64: 1, 128>}, {transform_indices = @transform_6, window_bounds = array<i64: 256, 128>}]} {
    %c0 = arith.constant 0 : index
    %c0_0 = arith.constant 0 : index
    %0 = vector.load %arg1[%c0, %c0_0] : memref<256x128xbf16, #tpu.memory_space<vmem>>, vector<256x128xbf16>
    %c0_1 = arith.constant 0 : index
    %c0_2 = arith.constant 0 : index
    %1 = vector.load %arg2[%c0_1, %c0_2] : memref<1x128xf32, #tpu.memory_space<vmem>>, vector<1x128xf32>
    %2 = arith.extf %0 : vector<256x128xbf16> to vector<256x128xf32>
    %3 = vector.broadcast %1 : vector<1x128xf32> to vector<256x128xf32>
    %4 = arith.mulf %2, %3 : vector<256x128xf32>
    %c0_3 = arith.constant 0 : index
    %c0_4 = arith.constant 0 : index
    %5 = vector.load %arg3[%c0_3, %c0_4] : memref<1x128xf32, #tpu.memory_space<vmem>>, vector<1x128xf32>
    %6 = vector.broadcast %5 : vector<1x128xf32> to vector<256x128xf32>
    %7 = arith.addf %4, %6 : vector<256x128xf32>
    %c0_5 = arith.constant 0 : index
    %c0_6 = arith.constant 0 : index
    %8 = vector.load %arg4[%c0_5, %c0_6] : memref<256x128xbf16, #tpu.memory_space<vmem>>, vector<256x128xbf16>
    %c0_7 = arith.constant 0 : index
    %c0_8 = arith.constant 0 : index
    %9 = vector.load %arg5[%c0_7, %c0_8] : memref<1x128xf32, #tpu.memory_space<vmem>>, vector<1x128xf32>
    %10 = arith.extf %8 : vector<256x128xbf16> to vector<256x128xf32>
    %11 = vector.broadcast %9 : vector<1x128xf32> to vector<256x128xf32>
    %12 = arith.mulf %10, %11 : vector<256x128xf32>
    %c0_9 = arith.constant 0 : index
    %c0_10 = arith.constant 0 : index
    %13 = vector.load %arg6[%c0_9, %c0_10] : memref<1x128xf32, #tpu.memory_space<vmem>>, vector<1x128xf32>
    %14 = vector.broadcast %13 : vector<1x128xf32> to vector<256x128xf32>
    %15 = arith.addf %12, %14 : vector<256x128xf32>
    %16 = arith.addf %7, %15 : vector<256x128xf32>
    %cst = arith.constant 0.000000e+00 : f32
    %17 = vector.broadcast %cst : f32 to vector<256x128xf32>
    %18 = arith.cmpf ogt, %16, %17 : vector<256x128xf32>
    %cst_11 = arith.constant 1.000000e-01 : f32
    %19 = vector.broadcast %cst_11 : f32 to vector<256x128xf32>
    %20 = arith.mulf %19, %16 : vector<256x128xf32>
    %21 = arith.select %18, %16, %20 : vector<256x128xi1>, vector<256x128xf32>
    %c0_12 = arith.constant 0 : index
    %c0_13 = arith.constant 0 : index
    %22 = vector.load %arg7[%c0_12, %c0_13] : memref<256x128xf32, #tpu.memory_space<vmem>>, vector<256x128xf32>
    tpu.vector_store %arg7[%c0_12, %c0_13], %21 {strides = array<i32>} : memref<256x128xf32, #tpu.memory_space<vmem>>, vector<256x128xf32>,
    return
  }
  func.func @transform_0(%arg0: i32) -> (i32, i32) {
    %c0_i32 = arith.constant 0 : i32
    %c0_i32_0 = arith.constant 0 : i32
    return %arg0, %c0_i32 : i32, i32
  }
  func.func @transform_1(%arg0: i32) -> (i32, i32) {
    %c0_i32 = arith.constant 0 : i32
    %c0_i32_0 = arith.constant 0 : i32
    %c0_i32_1 = arith.constant 0 : i32
    return %c0_i32, %c0_i32_0 : i32, i32
  }
  func.func @transform_2(%arg0: i32) -> (i32, i32) {
    %c0_i32 = arith.constant 0 : i32
    %c0_i32_0 = arith.constant 0 : i32
    %c0_i32_1 = arith.constant 0 : i32
    return %c0_i32, %c0_i32_0 : i32, i32
  }
  func.func @transform_3(%arg0: i32) -> (i32, i32) {
    %c0_i32 = arith.constant 0 : i32
    %c0_i32_0 = arith.constant 0 : i32
    return %arg0, %c0_i32 : i32, i32
  }
  func.func @transform_4(%arg0: i32) -> (i32, i32) {
    %c0_i32 = arith.constant 0 : i32
    %c0_i32_0 = arith.constant 0 : i32
    %c0_i32_1 = arith.constant 0 : i32
    return %c0_i32, %c0_i32_0 : i32, i32
  }
  func.func @transform_5(%arg0: i32) -> (i32, i32) {
    %c0_i32 = arith.constant 0 : i32
    %c0_i32_0 = arith.constant 0 : i32
    %c0_i32_1 = arith.constant 0 : i32
    return %c0_i32, %c0_i32_0 : i32, i32
  }
  func.func @transform_6(%arg0: i32) -> (i32, i32) {
    %c0_i32 = arith.constant 0 : i32
    %c0_i32_0 = arith.constant 0 : i32
    return %arg0, %c0_i32 : i32, i32
  }
}

</mosaic_0001>

<llo_original>
// kernel: basic_block_rn12.7
$region0: #{basic_block_rn12.7}
  #allocation0 [shape = 'u32[]', space=smem, size = 0x4, offset = 0x4, fixed_abs, tag = 'smem constant byte address 0x4 - core index']
  #allocation1 [shape = 'u32[144,128]{1,0:T(1,128)}', space=vmem, size = 0x12000, scoped, tag = 'internal scratch']
  %s0 = inlined_call_operand.vmem [shape: bf16[512,128], index: 0, kind: input, shape index: {}]
  %s1 = inlined_call_operand.vmem [shape: f32[1,128], index: 1, kind: input, shape index: {}]
  %s2 = inlined_call_operand.vmem [shape: f32[1,128], index: 2, kind: input, shape index: {}]
  %s3 = inlined_call_operand.vmem [shape: bf16[512,128], index: 3, kind: output, shape index: {}]
  %s4 = sld [smem:[#allocation0]]
  $region45: #{basic_block_rn12.7} parent=0
    _
  %s6 = ssub.s32 1, %s4
  %s7 = scalar_select 0, %s6, %s4
  loop: start=0, step=1, limit=4
  $region2: #{basic_block_rn12.7} parent=0 // loop_pre_header
    _
  $region3: #{basic_block_rn12.7} parent=0 // loop_header
    %s9 = sphi 0, %s13
    %p10 = scmp.ge.s32.totalorder %s9, 4
    %s19 = sphi 0, %s21
    %s22 = sphi 0, %s19
    %s23 = sphi 0, %s22
    %s39 = sphi 0, %s23
    %s43 = sphi 0, %s43
    %s45 = sphi 0, %s43
    %s46 = sphi 0, %s45
    %s60 = sphi 0, %s46
    %s64 = sphi 0, %s64
    %s66 = sphi 0, %s64
    %s67 = sphi 0, %s66
    %s81 = sphi 0, %s67
    %s87 = sphi 0, %s89
    %s90 = sphi 0, %s87
    %s91 = sphi 0, %s90
    %s107 = sphi 0, %s91
  $region4: #{basic_block_rn12.7} parent=0 // loop_header_branch
    %12 = sbr.rel (%p10) target = $region8
  $region5: #{basic_block_rn12.7} parent=0 // loop_body
    %s14 = ssub.s32 %s9, 1
    %s15 = ssub.s32 %s9, 2
    %s16 = sadd.s32 %s9, 1
    %s17 = ssub.s32 %s9, %s16
    %p18 = scmp.eq.s32.totalorder %s17, 0
    %s20 = sadd.s32 %s19, 1
    %s21 = scalar_select %p18, %s19, %s20
    %p24 = pneg %p18
    %p25 = scmp.eq.s32.totalorder %s9, 1
    %p26 = por %p24, %p25
    %p27 = scmp.ne.s32.totalorder %s19, %s22
    %p28 = scmp.eq.s32.totalorder %s9, 0
    %p29 = por %p27, %p28
    %p30 = scmp.ne.s32.totalorder %s19, %s22
    %p31 = scmp.eq.s32.totalorder %s14, 1
    %p32 = por %p30, %p31
    %p33 = scmp.ne.s32.totalorder %s22, %s23
    %p34 = scmp.eq.s32.totalorder %s14, 0
    %p35 = por %p33, %p34
    %p36 = scmp.ne.s32.totalorder %s22, %s23
    %p37 = scmp.eq.s32.totalorder %s15, 1
    %p38 = por %p36, %p37
    %p40 = scmp.ne.s32.totalorder %s23, %s39
    %p41 = scmp.eq.s32.totalorder %s15, 0
    %p42 = por %p40, %p41
    %s44 = sadd.s32 %s43, 1
    %p47 = scmp.eq.s32.totalorder %s9, 1
    %p48 = scmp.ne.s32.totalorder %s43, %s45
    %p49 = scmp.eq.s32.totalorder %s9, 0
    %p50 = por %p48, %p49
    %p51 = scmp.ne.s32.totalorder %s43, %s45
    %p52 = scmp.eq.s32.totalorder %s14, 1
    %p53 = por %p51, %p52
    %p54 = scmp.ne.s32.totalorder %s45, %s46
    %p55 = scmp.eq.s32.totalorder %s14, 0
    %p56 = por %p54, %p55
    %p57 = scmp.ne.s32.totalorder %s45, %s46
    %p58 = scmp.eq.s32.totalorder %s15, 1
    %p59 = por %p57, %p58
    %p61 = scmp.ne.s32.totalorder %s46, %s60
    %p62 = scmp.eq.s32.totalorder %s15, 0
    %p63 = por %p61, %p62
    %s65 = sadd.s32 %s64, 1
    %p68 = scmp.eq.s32.totalorder %s9, 1
    %p69 = scmp.ne.s32.totalorder %s64, %s66
    %p70 = scmp.eq.s32.totalorder %s9, 0
    %p71 = por %p69, %p70
    %p72 = scmp.ne.s32.totalorder %s64, %s66
    %p73 = scmp.eq.s32.totalorder %s14, 1
    %p74 = por %p72, %p73
    %p75 = scmp.ne.s32.totalorder %s66, %s67
    %p76 = scmp.eq.s32.totalorder %s14, 0
    %p77 = por %p75, %p76
    %p78 = scmp.ne.s32.totalorder %s66, %s67
    %p79 = scmp.eq.s32.totalorder %s15, 1
    %p80 = por %p78, %p79
    %p82 = scmp.ne.s32.totalorder %s67, %s81
    %p83 = scmp.eq.s32.totalorder %s15, 0
    %p84 = por %p82, %p83
    %s85 = ssub.s32 %s9, %s16
    %p86 = scmp.eq.s32.totalorder %s85, 0
    %s88 = sadd.s32 %s87, 1
    %s89 = scalar_select %p86, %s87, %s88
    %p92 = pneg %p86
    %p93 = scmp.eq.s32.totalorder %s9, 1
    %p94 = por %p92, %p93
    %p95 = scmp.ne.s32.totalorder %s87, %s90
    %p96 = scmp.eq.s32.totalorder %s9, 0
    %p97 = por %p95, %p96
    %p98 = scmp.ne.s32.totalorder %s87, %s90
    %p99 = scmp.eq.s32.totalorder %s14, 1
    %p100 = por %p98, %p99
    %p101 = scmp.ne.s32.totalorder %s90, %s91
    %p102 = scmp.eq.s32.totalorder %s14, 0
    %p103 = por %p101, %p102
    %p104 = scmp.ne.s32.totalorder %s90, %s91
    %p105 = scmp.eq.s32.totalorder %s15, 1
    %p106 = por %p104, %p105
    %p108 = scmp.ne.s32.totalorder %s91, %s107
    %p109 = scmp.eq.s32.totalorder %s15, 0
    %p110 = por %p108, %p109
    %p111 = scmp.le.s32.totalorder 1, %s9
    %p112 = scmp.lt.s32.totalorder %s9, 3
    %p113 = pnand %p111, %p112
    %p114 = pneg %p113
    // Predicated region
    $region9: #{basic_block_rn12.7} parent=5 // pred_check
      _
    $region10: #{basic_block_rn12.7} parent=5 // pred_check_branch
      %116 = sbr.rel (%p113) target = $region12
    $region11: #{basic_block_rn12.7} parent=5 // pred_region
      %s117 = ssub.s32 %s9, 1
      // Predicated region
      $region13: #{basic_block_rn12.7} parent=11 // pred_check
        %p118 = pneg %p56
      $region14: #{basic_block_rn12.7} parent=11 // pred_check_branch
        %120 = sbr.rel (%p118) target = $region16
      $region15: #{basic_block_rn12.7} parent=11 // pred_region
        _
      $region16: #{basic_block_rn12.7} parent=11 // pred_fallthru
        _
      // Predicated region
      $region17: #{basic_block_rn12.7} parent=11 // pred_check
        %p121 = pneg %p77
      $region18: #{basic_block_rn12.7} parent=11 // pred_check_branch
        %123 = sbr.rel (%p121) target = $region20
      $region19: #{basic_block_rn12.7} parent=11 // pred_region
        _
      $region20: #{basic_block_rn12.7} parent=11 // pred_fallthru
        _
    $region12: #{basic_block_rn12.7} parent=5 // pred_fallthru
      _
    %p124 = scmp.lt.s32.totalorder %s9, 2
    // Predicated region
    $region21: #{basic_block_rn12.7} parent=5 // pred_check
      %p125 = pneg %p124
    $region22: #{basic_block_rn12.7} parent=5 // pred_check_branch
      %127 = sbr.rel (%p125) target = $region24
    $region23: #{basic_block_rn12.7} parent=5 // pred_region
      // Predicated region
      $region25: #{basic_block_rn12.7} parent=23 // pred_check
        %p128 = pneg %p29
      $region26: #{basic_block_rn12.7} parent=23 // pred_check_branch
        %130 = sbr.rel (%p128) target = $region28
      $region27: #{basic_block_rn12.7} parent=23 // pred_region
        %s131 = smul.u32 32, %s9
        %p132 = scmp.lt.s32.totalorder %s131, 63
        %s133 = scalar_select %p132, %s131, 63
        %s134 = smul.addr %s133, 4
        %s135 = scalar_lea.vmem %s0, %s134
        %s136 = smul.u32 32, %s9
      $region28: #{basic_block_rn12.7} parent=23 // pred_fallthru
        _
    $region24: #{basic_block_rn12.7} parent=5 // pred_fallthru
      _
    %p137 = scmp.le.s32.totalorder 1, %s9
    %p138 = scmp.lt.s32.totalorder %s9, 3
    %p139 = pnand %p137, %p138
    %p140 = pneg %p139
    // Predicated region
    $region29: #{basic_block_rn12.7} parent=5 // pred_check
      _
    $region30: #{basic_block_rn12.7} parent=5 // pred_check_branch
      %142 = sbr.rel (%p139) target = $region32
    $region31: #{basic_block_rn12.7} parent=5 // pred_region
      %s143 = ssub.s32 %s9, 1
      %s144 = smul.u32 32, %s14
      %p145 = scmp.lt.s32.totalorder %s144, 63
      %s146 = scalar_select %p145, %s144, 63
      %s147 = smul.addr %s146, 4
      %s148 = scalar_lea.vmem %s0, %s147
      %p149 = pneg %p35
      %p150 = pneg %p32
      %p151 = pneg %p56
      %p152 = pneg %p53
      %p153 = pneg %p77
      %p154 = pneg %p74
      %p155 = pneg %p103
      %p156 = pneg %p100
      %s157 = smul.u32 32, %s14
      %p158 = scmp.lt.s32.totalorder %s157, 63
      %s159 = scalar_select %p158, %s157, 63
      %s160 = smul.addr %s159, 4
      %s161 = scalar_lea.vmem %s3, %s160
      %s162 = smul.u32 32, %s14
      %p163 = scmp.lt.s32.totalorder %s162, 63
      %s164 = scalar_select %p163, %s162, 63
      %s165 = smul.addr %s164, 4
      %s166 = scalar_lea.vmem %s0, %s165
      %s167 = smul.u32 32, %s14
      %s168 = smul.u32 32, %s14
      %p169 = scmp.lt.s32.totalorder %s168, 63
      %s170 = scalar_select %p169, %s168, 63
      %s171 = smul.addr %s170, 4
      %s172 = scalar_lea.vmem %s3, %s171
      %s173 = smul.u32 32, %s14
      %v174 = vld [vmem:[%s166] sm:$0xf]
      %v175 = vld [vmem:[%s166 + $0x4] sm:$0xf]
      %v176 = vld [vmem:[%s166 + $0x8] sm:$0xf]
      %v177 = vld [vmem:[%s166 + $0xc] sm:$0xf]
      %v178 = vld [vmem:[%s166 + $0x10] sm:$0xf]
      %v179 = vld [vmem:[%s166 + $0x14] sm:$0xf]
      %v180 = vld [vmem:[%s166 + $0x18] sm:$0xf]
      %v181 = vld [vmem:[%s166 + $0x1c] sm:$0xf]
      %v182 = vld [vmem:[%s166 + $0x20] sm:$0xf]
      %v183 = vld [vmem:[%s166 + $0x24] sm:$0xf]
      %v184 = vld [vmem:[%s166 + $0x28] sm:$0xf]
      %v185 = vld [vmem:[%s166 + $0x2c] sm:$0xf]
      %v186 = vld [vmem:[%s166 + $0x30] sm:$0xf]
      %v187 = vld [vmem:[%s166 + $0x34] sm:$0xf]
      %v188 = vld [vmem:[%s166 + $0x38] sm:$0xf]
      %v189 = vld [vmem:[%s166 + $0x3c] sm:$0xf]
      %v190 = vld [vmem:[%s166 + $0x40] sm:$0xf]
      %v191 = vld [vmem:[%s166 + $0x44] sm:$0xf]
      %v192 = vld [vmem:[%s166 + $0x48] sm:$0xf]
      %v193 = vld [vmem:[%s166 + $0x4c] sm:$0xf]
      %v194 = vld [vmem:[%s166 + $0x50] sm:$0xf]
      %v195 = vld [vmem:[%s166 + $0x54] sm:$0xf]
      %v196 = vld [vmem:[%s166 + $0x58] sm:$0xf]
      %v197 = vld [vmem:[%s166 + $0x5c] sm:$0xf]
      %v198 = vld [vmem:[%s166 + $0x60] sm:$0xf]
      %v199 = vld [vmem:[%s166 + $0x64] sm:$0xf]
      %v200 = vld [vmem:[%s166 + $0x68] sm:$0xf]
      %v201 = vld [vmem:[%s166 + $0x6c] sm:$0xf]
      %v202 = vld [vmem:[%s166 + $0x70] sm:$0xf]
      %v203 = vld [vmem:[%s166 + $0x74] sm:$0xf]
      %v204 = vld [vmem:[%s166 + $0x78] sm:$0xf]
      %v205 = vld [vmem:[%s166 + $0x7c] sm:$0xf]
      %v206 = vld [vmem:[%s1] sm:$0x1]
      %v207 = vunpack.c.l.bf16 %v174
      %v208 = vunpack.c.l.bf16 %v175
      %v209 = vunpack.c.l.bf16 %v176
      %v210 = vunpack.c.l.bf16 %v177
      %v211 = vunpack.c.l.bf16 %v178
      %v212 = vunpack.c.l.bf16 %v179
      %v213 = vunpack.c.l.bf16 %v180
      %v214 = vunpack.c.l.bf16 %v181
      %v215 = vunpack.c.l.bf16 %v182
      %v216 = vunpack.c.l.bf16 %v183
      %v217 = vunpack.c.l.bf16 %v184
      %v218 = vunpack.c.l.bf16 %v185
      %v219 = vunpack.c.l.bf16 %v186
      %v220 = vunpack.c.l.bf16 %v187
      %v221 = vunpack.c.l.bf16 %v188
      %v222 = vunpack.c.l.bf16 %v189
      %v223 = vunpack.c.l.bf16 %v190
      %v224 = vunpack.c.l.bf16 %v191
      %v225 = vunpack.c.l.bf16 %v192
      %v226 = vunpack.c.l.bf16 %v193
      %v227 = vunpack.c.l.bf16 %v194
      %v228 = vunpack.c.l.bf16 %v195
      %v229 = vunpack.c.l.bf16 %v196
      %v230 = vunpack.c.l.bf16 %v197
      %v231 = vunpack.c.l.bf16 %v198
      %v232 = vunpack.c.l.bf16 %v199
      %v233 = vunpack.c.l.bf16 %v200
      %v234 = vunpack.c.l.bf16 %v201
      %v235 = vunpack.c.l.bf16 %v202
      %v236 = vunpack.c.l.bf16 %v203
      %v237 = vunpack.c.l.bf16 %v204
      %v238 = vunpack.c.l.bf16 %v205
      %v240 = vlaneseq
      %v241 = vshrl.u32 %v240, 7
      %v242 = vsub.s32 0, %v241
      %v243 = vrot.slane %v206, %v242
      %v245 = vmul.f32 %v207, %v243
      %v246 = vmul.f32 %v208, %v243
      %v247 = vmul.f32 %v209, %v243
      %v248 = vmul.f32 %v210, %v243
      %v249 = vmul.f32 %v211, %v243
      %v250 = vmul.f32 %v212, %v243
      %v251 = vmul.f32 %v213, %v243
      %v252 = vmul.f32 %v214, %v243
      %v253 = vmul.f32 %v215, %v243
      %v254 = vmul.f32 %v216, %v243
      %v255 = vmul.f32 %v217, %v243
      %v256 = vmul.f32 %v218, %v243
      %v257 = vmul.f32 %v219, %v243
      %v258 = vmul.f32 %v220, %v243
      %v259 = vmul.f32 %v221, %v243
      %v260 = vmul.f32 %v222, %v243
      %v261 = vmul.f32 %v223, %v243
      %v262 = vmul.f32 %v224, %v243
      %v263 = vmul.f32 %v225, %v243
      %v264 = vmul.f32 %v226, %v243
      %v265 = vmul.f32 %v227, %v243
      %v266 = vmul.f32 %v228, %v243
      %v267 = vmul.f32 %v229, %v243
      %v268 = vmul.f32 %v230, %v243
      %v269 = vmul.f32 %v231, %v243
      %v270 = vmul.f32 %v232, %v243
      %v271 = vmul.f32 %v233, %v243
      %v272 = vmul.f32 %v234, %v243
      %v273 = vmul.f32 %v235, %v243
      %v274 = vmul.f32 %v236, %v243
      %v275 = vmul.f32 %v237, %v243
      %v276 = vmul.f32 %v238, %v243
      %v277 = vld [vmem:[%s2] sm:$0x1]
      %v279 = vlaneseq
      %v280 = vshrl.u32 %v279, 7
      %v281 = vsub.s32 0, %v280
      %v282 = vrot.slane %v277, %v281
      %v284 = vadd.f32 %v245, %v282
      %v285 = vadd.f32 %v246, %v282
      %v286 = vadd.f32 %v247, %v282
      %v287 = vadd.f32 %v248, %v282
      %v288 = vadd.f32 %v249, %v282
      %v289 = vadd.f32 %v250, %v282
      %v290 = vadd.f32 %v251, %v282
      %v291 = vadd.f32 %v252, %v282
      %v292 = vadd.f32 %v253, %v282
      %v293 = vadd.f32 %v254, %v282
      %v294 = vadd.f32 %v255, %v282
      %v295 = vadd.f32 %v256, %v282
      %v296 = vadd.f32 %v257, %v282
      %v297 = vadd.f32 %v258, %v282
      %v298 = vadd.f32 %v259, %v282
      %v299 = vadd.f32 %v260, %v282
      %v300 = vadd.f32 %v261, %v282
      %v301 = vadd.f32 %v262, %v282
      %v302 = vadd.f32 %v263, %v282
      %v303 = vadd.f32 %v264, %v282
      %v304 = vadd.f32 %v265, %v282
      %v305 = vadd.f32 %v266, %v282
      %v306 = vadd.f32 %v267, %v282
      %v307 = vadd.f32 %v268, %v282
      %v308 = vadd.f32 %v269, %v282
      %v309 = vadd.f32 %v270, %v282
      %v310 = vadd.f32 %v271, %v282
      %v311 = vadd.f32 %v272, %v282
      %v312 = vadd.f32 %v273, %v282
      %v313 = vadd.f32 %v274, %v282
      %v314 = vadd.f32 %v275, %v282
      %v315 = vadd.f32 %v276, %v282
      %vm316 = vcmp.gt.f32.partialorder %v284, 0.0
      %vm317 = vcmp.gt.f32.partialorder %v285, 0.0
      %vm318 = vcmp.gt.f32.partialorder %v286, 0.0
      %vm319 = vcmp.gt.f32.partialorder %v287, 0.0
      %vm320 = vcmp.gt.f32.partialorder %v288, 0.0
      %vm321 = vcmp.gt.f32.partialorder %v289, 0.0
      %vm322 = vcmp.gt.f32.partialorder %v290, 0.0
      %vm323 = vcmp.gt.f32.partialorder %v291, 0.0
      %vm324 = vcmp.gt.f32.partialorder %v292, 0.0
      %vm325 = vcmp.gt.f32.partialorder %v293, 0.0
      %vm326 = vcmp.gt.f32.partialorder %v294, 0.0
      %vm327 = vcmp.gt.f32.partialorder %v295, 0.0
      %vm328 = vcmp.gt.f32.partialorder %v296, 0.0
      %vm329 = vcmp.gt.f32.partialorder %v297, 0.0
      %vm330 = vcmp.gt.f32.partialorder %v298, 0.0
      %vm331 = vcmp.gt.f32.partialorder %v299, 0.0
      %vm332 = vcmp.gt.f32.partialorder %v300, 0.0
      %vm333 = vcmp.gt.f32.partialorder %v301, 0.0
      %vm334 = vcmp.gt.f32.partialorder %v302, 0.0
      %vm335 = vcmp.gt.f32.partialorder %v303, 0.0
      %vm336 = vcmp.gt.f32.partialorder %v304, 0.0
      %vm337 = vcmp.gt.f32.partialorder %v305, 0.0
      %vm338 = vcmp.gt.f32.partialorder %v306, 0.0
      %vm339 = vcmp.gt.f32.partialorder %v307, 0.0
      %vm340 = vcmp.gt.f32.partialorder %v308, 0.0
      %vm341 = vcmp.gt.f32.partialorder %v309, 0.0
      %vm342 = vcmp.gt.f32.partialorder %v310, 0.0
      %vm343 = vcmp.gt.f32.partialorder %v311, 0.0
      %vm344 = vcmp.gt.f32.partialorder %v312, 0.0
      %vm345 = vcmp.gt.f32.partialorder %v313, 0.0
      %vm346 = vcmp.gt.f32.partialorder %v314, 0.0
      %vm347 = vcmp.gt.f32.partialorder %v315, 0.0
      %v348 = vmul.f32 %v284, 0.1
      %v349 = vmul.f32 %v285, 0.1
      %v350 = vmul.f32 %v286, 0.1
      %v351 = vmul.f32 %v287, 0.1
      %v352 = vmul.f32 %v288, 0.1
      %v353 = vmul.f32 %v289, 0.1
      %v354 = vmul.f32 %v290, 0.1
      %v355 = vmul.f32 %v291, 0.1
      %v356 = vmul.f32 %v292, 0.1
      %v357 = vmul.f32 %v293, 0.1
      %v358 = vmul.f32 %v294, 0.1
      %v359 = vmul.f32 %v295, 0.1
      %v360 = vmul.f32 %v296, 0.1
      %v361 = vmul.f32 %v297, 0.1
      %v362 = vmul.f32 %v298, 0.1
      %v363 = vmul.f32 %v299, 0.1
      %v364 = vmul.f32 %v300, 0.1
      %v365 = vmul.f32 %v301, 0.1
      %v366 = vmul.f32 %v302, 0.1
      %v367 = vmul.f32 %v303, 0.1
      %v368 = vmul.f32 %v304, 0.1
      %v369 = vmul.f32 %v305, 0.1
      %v370 = vmul.f32 %v306, 0.1
      %v371 = vmul.f32 %v307, 0.1
      %v372 = vmul.f32 %v308, 0.1
      %v373 = vmul.f32 %v309, 0.1
      %v374 = vmul.f32 %v310, 0.1
      %v375 = vmul.f32 %v311, 0.1
      %v376 = vmul.f32 %v312, 0.1
      %v377 = vmul.f32 %v313, 0.1
      %v378 = vmul.f32 %v314, 0.1
      %v379 = vmul.f32 %v315, 0.1
      %v380 = vsel %vm316, %v284, %v348
      %v381 = vsel %vm317, %v285, %v349
      %v382 = vsel %vm318, %v286, %v350
      %v383 = vsel %vm319, %v287, %v351
      %v384 = vsel %vm320, %v288, %v352
      %v385 = vsel %vm321, %v289, %v353
      %v386 = vsel %vm322, %v290, %v354
      %v387 = vsel %vm323, %v291, %v355
      %v388 = vsel %vm324, %v292, %v356
      %v389 = vsel %vm325, %v293, %v357
      %v390 = vsel %vm326, %v294, %v358
      %v391 = vsel %vm327, %v295, %v359
      %v392 = vsel %vm328, %v296, %v360
      %v393 = vsel %vm329, %v297, %v361
      %v394 = vsel %vm330, %v298, %v362
      %v395 = vsel %vm331, %v299, %v363
      %v396 = vsel %vm332, %v300, %v364
      %v397 = vsel %vm333, %v301, %v365
      %v398 = vsel %vm334, %v302, %v366
      %v399 = vsel %vm335, %v303, %v367
      %v400 = vsel %vm336, %v304, %v368
      %v401 = vsel %vm337, %v305, %v369
      %v402 = vsel %vm338, %v306, %v370
      %v403 = vsel %vm339, %v307, %v371
      %v404 = vsel %vm340, %v308, %v372
      %v405 = vsel %vm341, %v309, %v373
      %v406 = vsel %vm342, %v310, %v374
      %v407 = vsel %vm343, %v311, %v375
      %v408 = vsel %vm344, %v312, %v376
      %v409 = vsel %vm345, %v313, %v377
      %v410 = vsel %vm346, %v314, %v378
      %v411 = vsel %vm347, %v315, %v379
      %v412 = vpack.c.bf16 %v381, %v380
      %v413 = vpack.c.bf16 %v383, %v382
      %v414 = vpack.c.bf16 %v385, %v384
      %v415 = vpack.c.bf16 %v387, %v386
      %v416 = vpack.c.bf16 %v389, %v388
      %v417 = vpack.c.bf16 %v391, %v390
      %v418 = vpack.c.bf16 %v393, %v392
      %v419 = vpack.c.bf16 %v395, %v394
      %v420 = vpack.c.bf16 %v397, %v396
      %v421 = vpack.c.bf16 %v399, %v398
      %v422 = vpack.c.bf16 %v401, %v400
      %v423 = vpack.c.bf16 %v403, %v402
      %v424 = vpack.c.bf16 %v405, %v404
      %v425 = vpack.c.bf16 %v407, %v406
      %v426 = vpack.c.bf16 %v409, %v408
      %v427 = vpack.c.bf16 %v411, %v410
      %v444 = vunpack.c.l.b16 %v412
      %v445 = vunpack.c.h.b16 %v412
      %v446 = vunpack.c.l.b16 %v413
      %v447 = vunpack.c.h.b16 %v413
      %v448 = vunpack.c.l.b16 %v414
      %v449 = vunpack.c.h.b16 %v414
      %v450 = vunpack.c.l.b16 %v415
      %v451 = vunpack.c.h.b16 %v415
      %v452 = vunpack.c.l.b16 %v416
      %v453 = vunpack.c.h.b16 %v416
      %v454 = vunpack.c.l.b16 %v417
      %v455 = vunpack.c.h.b16 %v417
      %v456 = vunpack.c.l.b16 %v418
      %v457 = vunpack.c.h.b16 %v418
      %v458 = vunpack.c.l.b16 %v419
      %v459 = vunpack.c.h.b16 %v419
      %v460 = vunpack.c.l.b16 %v420
      %v461 = vunpack.c.h.b16 %v420
      %v462 = vunpack.c.l.b16 %v421
      %v463 = vunpack.c.h.b16 %v421
      %v464 = vunpack.c.l.b16 %v422
      %v465 = vunpack.c.h.b16 %v422
      %v466 = vunpack.c.l.b16 %v423
      %v467 = vunpack.c.h.b16 %v423
      %v468 = vunpack.c.l.b16 %v424
      %v469 = vunpack.c.h.b16 %v424
      %v470 = vunpack.c.l.b16 %v425
      %v471 = vunpack.c.h.b16 %v425
      %v472 = vunpack.c.l.b16 %v426
      %v473 = vunpack.c.h.b16 %v426
      %v474 = vunpack.c.l.b16 %v427
      %v475 = vunpack.c.h.b16 %v427
      %v476 = vpack.c.b16 %v444, %v444
      %v477 = vpack.c.b16 %v445, %v445
      %v478 = vpack.c.b16 %v446, %v446
      %v479 = vpack.c.b16 %v447, %v447
      %v480 = vpack.c.b16 %v448, %v448
      %v481 = vpack.c.b16 %v449, %v449
      %v482 = vpack.c.b16 %v450, %v450
      %v483 = vpack.c.b16 %v451, %v451
      %v484 = vpack.c.b16 %v452, %v452
      %v485 = vpack.c.b16 %v453, %v453
      %v486 = vpack.c.b16 %v454, %v454
      %v487 = vpack.c.b16 %v455, %v455
      %v488 = vpack.c.b16 %v456, %v456
      %v489 = vpack.c.b16 %v457, %v457
      %v490 = vpack.c.b16 %v458, %v458
      %v491 = vpack.c.b16 %v459, %v459
      %v492 = vpack.c.b16 %v460, %v460
      %v493 = vpack.c.b16 %v461, %v461
      %v494 = vpack.c.b16 %v462, %v462
      %v495 = vpack.c.b16 %v463, %v463
      %v496 = vpack.c.b16 %v464, %v464
      %v497 = vpack.c.b16 %v465, %v465
      %v498 = vpack.c.b16 %v466, %v466
      %v499 = vpack.c.b16 %v467, %v467
      %v500 = vpack.c.b16 %v468, %v468
      %v501 = vpack.c.b16 %v469, %v469
      %v502 = vpack.c.b16 %v470, %v470
      %v503 = vpack.c.b16 %v471, %v471
      %v504 = vpack.c.b16 %v472, %v472
      %v505 = vpack.c.b16 %v473, %v473
      %v506 = vpack.c.b16 %v474, %v474
      %v507 = vpack.c.b16 %v475, %v475
      %540 = vst [vmem:[%s172] sm:$0xf] %v476
      %541 = vst [vmem:[%s172 + $0x4] sm:$0xf] %v477
      %542 = vst [vmem:[%s172 + $0x8] sm:$0xf] %v478
      %543 = vst [vmem:[%s172 + $0xc] sm:$0xf] %v479
      %544 = vst [vmem:[%s172 + $0x10] sm:$0xf] %v480
      %545 = vst [vmem:[%s172 + $0x14] sm:$0xf] %v481
      %546 = vst [vmem:[%s172 + $0x18] sm:$0xf] %v482
      %547 = vst [vmem:[%s172 + $0x1c] sm:$0xf] %v483
      %548 = vst [vmem:[%s172 + $0x20] sm:$0xf] %v484
      %549 = vst [vmem:[%s172 + $0x24] sm:$0xf] %v485
      %550 = vst [vmem:[%s172 + $0x28] sm:$0xf] %v486
      %551 = vst [vmem:[%s172 + $0x2c] sm:$0xf] %v487
      %552 = vst [vmem:[%s172 + $0x30] sm:$0xf] %v488
      %553 = vst [vmem:[%s172 + $0x34] sm:$0xf] %v489
      %554 = vst [vmem:[%s172 + $0x38] sm:$0xf] %v490
      %555 = vst [vmem:[%s172 + $0x3c] sm:$0xf] %v491
      %556 = vst [vmem:[%s172 + $0x40] sm:$0xf] %v492
      %557 = vst [vmem:[%s172 + $0x44] sm:$0xf] %v493
      %558 = vst [vmem:[%s172 + $0x48] sm:$0xf] %v494
      %559 = vst [vmem:[%s172 + $0x4c] sm:$0xf] %v495
      %560 = vst [vmem:[%s172 + $0x50] sm:$0xf] %v496
      %561 = vst [vmem:[%s172 + $0x54] sm:$0xf] %v497
      %562 = vst [vmem:[%s172 + $0x58] sm:$0xf] %v498
      %563 = vst [vmem:[%s172 + $0x5c] sm:$0xf] %v499
      %564 = vst [vmem:[%s172 + $0x60] sm:$0xf] %v500
      %565 = vst [vmem:[%s172 + $0x64] sm:$0xf] %v501
      %566 = vst [vmem:[%s172 + $0x68] sm:$0xf] %v502
      %567 = vst [vmem:[%s172 + $0x6c] sm:$0xf] %v503
      %568 = vst [vmem:[%s172 + $0x70] sm:$0xf] %v504
      %569 = vst [vmem:[%s172 + $0x74] sm:$0xf] %v505
      %570 = vst [vmem:[%s172 + $0x78] sm:$0xf] %v506
      %571 = vst [vmem:[%s172 + $0x7c] sm:$0xf] %v507
      %s572 = smul.u32 32, %s14
      %p573 = scmp.lt.s32.totalorder %s572, 63
      %s574 = scalar_select %p573, %s572, 63
      %s575 = smul.addr %s574, 4
      %s576 = scalar_lea.vmem %s3, %s575
      // Predicated region
      $region33: #{basic_block_rn12.7} parent=31 // pred_check
        %p577 = pneg %p100
      $region34: #{basic_block_rn12.7} parent=31 // pred_check_branch
        %579 = sbr.rel (%p577) target = $region36
      $region35: #{basic_block_rn12.7} parent=31 // pred_region
        %s580 = smul.u32 32, %s14
      $region36: #{basic_block_rn12.7} parent=31 // pred_fallthru
        _
    $region32: #{basic_block_rn12.7} parent=5 // pred_fallthru
      _
    %p581 = scmp.le.s32.totalorder 2, %s9
    // Predicated region
    $region37: #{basic_block_rn12.7} parent=5 // pred_check
      %p582 = pneg %p581
    $region38: #{basic_block_rn12.7} parent=5 // pred_check_branch
      %584 = sbr.rel (%p582) target = $region40
    $region39: #{basic_block_rn12.7} parent=5 // pred_region
      %s585 = ssub.s32 %s9, 2
      // Predicated region
      $region41: #{basic_block_rn12.7} parent=39 // pred_check
        %p586 = pneg %p106
      $region42: #{basic_block_rn12.7} parent=39 // pred_check_branch
        %588 = sbr.rel (%p586) target = $region44
      $region43: #{basic_block_rn12.7} parent=39 // pred_region
        %s589 = smul.u32 32, %s15
        %p590 = scmp.lt.s32.totalorder %s589, 63
        %s591 = scalar_select %p590, %s589, 63
        %s592 = smul.addr %s591, 4
        %s593 = scalar_lea.vmem %s3, %s592
      $region44: #{basic_block_rn12.7} parent=39 // pred_fallthru
        _
    $region40: #{basic_block_rn12.7} parent=5 // pred_fallthru
      _
  $region6: #{basic_block_rn12.7} parent=0 // loop_footer
    %s13 = sadd.s32 1, %s9
  $region7: #{basic_block_rn12.7} parent=0 // loop_footer_branch
    %8 = sbr.rel target = $region3
  $region8: #{basic_block_rn12.7} parent=0 // loop_exit
    _

// kernel: basic_block_rn12.6
$region0: #{basic_block_rn12.6}
  #allocation0 [shape = 'u32[]', space=smem, size = 0x4, offset = 0x4, fixed_abs, tag = 'smem constant byte address 0x4 - core index']
  #allocation1 [shape = 'u32[144,128]{1,0:T(1,128)}', space=vmem, size = 0x12000, scoped, tag = 'internal scratch']
  %s0 = inlined_call_operand.vmem [shape: bf16[512,36], index: 0, kind: input, shape index: {}]
  %s1 = inlined_call_operand.vmem [shape: bf16[36,128], index: 1, kind: input, shape index: {}]
  %s2 = inlined_call_operand.vmem [shape: bf16[512,128], index: 2, kind: output, shape index: {0}]
  %s3 = inlined_call_operand.vmem [shape: f32[16,128], index: 3, kind: output, shape index: {1}]
  %4 = xla_tuple %s2, %s3
  %s5 = sld [smem:[#allocation0]]
  $region49: #{basic_block_rn12.6} parent=0
    _
  %s7 = ssub.s32 1, %s5
  %s8 = scalar_select 0, %s7, %s5
  loop: start=0, step=1, limit=4
  $region2: #{basic_block_rn12.6} parent=0 // loop_pre_header
    _
  $region3: #{basic_block_rn12.6} parent=0 // loop_header
    %s10 = sphi 0, %s14
    %p11 = scmp.ge.s32.totalorder %s10, 4
    %s20 = sphi 0, %s22
    %s23 = sphi 0, %s20
    %s24 = sphi 0, %s23
    %s40 = sphi 0, %s24
    %s44 = sphi 0, %s44
    %s46 = sphi 0, %s44
    %s47 = sphi 0, %s46
    %s61 = sphi 0, %s47
    %s67 = sphi 0, %s69
    %s70 = sphi 0, %s67
    %s71 = sphi 0, %s70
    %s87 = sphi 0, %s71
    %s93 = sphi 0, %s95
    %s96 = sphi 0, %s93
    %s97 = sphi 0, %s96
    %s113 = sphi 0, %s97
  $region4: #{basic_block_rn12.6} parent=0 // loop_header_branch
    %13 = sbr.rel (%p11) target = $region8
  $region5: #{basic_block_rn12.6} parent=0 // loop_body
    %s15 = ssub.s32 %s10, 1
    %s16 = ssub.s32 %s10, 2
    %s17 = sadd.s32 %s10, 1
    %s18 = ssub.s32 %s10, %s17
    %p19 = scmp.eq.s32.totalorder %s18, 0
    %s21 = sadd.s32 %s20, 1
    %s22 = scalar_select %p19, %s20, %s21
    %p25 = pneg %p19
    %p26 = scmp.eq.s32.totalorder %s10, 1
    %p27 = por %p25, %p26
    %p28 = scmp.ne.s32.totalorder %s20, %s23
    %p29 = scmp.eq.s32.totalorder %s10, 0
    %p30 = por %p28, %p29
    %p31 = scmp.ne.s32.totalorder %s20, %s23
    %p32 = scmp.eq.s32.totalorder %s15, 1
    %p33 = por %p31, %p32
    %p34 = scmp.ne.s32.totalorder %s23, %s24
    %p35 = scmp.eq.s32.totalorder %s15, 0
    %p36 = por %p34, %p35
    %p37 = scmp.ne.s32.totalorder %s23, %s24
    %p38 = scmp.eq.s32.totalorder %s16, 1
    %p39 = por %p37, %p38
    %p41 = scmp.ne.s32.totalorder %s24, %s40
    %p42 = scmp.eq.s32.totalorder %s16, 0
    %p43 = por %p41, %p42
    %s45 = sadd.s32 %s44, 1
    %p48 = scmp.eq.s32.totalorder %s10, 1
    %p49 = scmp.ne.s32.totalorder %s44, %s46
    %p50 = scmp.eq.s32.totalorder %s10, 0
    %p51 = por %p49, %p50
    %p52 = scmp.ne.s32.totalorder %s44, %s46
    %p53 = scmp.eq.s32.totalorder %s15, 1
    %p54 = por %p52, %p53
    %p55 = scmp.ne.s32.totalorder %s46, %s47
    %p56 = scmp.eq.s32.totalorder %s15, 0
    %p57 = por %p55, %p56
    %p58 = scmp.ne.s32.totalorder %s46, %s47
    %p59 = scmp.eq.s32.totalorder %s16, 1
    %p60 = por %p58, %p59
    %p62 = scmp.ne.s32.totalorder %s47, %s61
    %p63 = scmp.eq.s32.totalorder %s16, 0
    %p64 = por %p62, %p63
    %s65 = ssub.s32 %s10, %s17
    %p66 = scmp.eq.s32.totalorder %s65, 0
    %s68 = sadd.s32 %s67, 1
    %s69 = scalar_select %p66, %s67, %s68
    %p72 = pneg %p66
    %p73 = scmp.eq.s32.totalorder %s10, 1
    %p74 = por %p72, %p73
    %p75 = scmp.ne.s32.totalorder %s67, %s70
    %p76 = scmp.eq.s32.totalorder %s10, 0
    %p77 = por %p75, %p76
    %p78 = scmp.ne.s32.totalorder %s67, %s70
    %p79 = scmp.eq.s32.totalorder %s15, 1
    %p80 = por %p78, %p79
    %p81 = scmp.ne.s32.totalorder %s70, %s71
    %p82 = scmp.eq.s32.totalorder %s15, 0
    %p83 = por %p81, %p82
    %p84 = scmp.ne.s32.totalorder %s70, %s71
    %p85 = scmp.eq.s32.totalorder %s16, 1
    %p86 = por %p84, %p85
    %p88 = scmp.ne.s32.totalorder %s71, %s87
    %p89 = scmp.eq.s32.totalorder %s16, 0
    %p90 = por %p88, %p89
    %s91 = ssub.s32 %s10, %s17
    %p92 = scmp.eq.s32.totalorder %s91, 0
    %s94 = sadd.s32 %s93, 1
    %s95 = scalar_select %p92, %s93, %s94
    %p98 = pneg %p92
    %p99 = scmp.eq.s32.totalorder %s10, 1
    %p100 = por %p98, %p99
    %p101 = scmp.ne.s32.totalorder %s93, %s96
    %p102 = scmp.eq.s32.totalorder %s10, 0
    %p103 = por %p101, %p102
    %p104 = scmp.ne.s32.totalorder %s93, %s96
    %p105 = scmp.eq.s32.totalorder %s15, 1
    %p106 = por %p104, %p105
    %p107 = scmp.ne.s32.totalorder %s96, %s97
    %p108 = scmp.eq.s32.totalorder %s15, 0
    %p109 = por %p107, %p108
    %p110 = scmp.ne.s32.totalorder %s96, %s97
    %p111 = scmp.eq.s32.totalorder %s16, 1
    %p112 = por %p110, %p111
    %p114 = scmp.ne.s32.totalorder %s97, %s113
    %p115 = scmp.eq.s32.totalorder %s16, 0
    %p116 = por %p114, %p115
    %p117 = scmp.le.s32.totalorder 1, %s10
    %p118 = scmp.lt.s32.totalorder %s10, 3
    %p119 = pnand %p117, %p118
    %p120 = pneg %p119
    // Predicated region
    $region9: #{basic_block_rn12.6} parent=5 // pred_check
      _
    $region10: #{basic_block_rn12.6} parent=5 // pred_check_branch
      %122 = sbr.rel (%p119) target = $region12
    $region11: #{basic_block_rn12.6} parent=5 // pred_region
      %s123 = ssub.s32 %s10, 1
      // Predicated region
      $region13: #{basic_block_rn12.6} parent=11 // pred_check
        %p124 = pneg %p57
      $region14: #{basic_block_rn12.6} parent=11 // pred_check_branch
        %126 = sbr.rel (%p124) target = $region16
      $region15: #{basic_block_rn12.6} parent=11 // pred_region
        _
      $region16: #{basic_block_rn12.6} parent=11 // pred_fallthru
        _
    $region12: #{basic_block_rn12.6} parent=5 // pred_fallthru
      _
    %p127 = scmp.lt.s32.totalorder %s10, 2
    // Predicated region
    $region17: #{basic_block_rn12.6} parent=5 // pred_check
      %p128 = pneg %p127
    $region18: #{basic_block_rn12.6} parent=5 // pred_check_branch
      %130 = sbr.rel (%p128) target = $region20
    $region19: #{basic_block_rn12.6} parent=5 // pred_region
      // Predicated region
      $region21: #{basic_block_rn12.6} parent=19 // pred_check
        %p131 = pneg %p30
      $region22: #{basic_block_rn12.6} parent=19 // pred_check_branch
        %133 = sbr.rel (%p131) target = $region24
      $region23: #{basic_block_rn12.6} parent=19 // pred_region
        %s134 = smul.u32 32, %s10
        %p135 = scmp.lt.s32.totalorder %s134, 63
        %s136 = scalar_select %p135, %s134, 63
        %s137 = smul.addr %s136, 4
        %s138 = scalar_lea.vmem %s0, %s137
        %s139 = smul.u32 32, %s10
      $region24: #{basic_block_rn12.6} parent=19 // pred_fallthru
        _
    $region20: #{basic_block_rn12.6} parent=5 // pred_fallthru
      _
    %p140 = scmp.le.s32.totalorder 1, %s10
    %p141 = scmp.lt.s32.totalorder %s10, 3
    %p142 = pnand %p140, %p141
    %p143 = pneg %p142
    // Predicated region
    $region25: #{basic_block_rn12.6} parent=5 // pred_check
      _
    $region26: #{basic_block_rn12.6} parent=5 // pred_check_branch
      %145 = sbr.rel (%p142) target = $region28
    $region27: #{basic_block_rn12.6} parent=5 // pred_region
      %s146 = ssub.s32 %s10, 1
      %s147 = smul.u32 32, %s15
      %p148 = scmp.lt.s32.totalorder %s147, 63
      %s149 = scalar_select %p148, %s147, 63
      %s150 = smul.addr %s149, 4
      %s151 = scalar_lea.vmem %s0, %s150
      %p152 = pneg %p36
      %p153 = pneg %p33
      %p154 = pneg %p57
      %p155 = pneg %p54
      %p156 = pneg %p83
      %p157 = pneg %p80
      %s158 = smul.u32 32, %s15
      %p159 = scmp.lt.s32.totalorder %s158, 63
      %s160 = scalar_select %p159, %s158, 63
      %s161 = smul.addr %s160, 4
      %s162 = scalar_lea.vmem %s2, %s161
      %p163 = pneg %p109
      %p164 = pneg %p106
      %p165 = scmp.lt.s32.totalorder %s15, 1
      %s166 = scalar_select %p165, %s15, 1
      %s167 = smul.addr %s166, 8
      %s168 = scalar_lea.vmem %s3, %s167
      %s169 = smul.u32 32, %s15
      %p170 = scmp.lt.s32.totalorder %s169, 63
      %s171 = scalar_select %p170, %s169, 63
      %s172 = smul.addr %s171, 4
      %s173 = scalar_lea.vmem %s0, %s172
      %s174 = smul.u32 32, %s15
      %s175 = smul.u32 32, %s15
      %p176 = scmp.lt.s32.totalorder %s175, 63
      %s177 = scalar_select %p176, %s175, 63
      %s178 = smul.addr %s177, 4
      %s179 = scalar_lea.vmem %s2, %s178
      %s180 = smul.u32 32, %s15
      %p181 = scmp.lt.s32.totalorder %s15, 1
      %s182 = scalar_select %p181, %s15, 1
      %s183 = smul.addr %s182, 8
      %s184 = scalar_lea.vmem %s3, %s183
      %v186 = vld [vmem:[%s173] sm:$0xf]
      %v187 = vld [vmem:[%s173 + $0x4] sm:$0xf]
      %v188 = vld [vmem:[%s173 + $0x8] sm:$0xf]
      %v189 = vld [vmem:[%s173 + $0xc] sm:$0xf]
      %v190 = vld [vmem:[%s173 + $0x10] sm:$0xf]
      %v191 = vld [vmem:[%s173 + $0x14] sm:$0xf]
      %v192 = vld [vmem:[%s173 + $0x18] sm:$0xf]
      %v193 = vld [vmem:[%s173 + $0x1c] sm:$0xf]
      %v194 = vld [vmem:[%s173 + $0x20] sm:$0xf]
      %v195 = vld [vmem:[%s173 + $0x24] sm:$0xf]
      %v196 = vld [vmem:[%s173 + $0x28] sm:$0xf]
      %v197 = vld [vmem:[%s173 + $0x2c] sm:$0xf]
      %v198 = vld [vmem:[%s173 + $0x30] sm:$0xf]
      %v199 = vld [vmem:[%s173 + $0x34] sm:$0xf]
      %v200 = vld [vmem:[%s173 + $0x38] sm:$0xf]
      %v201 = vld [vmem:[%s173 + $0x3c] sm:$0xf]
      %v202 = vld [vmem:[%s173 + $0x40] sm:$0xf]
      %v203 = vld [vmem:[%s173 + $0x44] sm:$0xf]
      %v204 = vld [vmem:[%s173 + $0x48] sm:$0xf]
      %v205 = vld [vmem:[%s173 + $0x4c] sm:$0xf]
      %v206 = vld [vmem:[%s173 + $0x50] sm:$0xf]
      %v207 = vld [vmem:[%s173 + $0x54] sm:$0xf]
      %v208 = vld [vmem:[%s173 + $0x58] sm:$0xf]
      %v209 = vld [vmem:[%s173 + $0x5c] sm:$0xf]
      %v210 = vld [vmem:[%s173 + $0x60] sm:$0xf]
      %v211 = vld [vmem:[%s173 + $0x64] sm:$0xf]
      %v212 = vld [vmem:[%s173 + $0x68] sm:$0xf]
      %v213 = vld [vmem:[%s173 + $0x6c] sm:$0xf]
      %v214 = vld [vmem:[%s173 + $0x70] sm:$0xf]
      %v215 = vld [vmem:[%s173 + $0x74] sm:$0xf]
      %v216 = vld [vmem:[%s173 + $0x78] sm:$0xf]
      %v217 = vld [vmem:[%s173 + $0x7c] sm:$0xf]
      %v218 = vld [vmem:[%s1] sm:$0xf]
      %v219 = vld [vmem:[%s1 + $0x4] sm:$0xf]
      %v220 = vld [vmem:[%s1 + $0x8] sm:$0xf]
      %v221 = vld [vmem:[%s1 + $0xc] sm:$0xf]
      %v222 = vld [vmem:[%s1 + $0x10] sm:$0x3]
      %v255 = vunpack.c.l.b16 %v186
      %v256 = vunpack.c.l.b16 %v187
      %v257 = vunpack.c.l.b16 %v188
      %v258 = vunpack.c.l.b16 %v189
      %v259 = vunpack.c.l.b16 %v190
      %v260 = vunpack.c.l.b16 %v191
      %v261 = vunpack.c.l.b16 %v192
      %v262 = vunpack.c.l.b16 %v193
      %v263 = vunpack.c.l.b16 %v194
      %v264 = vunpack.c.l.b16 %v195
      %v265 = vunpack.c.l.b16 %v196
      %v266 = vunpack.c.l.b16 %v197
      %v267 = vunpack.c.l.b16 %v198
      %v268 = vunpack.c.l.b16 %v199
      %v269 = vunpack.c.l.b16 %v200
      %v270 = vunpack.c.l.b16 %v201
      %v271 = vunpack.c.l.b16 %v202
      %v272 = vunpack.c.l.b16 %v203
      %v273 = vunpack.c.l.b16 %v204
      %v274 = vunpack.c.l.b16 %v205
      %v275 = vunpack.c.l.b16 %v206
      %v276 = vunpack.c.l.b16 %v207
      %v277 = vunpack.c.l.b16 %v208
      %v278 = vunpack.c.l.b16 %v209
      %v279 = vunpack.c.l.b16 %v210
      %v280 = vunpack.c.l.b16 %v211
      %v281 = vunpack.c.l.b16 %v212
      %v282 = vunpack.c.l.b16 %v213
      %v283 = vunpack.c.l.b16 %v214
      %v284 = vunpack.c.l.b16 %v215
      %v285 = vunpack.c.l.b16 %v216
      %v286 = vunpack.c.l.b16 %v217
      %v287 = vpack.c.b16 %v256, %v255
      %v288 = vpack.c.b16 %v258, %v257
      %v289 = vpack.c.b16 %v260, %v259
      %v290 = vpack.c.b16 %v262, %v261
      %v291 = vpack.c.b16 %v264, %v263
      %v292 = vpack.c.b16 %v266, %v265
      %v293 = vpack.c.b16 %v268, %v267
      %v294 = vpack.c.b16 %v270, %v269
      %v295 = vpack.c.b16 %v272, %v271
      %v296 = vpack.c.b16 %v274, %v273
      %v297 = vpack.c.b16 %v276, %v275
      %v298 = vpack.c.b16 %v278, %v277
      %v299 = vpack.c.b16 %v280, %v279
      %v300 = vpack.c.b16 %v282, %v281
      %v301 = vpack.c.b16 %v284, %v283
      %v302 = vpack.c.b16 %v286, %v285
      %v308 = vunpack.c.l.b16 %v218
      %v309 = vunpack.c.l.b16 %v219
      %v310 = vunpack.c.l.b16 %v220
      %v311 = vunpack.c.l.b16 %v221
      %v312 = vunpack.c.l.b16 %v222
      %v313 = vpack.c.b16 %v309, %v308
      %v314 = vpack.c.b16 %v311, %v310
      %v315 = vpack.c.b16 %v312, %v312
      %vm318 = vcmask 293888
      %v320 = vsel %vm318, %v287, 0
      %v323 = vsel %vm318, %v288, 0
      %v326 = vsel %vm318, %v289, 0
      %v329 = vsel %vm318, %v290, 0
      %v332 = vsel %vm318, %v291, 0
      %v335 = vsel %vm318, %v292, 0
      %v338 = vsel %vm318, %v293, 0
      %v341 = vsel %vm318, %v294, 0
      %v344 = vsel %vm318, %v295, 0
      %v347 = vsel %vm318, %v296, 0
      %v350 = vsel %vm318, %v297, 0
      %v353 = vsel %vm318, %v298, 0
      %v356 = vsel %vm318, %v299, 0
      %v359 = vsel %vm318, %v300, 0
      %v362 = vsel %vm318, %v301, 0
      %v365 = vsel %vm318, %v302, 0
      %vm367 = vcmask 1041408
      %v369 = vsel %vm367, %v315, 0
      %371 = vmatprep.subr.bf16.mxu0 0
      %372 = vmatpush1.bf16.msra.mxu0 %v313
      %373 = vmatprep.subr.bf16.mxu0 0
      %374 = vmatpush1.bf16.msra.mxu0 %v314
      %375 = vmatprep.subr.bf16.mxu0 0
      %376 = vmatpush1.bf16.msra.mxu0 %v369
      %377 = vmatprep.subr.bf16.mxu0 0
      %378 = vmatpush1.bf16.msra.mxu0 0
      %379 = vmatprep.subr.bf16.mxu0 0
      %380 = vmatpush1.bf16.msra.mxu0 0
      %381 = vmatprep.subr.bf16.mxu0 0
      %382 = vmatpush1.bf16.msra.mxu0 0
      %383 = vmatprep.subr.bf16.mxu0 0
      %384 = vmatpush1.bf16.msra.mxu0 0
      %385 = vmatprep.subr.bf16.mxu0 0
      %386 = vmatpush1.bf16.msra.mxu0 0
      %387 = vmatprep.subr.bf16.mxu0 0
      %388 = vmatpush1.bf16.msra.mxu0 0
      %389 = vmatprep.subr.bf16.mxu0 0
      %390 = vmatpush1.bf16.msra.mxu0 0
      %391 = vmatprep.subr.bf16.mxu0 0
      %392 = vmatpush1.bf16.msra.mxu0 0
      %393 = vmatprep.subr.bf16.mxu0 0
      %394 = vmatpush1.bf16.msra.mxu0 0
      %395 = vmatprep.subr.bf16.mxu0 0
      %396 = vmatpush1.bf16.msra.mxu0 0
      %397 = vmatprep.subr.bf16.mxu0 0
      %398 = vmatpush1.bf16.msra.mxu0 0
      %399 = vmatprep.subr.bf16.mxu0 0
      %400 = vmatpush1.bf16.msra.mxu0 0
      %401 = vmatprep.subr.bf16.mxu0 0
      %402 = vmatpush1.bf16.msra.mxu0 0
      %403 = vmatprep.mubr.bf16.mxu0 0
      %404 = vmatmul.mubr.bf16.gmra.mrb[0].mxu0 %v320
      %v405 = vpop.f32.mrb[0].mxu0
      %v406 = vadd.f32 0.0, %v405
      %v407 = vpop.f32.mrb[0].mxu0
      %v408 = vpop.f32.mrb[0].mxu0
      %v409 = vadd.f32 0.0, %v408
      %v410 = vpop.f32.mrb[0].mxu0
      %411 = vmatprep.mubr.bf16.mxu0 0
      %412 = vmatmul.mubr.bf16.gmra.mrb[0].mxu0 %v323
      %v413 = vpop.f32.mrb[0].mxu0
      %v414 = vadd.f32 0.0, %v413
      %v415 = vpop.f32.mrb[0].mxu0
      %v416 = vpop.f32.mrb[0].mxu0
      %v417 = vadd.f32 0.0, %v416
      %v418 = vpop.f32.mrb[0].mxu0
      %419 = vmatprep.mubr.bf16.mxu0 0
      %420 = vmatmul.mubr.bf16.gmra.mrb[0].mxu0 %v326
      %v421 = vpop.f32.mrb[0].mxu0
      %v422 = vadd.f32 0.0, %v421
      %v423 = vpop.f32.mrb[0].mxu0
      %v424 = vpop.f32.mrb[0].mxu0
      %v425 = vadd.f32 0.0, %v424
      %v426 = vpop.f32.mrb[0].mxu0
      %427 = vmatprep.mubr.bf16.mxu0 0
      %428 = vmatmul.mubr.bf16.gmra.mrb[0].mxu0 %v329
      %v429 = vpop.f32.mrb[0].mxu0
      %v430 = vadd.f32 0.0, %v429
      %v431 = vpop.f32.mrb[0].mxu0
      %v432 = vpop.f32.mrb[0].mxu0
      %v433 = vadd.f32 0.0, %v432
      %v434 = vpop.f32.mrb[0].mxu0
      %435 = vmatprep.mubr.bf16.mxu0 0
      %436 = vmatmul.mubr.bf16.gmra.mrb[0].mxu0 %v332
      %v437 = vpop.f32.mrb[0].mxu0
      %v438 = vadd.f32 0.0, %v437
      %v439 = vpop.f32.mrb[0].mxu0
      %v440 = vpop.f32.mrb[0].mxu0
      %v441 = vadd.f32 0.0, %v440
      %v442 = vpop.f32.mrb[0].mxu0
      %443 = vmatprep.mubr.bf16.mxu0 0
      %444 = vmatmul.mubr.bf16.gmra.mrb[0].mxu0 %v335
      %v445 = vpop.f32.mrb[0].mxu0
      %v446 = vadd.f32 0.0, %v445
      %v447 = vpop.f32.mrb[0].mxu0
      %v448 = vpop.f32.mrb[0].mxu0
      %v449 = vadd.f32 0.0, %v448
      %v450 = vpop.f32.mrb[0].mxu0
      %451 = vmatprep.mubr.bf16.mxu0 0
      %452 = vmatmul.mubr.bf16.gmra.mrb[0].mxu0 %v338
      %v453 = vpop.f32.mrb[0].mxu0
      %v454 = vadd.f32 0.0, %v453
      %v455 = vpop.f32.mrb[0].mxu0
      %v456 = vpop.f32.mrb[0].mxu0
      %v457 = vadd.f32 0.0, %v456
      %v458 = vpop.f32.mrb[0].mxu0
      %459 = vmatprep.mubr.bf16.mxu0 0
      %460 = vmatmul.mubr.bf16.gmra.mrb[0].mxu0 %v341
      %v461 = vpop.f32.mrb[0].mxu0
      %v462 = vadd.f32 0.0, %v461
      %v463 = vpop.f32.mrb[0].mxu0
      %v464 = vpop.f32.mrb[0].mxu0
      %v465 = vadd.f32 0.0, %v464
      %v466 = vpop.f32.mrb[0].mxu0
      %467 = vmatprep.mubr.bf16.mxu0 0
      %468 = vmatmul.mubr.bf16.gmra.mrb[0].mxu0 %v344
      %v469 = vpop.f32.mrb[0].mxu0
      %v470 = vadd.f32 0.0, %v469
      %v471 = vpop.f32.mrb[0].mxu0
      %v472 = vpop.f32.mrb[0].mxu0
      %v473 = vadd.f32 0.0, %v472
      %v474 = vpop.f32.mrb[0].mxu0
      %475 = vmatprep.mubr.bf16.mxu0 0
      %476 = vmatmul.mubr.bf16.gmra.mrb[0].mxu0 %v347
      %v477 = vpop.f32.mrb[0].mxu0
      %v478 = vadd.f32 0.0, %v477
      %v479 = vpop.f32.mrb[0].mxu0
      %v480 = vpop.f32.mrb[0].mxu0
      %v481 = vadd.f32 0.0, %v480
      %v482 = vpop.f32.mrb[0].mxu0
      %483 = vmatprep.mubr.bf16.mxu0 0
      %484 = vmatmul.mubr.bf16.gmra.mrb[0].mxu0 %v350
      %v485 = vpop.f32.mrb[0].mxu0
      %v486 = vadd.f32 0.0, %v485
      %v487 = vpop.f32.mrb[0].mxu0
      %v488 = vpop.f32.mrb[0].mxu0
      %v489 = vadd.f32 0.0, %v488
      %v490 = vpop.f32.mrb[0].mxu0
      %491 = vmatprep.mubr.bf16.mxu0 0
      %492 = vmatmul.mubr.bf16.gmra.mrb[0].mxu0 %v353
      %v493 = vpop.f32.mrb[0].mxu0
      %v494 = vadd.f32 0.0, %v493
      %v495 = vpop.f32.mrb[0].mxu0
      %v496 = vpop.f32.mrb[0].mxu0
      %v497 = vadd.f32 0.0, %v496
      %v498 = vpop.f32.mrb[0].mxu0
      %499 = vmatprep.mubr.bf16.mxu0 0
      %500 = vmatmul.mubr.bf16.gmra.mrb[0].mxu0 %v356
      %v501 = vpop.f32.mrb[0].mxu0
      %v502 = vadd.f32 0.0, %v501
      %v503 = vpop.f32.mrb[0].mxu0
      %v504 = vpop.f32.mrb[0].mxu0
      %v505 = vadd.f32 0.0, %v504
      %v506 = vpop.f32.mrb[0].mxu0
      %507 = vmatprep.mubr.bf16.mxu0 0
      %508 = vmatmul.mubr.bf16.gmra.mrb[0].mxu0 %v359
      %v509 = vpop.f32.mrb[0].mxu0
      %v510 = vadd.f32 0.0, %v509
      %v511 = vpop.f32.mrb[0].mxu0
      %v512 = vpop.f32.mrb[0].mxu0
      %v513 = vadd.f32 0.0, %v512
      %v514 = vpop.f32.mrb[0].mxu0
      %515 = vmatprep.mubr.bf16.mxu0 0
      %516 = vmatmul.mubr.bf16.gmra.mrb[0].mxu0 %v362
      %v517 = vpop.f32.mrb[0].mxu0
      %v518 = vadd.f32 0.0, %v517
      %v519 = vpop.f32.mrb[0].mxu0
      %v520 = vpop.f32.mrb[0].mxu0
      %v521 = vadd.f32 0.0, %v520
      %v522 = vpop.f32.mrb[0].mxu0
      %523 = vmatprep.mubr.bf16.mxu0 0
      %524 = vmatmul.mubr.bf16.gmra.mrb[0].mxu0 %v365
      %v525 = vpop.f32.mrb[0].mxu0
      %v526 = vadd.f32 0.0, %v525
      %v527 = vpop.f32.mrb[0].mxu0
      %v528 = vpop.f32.mrb[0].mxu0
      %v529 = vadd.f32 0.0, %v528
      %v530 = vpop.f32.mrb[0].mxu0
      %531 = vdwg.mxu0
      %v532 = vpack.c.bf16 %v409, %v406
      %v533 = vpack.c.bf16 %v417, %v414
      %v534 = vpack.c.bf16 %v425, %v422
      %v535 = vpack.c.bf16 %v433, %v430
      %v536 = vpack.c.bf16 %v441, %v438
      %v537 = vpack.c.bf16 %v449, %v446
      %v538 = vpack.c.bf16 %v457, %v454
      %v539 = vpack.c.bf16 %v465, %v462
      %v540 = vpack.c.bf16 %v473, %v470
      %v541 = vpack.c.bf16 %v481, %v478
      %v542 = vpack.c.bf16 %v489, %v486
      %v543 = vpack.c.bf16 %v497, %v494
      %v544 = vpack.c.bf16 %v505, %v502
      %v545 = vpack.c.bf16 %v513, %v510
      %v546 = vpack.c.bf16 %v521, %v518
      %v547 = vpack.c.bf16 %v529, %v526
      %v564 = vunpack.c.l.b16 %v532
      %v565 = vunpack.c.h.b16 %v532
      %v566 = vunpack.c.l.b16 %v533
      %v567 = vunpack.c.h.b16 %v533
      %v568 = vunpack.c.l.b16 %v534
      %v569 = vunpack.c.h.b16 %v534
      %v570 = vunpack.c.l.b16 %v535
      %v571 = vunpack.c.h.b16 %v535
      %v572 = vunpack.c.l.b16 %v536
      %v573 = vunpack.c.h.b16 %v536
      %v574 = vunpack.c.l.b16 %v537
      %v575 = vunpack.c.h.b16 %v537
      %v576 = vunpack.c.l.b16 %v538
      %v577 = vunpack.c.h.b16 %v538
      %v578 = vunpack.c.l.b16 %v539
      %v579 = vunpack.c.h.b16 %v539
      %v580 = vunpack.c.l.b16 %v540
      %v581 = vunpack.c.h.b16 %v540
      %v582 = vunpack.c.l.b16 %v541
      %v583 = vunpack.c.h.b16 %v541
      %v584 = vunpack.c.l.b16 %v542
      %v585 = vunpack.c.h.b16 %v542
      %v586 = vunpack.c.l.b16 %v543
      %v587 = vunpack.c.h.b16 %v543
      %v588 = vunpack.c.l.b16 %v544
      %v589 = vunpack.c.h.b16 %v544
      %v590 = vunpack.c.l.b16 %v545
      %v591 = vunpack.c.h.b16 %v545
      %v592 = vunpack.c.l.b16 %v546
      %v593 = vunpack.c.h.b16 %v546
      %v594 = vunpack.c.l.b16 %v547
      %v595 = vunpack.c.h.b16 %v547
      %v596 = vpack.c.b16 %v564, %v564
      %v597 = vpack.c.b16 %v565, %v565
      %v598 = vpack.c.b16 %v566, %v566
      %v599 = vpack.c.b16 %v567, %v567
      %v600 = vpack.c.b16 %v568, %v568
      %v601 = vpack.c.b16 %v569, %v569
      %v602 = vpack.c.b16 %v570, %v570
      %v603 = vpack.c.b16 %v571, %v571
      %v604 = vpack.c.b16 %v572, %v572
      %v605 = vpack.c.b16 %v573, %v573
      %v606 = vpack.c.b16 %v574, %v574
      %v607 = vpack.c.b16 %v575, %v575
      %v608 = vpack.c.b16 %v576, %v576
      %v609 = vpack.c.b16 %v577, %v577
      %v610 = vpack.c.b16 %v578, %v578
      %v611 = vpack.c.b16 %v579, %v579
      %v612 = vpack.c.b16 %v580, %v580
      %v613 = vpack.c.b16 %v581, %v581
      %v614 = vpack.c.b16 %v582, %v582
      %v615 = vpack.c.b16 %v583, %v583
      %v616 = vpack.c.b16 %v584, %v584
      %v617 = vpack.c.b16 %v585, %v585
      %v618 = vpack.c.b16 %v586, %v586
      %v619 = vpack.c.b16 %v587, %v587
      %v620 = vpack.c.b16 %v588, %v588
      %v621 = vpack.c.b16 %v589, %v589
      %v622 = vpack.c.b16 %v590, %v590
      %v623 = vpack.c.b16 %v591, %v591
      %v624 = vpack.c.b16 %v592, %v592
      %v625 = vpack.c.b16 %v593, %v593
      %v626 = vpack.c.b16 %v594, %v594
      %v627 = vpack.c.b16 %v595, %v595
      %660 = vst [vmem:[%s179] sm:$0xf] %v596
      %661 = vst [vmem:[%s179 + $0x4] sm:$0xf] %v597
      %662 = vst [vmem:[%s179 + $0x8] sm:$0xf] %v598
      %663 = vst [vmem:[%s179 + $0xc] sm:$0xf] %v599
      %664 = vst [vmem:[%s179 + $0x10] sm:$0xf] %v600
      %665 = vst [vmem:[%s179 + $0x14] sm:$0xf] %v601
      %666 = vst [vmem:[%s179 + $0x18] sm:$0xf] %v602
      %667 = vst [vmem:[%s179 + $0x1c] sm:$0xf] %v603
      %668 = vst [vmem:[%s179 + $0x20] sm:$0xf] %v604
      %669 = vst [vmem:[%s179 + $0x24] sm:$0xf] %v605
      %670 = vst [vmem:[%s179 + $0x28] sm:$0xf] %v606
      %671 = vst [vmem:[%s179 + $0x2c] sm:$0xf] %v607
      %672 = vst [vmem:[%s179 + $0x30] sm:$0xf] %v608
      %673 = vst [vmem:[%s179 + $0x34] sm:$0xf] %v609
      %674 = vst [vmem:[%s179 + $0x38] sm:$0xf] %v610
      %675 = vst [vmem:[%s179 + $0x3c] sm:$0xf] %v611
      %676 = vst [vmem:[%s179 + $0x40] sm:$0xf] %v612
      %677 = vst [vmem:[%s179 + $0x44] sm:$0xf] %v613
      %678 = vst [vmem:[%s179 + $0x48] sm:$0xf] %v614
      %679 = vst [vmem:[%s179 + $0x4c] sm:$0xf] %v615
      %680 = vst [vmem:[%s179 + $0x50] sm:$0xf] %v616
      %681 = vst [vmem:[%s179 + $0x54] sm:$0xf] %v617
      %682 = vst [vmem:[%s179 + $0x58] sm:$0xf] %v618
      %683 = vst [vmem:[%s179 + $0x5c] sm:$0xf] %v619
      %684 = vst [vmem:[%s179 + $0x60] sm:$0xf] %v620
      %685 = vst [vmem:[%s179 + $0x64] sm:$0xf] %v621
      %686 = vst [vmem:[%s179 + $0x68] sm:$0xf] %v622
      %687 = vst [vmem:[%s179 + $0x6c] sm:$0xf] %v623
      %688 = vst [vmem:[%s179 + $0x70] sm:$0xf] %v624
      %689 = vst [vmem:[%s179 + $0x74] sm:$0xf] %v625
      %690 = vst [vmem:[%s179 + $0x78] sm:$0xf] %v626
      %691 = vst [vmem:[%s179 + $0x7c] sm:$0xf] %v627
      %v692 = vadd.f32 %v406, %v409
      %v693 = vadd.f32 %v692, %v414
      %v694 = vadd.f32 %v693, %v417
      %v695 = vadd.f32 %v694, %v422
      %v696 = vadd.f32 %v695, %v425
      %v697 = vadd.f32 %v696, %v430
      %v698 = vadd.f32 %v697, %v433
      %v699 = vadd.f32 %v698, %v438
      %v700 = vadd.f32 %v699, %v441
      %v701 = vadd.f32 %v700, %v446
      %v702 = vadd.f32 %v701, %v449
      %v703 = vadd.f32 %v702, %v454
      %v704 = vadd.f32 %v703, %v457
      %v705 = vadd.f32 %v704, %v462
      %v706 = vadd.f32 %v705, %v465
      %v707 = vadd.f32 %v706, %v470
      %v708 = vadd.f32 %v707, %v473
      %v709 = vadd.f32 %v708, %v478
      %v710 = vadd.f32 %v709, %v481
      %v711 = vadd.f32 %v710, %v486
      %v712 = vadd.f32 %v711, %v489
      %v713 = vadd.f32 %v712, %v494
      %v714 = vadd.f32 %v713, %v497
      %v715 = vadd.f32 %v714, %v502
      %v716 = vadd.f32 %v715, %v505
      %v717 = vadd.f32 %v716, %v510
      %v718 = vadd.f32 %v717, %v513
      %v719 = vadd.f32 %v718, %v518
      %v720 = vadd.f32 %v719, %v521
      %v721 = vadd.f32 %v720, %v526
      %v722 = vadd.f32 %v721, %v529
      %v723 = vrot.slane %v722, 4
      %v724 = vadd.f32 %v722, %v723
      %v725 = vrot.slane %v724, 2
      %v726 = vadd.f32 %v724, %v725
      %v727 = vrot.slane %v726, 1
      %v728 = vadd.f32 %v726, %v727
      %v729 = vmul.f32 %v406, %v406
      %v730 = vmul.f32 %v409, %v409
      %v731 = vmul.f32 %v414, %v414
      %v732 = vmul.f32 %v417, %v417
      %v733 = vmul.f32 %v422, %v422
      %v734 = vmul.f32 %v425, %v425
      %v735 = vmul.f32 %v430, %v430
      %v736 = vmul.f32 %v433, %v433
      %v737 = vmul.f32 %v438, %v438
      %v738 = vmul.f32 %v441, %v441
      %v739 = vmul.f32 %v446, %v446
      %v740 = vmul.f32 %v449, %v449
      %v741 = vmul.f32 %v454, %v454
      %v742 = vmul.f32 %v457, %v457
      %v743 = vmul.f32 %v462, %v462
      %v744 = vmul.f32 %v465, %v465
      %v745 = vmul.f32 %v470, %v470
      %v746 = vmul.f32 %v473, %v473
      %v747 = vmul.f32 %v478, %v478
      %v748 = vmul.f32 %v481, %v481
      %v749 = vmul.f32 %v486, %v486
      %v750 = vmul.f32 %v489, %v489
      %v751 = vmul.f32 %v494, %v494
      %v752 = vmul.f32 %v497, %v497
      %v753 = vmul.f32 %v502, %v502
      %v754 = vmul.f32 %v505, %v505
      %v755 = vmul.f32 %v510, %v510
      %v756 = vmul.f32 %v513, %v513
      %v757 = vmul.f32 %v518, %v518
      %v758 = vmul.f32 %v521, %v521
      %v759 = vmul.f32 %v526, %v526
      %v760 = vmul.f32 %v529, %v529
      %v761 = vadd.f32 %v729, %v730
      %v762 = vadd.f32 %v761, %v731
      %v763 = vadd.f32 %v762, %v732
      %v764 = vadd.f32 %v763, %v733
      %v765 = vadd.f32 %v764, %v734
      %v766 = vadd.f32 %v765, %v735
      %v767 = vadd.f32 %v766, %v736
      %v768 = vadd.f32 %v767, %v737
      %v769 = vadd.f32 %v768, %v738
      %v770 = vadd.f32 %v769, %v739
      %v771 = vadd.f32 %v770, %v740
      %v772 = vadd.f32 %v771, %v741
      %v773 = vadd.f32 %v772, %v742
      %v774 = vadd.f32 %v773, %v743
      %v775 = vadd.f32 %v774, %v744
      %v776 = vadd.f32 %v775, %v745
      %v777 = vadd.f32 %v776, %v746
      %v778 = vadd.f32 %v777, %v747
      %v779 = vadd.f32 %v778, %v748
      %v780 = vadd.f32 %v779, %v749
      %v781 = vadd.f32 %v780, %v750
      %v782 = vadd.f32 %v781, %v751
      %v783 = vadd.f32 %v782, %v752
      %v784 = vadd.f32 %v783, %v753
      %v785 = vadd.f32 %v784, %v754
      %v786 = vadd.f32 %v785, %v755
      %v787 = vadd.f32 %v786, %v756
      %v788 = vadd.f32 %v787, %v757
      %v789 = vadd.f32 %v788, %v758
      %v790 = vadd.f32 %v789, %v759
      %v791 = vadd.f32 %v790, %v760
      %v792 = vrot.slane %v791, 4
      %v793 = vadd.f32 %v791, %v792
      %v794 = vrot.slane %v793, 2
      %v795 = vadd.f32 %v793, %v794
      %v796 = vrot.slane %v795, 1
      %v797 = vadd.f32 %v795, %v796
      %vm798 = vcmask 1040384
      %v799 = vsel %vm798, %v728, %v797
      %v800 = vsel %vm367, %v799, 0.0
      %801 = vst [vmem:[%s184] sm:$0xff] %v800
      %s802 = smul.u32 32, %s15
      %p803 = scmp.lt.s32.totalorder %s802, 63
      %s804 = scalar_select %p803, %s802, 63
      %s805 = smul.addr %s804, 4
      %s806 = scalar_lea.vmem %s2, %s805
      %p807 = scmp.lt.s32.totalorder %s15, 1
      %s808 = scalar_select %p807, %s15, 1
      %s809 = smul.addr %s808, 8
      %s810 = scalar_lea.vmem %s3, %s809
      // Predicated region
      $region29: #{basic_block_rn12.6} parent=27 // pred_check
        %p811 = pneg %p80
      $region30: #{basic_block_rn12.6} parent=27 // pred_check_branch
        %813 = sbr.rel (%p811) target = $region32
      $region31: #{basic_block_rn12.6} parent=27 // pred_region
        %s814 = smul.u32 32, %s15
      $region32: #{basic_block_rn12.6} parent=27 // pred_fallthru
        _
      // Predicated region
      $region33: #{basic_block_rn12.6} parent=27 // pred_check
        %p815 = pneg %p106
      $region34: #{basic_block_rn12.6} parent=27 // pred_check_branch
        %817 = sbr.rel (%p815) target = $region36
      $region35: #{basic_block_rn12.6} parent=27 // pred_region
        _
      $region36: #{basic_block_rn12.6} parent=27 // pred_fallthru
        _
    $region28: #{basic_block_rn12.6} parent=5 // pred_fallthru
      _
    %p818 = scmp.le.s32.totalorder 2, %s10
    // Predicated region
    $region37: #{basic_block_rn12.6} parent=5 // pred_check
      %p819 = pneg %p818
    $region38: #{basic_block_rn12.6} parent=5 // pred_check_branch
      %821 = sbr.rel (%p819) target = $region40
    $region39: #{basic_block_rn12.6} parent=5 // pred_region
      %s822 = ssub.s32 %s10, 2
      // Predicated region
      $region41: #{basic_block_rn12.6} parent=39 // pred_check
        %p823 = pneg %p86
      $region42: #{basic_block_rn12.6} parent=39 // pred_check_branch
        %825 = sbr.rel (%p823) target = $region44
      $region43: #{basic_block_rn12.6} parent=39 // pred_region
        %s826 = smul.u32 32, %s16
        %p827 = scmp.lt.s32.totalorder %s826, 63
        %s828 = scalar_select %p827, %s826, 63
        %s829 = smul.addr %s828, 4
        %s830 = scalar_lea.vmem %s2, %s829
      $region44: #{basic_block_rn12.6} parent=39 // pred_fallthru
        _
      // Predicated region
      $region45: #{basic_block_rn12.6} parent=39 // pred_check
        %p831 = pneg %p112
      $region46: #{basic_block_rn12.6} parent=39 // pred_check_branch
        %833 = sbr.rel (%p831) target = $region48
      $region47: #{basic_block_rn12.6} parent=39 // pred_region
        %p834 = scmp.lt.s32.totalorder %s16, 1
        %s835 = scalar_select %p834, %s16, 1
        %s836 = smul.addr %s835, 8
        %s837 = scalar_lea.vmem %s3, %s836
      $region48: #{basic_block_rn12.6} parent=39 // pred_fallthru
        _
    $region40: #{basic_block_rn12.6} parent=5 // pred_fallthru
      _
  $region6: #{basic_block_rn12.6} parent=0 // loop_footer
    %s14 = sadd.s32 1, %s10
  $region7: #{basic_block_rn12.6} parent=0 // loop_footer_branch
    %9 = sbr.rel target = $region3
  $region8: #{basic_block_rn12.6} parent=0 // loop_exit
    _

// kernel: basic_block_rn12.11
$region0: #{basic_block_rn12.11}
  #allocation0 [shape = 'u32[]', space=smem, size = 0x4, offset = 0x4, fixed_abs, tag = 'smem constant byte address 0x4 - core index']
  #allocation1 [shape = 'u32[144,128]{1,0:T(1,128)}', space=vmem, size = 0x12000, scoped, tag = 'internal scratch']
  %s0 = inlined_call_operand.vmem [shape: bf16[512,128], index: 0, kind: input, shape index: {}]
  %s1 = inlined_call_operand.vmem [shape: f32[1,128], index: 1, kind: input, shape index: {}]
  %s2 = inlined_call_operand.vmem [shape: f32[1,128], index: 2, kind: input, shape index: {}]
  %s3 = inlined_call_operand.vmem [shape: bf16[512,128], index: 3, kind: input, shape index: {}]
  %s4 = inlined_call_operand.vmem [shape: f32[1,128], index: 4, kind: input, shape index: {}]
  %s5 = inlined_call_operand.vmem [shape: f32[1,128], index: 5, kind: input, shape index: {}]
  %s6 = inlined_call_operand.vmem [shape: f32[512,128], index: 6, kind: output, shape index: {}]
  %s7 = sld [smem:[#allocation0]]
  $region57: #{basic_block_rn12.11} parent=0
    _
  %s9 = ssub.s32 1, %s7
  %s10 = scalar_select 0, %s9, %s7
  loop: start=0, step=1, limit=4
  $region2: #{basic_block_rn12.11} parent=0 // loop_pre_header
    _
  $region3: #{basic_block_rn12.11} parent=0 // loop_header
    %s12 = sphi 0, %s16
    %p13 = scmp.ge.s32.totalorder %s12, 4
    %s22 = sphi 0, %s24
    %s25 = sphi 0, %s22
    %s26 = sphi 0, %s25
    %s42 = sphi 0, %s26
    %s46 = sphi 0, %s46
    %s48 = sphi 0, %s46
    %s49 = sphi 0, %s48
    %s63 = sphi 0, %s49
    %s67 = sphi 0, %s67
    %s69 = sphi 0, %s67
    %s70 = sphi 0, %s69
    %s84 = sphi 0, %s70
    %s90 = sphi 0, %s92
    %s93 = sphi 0, %s90
    %s94 = sphi 0, %s93
    %s110 = sphi 0, %s94
    %s114 = sphi 0, %s114
    %s116 = sphi 0, %s114
    %s117 = sphi 0, %s116
    %s131 = sphi 0, %s117
    %s135 = sphi 0, %s135
    %s137 = sphi 0, %s135
    %s138 = sphi 0, %s137
    %s152 = sphi 0, %s138
    %s158 = sphi 0, %s160
    %s161 = sphi 0, %s158
    %s162 = sphi 0, %s161
    %s178 = sphi 0, %s162
  $region4: #{basic_block_rn12.11} parent=0 // loop_header_branch
    %15 = sbr.rel (%p13) target = $region8
  $region5: #{basic_block_rn12.11} parent=0 // loop_body
    %s17 = ssub.s32 %s12, 1
    %s18 = ssub.s32 %s12, 2
    %s19 = sadd.s32 %s12, 1
    %s20 = ssub.s32 %s12, %s19
    %p21 = scmp.eq.s32.totalorder %s20, 0
    %s23 = sadd.s32 %s22, 1
    %s24 = scalar_select %p21, %s22, %s23
    %p27 = pneg %p21
    %p28 = scmp.eq.s32.totalorder %s12, 1
    %p29 = por %p27, %p28
    %p30 = scmp.ne.s32.totalorder %s22, %s25
    %p31 = scmp.eq.s32.totalorder %s12, 0
    %p32 = por %p30, %p31
    %p33 = scmp.ne.s32.totalorder %s22, %s25
    %p34 = scmp.eq.s32.totalorder %s17, 1
    %p35 = por %p33, %p34
    %p36 = scmp.ne.s32.totalorder %s25, %s26
    %p37 = scmp.eq.s32.totalorder %s17, 0
    %p38 = por %p36, %p37
    %p39 = scmp.ne.s32.totalorder %s25, %s26
    %p40 = scmp.eq.s32.totalorder %s18, 1
    %p41 = por %p39, %p40
    %p43 = scmp.ne.s32.totalorder %s26, %s42
    %p44 = scmp.eq.s32.totalorder %s18, 0
    %p45 = por %p43, %p44
    %s47 = sadd.s32 %s46, 1
    %p50 = scmp.eq.s32.totalorder %s12, 1
    %p51 = scmp.ne.s32.totalorder %s46, %s48
    %p52 = scmp.eq.s32.totalorder %s12, 0
    %p53 = por %p51, %p52
    %p54 = scmp.ne.s32.totalorder %s46, %s48
    %p55 = scmp.eq.s32.totalorder %s17, 1
    %p56 = por %p54, %p55
    %p57 = scmp.ne.s32.totalorder %s48, %s49
    %p58 = scmp.eq.s32.totalorder %s17, 0
    %p59 = por %p57, %p58
    %p60 = scmp.ne.s32.totalorder %s48, %s49
    %p61 = scmp.eq.s32.totalorder %s18, 1
    %p62 = por %p60, %p61
    %p64 = scmp.ne.s32.totalorder %s49, %s63
    %p65 = scmp.eq.s32.totalorder %s18, 0
    %p66 = por %p64, %p65
    %s68 = sadd.s32 %s67, 1
    %p71 = scmp.eq.s32.totalorder %s12, 1
    %p72 = scmp.ne.s32.totalorder %s67, %s69
    %p73 = scmp.eq.s32.totalorder %s12, 0
    %p74 = por %p72, %p73
    %p75 = scmp.ne.s32.totalorder %s67, %s69
    %p76 = scmp.eq.s32.totalorder %s17, 1
    %p77 = por %p75, %p76
    %p78 = scmp.ne.s32.totalorder %s69, %s70
    %p79 = scmp.eq.s32.totalorder %s17, 0
    %p80 = por %p78, %p79
    %p81 = scmp.ne.s32.totalorder %s69, %s70
    %p82 = scmp.eq.s32.totalorder %s18, 1
    %p83 = por %p81, %p82
    %p85 = scmp.ne.s32.totalorder %s70, %s84
    %p86 = scmp.eq.s32.totalorder %s18, 0
    %p87 = por %p85, %p86
    %s88 = ssub.s32 %s12, %s19
    %p89 = scmp.eq.s32.totalorder %s88, 0
    %s91 = sadd.s32 %s90, 1
    %s92 = scalar_select %p89, %s90, %s91
    %p95 = pneg %p89
    %p96 = scmp.eq.s32.totalorder %s12, 1
    %p97 = por %p95, %p96
    %p98 = scmp.ne.s32.totalorder %s90, %s93
    %p99 = scmp.eq.s32.totalorder %s12, 0
    %p100 = por %p98, %p99
    %p101 = scmp.ne.s32.totalorder %s90, %s93
    %p102 = scmp.eq.s32.totalorder %s17, 1
    %p103 = por %p101, %p102
    %p104 = scmp.ne.s32.totalorder %s93, %s94
    %p105 = scmp.eq.s32.totalorder %s17, 0
    %p106 = por %p104, %p105
    %p107 = scmp.ne.s32.totalorder %s93, %s94
    %p108 = scmp.eq.s32.totalorder %s18, 1
    %p109 = por %p107, %p108
    %p111 = scmp.ne.s32.totalorder %s94, %s110
    %p112 = scmp.eq.s32.totalorder %s18, 0
    %p113 = por %p111, %p112
    %s115 = sadd.s32 %s114, 1
    %p118 = scmp.eq.s32.totalorder %s12, 1
    %p119 = scmp.ne.s32.totalorder %s114, %s116
    %p120 = scmp.eq.s32.totalorder %s12, 0
    %p121 = por %p119, %p120
    %p122 = scmp.ne.s32.totalorder %s114, %s116
    %p123 = scmp.eq.s32.totalorder %s17, 1
    %p124 = por %p122, %p123
    %p125 = scmp.ne.s32.totalorder %s116, %s117
    %p126 = scmp.eq.s32.totalorder %s17, 0
    %p127 = por %p125, %p126
    %p128 = scmp.ne.s32.totalorder %s116, %s117
    %p129 = scmp.eq.s32.totalorder %s18, 1
    %p130 = por %p128, %p129
    %p132 = scmp.ne.s32.totalorder %s117, %s131
    %p133 = scmp.eq.s32.totalorder %s18, 0
    %p134 = por %p132, %p133
    %s136 = sadd.s32 %s135, 1
    %p139 = scmp.eq.s32.totalorder %s12, 1
    %p140 = scmp.ne.s32.totalorder %s135, %s137
    %p141 = scmp.eq.s32.totalorder %s12, 0
    %p142 = por %p140, %p141
    %p143 = scmp.ne.s32.totalorder %s135, %s137
    %p144 = scmp.eq.s32.totalorder %s17, 1
    %p145 = por %p143, %p144
    %p146 = scmp.ne.s32.totalorder %s137, %s138
    %p147 = scmp.eq.s32.totalorder %s17, 0
    %p148 = por %p146, %p147
    %p149 = scmp.ne.s32.totalorder %s137, %s138
    %p150 = scmp.eq.s32.totalorder %s18, 1
    %p151 = por %p149, %p150
    %p153 = scmp.ne.s32.totalorder %s138, %s152
    %p154 = scmp.eq.s32.totalorder %s18, 0
    %p155 = por %p153, %p154
    %s156 = ssub.s32 %s12, %s19
    %p157 = scmp.eq.s32.totalorder %s156, 0
    %s159 = sadd.s32 %s158, 1
    %s160 = scalar_select %p157, %s158, %s159
    %p163 = pneg %p157
    %p164 = scmp.eq.s32.totalorder %s12, 1
    %p165 = por %p163, %p164
    %p166 = scmp.ne.s32.totalorder %s158, %s161
    %p167 = scmp.eq.s32.totalorder %s12, 0
    %p168 = por %p166, %p167
    %p169 = scmp.ne.s32.totalorder %s158, %s161
    %p170 = scmp.eq.s32.totalorder %s17, 1
    %p171 = por %p169, %p170
    %p172 = scmp.ne.s32.totalorder %s161, %s162
    %p173 = scmp.eq.s32.totalorder %s17, 0
    %p174 = por %p172, %p173
    %p175 = scmp.ne.s32.totalorder %s161, %s162
    %p176 = scmp.eq.s32.totalorder %s18, 1
    %p177 = por %p175, %p176
    %p179 = scmp.ne.s32.totalorder %s162, %s178
    %p180 = scmp.eq.s32.totalorder %s18, 0
    %p181 = por %p179, %p180
    %p182 = scmp.le.s32.totalorder 1, %s12
    %p183 = scmp.lt.s32.totalorder %s12, 3
    %p184 = pnand %p182, %p183
    %p185 = pneg %p184
    // Predicated region
    $region9: #{basic_block_rn12.11} parent=5 // pred_check
      _
    $region10: #{basic_block_rn12.11} parent=5 // pred_check_branch
      %187 = sbr.rel (%p184) target = $region12
    $region11: #{basic_block_rn12.11} parent=5 // pred_region
      %s188 = ssub.s32 %s12, 1
      // Predicated region
      $region13: #{basic_block_rn12.11} parent=11 // pred_check
        %p189 = pneg %p59
      $region14: #{basic_block_rn12.11} parent=11 // pred_check_branch
        %191 = sbr.rel (%p189) target = $region16
      $region15: #{basic_block_rn12.11} parent=11 // pred_region
        _
      $region16: #{basic_block_rn12.11} parent=11 // pred_fallthru
        _
      // Predicated region
      $region17: #{basic_block_rn12.11} parent=11 // pred_check
        %p192 = pneg %p80
      $region18: #{basic_block_rn12.11} parent=11 // pred_check_branch
        %194 = sbr.rel (%p192) target = $region20
      $region19: #{basic_block_rn12.11} parent=11 // pred_region
        _
      $region20: #{basic_block_rn12.11} parent=11 // pred_fallthru
        _
      // Predicated region
      $region21: #{basic_block_rn12.11} parent=11 // pred_check
        %p195 = pneg %p127
      $region22: #{basic_block_rn12.11} parent=11 // pred_check_branch
        %197 = sbr.rel (%p195) target = $region24
      $region23: #{basic_block_rn12.11} parent=11 // pred_region
        _
      $region24: #{basic_block_rn12.11} parent=11 // pred_fallthru
        _
      // Predicated region
      $region25: #{basic_block_rn12.11} parent=11 // pred_check
        %p198 = pneg %p148
      $region26: #{basic_block_rn12.11} parent=11 // pred_check_branch
        %200 = sbr.rel (%p198) target = $region28
      $region27: #{basic_block_rn12.11} parent=11 // pred_region
        _
      $region28: #{basic_block_rn12.11} parent=11 // pred_fallthru
        _
    $region12: #{basic_block_rn12.11} parent=5 // pred_fallthru
      _
    %p201 = scmp.lt.s32.totalorder %s12, 2
    // Predicated region
    $region29: #{basic_block_rn12.11} parent=5 // pred_check
      %p202 = pneg %p201
    $region30: #{basic_block_rn12.11} parent=5 // pred_check_branch
      %204 = sbr.rel (%p202) target = $region32
    $region31: #{basic_block_rn12.11} parent=5 // pred_region
      // Predicated region
      $region33: #{basic_block_rn12.11} parent=31 // pred_check
        %p205 = pneg %p32
      $region34: #{basic_block_rn12.11} parent=31 // pred_check_branch
        %207 = sbr.rel (%p205) target = $region36
      $region35: #{basic_block_rn12.11} parent=31 // pred_region
        %s208 = smul.u32 32, %s12
        %p209 = scmp.lt.s32.totalorder %s208, 63
        %s210 = scalar_select %p209, %s208, 63
        %s211 = smul.addr %s210, 4
        %s212 = scalar_lea.vmem %s0, %s211
        %s213 = smul.u32 32, %s12
      $region36: #{basic_block_rn12.11} parent=31 // pred_fallthru
        _
      // Predicated region
      $region37: #{basic_block_rn12.11} parent=31 // pred_check
        %p214 = pneg %p100
      $region38: #{basic_block_rn12.11} parent=31 // pred_check_branch
        %216 = sbr.rel (%p214) target = $region40
      $region39: #{basic_block_rn12.11} parent=31 // pred_region
        %s217 = smul.u32 32, %s12
        %p218 = scmp.lt.s32.totalorder %s217, 63
        %s219 = scalar_select %p218, %s217, 63
        %s220 = smul.addr %s219, 4
        %s221 = scalar_lea.vmem %s3, %s220
        %s222 = smul.u32 32, %s12
      $region40: #{basic_block_rn12.11} parent=31 // pred_fallthru
        _
    $region32: #{basic_block_rn12.11} parent=5 // pred_fallthru
      _
    %p223 = scmp.le.s32.totalorder 1, %s12
    %p224 = scmp.lt.s32.totalorder %s12, 3
    %p225 = pnand %p223, %p224
    %p226 = pneg %p225
    // Predicated region
    $region41: #{basic_block_rn12.11} parent=5 // pred_check
      _
    $region42: #{basic_block_rn12.11} parent=5 // pred_check_branch
      %228 = sbr.rel (%p225) target = $region44
    $region43: #{basic_block_rn12.11} parent=5 // pred_region
      %s229 = ssub.s32 %s12, 1
      %s230 = smul.u32 32, %s17
      %p231 = scmp.lt.s32.totalorder %s230, 63
      %s232 = scalar_select %p231, %s230, 63
      %s233 = smul.addr %s232, 4
      %s234 = scalar_lea.vmem %s0, %s233
      %p235 = pneg %p38
      %p236 = pneg %p35
      %p237 = pneg %p59
      %p238 = pneg %p56
      %p239 = pneg %p80
      %p240 = pneg %p77
      %s241 = smul.u32 32, %s17
      %p242 = scmp.lt.s32.totalorder %s241, 63
      %s243 = scalar_select %p242, %s241, 63
      %s244 = smul.addr %s243, 4
      %s245 = scalar_lea.vmem %s3, %s244
      %p246 = pneg %p106
      %p247 = pneg %p103
      %p248 = pneg %p127
      %p249 = pneg %p124
      %p250 = pneg %p148
      %p251 = pneg %p145
      %p252 = pneg %p174
      %p253 = pneg %p171
      %s254 = smul.u32 32, %s17
      %p255 = scmp.lt.s32.totalorder %s254, 63
      %s256 = scalar_select %p255, %s254, 63
      %s257 = smul.addr %s256, 8
      %s258 = scalar_lea.vmem %s6, %s257
      %s259 = smul.u32 32, %s17
      %p260 = scmp.lt.s32.totalorder %s259, 63
      %s261 = scalar_select %p260, %s259, 63
      %s262 = smul.addr %s261, 4
      %s263 = scalar_lea.vmem %s0, %s262
      %s264 = smul.u32 32, %s17
      %s265 = smul.u32 32, %s17
      %p266 = scmp.lt.s32.totalorder %s265, 63
      %s267 = scalar_select %p266, %s265, 63
      %s268 = smul.addr %s267, 4
      %s269 = scalar_lea.vmem %s3, %s268
      %s270 = smul.u32 32, %s17
      %s271 = smul.u32 32, %s17
      %p272 = scmp.lt.s32.totalorder %s271, 63
      %s273 = scalar_select %p272, %s271, 63
      %s274 = smul.addr %s273, 8
      %s275 = scalar_lea.vmem %s6, %s274
      %s276 = smul.u32 32, %s17
      %v277 = vld [vmem:[%s263] sm:$0xf]
      %v278 = vld [vmem:[%s263 + $0x4] sm:$0xf]
      %v279 = vld [vmem:[%s263 + $0x8] sm:$0xf]
      %v280 = vld [vmem:[%s263 + $0xc] sm:$0xf]
      %v281 = vld [vmem:[%s263 + $0x10] sm:$0xf]
      %v282 = vld [vmem:[%s263 + $0x14] sm:$0xf]
      %v283 = vld [vmem:[%s263 + $0x18] sm:$0xf]
      %v284 = vld [vmem:[%s263 + $0x1c] sm:$0xf]
      %v285 = vld [vmem:[%s263 + $0x20] sm:$0xf]
      %v286 = vld [vmem:[%s263 + $0x24] sm:$0xf]
      %v287 = vld [vmem:[%s263 + $0x28] sm:$0xf]
      %v288 = vld [vmem:[%s263 + $0x2c] sm:$0xf]
      %v289 = vld [vmem:[%s263 + $0x30] sm:$0xf]
      %v290 = vld [vmem:[%s263 + $0x34] sm:$0xf]
      %v291 = vld [vmem:[%s263 + $0x38] sm:$0xf]
      %v292 = vld [vmem:[%s263 + $0x3c] sm:$0xf]
      %v293 = vld [vmem:[%s263 + $0x40] sm:$0xf]
      %v294 = vld [vmem:[%s263 + $0x44] sm:$0xf]
      %v295 = vld [vmem:[%s263 + $0x48] sm:$0xf]
      %v296 = vld [vmem:[%s263 + $0x4c] sm:$0xf]
      %v297 = vld [vmem:[%s263 + $0x50] sm:$0xf]
      %v298 = vld [vmem:[%s263 + $0x54] sm:$0xf]
      %v299 = vld [vmem:[%s263 + $0x58] sm:$0xf]
      %v300 = vld [vmem:[%s263 + $0x5c] sm:$0xf]
      %v301 = vld [vmem:[%s263 + $0x60] sm:$0xf]
      %v302 = vld [vmem:[%s263 + $0x64] sm:$0xf]
      %v303 = vld [vmem:[%s263 + $0x68] sm:$0xf]
      %v304 = vld [vmem:[%s263 + $0x6c] sm:$0xf]
      %v305 = vld [vmem:[%s263 + $0x70] sm:$0xf]
      %v306 = vld [vmem:[%s263 + $0x74] sm:$0xf]
      %v307 = vld [vmem:[%s263 + $0x78] sm:$0xf]
      %v308 = vld [vmem:[%s263 + $0x7c] sm:$0xf]
      %v309 = vld [vmem:[%s1] sm:$0x1]
      %v310 = vunpack.c.l.bf16 %v277
      %v311 = vunpack.c.l.bf16 %v278
      %v312 = vunpack.c.l.bf16 %v279
      %v313 = vunpack.c.l.bf16 %v280
      %v314 = vunpack.c.l.bf16 %v281
      %v315 = vunpack.c.l.bf16 %v282
      %v316 = vunpack.c.l.bf16 %v283
      %v317 = vunpack.c.l.bf16 %v284
      %v318 = vunpack.c.l.bf16 %v285
      %v319 = vunpack.c.l.bf16 %v286
      %v320 = vunpack.c.l.bf16 %v287
      %v321 = vunpack.c.l.bf16 %v288
      %v322 = vunpack.c.l.bf16 %v289
      %v323 = vunpack.c.l.bf16 %v290
      %v324 = vunpack.c.l.bf16 %v291
      %v325 = vunpack.c.l.bf16 %v292
      %v326 = vunpack.c.l.bf16 %v293
      %v327 = vunpack.c.l.bf16 %v294
      %v328 = vunpack.c.l.bf16 %v295
      %v329 = vunpack.c.l.bf16 %v296
      %v330 = vunpack.c.l.bf16 %v297
      %v331 = vunpack.c.l.bf16 %v298
      %v332 = vunpack.c.l.bf16 %v299
      %v333 = vunpack.c.l.bf16 %v300
      %v334 = vunpack.c.l.bf16 %v301
      %v335 = vunpack.c.l.bf16 %v302
      %v336 = vunpack.c.l.bf16 %v303
      %v337 = vunpack.c.l.bf16 %v304
      %v338 = vunpack.c.l.bf16 %v305
      %v339 = vunpack.c.l.bf16 %v306
      %v340 = vunpack.c.l.bf16 %v307
      %v341 = vunpack.c.l.bf16 %v308
      %v343 = vlaneseq
      %v344 = vshrl.u32 %v343, 7
      %v345 = vsub.s32 0, %v344
      %v346 = vrot.slane %v309, %v345
      %v348 = vmul.f32 %v310, %v346
      %v349 = vmul.f32 %v311, %v346
      %v350 = vmul.f32 %v312, %v346
      %v351 = vmul.f32 %v313, %v346
      %v352 = vmul.f32 %v314, %v346
      %v353 = vmul.f32 %v315, %v346
      %v354 = vmul.f32 %v316, %v346
      %v355 = vmul.f32 %v317, %v346
      %v356 = vmul.f32 %v318, %v346
      %v357 = vmul.f32 %v319, %v346
      %v358 = vmul.f32 %v320, %v346
      %v359 = vmul.f32 %v321, %v346
      %v360 = vmul.f32 %v322, %v346
      %v361 = vmul.f32 %v323, %v346
      %v362 = vmul.f32 %v324, %v346
      %v363 = vmul.f32 %v325, %v346
      %v364 = vmul.f32 %v326, %v346
      %v365 = vmul.f32 %v327, %v346
      %v366 = vmul.f32 %v328, %v346
      %v367 = vmul.f32 %v329, %v346
      %v368 = vmul.f32 %v330, %v346
      %v369 = vmul.f32 %v331, %v346
      %v370 = vmul.f32 %v332, %v346
      %v371 = vmul.f32 %v333, %v346
      %v372 = vmul.f32 %v334, %v346
      %v373 = vmul.f32 %v335, %v346
      %v374 = vmul.f32 %v336, %v346
      %v375 = vmul.f32 %v337, %v346
      %v376 = vmul.f32 %v338, %v346
      %v377 = vmul.f32 %v339, %v346
      %v378 = vmul.f32 %v340, %v346
      %v379 = vmul.f32 %v341, %v346
      %v380 = vld [vmem:[%s2] sm:$0x1]
      %v382 = vlaneseq
      %v383 = vshrl.u32 %v382, 7
      %v384 = vsub.s32 0, %v383
      %v385 = vrot.slane %v380, %v384
      %v387 = vadd.f32 %v348, %v385
      %v388 = vadd.f32 %v349, %v385
      %v389 = vadd.f32 %v350, %v385
      %v390 = vadd.f32 %v351, %v385
      %v391 = vadd.f32 %v352, %v385
      %v392 = vadd.f32 %v353, %v385
      %v393 = vadd.f32 %v354, %v385
      %v394 = vadd.f32 %v355, %v385
      %v395 = vadd.f32 %v356, %v385
      %v396 = vadd.f32 %v357, %v385
      %v397 = vadd.f32 %v358, %v385
      %v398 = vadd.f32 %v359, %v385
      %v399 = vadd.f32 %v360, %v385
      %v400 = vadd.f32 %v361, %v385
      %v401 = vadd.f32 %v362, %v385
      %v402 = vadd.f32 %v363, %v385
      %v403 = vadd.f32 %v364, %v385
      %v404 = vadd.f32 %v365, %v385
      %v405 = vadd.f32 %v366, %v385
      %v406 = vadd.f32 %v367, %v385
      %v407 = vadd.f32 %v368, %v385
      %v408 = vadd.f32 %v369, %v385
      %v409 = vadd.f32 %v370, %v385
      %v410 = vadd.f32 %v371, %v385
      %v411 = vadd.f32 %v372, %v385
      %v412 = vadd.f32 %v373, %v385
      %v413 = vadd.f32 %v374, %v385
      %v414 = vadd.f32 %v375, %v385
      %v415 = vadd.f32 %v376, %v385
      %v416 = vadd.f32 %v377, %v385
      %v417 = vadd.f32 %v378, %v385
      %v418 = vadd.f32 %v379, %v385
      %v419 = vld [vmem:[%s269] sm:$0xf]
      %v420 = vld [vmem:[%s269 + $0x4] sm:$0xf]
      %v421 = vld [vmem:[%s269 + $0x8] sm:$0xf]
      %v422 = vld [vmem:[%s269 + $0xc] sm:$0xf]
      %v423 = vld [vmem:[%s269 + $0x10] sm:$0xf]
      %v424 = vld [vmem:[%s269 + $0x14] sm:$0xf]
      %v425 = vld [vmem:[%s269 + $0x18] sm:$0xf]
      %v426 = vld [vmem:[%s269 + $0x1c] sm:$0xf]
      %v427 = vld [vmem:[%s269 + $0x20] sm:$0xf]
      %v428 = vld [vmem:[%s269 + $0x24] sm:$0xf]
      %v429 = vld [vmem:[%s269 + $0x28] sm:$0xf]
      %v430 = vld [vmem:[%s269 + $0x2c] sm:$0xf]
      %v431 = vld [vmem:[%s269 + $0x30] sm:$0xf]
      %v432 = vld [vmem:[%s269 + $0x34] sm:$0xf]
      %v433 = vld [vmem:[%s269 + $0x38] sm:$0xf]
      %v434 = vld [vmem:[%s269 + $0x3c] sm:$0xf]
      %v435 = vld [vmem:[%s269 + $0x40] sm:$0xf]
      %v436 = vld [vmem:[%s269 + $0x44] sm:$0xf]
      %v437 = vld [vmem:[%s269 + $0x48] sm:$0xf]
      %v438 = vld [vmem:[%s269 + $0x4c] sm:$0xf]
      %v439 = vld [vmem:[%s269 + $0x50] sm:$0xf]
      %v440 = vld [vmem:[%s269 + $0x54] sm:$0xf]
      %v441 = vld [vmem:[%s269 + $0x58] sm:$0xf]
      %v442 = vld [vmem:[%s269 + $0x5c] sm:$0xf]
      %v443 = vld [vmem:[%s269 + $0x60] sm:$0xf]
      %v444 = vld [vmem:[%s269 + $0x64] sm:$0xf]
      %v445 = vld [vmem:[%s269 + $0x68] sm:$0xf]
      %v446 = vld [vmem:[%s269 + $0x6c] sm:$0xf]
      %v447 = vld [vmem:[%s269 + $0x70] sm:$0xf]
      %v448 = vld [vmem:[%s269 + $0x74] sm:$0xf]
      %v449 = vld [vmem:[%s269 + $0x78] sm:$0xf]
      %v450 = vld [vmem:[%s269 + $0x7c] sm:$0xf]
      %v451 = vld [vmem:[%s4] sm:$0x1]
      %v452 = vunpack.c.l.bf16 %v419
      %v453 = vunpack.c.l.bf16 %v420
      %v454 = vunpack.c.l.bf16 %v421
      %v455 = vunpack.c.l.bf16 %v422
      %v456 = vunpack.c.l.bf16 %v423
      %v457 = vunpack.c.l.bf16 %v424
      %v458 = vunpack.c.l.bf16 %v425
      %v459 = vunpack.c.l.bf16 %v426
      %v460 = vunpack.c.l.bf16 %v427
      %v461 = vunpack.c.l.bf16 %v428
      %v462 = vunpack.c.l.bf16 %v429
      %v463 = vunpack.c.l.bf16 %v430
      %v464 = vunpack.c.l.bf16 %v431
      %v465 = vunpack.c.l.bf16 %v432
      %v466 = vunpack.c.l.bf16 %v433
      %v467 = vunpack.c.l.bf16 %v434
      %v468 = vunpack.c.l.bf16 %v435
      %v469 = vunpack.c.l.bf16 %v436
      %v470 = vunpack.c.l.bf16 %v437
      %v471 = vunpack.c.l.bf16 %v438
      %v472 = vunpack.c.l.bf16 %v439
      %v473 = vunpack.c.l.bf16 %v440
      %v474 = vunpack.c.l.bf16 %v441
      %v475 = vunpack.c.l.bf16 %v442
      %v476 = vunpack.c.l.bf16 %v443
      %v477 = vunpack.c.l.bf16 %v444
      %v478 = vunpack.c.l.bf16 %v445
      %v479 = vunpack.c.l.bf16 %v446
      %v480 = vunpack.c.l.bf16 %v447
      %v481 = vunpack.c.l.bf16 %v448
      %v482 = vunpack.c.l.bf16 %v449
      %v483 = vunpack.c.l.bf16 %v450
      %v485 = vlaneseq
      %v486 = vshrl.u32 %v485, 7
      %v487 = vsub.s32 0, %v486
      %v488 = vrot.slane %v451, %v487
      %v490 = vmul.f32 %v452, %v488
      %v491 = vmul.f32 %v453, %v488
      %v492 = vmul.f32 %v454, %v488
      %v493 = vmul.f32 %v455, %v488
      %v494 = vmul.f32 %v456, %v488
      %v495 = vmul.f32 %v457, %v488
      %v496 = vmul.f32 %v458, %v488
      %v497 = vmul.f32 %v459, %v488
      %v498 = vmul.f32 %v460, %v488
      %v499 = vmul.f32 %v461, %v488
      %v500 = vmul.f32 %v462, %v488
      %v501 = vmul.f32 %v463, %v488
      %v502 = vmul.f32 %v464, %v488
      %v503 = vmul.f32 %v465, %v488
      %v504 = vmul.f32 %v466, %v488
      %v505 = vmul.f32 %v467, %v488
      %v506 = vmul.f32 %v468, %v488
      %v507 = vmul.f32 %v469, %v488
      %v508 = vmul.f32 %v470, %v488
      %v509 = vmul.f32 %v471, %v488
      %v510 = vmul.f32 %v472, %v488
      %v511 = vmul.f32 %v473, %v488
      %v512 = vmul.f32 %v474, %v488
      %v513 = vmul.f32 %v475, %v488
      %v514 = vmul.f32 %v476, %v488
      %v515 = vmul.f32 %v477, %v488
      %v516 = vmul.f32 %v478, %v488
      %v517 = vmul.f32 %v479, %v488
      %v518 = vmul.f32 %v480, %v488
      %v519 = vmul.f32 %v481, %v488
      %v520 = vmul.f32 %v482, %v488
      %v521 = vmul.f32 %v483, %v488
      %v522 = vld [vmem:[%s5] sm:$0x1]
      %v524 = vlaneseq
      %v525 = vshrl.u32 %v524, 7
      %v526 = vsub.s32 0, %v525
      %v527 = vrot.slane %v522, %v526
      %v529 = vadd.f32 %v490, %v527
      %v530 = vadd.f32 %v491, %v527
      %v531 = vadd.f32 %v492, %v527
      %v532 = vadd.f32 %v493, %v527
      %v533 = vadd.f32 %v494, %v527
      %v534 = vadd.f32 %v495, %v527
      %v535 = vadd.f32 %v496, %v527
      %v536 = vadd.f32 %v497, %v527
      %v537 = vadd.f32 %v498, %v527
      %v538 = vadd.f32 %v499, %v527
      %v539 = vadd.f32 %v500, %v527
      %v540 = vadd.f32 %v501, %v527
      %v541 = vadd.f32 %v502, %v527
      %v542 = vadd.f32 %v503, %v527
      %v543 = vadd.f32 %v504, %v527
      %v544 = vadd.f32 %v505, %v527
      %v545 = vadd.f32 %v506, %v527
      %v546 = vadd.f32 %v507, %v527
      %v547 = vadd.f32 %v508, %v527
      %v548 = vadd.f32 %v509, %v527
      %v549 = vadd.f32 %v510, %v527
      %v550 = vadd.f32 %v511, %v527
      %v551 = vadd.f32 %v512, %v527
      %v552 = vadd.f32 %v513, %v527
      %v553 = vadd.f32 %v514, %v527
      %v554 = vadd.f32 %v515, %v527
      %v555 = vadd.f32 %v516, %v527
      %v556 = vadd.f32 %v517, %v527
      %v557 = vadd.f32 %v518, %v527
      %v558 = vadd.f32 %v519, %v527
      %v559 = vadd.f32 %v520, %v527
      %v560 = vadd.f32 %v521, %v527
      %v561 = vadd.f32 %v387, %v529
      %v562 = vadd.f32 %v388, %v530
      %v563 = vadd.f32 %v389, %v531
      %v564 = vadd.f32 %v390, %v532
      %v565 = vadd.f32 %v391, %v533
      %v566 = vadd.f32 %v392, %v534
      %v567 = vadd.f32 %v393, %v535
      %v568 = vadd.f32 %v394, %v536
      %v569 = vadd.f32 %v395, %v537
      %v570 = vadd.f32 %v396, %v538
      %v571 = vadd.f32 %v397, %v539
      %v572 = vadd.f32 %v398, %v540
      %v573 = vadd.f32 %v399, %v541
      %v574 = vadd.f32 %v400, %v542
      %v575 = vadd.f32 %v401, %v543
      %v576 = vadd.f32 %v402, %v544
      %v577 = vadd.f32 %v403, %v545
      %v578 = vadd.f32 %v404, %v546
      %v579 = vadd.f32 %v405, %v547
      %v580 = vadd.f32 %v406, %v548
      %v581 = vadd.f32 %v407, %v549
      %v582 = vadd.f32 %v408, %v550
      %v583 = vadd.f32 %v409, %v551
      %v584 = vadd.f32 %v410, %v552
      %v585 = vadd.f32 %v411, %v553
      %v586 = vadd.f32 %v412, %v554
      %v587 = vadd.f32 %v413, %v555
      %v588 = vadd.f32 %v414, %v556
      %v589 = vadd.f32 %v415, %v557
      %v590 = vadd.f32 %v416, %v558
      %v591 = vadd.f32 %v417, %v559
      %v592 = vadd.f32 %v418, %v560
      %vm593 = vcmp.gt.f32.partialorder %v561, 0.0
      %vm594 = vcmp.gt.f32.partialorder %v562, 0.0
      %vm595 = vcmp.gt.f32.partialorder %v563, 0.0
      %vm596 = vcmp.gt.f32.partialorder %v564, 0.0
      %vm597 = vcmp.gt.f32.partialorder %v565, 0.0
      %vm598 = vcmp.gt.f32.partialorder %v566, 0.0
      %vm599 = vcmp.gt.f32.partialorder %v567, 0.0
      %vm600 = vcmp.gt.f32.partialorder %v568, 0.0
      %vm601 = vcmp.gt.f32.partialorder %v569, 0.0
      %vm602 = vcmp.gt.f32.partialorder %v570, 0.0
      %vm603 = vcmp.gt.f32.partialorder %v571, 0.0
      %vm604 = vcmp.gt.f32.partialorder %v572, 0.0
      %vm605 = vcmp.gt.f32.partialorder %v573, 0.0
      %vm606 = vcmp.gt.f32.partialorder %v574, 0.0
      %vm607 = vcmp.gt.f32.partialorder %v575, 0.0
      %vm608 = vcmp.gt.f32.partialorder %v576, 0.0
      %vm609 = vcmp.gt.f32.partialorder %v577, 0.0
      %vm610 = vcmp.gt.f32.partialorder %v578, 0.0
      %vm611 = vcmp.gt.f32.partialorder %v579, 0.0
      %vm612 = vcmp.gt.f32.partialorder %v580, 0.0
      %vm613 = vcmp.gt.f32.partialorder %v581, 0.0
      %vm614 = vcmp.gt.f32.partialorder %v582, 0.0
      %vm615 = vcmp.gt.f32.partialorder %v583, 0.0
      %vm616 = vcmp.gt.f32.partialorder %v584, 0.0
      %vm617 = vcmp.gt.f32.partialorder %v585, 0.0
      %vm618 = vcmp.gt.f32.partialorder %v586, 0.0
      %vm619 = vcmp.gt.f32.partialorder %v587, 0.0
      %vm620 = vcmp.gt.f32.partialorder %v588, 0.0
      %vm621 = vcmp.gt.f32.partialorder %v589, 0.0
      %vm622 = vcmp.gt.f32.partialorder %v590, 0.0
      %vm623 = vcmp.gt.f32.partialorder %v591, 0.0
      %vm624 = vcmp.gt.f32.partialorder %v592, 0.0
      %v625 = vmul.f32 %v561, 0.1
      %v626 = vmul.f32 %v562, 0.1
      %v627 = vmul.f32 %v563, 0.1
      %v628 = vmul.f32 %v564, 0.1
      %v629 = vmul.f32 %v565, 0.1
      %v630 = vmul.f32 %v566, 0.1
      %v631 = vmul.f32 %v567, 0.1
      %v632 = vmul.f32 %v568, 0.1
      %v633 = vmul.f32 %v569, 0.1
      %v634 = vmul.f32 %v570, 0.1
      %v635 = vmul.f32 %v571, 0.1
      %v636 = vmul.f32 %v572, 0.1
      %v637 = vmul.f32 %v573, 0.1
      %v638 = vmul.f32 %v574, 0.1
      %v639 = vmul.f32 %v575, 0.1
      %v640 = vmul.f32 %v576, 0.1
      %v641 = vmul.f32 %v577, 0.1
      %v642 = vmul.f32 %v578, 0.1
      %v643 = vmul.f32 %v579, 0.1
      %v644 = vmul.f32 %v580, 0.1
      %v645 = vmul.f32 %v581, 0.1
      %v646 = vmul.f32 %v582, 0.1
      %v647 = vmul.f32 %v583, 0.1
      %v648 = vmul.f32 %v584, 0.1
      %v649 = vmul.f32 %v585, 0.1
      %v650 = vmul.f32 %v586, 0.1
      %v651 = vmul.f32 %v587, 0.1
      %v652 = vmul.f32 %v588, 0.1
      %v653 = vmul.f32 %v589, 0.1
      %v654 = vmul.f32 %v590, 0.1
      %v655 = vmul.f32 %v591, 0.1
      %v656 = vmul.f32 %v592, 0.1
      %v657 = vsel %vm593, %v561, %v625
      %v658 = vsel %vm594, %v562, %v626
      %v659 = vsel %vm595, %v563, %v627
      %v660 = vsel %vm596, %v564, %v628
      %v661 = vsel %vm597, %v565, %v629
      %v662 = vsel %vm598, %v566, %v630
      %v663 = vsel %vm599, %v567, %v631
      %v664 = vsel %vm600, %v568, %v632
      %v665 = vsel %vm601, %v569, %v633
      %v666 = vsel %vm602, %v570, %v634
      %v667 = vsel %vm603, %v571, %v635
      %v668 = vsel %vm604, %v572, %v636
      %v669 = vsel %vm605, %v573, %v637
      %v670 = vsel %vm606, %v574, %v638
      %v671 = vsel %vm607, %v575, %v639
      %v672 = vsel %vm608, %v576, %v640
      %v673 = vsel %vm609, %v577, %v641
      %v674 = vsel %vm610, %v578, %v642
      %v675 = vsel %vm611, %v579, %v643
      %v676 = vsel %vm612, %v580, %v644
      %v677 = vsel %vm613, %v581, %v645
      %v678 = vsel %vm614, %v582, %v646
      %v679 = vsel %vm615, %v583, %v647
      %v680 = vsel %vm616, %v584, %v648
      %v681 = vsel %vm617, %v585, %v649
      %v682 = vsel %vm618, %v586, %v650
      %v683 = vsel %vm619, %v587, %v651
      %v684 = vsel %vm620, %v588, %v652
      %v685 = vsel %vm621, %v589, %v653
      %v686 = vsel %vm622, %v590, %v654
      %v687 = vsel %vm623, %v591, %v655
      %v688 = vsel %vm624, %v592, %v656
      %689 = vst [vmem:[%s275] sm:$0xff] %v657
      %690 = vst [vmem:[%s275 + $0x8] sm:$0xff] %v658
      %691 = vst [vmem:[%s275 + $0x10] sm:$0xff] %v659
      %692 = vst [vmem:[%s275 + $0x18] sm:$0xff] %v660
      %693 = vst [vmem:[%s275 + $0x20] sm:$0xff] %v661
      %694 = vst [vmem:[%s275 + $0x28] sm:$0xff] %v662
      %695 = vst [vmem:[%s275 + $0x30] sm:$0xff] %v663
      %696 = vst [vmem:[%s275 + $0x38] sm:$0xff] %v664
      %697 = vst [vmem:[%s275 + $0x40] sm:$0xff] %v665
      %698 = vst [vmem:[%s275 + $0x48] sm:$0xff] %v666
      %699 = vst [vmem:[%s275 + $0x50] sm:$0xff] %v667
      %700 = vst [vmem:[%s275 + $0x58] sm:$0xff] %v668
      %701 = vst [vmem:[%s275 + $0x60] sm:$0xff] %v669
      %702 = vst [vmem:[%s275 + $0x68] sm:$0xff] %v670
      %703 = vst [vmem:[%s275 + $0x70] sm:$0xff] %v671
      %704 = vst [vmem:[%s275 + $0x78] sm:$0xff] %v672
      %705 = vst [vmem:[%s275 + $0x80] sm:$0xff] %v673
      %706 = vst [vmem:[%s275 + $0x88] sm:$0xff] %v674
      %707 = vst [vmem:[%s275 + $0x90] sm:$0xff] %v675
      %708 = vst [vmem:[%s275 + $0x98] sm:$0xff] %v676
      %709 = vst [vmem:[%s275 + $0xa0] sm:$0xff] %v677
      %710 = vst [vmem:[%s275 + $0xa8] sm:$0xff] %v678
      %711 = vst [vmem:[%s275 + $0xb0] sm:$0xff] %v679
      %712 = vst [vmem:[%s275 + $0xb8] sm:$0xff] %v680
      %713 = vst [vmem:[%s275 + $0xc0] sm:$0xff] %v681
      %714 = vst [vmem:[%s275 + $0xc8] sm:$0xff] %v682
      %715 = vst [vmem:[%s275 + $0xd0] sm:$0xff] %v683
      %716 = vst [vmem:[%s275 + $0xd8] sm:$0xff] %v684
      %717 = vst [vmem:[%s275 + $0xe0] sm:$0xff] %v685
      %718 = vst [vmem:[%s275 + $0xe8] sm:$0xff] %v686
      %719 = vst [vmem:[%s275 + $0xf0] sm:$0xff] %v687
      %720 = vst [vmem:[%s275 + $0xf8] sm:$0xff] %v688
      %s721 = smul.u32 32, %s17
      %p722 = scmp.lt.s32.totalorder %s721, 63
      %s723 = scalar_select %p722, %s721, 63
      %s724 = smul.addr %s723, 8
      %s725 = scalar_lea.vmem %s6, %s724
      // Predicated region
      $region45: #{basic_block_rn12.11} parent=43 // pred_check
        %p726 = pneg %p171
      $region46: #{basic_block_rn12.11} parent=43 // pred_check_branch
        %728 = sbr.rel (%p726) target = $region48
      $region47: #{basic_block_rn12.11} parent=43 // pred_region
        %s729 = smul.u32 32, %s17
      $region48: #{basic_block_rn12.11} parent=43 // pred_fallthru
        _
    $region44: #{basic_block_rn12.11} parent=5 // pred_fallthru
      _
    %p730 = scmp.le.s32.totalorder 2, %s12
    // Predicated region
    $region49: #{basic_block_rn12.11} parent=5 // pred_check
      %p731 = pneg %p730
    $region50: #{basic_block_rn12.11} parent=5 // pred_check_branch
      %733 = sbr.rel (%p731) target = $region52
    $region51: #{basic_block_rn12.11} parent=5 // pred_region
      %s734 = ssub.s32 %s12, 2
      // Predicated region
      $region53: #{basic_block_rn12.11} parent=51 // pred_check
        %p735 = pneg %p177
      $region54: #{basic_block_rn12.11} parent=51 // pred_check_branch
        %737 = sbr.rel (%p735) target = $region56
      $region55: #{basic_block_rn12.11} parent=51 // pred_region
        %s738 = smul.u32 32, %s18
        %p739 = scmp.lt.s32.totalorder %s738, 63
        %s740 = scalar_select %p739, %s738, 63
        %s741 = smul.addr %s740, 8
        %s742 = scalar_lea.vmem %s6, %s741
      $region56: #{basic_block_rn12.11} parent=51 // pred_fallthru
        _
    $region52: #{basic_block_rn12.11} parent=5 // pred_fallthru
      _
  $region6: #{basic_block_rn12.11} parent=0 // loop_footer
    %s16 = sadd.s32 1, %s12
  $region7: #{basic_block_rn12.11} parent=0 // loop_footer_branch
    %11 = sbr.rel target = $region3
  $region8: #{basic_block_rn12.11} parent=0 // loop_exit
    _

// kernel: basic_block_rn12.8
$region0: #{basic_block_rn12.8}
  #allocation0 [shape = 'u32[]', space=smem, size = 0x4, offset = 0x4, fixed_abs, tag = 'smem constant byte address 0x4 - core index']
  #allocation1 [shape = 'u32[144,128]{1,0:T(1,128)}', space=vmem, size = 0x12000, scoped, tag = 'internal scratch']
  %s0 = inlined_call_operand.vmem [shape: bf16[512,1152], index: 0, kind: input, shape index: {}]
  %s1 = inlined_call_operand.vmem [shape: bf16[1152,128], index: 1, kind: input, shape index: {}]
  %s2 = inlined_call_operand.vmem [shape: bf16[512,128], index: 2, kind: output, shape index: {0}]
  %s3 = inlined_call_operand.vmem [shape: f32[16,128], index: 3, kind: output, shape index: {1}]
  %4 = xla_tuple %s2, %s3
  %s5 = sld [smem:[#allocation0]]
  $region49: #{basic_block_rn12.8} parent=0
    _
  %s7 = ssub.s32 1, %s5
  %s8 = scalar_select 0, %s7, %s5
  loop: start=0, step=1, limit=4
  $region2: #{basic_block_rn12.8} parent=0 // loop_pre_header
    _
  $region3: #{basic_block_rn12.8} parent=0 // loop_header
    %s10 = sphi 0, %s14
    %p11 = scmp.ge.s32.totalorder %s10, 4
    %s20 = sphi 0, %s22
    %s23 = sphi 0, %s20
    %s24 = sphi 0, %s23
    %s40 = sphi 0, %s24
    %s44 = sphi 0, %s44
    %s46 = sphi 0, %s44
    %s47 = sphi 0, %s46
    %s61 = sphi 0, %s47
    %s67 = sphi 0, %s69
    %s70 = sphi 0, %s67
    %s71 = sphi 0, %s70
    %s87 = sphi 0, %s71
    %s93 = sphi 0, %s95
    %s96 = sphi 0, %s93
    %s97 = sphi 0, %s96
    %s113 = sphi 0, %s97
  $region4: #{basic_block_rn12.8} parent=0 // loop_header_branch
    %13 = sbr.rel (%p11) target = $region8
  $region5: #{basic_block_rn12.8} parent=0 // loop_body
    %s15 = ssub.s32 %s10, 1
    %s16 = ssub.s32 %s10, 2
    %s17 = sadd.s32 %s10, 1
    %s18 = ssub.s32 %s10, %s17
    %p19 = scmp.eq.s32.totalorder %s18, 0
    %s21 = sadd.s32 %s20, 1
    %s22 = scalar_select %p19, %s20, %s21
    %p25 = pneg %p19
    %p26 = scmp.eq.s32.totalorder %s10, 1
    %p27 = por %p25, %p26
    %p28 = scmp.ne.s32.totalorder %s20, %s23
    %p29 = scmp.eq.s32.totalorder %s10, 0
    %p30 = por %p28, %p29
    %p31 = scmp.ne.s32.totalorder %s20, %s23
    %p32 = scmp.eq.s32.totalorder %s15, 1
    %p33 = por %p31, %p32
    %p34 = scmp.ne.s32.totalorder %s23, %s24
    %p35 = scmp.eq.s32.totalorder %s15, 0
    %p36 = por %p34, %p35
    %p37 = scmp.ne.s32.totalorder %s23, %s24
    %p38 = scmp.eq.s32.totalorder %s16, 1
    %p39 = por %p37, %p38
    %p41 = scmp.ne.s32.totalorder %s24, %s40
    %p42 = scmp.eq.s32.totalorder %s16, 0
    %p43 = por %p41, %p42
    %s45 = sadd.s32 %s44, 1
    %p48 = scmp.eq.s32.totalorder %s10, 1
    %p49 = scmp.ne.s32.totalorder %s44, %s46
    %p50 = scmp.eq.s32.totalorder %s10, 0
    %p51 = por %p49, %p50
    %p52 = scmp.ne.s32.totalorder %s44, %s46
    %p53 = scmp.eq.s32.totalorder %s15, 1
    %p54 = por %p52, %p53
    %p55 = scmp.ne.s32.totalorder %s46, %s47
    %p56 = scmp.eq.s32.totalorder %s15, 0
    %p57 = por %p55, %p56
    %p58 = scmp.ne.s32.totalorder %s46, %s47
    %p59 = scmp.eq.s32.totalorder %s16, 1
    %p60 = por %p58, %p59
    %p62 = scmp.ne.s32.totalorder %s47, %s61
    %p63 = scmp.eq.s32.totalorder %s16, 0
    %p64 = por %p62, %p63
    %s65 = ssub.s32 %s10, %s17
    %p66 = scmp.eq.s32.totalorder %s65, 0
    %s68 = sadd.s32 %s67, 1
    %s69 = scalar_select %p66, %s67, %s68
    %p72 = pneg %p66
    %p73 = scmp.eq.s32.totalorder %s10, 1
    %p74 = por %p72, %p73
    %p75 = scmp.ne.s32.totalorder %s67, %s70
    %p76 = scmp.eq.s32.totalorder %s10, 0
    %p77 = por %p75, %p76
    %p78 = scmp.ne.s32.totalorder %s67, %s70
    %p79 = scmp.eq.s32.totalorder %s15, 1
    %p80 = por %p78, %p79
    %p81 = scmp.ne.s32.totalorder %s70, %s71
    %p82 = scmp.eq.s32.totalorder %s15, 0
    %p83 = por %p81, %p82
    %p84 = scmp.ne.s32.totalorder %s70, %s71
    %p85 = scmp.eq.s32.totalorder %s16, 1
    %p86 = por %p84, %p85
    %p88 = scmp.ne.s32.totalorder %s71, %s87
    %p89 = scmp.eq.s32.totalorder %s16, 0
    %p90 = por %p88, %p89
    %s91 = ssub.s32 %s10, %s17
    %p92 = scmp.eq.s32.totalorder %s91, 0
    %s94 = sadd.s32 %s93, 1
    %s95 = scalar_select %p92, %s93, %s94
    %p98 = pneg %p92
    %p99 = scmp.eq.s32.totalorder %s10, 1
    %p100 = por %p98, %p99
    %p101 = scmp.ne.s32.totalorder %s93, %s96
    %p102 = scmp.eq.s32.totalorder %s10, 0
    %p103 = por %p101, %p102
    %p104 = scmp.ne.s32.totalorder %s93, %s96
    %p105 = scmp.eq.s32.totalorder %s15, 1
    %p106 = por %p104, %p105
    %p107 = scmp.ne.s32.totalorder %s96, %s97
    %p108 = scmp.eq.s32.totalorder %s15, 0
    %p109 = por %p107, %p108
    %p110 = scmp.ne.s32.totalorder %s96, %s97
    %p111 = scmp.eq.s32.totalorder %s16, 1
    %p112 = por %p110, %p111
    %p114 = scmp.ne.s32.totalorder %s97, %s113
    %p115 = scmp.eq.s32.totalorder %s16, 0
    %p116 = por %p114, %p115
    %p117 = scmp.le.s32.totalorder 1, %s10
    %p118 = scmp.lt.s32.totalorder %s10, 3
    %p119 = pnand %p117, %p118
    %p120 = pneg %p119
    // Predicated region
    $region9: #{basic_block_rn12.8} parent=5 // pred_check
      _
    $region10: #{basic_block_rn12.8} parent=5 // pred_check_branch
      %122 = sbr.rel (%p119) target = $region12
    $region11: #{basic_block_rn12.8} parent=5 // pred_region
      %s123 = ssub.s32 %s10, 1
      // Predicated region
      $region13: #{basic_block_rn12.8} parent=11 // pred_check
        %p124 = pneg %p57
      $region14: #{basic_block_rn12.8} parent=11 // pred_check_branch
        %126 = sbr.rel (%p124) target = $region16
      $region15: #{basic_block_rn12.8} parent=11 // pred_region
        _
      $region16: #{basic_block_rn12.8} parent=11 // pred_fallthru
        _
    $region12: #{basic_block_rn12.8} parent=5 // pred_fallthru
      _
    %p127 = scmp.lt.s32.totalorder %s10, 2
    // Predicated region
    $region17: #{basic_block_rn12.8} parent=5 // pred_check
      %p128 = pneg %p127
    $region18: #{basic_block_rn12.8} parent=5 // pred_check_branch
      %130 = sbr.rel (%p128) target = $region20
    $region19: #{basic_block_rn12.8} parent=5 // pred_region
      // Predicated region
      $region21: #{basic_block_rn12.8} parent=19 // pred_check
        %p131 = pneg %p30
      $region22: #{basic_block_rn12.8} parent=19 // pred_check_branch
        %133 = sbr.rel (%p131) target = $region24
      $region23: #{basic_block_rn12.8} parent=19 // pred_region
        %s134 = smul.u32 32, %s10
        %p135 = scmp.lt.s32.totalorder %s134, 63
        %s136 = scalar_select %p135, %s134, 63
        %s137 = smul.addr %s136, 9
        %s138 = smul.addr %s137, 4
        %s139 = scalar_lea.vmem %s0, %s138
        %s140 = smul.u32 32, %s10
      $region24: #{basic_block_rn12.8} parent=19 // pred_fallthru
        _
    $region20: #{basic_block_rn12.8} parent=5 // pred_fallthru
      _
    %p141 = scmp.le.s32.totalorder 1, %s10
    %p142 = scmp.lt.s32.totalorder %s10, 3
    %p143 = pnand %p141, %p142
    %p144 = pneg %p143
    // Predicated region
    $region25: #{basic_block_rn12.8} parent=5 // pred_check
      _
    $region26: #{basic_block_rn12.8} parent=5 // pred_check_branch
      %146 = sbr.rel (%p143) target = $region28
    $region27: #{basic_block_rn12.8} parent=5 // pred_region
      %s147 = ssub.s32 %s10, 1
      %s148 = smul.u32 32, %s15
      %p149 = scmp.lt.s32.totalorder %s148, 63
      %s150 = scalar_select %p149, %s148, 63
      %s151 = smul.addr %s150, 9
      %s152 = smul.addr %s151, 4
      %s153 = scalar_lea.vmem %s0, %s152
      %p154 = pneg %p36
      %p155 = pneg %p33
      %p156 = pneg %p57
      %p157 = pneg %p54
      %p158 = pneg %p83
      %p159 = pneg %p80
      %s160 = smul.u32 32, %s15
      %p161 = scmp.lt.s32.totalorder %s160, 63
      %s162 = scalar_select %p161, %s160, 63
      %s163 = smul.addr %s162, 4
      %s164 = scalar_lea.vmem %s2, %s163
      %p165 = pneg %p109
      %p166 = pneg %p106
      %p167 = scmp.lt.s32.totalorder %s15, 1
      %s168 = scalar_select %p167, %s15, 1
      %s169 = smul.addr %s168, 8
      %s170 = scalar_lea.vmem %s3, %s169
      %s171 = smul.u32 32, %s15
      %p172 = scmp.lt.s32.totalorder %s171, 63
      %s173 = scalar_select %p172, %s171, 63
      %s174 = smul.addr %s173, 9
      %s175 = smul.addr %s174, 4
      %s176 = scalar_lea.vmem %s0, %s175
      %s177 = smul.u32 32, %s15
      %s178 = smul.u32 32, %s15
      %p179 = scmp.lt.s32.totalorder %s178, 63
      %s180 = scalar_select %p179, %s178, 63
      %s181 = smul.addr %s180, 4
      %s182 = scalar_lea.vmem %s2, %s181
      %s183 = smul.u32 32, %s15
      %p184 = scmp.lt.s32.totalorder %s15, 1
      %s185 = scalar_select %p184, %s15, 1
      %s186 = smul.addr %s185, 8
      %s187 = scalar_lea.vmem %s3, %s186
      %v189 = vld [vmem:[%s176] sm:$0xff]
      %v190 = vld [vmem:[%s176 + $0x8] sm:$0xff]
      %v191 = vld [vmem:[%s176 + $0x10] sm:$0xff]
      %v192 = vld [vmem:[%s176 + $0x18] sm:$0xff]
      %v193 = vld [vmem:[%s176 + $0x20] sm:$0xf]
      %v194 = vld [vmem:[%s176 + $0x24] sm:$0xff]
      %v195 = vld [vmem:[%s176 + $0x2c] sm:$0xff]
      %v196 = vld [vmem:[%s176 + $0x34] sm:$0xff]
      %v197 = vld [vmem:[%s176 + $0x3c] sm:$0xff]
      %v198 = vld [vmem:[%s176 + $0x44] sm:$0xf]
      %v199 = vld [vmem:[%s176 + $0x48] sm:$0xff]
      %v200 = vld [vmem:[%s176 + $0x50] sm:$0xff]
      %v201 = vld [vmem:[%s176 + $0x58] sm:$0xff]
      %v202 = vld [vmem:[%s176 + $0x60] sm:$0xff]
      %v203 = vld [vmem:[%s176 + $0x68] sm:$0xf]
      %v204 = vld [vmem:[%s176 + $0x6c] sm:$0xff]
      %v205 = vld [vmem:[%s176 + $0x74] sm:$0xff]
      %v206 = vld [vmem:[%s176 + $0x7c] sm:$0xff]
      %v207 = vld [vmem:[%s176 + $0x84] sm:$0xff]
      %v208 = vld [vmem:[%s176 + $0x8c] sm:$0xf]
      %v209 = vld [vmem:[%s176 + $0x90] sm:$0xff]
      %v210 = vld [vmem:[%s176 + $0x98] sm:$0xff]
      %v211 = vld [vmem:[%s176 + $0xa0] sm:$0xff]
      %v212 = vld [vmem:[%s176 + $0xa8] sm:$0xff]
      %v213 = vld [vmem:[%s176 + $0xb0] sm:$0xf]
      %v214 = vld [vmem:[%s176 + $0xb4] sm:$0xff]
      %v215 = vld [vmem:[%s176 + $0xbc] sm:$0xff]
      %v216 = vld [vmem:[%s176 + $0xc4] sm:$0xff]
      %v217 = vld [vmem:[%s176 + $0xcc] sm:$0xff]
      %v218 = vld [vmem:[%s176 + $0xd4] sm:$0xf]
      %v219 = vld [vmem:[%s176 + $0xd8] sm:$0xff]
      %v220 = vld [vmem:[%s176 + $0xe0] sm:$0xff]
      %v221 = vld [vmem:[%s176 + $0xe8] sm:$0xff]
      %v222 = vld [vmem:[%s176 + $0xf0] sm:$0xff]
      %v223 = vld [vmem:[%s176 + $0xf8] sm:$0xf]
      %v224 = vld [vmem:[%s176 + $0xfc] sm:$0xff]
      %v225 = vld [vmem:[%s176 + $0x104] sm:$0xff]
      %v226 = vld [vmem:[%s176 + $0x10c] sm:$0xff]
      %v227 = vld [vmem:[%s176 + $0x114] sm:$0xff]
      %v228 = vld [vmem:[%s176 + $0x11c] sm:$0xf]
      %v229 = vld [vmem:[%s176 + $0x120] sm:$0xff]
      %v230 = vld [vmem:[%s176 + $0x128] sm:$0xff]
      %v231 = vld [vmem:[%s176 + $0x130] sm:$0xff]
      %v232 = vld [vmem:[%s176 + $0x138] sm:$0xff]
      %v233 = vld [vmem:[%s176 + $0x140] sm:$0xf]
      %v234 = vld [vmem:[%s176 + $0x144] sm:$0xff]
      %v235 = vld [vmem:[%s176 + $0x14c] sm:$0xff]
      %v236 = vld [vmem:[%s176 + $0x154] sm:$0xff]
      %v237 = vld [vmem:[%s176 + $0x15c] sm:$0xff]
      %v238 = vld [vmem:[%s176 + $0x164] sm:$0xf]
      %v239 = vld [vmem:[%s176 + $0x168] sm:$0xff]
      %v240 = vld [vmem:[%s176 + $0x170] sm:$0xff]
      %v241 = vld [vmem:[%s176 + $0x178] sm:$0xff]
      %v242 = vld [vmem:[%s176 + $0x180] sm:$0xff]
      %v243 = vld [vmem:[%s176 + $0x188] sm:$0xf]
      %v244 = vld [vmem:[%s176 + $0x18c] sm:$0xff]
      %v245 = vld [vmem:[%s176 + $0x194] sm:$0xff]
      %v246 = vld [vmem:[%s176 + $0x19c] sm:$0xff]
      %v247 = vld [vmem:[%s176 + $0x1a4] sm:$0xff]
      %v248 = vld [vmem:[%s176 + $0x1ac] sm:$0xf]
      %v249 = vld [vmem:[%s176 + $0x1b0] sm:$0xff]
      %v250 = vld [vmem:[%s176 + $0x1b8] sm:$0xff]
      %v251 = vld [vmem:[%s176 + $0x1c0] sm:$0xff]
      %v252 = vld [vmem:[%s176 + $0x1c8] sm:$0xff]
      %v253 = vld [vmem:[%s176 + $0x1d0] sm:$0xf]
      %v254 = vld [vmem:[%s176 + $0x1d4] sm:$0xff]
      %v255 = vld [vmem:[%s176 + $0x1dc] sm:$0xff]
      %v256 = vld [vmem:[%s176 + $0x1e4] sm:$0xff]
      %v257 = vld [vmem:[%s176 + $0x1ec] sm:$0xff]
      %v258 = vld [vmem:[%s176 + $0x1f4] sm:$0xf]
      %v259 = vld [vmem:[%s176 + $0x1f8] sm:$0xff]
      %v260 = vld [vmem:[%s176 + $0x200] sm:$0xff]
      %v261 = vld [vmem:[%s176 + $0x208] sm:$0xff]
      %v262 = vld [vmem:[%s176 + $0x210] sm:$0xff]
      %v263 = vld [vmem:[%s176 + $0x218] sm:$0xf]
      %v264 = vld [vmem:[%s176 + $0x21c] sm:$0xff]
      %v265 = vld [vmem:[%s176 + $0x224] sm:$0xff]
      %v266 = vld [vmem:[%s176 + $0x22c] sm:$0xff]
      %v267 = vld [vmem:[%s176 + $0x234] sm:$0xff]
      %v268 = vld [vmem:[%s176 + $0x23c] sm:$0xf]
      %v269 = vld [vmem:[%s176 + $0x240] sm:$0xff]
      %v270 = vld [vmem:[%s176 + $0x248] sm:$0xff]
      %v271 = vld [vmem:[%s176 + $0x250] sm:$0xff]
      %v272 = vld [vmem:[%s176 + $0x258] sm:$0xff]
      %v273 = vld [vmem:[%s176 + $0x260] sm:$0xf]
      %v274 = vld [vmem:[%s176 + $0x264] sm:$0xff]
      %v275 = vld [vmem:[%s176 + $0x26c] sm:$0xff]
      %v276 = vld [vmem:[%s176 + $0x274] sm:$0xff]
      %v277 = vld [vmem:[%s176 + $0x27c] sm:$0xff]
      %v278 = vld [vmem:[%s176 + $0x284] sm:$0xf]
      %v279 = vld [vmem:[%s176 + $0x288] sm:$0xff]
      %v280 = vld [vmem:[%s176 + $0x290] sm:$0xff]
      %v281 = vld [vmem:[%s176 + $0x298] sm:$0xff]
      %v282 = vld [vmem:[%s176 + $0x2a0] sm:$0xff]
      %v283 = vld [vmem:[%s176 + $0x2a8] sm:$0xf]
      %v284 = vld [vmem:[%s176 + $0x2ac] sm:$0xff]
      %v285 = vld [vmem:[%s176 + $0x2b4] sm:$0xff]
      %v286 = vld [vmem:[%s176 + $0x2bc] sm:$0xff]
      %v287 = vld [vmem:[%s176 + $0x2c4] sm:$0xff]
      %v288 = vld [vmem:[%s176 + $0x2cc] sm:$0xf]
      %v289 = vld [vmem:[%s176 + $0x2d0] sm:$0xff]
      %v290 = vld [vmem:[%s176 + $0x2d8] sm:$0xff]
      %v291 = vld [vmem:[%s176 + $0x2e0] sm:$0xff]
      %v292 = vld [vmem:[%s176 + $0x2e8] sm:$0xff]
      %v293 = vld [vmem:[%s176 + $0x2f0] sm:$0xf]
      %v294 = vld [vmem:[%s176 + $0x2f4] sm:$0xff]
      %v295 = vld [vmem:[%s176 + $0x2fc] sm:$0xff]
      %v296 = vld [vmem:[%s176 + $0x304] sm:$0xff]
      %v297 = vld [vmem:[%s176 + $0x30c] sm:$0xff]
      %v298 = vld [vmem:[%s176 + $0x314] sm:$0xf]
      %v299 = vld [vmem:[%s176 + $0x318] sm:$0xff]
      %v300 = vld [vmem:[%s176 + $0x320] sm:$0xff]
      %v301 = vld [vmem:[%s176 + $0x328] sm:$0xff]
      %v302 = vld [vmem:[%s176 + $0x330] sm:$0xff]
      %v303 = vld [vmem:[%s176 + $0x338] sm:$0xf]
      %v304 = vld [vmem:[%s176 + $0x33c] sm:$0xff]
      %v305 = vld [vmem:[%s176 + $0x344] sm:$0xff]
      %v306 = vld [vmem:[%s176 + $0x34c] sm:$0xff]
      %v307 = vld [vmem:[%s176 + $0x354] sm:$0xff]
      %v308 = vld [vmem:[%s176 + $0x35c] sm:$0xf]
      %v309 = vld [vmem:[%s176 + $0x360] sm:$0xff]
      %v310 = vld [vmem:[%s176 + $0x368] sm:$0xff]
      %v311 = vld [vmem:[%s176 + $0x370] sm:$0xff]
      %v312 = vld [vmem:[%s176 + $0x378] sm:$0xff]
      %v313 = vld [vmem:[%s176 + $0x380] sm:$0xf]
      %v314 = vld [vmem:[%s176 + $0x384] sm:$0xff]
      %v315 = vld [vmem:[%s176 + $0x38c] sm:$0xff]
      %v316 = vld [vmem:[%s176 + $0x394] sm:$0xff]
      %v317 = vld [vmem:[%s176 + $0x39c] sm:$0xff]
      %v318 = vld [vmem:[%s176 + $0x3a4] sm:$0xf]
      %v319 = vld [vmem:[%s176 + $0x3a8] sm:$0xff]
      %v320 = vld [vmem:[%s176 + $0x3b0] sm:$0xff]
      %v321 = vld [vmem:[%s176 + $0x3b8] sm:$0xff]
      %v322 = vld [vmem:[%s176 + $0x3c0] sm:$0xff]
      %v323 = vld [vmem:[%s176 + $0x3c8] sm:$0xf]
      %v324 = vld [vmem:[%s176 + $0x3cc] sm:$0xff]
      %v325 = vld [vmem:[%s176 + $0x3d4] sm:$0xff]
      %v326 = vld [vmem:[%s176 + $0x3dc] sm:$0xff]
      %v327 = vld [vmem:[%s176 + $0x3e4] sm:$0xff]
      %v328 = vld [vmem:[%s176 + $0x3ec] sm:$0xf]
      %v329 = vld [vmem:[%s176 + $0x3f0] sm:$0xff]
      %v330 = vld [vmem:[%s176 + $0x3f8] sm:$0xff]
      %v331 = vld [vmem:[%s176 + $0x400] sm:$0xff]
      %v332 = vld [vmem:[%s176 + $0x408] sm:$0xff]
      %v333 = vld [vmem:[%s176 + $0x410] sm:$0xf]
      %v334 = vld [vmem:[%s176 + $0x414] sm:$0xff]
      %v335 = vld [vmem:[%s176 + $0x41c] sm:$0xff]
      %v336 = vld [vmem:[%s176 + $0x424] sm:$0xff]
      %v337 = vld [vmem:[%s176 + $0x42c] sm:$0xff]
      %v338 = vld [vmem:[%s176 + $0x434] sm:$0xf]
      %v339 = vld [vmem:[%s176 + $0x438] sm:$0xff]
      %v340 = vld [vmem:[%s176 + $0x440] sm:$0xff]
      %v341 = vld [vmem:[%s176 + $0x448] sm:$0xff]
      %v342 = vld [vmem:[%s176 + $0x450] sm:$0xff]
      %v343 = vld [vmem:[%s176 + $0x458] sm:$0xf]
      %v344 = vld [vmem:[%s176 + $0x45c] sm:$0xff]
      %v345 = vld [vmem:[%s176 + $0x464] sm:$0xff]
      %v346 = vld [vmem:[%s176 + $0x46c] sm:$0xff]
      %v347 = vld [vmem:[%s176 + $0x474] sm:$0xff]
      %v348 = vld [vmem:[%s176 + $0x47c] sm:$0xf]
      %v349 = vld [vmem:[%s1] sm:$0xf]
      %v350 = vld [vmem:[%s1 + $0x4] sm:$0xf]
      %v351 = vld [vmem:[%s1 + $0x8] sm:$0xf]
      %v352 = vld [vmem:[%s1 + $0xc] sm:$0xf]
      %v353 = vld [vmem:[%s1 + $0x10] sm:$0xf]
      %v354 = vld [vmem:[%s1 + $0x14] sm:$0xf]
      %v355 = vld [vmem:[%s1 + $0x18] sm:$0xf]
      %v356 = vld [vmem:[%s1 + $0x1c] sm:$0xf]
      %v357 = vld [vmem:[%s1 + $0x20] sm:$0xf]
      %v358 = vld [vmem:[%s1 + $0x24] sm:$0xf]
      %v359 = vld [vmem:[%s1 + $0x28] sm:$0xf]
      %v360 = vld [vmem:[%s1 + $0x2c] sm:$0xf]
      %v361 = vld [vmem:[%s1 + $0x30] sm:$0xf]
      %v362 = vld [vmem:[%s1 + $0x34] sm:$0xf]
      %v363 = vld [vmem:[%s1 + $0x38] sm:$0xf]
      %v364 = vld [vmem:[%s1 + $0x3c] sm:$0xf]
      %v365 = vld [vmem:[%s1 + $0x40] sm:$0xf]
      %v366 = vld [vmem:[%s1 + $0x44] sm:$0xf]
      %v367 = vld [vmem:[%s1 + $0x48] sm:$0xf]
      %v368 = vld [vmem:[%s1 + $0x4c] sm:$0xf]
      %v369 = vld [vmem:[%s1 + $0x50] sm:$0xf]
      %v370 = vld [vmem:[%s1 + $0x54] sm:$0xf]
      %v371 = vld [vmem:[%s1 + $0x58] sm:$0xf]
      %v372 = vld [vmem:[%s1 + $0x5c] sm:$0xf]
      %v373 = vld [vmem:[%s1 + $0x60] sm:$0xf]
      %v374 = vld [vmem:[%s1 + $0x64] sm:$0xf]
      %v375 = vld [vmem:[%s1 + $0x68] sm:$0xf]
      %v376 = vld [vmem:[%s1 + $0x6c] sm:$0xf]
      %v377 = vld [vmem:[%s1 + $0x70] sm:$0xf]
      %v378 = vld [vmem:[%s1 + $0x74] sm:$0xf]
      %v379 = vld [vmem:[%s1 + $0x78] sm:$0xf]
      %v380 = vld [vmem:[%s1 + $0x7c] sm:$0xf]
      %v381 = vld [vmem:[%s1 + $0x80] sm:$0xf]
      %v382 = vld [vmem:[%s1 + $0x84] sm:$0xf]
      %v383 = vld [vmem:[%s1 + $0x88] sm:$0xf]
      %v384 = vld [vmem:[%s1 + $0x8c] sm:$0xf]
      %v385 = vld [vmem:[%s1 + $0x90] sm:$0xf]
      %v386 = vld [vmem:[%s1 + $0x94] sm:$0xf]
      %v387 = vld [vmem:[%s1 + $0x98] sm:$0xf]
      %v388 = vld [vmem:[%s1 + $0x9c] sm:$0xf]
      %v389 = vld [vmem:[%s1 + $0xa0] sm:$0xf]
      %v390 = vld [vmem:[%s1 + $0xa4] sm:$0xf]
      %v391 = vld [vmem:[%s1 + $0xa8] sm:$0xf]
      %v392 = vld [vmem:[%s1 + $0xac] sm:$0xf]
      %v393 = vld [vmem:[%s1 + $0xb0] sm:$0xf]
      %v394 = vld [vmem:[%s1 + $0xb4] sm:$0xf]
      %v395 = vld [vmem:[%s1 + $0xb8] sm:$0xf]
      %v396 = vld [vmem:[%s1 + $0xbc] sm:$0xf]
      %v397 = vld [vmem:[%s1 + $0xc0] sm:$0xf]
      %v398 = vld [vmem:[%s1 + $0xc4] sm:$0xf]
      %v399 = vld [vmem:[%s1 + $0xc8] sm:$0xf]
      %v400 = vld [vmem:[%s1 + $0xcc] sm:$0xf]
      %v401 = vld [vmem:[%s1 + $0xd0] sm:$0xf]
      %v402 = vld [vmem:[%s1 + $0xd4] sm:$0xf]
      %v403 = vld [vmem:[%s1 + $0xd8] sm:$0xf]
      %v404 = vld [vmem:[%s1 + $0xdc] sm:$0xf]
      %v405 = vld [vmem:[%s1 + $0xe0] sm:$0xf]
      %v406 = vld [vmem:[%s1 + $0xe4] sm:$0xf]
      %v407 = vld [vmem:[%s1 + $0xe8] sm:$0xf]
      %v408 = vld [vmem:[%s1 + $0xec] sm:$0xf]
      %v409 = vld [vmem:[%s1 + $0xf0] sm:$0xf]
      %v410 = vld [vmem:[%s1 + $0xf4] sm:$0xf]
      %v411 = vld [vmem:[%s1 + $0xf8] sm:$0xf]
      %v412 = vld [vmem:[%s1 + $0xfc] sm:$0xf]
      %v413 = vld [vmem:[%s1 + $0x100] sm:$0xf]
      %v414 = vld [vmem:[%s1 + $0x104] sm:$0xf]
      %v415 = vld [vmem:[%s1 + $0x108] sm:$0xf]
      %v416 = vld [vmem:[%s1 + $0x10c] sm:$0xf]
      %v417 = vld [vmem:[%s1 + $0x110] sm:$0xf]
      %v418 = vld [vmem:[%s1 + $0x114] sm:$0xf]
      %v419 = vld [vmem:[%s1 + $0x118] sm:$0xf]
      %v420 = vld [vmem:[%s1 + $0x11c] sm:$0xf]
      %v421 = vld [vmem:[%s1 + $0x120] sm:$0xf]
      %v422 = vld [vmem:[%s1 + $0x124] sm:$0xf]
      %v423 = vld [vmem:[%s1 + $0x128] sm:$0xf]
      %v424 = vld [vmem:[%s1 + $0x12c] sm:$0xf]
      %v425 = vld [vmem:[%s1 + $0x130] sm:$0xf]
      %v426 = vld [vmem:[%s1 + $0x134] sm:$0xf]
      %v427 = vld [vmem:[%s1 + $0x138] sm:$0xf]
      %v428 = vld [vmem:[%s1 + $0x13c] sm:$0xf]
      %v429 = vld [vmem:[%s1 + $0x140] sm:$0xf]
      %v430 = vld [vmem:[%s1 + $0x144] sm:$0xf]
      %v431 = vld [vmem:[%s1 + $0x148] sm:$0xf]
      %v432 = vld [vmem:[%s1 + $0x14c] sm:$0xf]
      %v433 = vld [vmem:[%s1 + $0x150] sm:$0xf]
      %v434 = vld [vmem:[%s1 + $0x154] sm:$0xf]
      %v435 = vld [vmem:[%s1 + $0x158] sm:$0xf]
      %v436 = vld [vmem:[%s1 + $0x15c] sm:$0xf]
      %v437 = vld [vmem:[%s1 + $0x160] sm:$0xf]
      %v438 = vld [vmem:[%s1 + $0x164] sm:$0xf]
      %v439 = vld [vmem:[%s1 + $0x168] sm:$0xf]
      %v440 = vld [vmem:[%s1 + $0x16c] sm:$0xf]
      %v441 = vld [vmem:[%s1 + $0x170] sm:$0xf]
      %v442 = vld [vmem:[%s1 + $0x174] sm:$0xf]
      %v443 = vld [vmem:[%s1 + $0x178] sm:$0xf]
      %v444 = vld [vmem:[%s1 + $0x17c] sm:$0xf]
      %v445 = vld [vmem:[%s1 + $0x180] sm:$0xf]
      %v446 = vld [vmem:[%s1 + $0x184] sm:$0xf]
      %v447 = vld [vmem:[%s1 + $0x188] sm:$0xf]
      %v448 = vld [vmem:[%s1 + $0x18c] sm:$0xf]
      %v449 = vld [vmem:[%s1 + $0x190] sm:$0xf]
      %v450 = vld [vmem:[%s1 + $0x194] sm:$0xf]
      %v451 = vld [vmem:[%s1 + $0x198] sm:$0xf]
      %v452 = vld [vmem:[%s1 + $0x19c] sm:$0xf]
      %v453 = vld [vmem:[%s1 + $0x1a0] sm:$0xf]
      %v454 = vld [vmem:[%s1 + $0x1a4] sm:$0xf]
      %v455 = vld [vmem:[%s1 + $0x1a8] sm:$0xf]
      %v456 = vld [vmem:[%s1 + $0x1ac] sm:$0xf]
      %v457 = vld [vmem:[%s1 + $0x1b0] sm:$0xf]
      %v458 = vld [vmem:[%s1 + $0x1b4] sm:$0xf]
      %v459 = vld [vmem:[%s1 + $0x1b8] sm:$0xf]
      %v460 = vld [vmem:[%s1 + $0x1bc] sm:$0xf]
      %v461 = vld [vmem:[%s1 + $0x1c0] sm:$0xf]
      %v462 = vld [vmem:[%s1 + $0x1c4] sm:$0xf]
      %v463 = vld [vmem:[%s1 + $0x1c8] sm:$0xf]
      %v464 = vld [vmem:[%s1 + $0x1cc] sm:$0xf]
      %v465 = vld [vmem:[%s1 + $0x1d0] sm:$0xf]
      %v466 = vld [vmem:[%s1 + $0x1d4] sm:$0xf]
      %v467 = vld [vmem:[%s1 + $0x1d8] sm:$0xf]
      %v468 = vld [vmem:[%s1 + $0x1dc] sm:$0xf]
      %v469 = vld [vmem:[%s1 + $0x1e0] sm:$0xf]
      %v470 = vld [vmem:[%s1 + $0x1e4] sm:$0xf]
      %v471 = vld [vmem:[%s1 + $0x1e8] sm:$0xf]
      %v472 = vld [vmem:[%s1 + $0x1ec] sm:$0xf]
      %v473 = vld [vmem:[%s1 + $0x1f0] sm:$0xf]
      %v474 = vld [vmem:[%s1 + $0x1f4] sm:$0xf]
      %v475 = vld [vmem:[%s1 + $0x1f8] sm:$0xf]
      %v476 = vld [vmem:[%s1 + $0x1fc] sm:$0xf]
      %v477 = vld [vmem:[%s1 + $0x200] sm:$0xf]
      %v478 = vld [vmem:[%s1 + $0x204] sm:$0xf]
      %v479 = vld [vmem:[%s1 + $0x208] sm:$0xf]
      %v480 = vld [vmem:[%s1 + $0x20c] sm:$0xf]
      %v481 = vld [vmem:[%s1 + $0x210] sm:$0xf]
      %v482 = vld [vmem:[%s1 + $0x214] sm:$0xf]
      %v483 = vld [vmem:[%s1 + $0x218] sm:$0xf]
      %v484 = vld [vmem:[%s1 + $0x21c] sm:$0xf]
      %v485 = vld [vmem:[%s1 + $0x220] sm:$0xf]
      %v486 = vld [vmem:[%s1 + $0x224] sm:$0xf]
      %v487 = vld [vmem:[%s1 + $0x228] sm:$0xf]
      %v488 = vld [vmem:[%s1 + $0x22c] sm:$0xf]
      %v489 = vld [vmem:[%s1 + $0x230] sm:$0xf]
      %v490 = vld [vmem:[%s1 + $0x234] sm:$0xf]
      %v491 = vld [vmem:[%s1 + $0x238] sm:$0xf]
      %v492 = vld [vmem:[%s1 + $0x23c] sm:$0xf]
      %v653 = vunpack.c.l.b16 %v189
      %v654 = vunpack.c.h.b16 %v189
      %v655 = vunpack.c.l.b16 %v190
      %v656 = vunpack.c.h.b16 %v190
      %v657 = vunpack.c.l.b16 %v191
      %v658 = vunpack.c.h.b16 %v191
      %v659 = vunpack.c.l.b16 %v192
      %v660 = vunpack.c.h.b16 %v192
      %v661 = vunpack.c.l.b16 %v193
      %v662 = vunpack.c.l.b16 %v194
      %v663 = vunpack.c.h.b16 %v194
      %v664 = vunpack.c.l.b16 %v195
      %v665 = vunpack.c.h.b16 %v195
      %v666 = vunpack.c.l.b16 %v196
      %v667 = vunpack.c.h.b16 %v196
      %v668 = vunpack.c.l.b16 %v197
      %v669 = vunpack.c.h.b16 %v197
      %v670 = vunpack.c.l.b16 %v198
      %v671 = vunpack.c.l.b16 %v199
      %v672 = vunpack.c.h.b16 %v199
      %v673 = vunpack.c.l.b16 %v200
      %v674 = vunpack.c.h.b16 %v200
      %v675 = vunpack.c.l.b16 %v201
      %v676 = vunpack.c.h.b16 %v201
      %v677 = vunpack.c.l.b16 %v202
      %v678 = vunpack.c.h.b16 %v202
      %v679 = vunpack.c.l.b16 %v203
      %v680 = vunpack.c.l.b16 %v204
      %v681 = vunpack.c.h.b16 %v204
      %v682 = vunpack.c.l.b16 %v205
      %v683 = vunpack.c.h.b16 %v205
      %v684 = vunpack.c.l.b16 %v206
      %v685 = vunpack.c.h.b16 %v206
      %v686 = vunpack.c.l.b16 %v207
      %v687 = vunpack.c.h.b16 %v207
      %v688 = vunpack.c.l.b16 %v208
      %v689 = vunpack.c.l.b16 %v209
      %v690 = vunpack.c.h.b16 %v209
      %v691 = vunpack.c.l.b16 %v210
      %v692 = vunpack.c.h.b16 %v210
      %v693 = vunpack.c.l.b16 %v211
      %v694 = vunpack.c.h.b16 %v211
      %v695 = vunpack.c.l.b16 %v212
      %v696 = vunpack.c.h.b16 %v212
      %v697 = vunpack.c.l.b16 %v213
      %v698 = vunpack.c.l.b16 %v214
      %v699 = vunpack.c.h.b16 %v214
      %v700 = vunpack.c.l.b16 %v215
      %v701 = vunpack.c.h.b16 %v215
      %v702 = vunpack.c.l.b16 %v216
      %v703 = vunpack.c.h.b16 %v216
      %v704 = vunpack.c.l.b16 %v217
      %v705 = vunpack.c.h.b16 %v217
      %v706 = vunpack.c.l.b16 %v218
      %v707 = vunpack.c.l.b16 %v219
      %v708 = vunpack.c.h.b16 %v219
      %v709 = vunpack.c.l.b16 %v220
      %v710 = vunpack.c.h.b16 %v220
      %v711 = vunpack.c.l.b16 %v221
      %v712 = vunpack.c.h.b16 %v221
      %v713 = vunpack.c.l.b16 %v222
      %v714 = vunpack.c.h.b16 %v222
      %v715 = vunpack.c.l.b16 %v223
      %v716 = vunpack.c.l.b16 %v224
      %v717 = vunpack.c.h.b16 %v224
      %v718 = vunpack.c.l.b16 %v225
      %v719 = vunpack.c.h.b16 %v225
      %v720 = vunpack.c.l.b16 %v226
      %v721 = vunpack.c.h.b16 %v226
      %v722 = vunpack.c.l.b16 %v227
      %v723 = vunpack.c.h.b16 %v227
      %v724 = vunpack.c.l.b16 %v228
      %v725 = vunpack.c.l.b16 %v229
      %v726 = vunpack.c.h.b16 %v229
      %v727 = vunpack.c.l.b16 %v230
      %v728 = vunpack.c.h.b16 %v230
      %v729 = vunpack.c.l.b16 %v231
      %v730 = vunpack.c.h.b16 %v231
      %v731 = vunpack.c.l.b16 %v232
      %v732 = vunpack.c.h.b16 %v232
      %v733 = vunpack.c.l.b16 %v233
      %v734 = vunpack.c.l.b16 %v234
      %v735 = vunpack.c.h.b16 %v234
      %v736 = vunpack.c.l.b16 %v235
      %v737 = vunpack.c.h.b16 %v235
      %v738 = vunpack.c.l.b16 %v236
      %v739 = vunpack.c.h.b16 %v236
      %v740 = vunpack.c.l.b16 %v237
      %v741 = vunpack.c.h.b16 %v237
      %v742 = vunpack.c.l.b16 %v238
      %v743 = vunpack.c.l.b16 %v239
      %v744 = vunpack.c.h.b16 %v239
      %v745 = vunpack.c.l.b16 %v240
      %v746 = vunpack.c.h.b16 %v240
      %v747 = vunpack.c.l.b16 %v241
      %v748 = vunpack.c.h.b16 %v241
      %v749 = vunpack.c.l.b16 %v242
      %v750 = vunpack.c.h.b16 %v242
      %v751 = vunpack.c.l.b16 %v243
      %v752 = vunpack.c.l.b16 %v244
      %v753 = vunpack.c.h.b16 %v244
      %v754 = vunpack.c.l.b16 %v245
      %v755 = vunpack.c.h.b16 %v245
      %v756 = vunpack.c.l.b16 %v246
      %v757 = vunpack.c.h.b16 %v246
      %v758 = vunpack.c.l.b16 %v247
      %v759 = vunpack.c.h.b16 %v247
      %v760 = vunpack.c.l.b16 %v248
      %v761 = vunpack.c.l.b16 %v249
      %v762 = vunpack.c.h.b16 %v249
      %v763 = vunpack.c.l.b16 %v250
      %v764 = vunpack.c.h.b16 %v250
      %v765 = vunpack.c.l.b16 %v251
      %v766 = vunpack.c.h.b16 %v251
      %v767 = vunpack.c.l.b16 %v252
      %v768 = vunpack.c.h.b16 %v252
      %v769 = vunpack.c.l.b16 %v253
      %v770 = vunpack.c.l.b16 %v254
      %v771 = vunpack.c.h.b16 %v254
      %v772 = vunpack.c.l.b16 %v255
      %v773 = vunpack.c.h.b16 %v255
      %v774 = vunpack.c.l.b16 %v256
      %v775 = vunpack.c.h.b16 %v256
      %v776 = vunpack.c.l.b16 %v257
      %v777 = vunpack.c.h.b16 %v257
      %v778 = vunpack.c.l.b16 %v258
      %v779 = vunpack.c.l.b16 %v259
      %v780 = vunpack.c.h.b16 %v259
      %v781 = vunpack.c.l.b16 %v260
      %v782 = vunpack.c.h.b16 %v260
      %v783 = vunpack.c.l.b16 %v261
      %v784 = vunpack.c.h.b16 %v261
      %v785 = vunpack.c.l.b16 %v262
      %v786 = vunpack.c.h.b16 %v262
      %v787 = vunpack.c.l.b16 %v263
      %v788 = vunpack.c.l.b16 %v264
      %v789 = vunpack.c.h.b16 %v264
      %v790 = vunpack.c.l.b16 %v265
      %v791 = vunpack.c.h.b16 %v265
      %v792 = vunpack.c.l.b16 %v266
      %v793 = vunpack.c.h.b16 %v266
      %v794 = vunpack.c.l.b16 %v267
      %v795 = vunpack.c.h.b16 %v267
      %v796 = vunpack.c.l.b16 %v268
      %v797 = vunpack.c.l.b16 %v269
      %v798 = vunpack.c.h.b16 %v269
      %v799 = vunpack.c.l.b16 %v270
      %v800 = vunpack.c.h.b16 %v270
      %v801 = vunpack.c.l.b16 %v271
      %v802 = vunpack.c.h.b16 %v271
      %v803 = vunpack.c.l.b16 %v272
      %v804 = vunpack.c.h.b16 %v272
      %v805 = vunpack.c.l.b16 %v273
      %v806 = vunpack.c.l.b16 %v274
      %v807 = vunpack.c.h.b16 %v274
      %v808 = vunpack.c.l.b16 %v275
      %v809 = vunpack.c.h.b16 %v275
      %v810 = vunpack.c.l.b16 %v276
      %v811 = vunpack.c.h.b16 %v276
      %v812 = vunpack.c.l.b16 %v277
      %v813 = vunpack.c.h.b16 %v277
      %v814 = vunpack.c.l.b16 %v278
      %v815 = vunpack.c.l.b16 %v279
      %v816 = vunpack.c.h.b16 %v279
      %v817 = vunpack.c.l.b16 %v280
      %v818 = vunpack.c.h.b16 %v280
      %v819 = vunpack.c.l.b16 %v281
      %v820 = vunpack.c.h.b16 %v281
      %v821 = vunpack.c.l.b16 %v282
      %v822 = vunpack.c.h.b16 %v282
      %v823 = vunpack.c.l.b16 %v283
      %v824 = vunpack.c.l.b16 %v284
      %v825 = vunpack.c.h.b16 %v284
      %v826 = vunpack.c.l.b16 %v285
      %v827 = vunpack.c.h.b16 %v285
      %v828 = vunpack.c.l.b16 %v286
      %v829 = vunpack.c.h.b16 %v286
      %v830 = vunpack.c.l.b16 %v287
      %v831 = vunpack.c.h.b16 %v287
      %v832 = vunpack.c.l.b16 %v288
      %v833 = vunpack.c.l.b16 %v289
      %v834 = vunpack.c.h.b16 %v289
      %v835 = vunpack.c.l.b16 %v290
      %v836 = vunpack.c.h.b16 %v290
      %v837 = vunpack.c.l.b16 %v291
      %v838 = vunpack.c.h.b16 %v291
      %v839 = vunpack.c.l.b16 %v292
      %v840 = vunpack.c.h.b16 %v292
      %v841 = vunpack.c.l.b16 %v293
      %v842 = vunpack.c.l.b16 %v294
      %v843 = vunpack.c.h.b16 %v294
      %v844 = vunpack.c.l.b16 %v295
      %v845 = vunpack.c.h.b16 %v295
      %v846 = vunpack.c.l.b16 %v296
      %v847 = vunpack.c.h.b16 %v296
      %v848 = vunpack.c.l.b16 %v297
      %v849 = vunpack.c.h.b16 %v297
      %v850 = vunpack.c.l.b16 %v298
      %v851 = vunpack.c.l.b16 %v299
      %v852 = vunpack.c.h.b16 %v299
      %v853 = vunpack.c.l.b16 %v300
      %v854 = vunpack.c.h.b16 %v300
      %v855 = vunpack.c.l.b16 %v301
      %v856 = vunpack.c.h.b16 %v301
      %v857 = vunpack.c.l.b16 %v302
      %v858 = vunpack.c.h.b16 %v302
      %v859 = vunpack.c.l.b16 %v303
      %v860 = vunpack.c.l.b16 %v304
      %v861 = vunpack.c.h.b16 %v304
      %v862 = vunpack.c.l.b16 %v305
      %v863 = vunpack.c.h.b16 %v305
      %v864 = vunpack.c.l.b16 %v306
      %v865 = vunpack.c.h.b16 %v306
      %v866 = vunpack.c.l.b16 %v307
      %v867 = vunpack.c.h.b16 %v307
      %v868 = vunpack.c.l.b16 %v308
      %v869 = vunpack.c.l.b16 %v309
      %v870 = vunpack.c.h.b16 %v309
      %v871 = vunpack.c.l.b16 %v310
      %v872 = vunpack.c.h.b16 %v310
      %v873 = vunpack.c.l.b16 %v311
      %v874 = vunpack.c.h.b16 %v311
      %v875 = vunpack.c.l.b16 %v312
      %v876 = vunpack.c.h.b16 %v312
      %v877 = vunpack.c.l.b16 %v313
      %v878 = vunpack.c.l.b16 %v314
      %v879 = vunpack.c.h.b16 %v314
      %v880 = vunpack.c.l.b16 %v315
      %v881 = vunpack.c.h.b16 %v315
      %v882 = vunpack.c.l.b16 %v316
      %v883 = vunpack.c.h.b16 %v316
      %v884 = vunpack.c.l.b16 %v317
      %v885 = vunpack.c.h.b16 %v317
      %v886 = vunpack.c.l.b16 %v318
      %v887 = vunpack.c.l.b16 %v319
      %v888 = vunpack.c.h.b16 %v319
      %v889 = vunpack.c.l.b16 %v320
      %v890 = vunpack.c.h.b16 %v320
      %v891 = vunpack.c.l.b16 %v321
      %v892 = vunpack.c.h.b16 %v321
      %v893 = vunpack.c.l.b16 %v322
      %v894 = vunpack.c.h.b16 %v322
      %v895 = vunpack.c.l.b16 %v323
      %v896 = vunpack.c.l.b16 %v324
      %v897 = vunpack.c.h.b16 %v324
      %v898 = vunpack.c.l.b16 %v325
      %v899 = vunpack.c.h.b16 %v325
      %v900 = vunpack.c.l.b16 %v326
      %v901 = vunpack.c.h.b16 %v326
      %v902 = vunpack.c.l.b16 %v327
      %v903 = vunpack.c.h.b16 %v327
      %v904 = vunpack.c.l.b16 %v328
      %v905 = vunpack.c.l.b16 %v329
      %v906 = vunpack.c.h.b16 %v329
      %v907 = vunpack.c.l.b16 %v330
      %v908 = vunpack.c.h.b16 %v330
      %v909 = vunpack.c.l.b16 %v331
      %v910 = vunpack.c.h.b16 %v331
      %v911 = vunpack.c.l.b16 %v332
      %v912 = vunpack.c.h.b16 %v332
      %v913 = vunpack.c.l.b16 %v333
      %v914 = vunpack.c.l.b16 %v334
      %v915 = vunpack.c.h.b16 %v334
      %v916 = vunpack.c.l.b16 %v335
      %v917 = vunpack.c.h.b16 %v335
      %v918 = vunpack.c.l.b16 %v336
      %v919 = vunpack.c.h.b16 %v336
      %v920 = vunpack.c.l.b16 %v337
      %v921 = vunpack.c.h.b16 %v337
      %v922 = vunpack.c.l.b16 %v338
      %v923 = vunpack.c.l.b16 %v339
      %v924 = vunpack.c.h.b16 %v339
      %v925 = vunpack.c.l.b16 %v340
      %v926 = vunpack.c.h.b16 %v340
      %v927 = vunpack.c.l.b16 %v341
      %v928 = vunpack.c.h.b16 %v341
      %v929 = vunpack.c.l.b16 %v342
      %v930 = vunpack.c.h.b16 %v342
      %v931 = vunpack.c.l.b16 %v343
      %v932 = vunpack.c.l.b16 %v344
      %v933 = vunpack.c.h.b16 %v344
      %v934 = vunpack.c.l.b16 %v345
      %v935 = vunpack.c.h.b16 %v345
      %v936 = vunpack.c.l.b16 %v346
      %v937 = vunpack.c.h.b16 %v346
      %v938 = vunpack.c.l.b16 %v347
      %v939 = vunpack.c.h.b16 %v347
      %v940 = vunpack.c.l.b16 %v348
      %v941 = vpack.c.b16 %v662, %v653
      %v942 = vpack.c.b16 %v663, %v654
      %v943 = vpack.c.b16 %v664, %v655
      %v944 = vpack.c.b16 %v665, %v656
      %v945 = vpack.c.b16 %v666, %v657
      %v946 = vpack.c.b16 %v667, %v658
      %v947 = vpack.c.b16 %v668, %v659
      %v948 = vpack.c.b16 %v669, %v660
      %v949 = vpack.c.b16 %v670, %v661
      %v950 = vpack.c.b16 %v680, %v671
      %v951 = vpack.c.b16 %v681, %v672
      %v952 = vpack.c.b16 %v682, %v673
      %v953 = vpack.c.b16 %v683, %v674
      %v954 = vpack.c.b16 %v684, %v675
      %v955 = vpack.c.b16 %v685, %v676
      %v956 = vpack.c.b16 %v686, %v677
      %v957 = vpack.c.b16 %v687, %v678
      %v958 = vpack.c.b16 %v688, %v679
      %v959 = vpack.c.b16 %v698, %v689
      %v960 = vpack.c.b16 %v699, %v690
      %v961 = vpack.c.b16 %v700, %v691
      %v962 = vpack.c.b16 %v701, %v692
      %v963 = vpack.c.b16 %v702, %v693
      %v964 = vpack.c.b16 %v703, %v694
      %v965 = vpack.c.b16 %v704, %v695
      %v966 = vpack.c.b16 %v705, %v696
      %v967 = vpack.c.b16 %v706, %v697
      %v968 = vpack.c.b16 %v716, %v707
      %v969 = vpack.c.b16 %v717, %v708
      %v970 = vpack.c.b16 %v718, %v709
      %v971 = vpack.c.b16 %v719, %v710
      %v972 = vpack.c.b16 %v720, %v711
      %v973 = vpack.c.b16 %v721, %v712
      %v974 = vpack.c.b16 %v722, %v713
      %v975 = vpack.c.b16 %v723, %v714
      %v976 = vpack.c.b16 %v724, %v715
      %v977 = vpack.c.b16 %v734, %v725
      %v978 = vpack.c.b16 %v735, %v726
      %v979 = vpack.c.b16 %v736, %v727
      %v980 = vpack.c.b16 %v737, %v728
      %v981 = vpack.c.b16 %v738, %v729
      %v982 = vpack.c.b16 %v739, %v730
      %v983 = vpack.c.b16 %v740, %v731
      %v984 = vpack.c.b16 %v741, %v732
      %v985 = vpack.c.b16 %v742, %v733
      %v986 = vpack.c.b16 %v752, %v743
      %v987 = vpack.c.b16 %v753, %v744
      %v988 = vpack.c.b16 %v754, %v745
      %v989 = vpack.c.b16 %v755, %v746
      %v990 = vpack.c.b16 %v756, %v747
      %v991 = vpack.c.b16 %v757, %v748
      %v992 = vpack.c.b16 %v758, %v749
      %v993 = vpack.c.b16 %v759, %v750
      %v994 = vpack.c.b16 %v760, %v751
      %v995 = vpack.c.b16 %v770, %v761
      %v996 = vpack.c.b16 %v771, %v762
      %v997 = vpack.c.b16 %v772, %v763
      %v998 = vpack.c.b16 %v773, %v764
      %v999 = vpack.c.b16 %v774, %v765
      %v1000 = vpack.c.b16 %v775, %v766
      %v1001 = vpack.c.b16 %v776, %v767
      %v1002 = vpack.c.b16 %v777, %v768
      %v1003 = vpack.c.b16 %v778, %v769
      %v1004 = vpack.c.b16 %v788, %v779
      %v1005 = vpack.c.b16 %v789, %v780
      %v1006 = vpack.c.b16 %v790, %v781
      %v1007 = vpack.c.b16 %v791, %v782
      %v1008 = vpack.c.b16 %v792, %v783
      %v1009 = vpack.c.b16 %v793, %v784
      %v1010 = vpack.c.b16 %v794, %v785
      %v1011 = vpack.c.b16 %v795, %v786
      %v1012 = vpack.c.b16 %v796, %v787
      %v1013 = vpack.c.b16 %v806, %v797
      %v1014 = vpack.c.b16 %v807, %v798
      %v1015 = vpack.c.b16 %v808, %v799
      %v1016 = vpack.c.b16 %v809, %v800
      %v1017 = vpack.c.b16 %v810, %v801
      %v1018 = vpack.c.b16 %v811, %v802
      %v1019 = vpack.c.b16 %v812, %v803
      %v1020 = vpack.c.b16 %v813, %v804
      %v1021 = vpack.c.b16 %v814, %v805
      %v1022 = vpack.c.b16 %v824, %v815
      %v1023 = vpack.c.b16 %v825, %v816
      %v1024 = vpack.c.b16 %v826, %v817
      %v1025 = vpack.c.b16 %v827, %v818
      %v1026 = vpack.c.b16 %v828, %v819
      %v1027 = vpack.c.b16 %v829, %v820
      %v1028 = vpack.c.b16 %v830, %v821
      %v1029 = vpack.c.b16 %v831, %v822
      %v1030 = vpack.c.b16 %v832, %v823
      %v1031 = vpack.c.b16 %v842, %v833
      %v1032 = vpack.c.b16 %v843, %v834
      %v1033 = vpack.c.b16 %v844, %v835
      %v1034 = vpack.c.b16 %v845, %v836
      %v1035 = vpack.c.b16 %v846, %v837
      %v1036 = vpack.c.b16 %v847, %v838
      %v1037 = vpack.c.b16 %v848, %v839
      %v1038 = vpack.c.b16 %v849, %v840
      %v1039 = vpack.c.b16 %v850, %v841
      %v1040 = vpack.c.b16 %v860, %v851
      %v1041 = vpack.c.b16 %v861, %v852
      %v1042 = vpack.c.b16 %v862, %v853
      %v1043 = vpack.c.b16 %v863, %v854
      %v1044 = vpack.c.b16 %v864, %v855
      %v1045 = vpack.c.b16 %v865, %v856
      %v1046 = vpack.c.b16 %v866, %v857
      %v1047 = vpack.c.b16 %v867, %v858
      %v1048 = vpack.c.b16 %v868, %v859
      %v1049 = vpack.c.b16 %v878, %v869
      %v1050 = vpack.c.b16 %v879, %v870
      %v1051 = vpack.c.b16 %v880, %v871
      %v1052 = vpack.c.b16 %v881, %v872
      %v1053 = vpack.c.b16 %v882, %v873
      %v1054 = vpack.c.b16 %v883, %v874
      %v1055 = vpack.c.b16 %v884, %v875
      %v1056 = vpack.c.b16 %v885, %v876
      %v1057 = vpack.c.b16 %v886, %v877
      %v1058 = vpack.c.b16 %v896, %v887
      %v1059 = vpack.c.b16 %v897, %v888
      %v1060 = vpack.c.b16 %v898, %v889
      %v1061 = vpack.c.b16 %v899, %v890
      %v1062 = vpack.c.b16 %v900, %v891
      %v1063 = vpack.c.b16 %v901, %v892
      %v1064 = vpack.c.b16 %v902, %v893
      %v1065 = vpack.c.b16 %v903, %v894
      %v1066 = vpack.c.b16 %v904, %v895
      %v1067 = vpack.c.b16 %v914, %v905
      %v1068 = vpack.c.b16 %v915, %v906
      %v1069 = vpack.c.b16 %v916, %v907
      %v1070 = vpack.c.b16 %v917, %v908
      %v1071 = vpack.c.b16 %v918, %v909
      %v1072 = vpack.c.b16 %v919, %v910
      %v1073 = vpack.c.b16 %v920, %v911
      %v1074 = vpack.c.b16 %v921, %v912
      %v1075 = vpack.c.b16 %v922, %v913
      %v1076 = vpack.c.b16 %v932, %v923
      %v1077 = vpack.c.b16 %v933, %v924
      %v1078 = vpack.c.b16 %v934, %v925
      %v1079 = vpack.c.b16 %v935, %v926
      %v1080 = vpack.c.b16 %v936, %v927
      %v1081 = vpack.c.b16 %v937, %v928
      %v1082 = vpack.c.b16 %v938, %v929
      %v1083 = vpack.c.b16 %v939, %v930
      %v1084 = vpack.c.b16 %v940, %v931
      %v1373 = vunpack.c.l.b16 %v349
      %v1374 = vunpack.c.l.b16 %v350
      %v1375 = vunpack.c.l.b16 %v351
      %v1376 = vunpack.c.l.b16 %v352
      %v1377 = vunpack.c.l.b16 %v353
      %v1378 = vunpack.c.l.b16 %v354
      %v1379 = vunpack.c.l.b16 %v355
      %v1380 = vunpack.c.l.b16 %v356
      %v1381 = vunpack.c.l.b16 %v357
      %v1382 = vunpack.c.l.b16 %v358
      %v1383 = vunpack.c.l.b16 %v359
      %v1384 = vunpack.c.l.b16 %v360
      %v1385 = vunpack.c.l.b16 %v361
      %v1386 = vunpack.c.l.b16 %v362
      %v1387 = vunpack.c.l.b16 %v363
      %v1388 = vunpack.c.l.b16 %v364
      %v1389 = vunpack.c.l.b16 %v365
      %v1390 = vunpack.c.l.b16 %v366
      %v1391 = vunpack.c.l.b16 %v367
      %v1392 = vunpack.c.l.b16 %v368
      %v1393 = vunpack.c.l.b16 %v369
      %v1394 = vunpack.c.l.b16 %v370
      %v1395 = vunpack.c.l.b16 %v371
      %v1396 = vunpack.c.l.b16 %v372
      %v1397 = vunpack.c.l.b16 %v373
      %v1398 = vunpack.c.l.b16 %v374
      %v1399 = vunpack.c.l.b16 %v375
      %v1400 = vunpack.c.l.b16 %v376
      %v1401 = vunpack.c.l.b16 %v377
      %v1402 = vunpack.c.l.b16 %v378
      %v1403 = vunpack.c.l.b16 %v379
      %v1404 = vunpack.c.l.b16 %v380
      %v1405 = vunpack.c.l.b16 %v381
      %v1406 = vunpack.c.l.b16 %v382
      %v1407 = vunpack.c.l.b16 %v383
      %v1408 = vunpack.c.l.b16 %v384
      %v1409 = vunpack.c.l.b16 %v385
      %v1410 = vunpack.c.l.b16 %v386
      %v1411 = vunpack.c.l.b16 %v387
      %v1412 = vunpack.c.l.b16 %v388
      %v1413 = vunpack.c.l.b16 %v389
      %v1414 = vunpack.c.l.b16 %v390
      %v1415 = vunpack.c.l.b16 %v391
      %v1416 = vunpack.c.l.b16 %v392
      %v1417 = vunpack.c.l.b16 %v393
      %v1418 = vunpack.c.l.b16 %v394
      %v1419 = vunpack.c.l.b16 %v395
      %v1420 = vunpack.c.l.b16 %v396
      %v1421 = vunpack.c.l.b16 %v397
      %v1422 = vunpack.c.l.b16 %v398
      %v1423 = vunpack.c.l.b16 %v399
      %v1424 = vunpack.c.l.b16 %v400
      %v1425 = vunpack.c.l.b16 %v401
      %v1426 = vunpack.c.l.b16 %v402
      %v1427 = vunpack.c.l.b16 %v403
      %v1428 = vunpack.c.l.b16 %v404
      %v1429 = vunpack.c.l.b16 %v405
      %v1430 = vunpack.c.l.b16 %v406
      %v1431 = vunpack.c.l.b16 %v407
      %v1432 = vunpack.c.l.b16 %v408
      %v1433 = vunpack.c.l.b16 %v409
      %v1434 = vunpack.c.l.b16 %v410
      %v1435 = vunpack.c.l.b16 %v411
      %v1436 = vunpack.c.l.b16 %v412
      %v1437 = vunpack.c.l.b16 %v413
      %v1438 = vunpack.c.l.b16 %v414
      %v1439 = vunpack.c.l.b16 %v415
      %v1440 = vunpack.c.l.b16 %v416
      %v1441 = vunpack.c.l.b16 %v417
      %v1442 = vunpack.c.l.b16 %v418
      %v1443 = vunpack.c.l.b16 %v419
      %v1444 = vunpack.c.l.b16 %v420
      %v1445 = vunpack.c.l.b16 %v421
      %v1446 = vunpack.c.l.b16 %v422
      %v1447 = vunpack.c.l.b16 %v423
      %v1448 = vunpack.c.l.b16 %v424
      %v1449 = vunpack.c.l.b16 %v425
      %v1450 = vunpack.c.l.b16 %v426
      %v1451 = vunpack.c.l.b16 %v427
      %v1452 = vunpack.c.l.b16 %v428
      %v1453 = vunpack.c.l.b16 %v429
      %v1454 = vunpack.c.l.b16 %v430
      %v1455 = vunpack.c.l.b16 %v431
      %v1456 = vunpack.c.l.b16 %v432
      %v1457 = vunpack.c.l.b16 %v433
      %v1458 = vunpack.c.l.b16 %v434
      %v1459 = vunpack.c.l.b16 %v435
      %v1460 = vunpack.c.l.b16 %v436
      %v1461 = vunpack.c.l.b16 %v437
      %v1462 = vunpack.c.l.b16 %v438
      %v1463 = vunpack.c.l.b16 %v439
      %v1464 = vunpack.c.l.b16 %v440
      %v1465 = vunpack.c.l.b16 %v441
      %v1466 = vunpack.c.l.b16 %v442
      %v1467 = vunpack.c.l.b16 %v443
      %v1468 = vunpack.c.l.b16 %v444
      %v1469 = vunpack.c.l.b16 %v445
      %v1470 = vunpack.c.l.b16 %v446
      %v1471 = vunpack.c.l.b16 %v447
      %v1472 = vunpack.c.l.b16 %v448
      %v1473 = vunpack.c.l.b16 %v449
      %v1474 = vunpack.c.l.b16 %v450
      %v1475 = vunpack.c.l.b16 %v451
      %v1476 = vunpack.c.l.b16 %v452
      %v1477 = vunpack.c.l.b16 %v453
      %v1478 = vunpack.c.l.b16 %v454
      %v1479 = vunpack.c.l.b16 %v455
      %v1480 = vunpack.c.l.b16 %v456
      %v1481 = vunpack.c.l.b16 %v457
      %v1482 = vunpack.c.l.b16 %v458
      %v1483 = vunpack.c.l.b16 %v459
      %v1484 = vunpack.c.l.b16 %v460
      %v1485 = vunpack.c.l.b16 %v461
      %v1486 = vunpack.c.l.b16 %v462
      %v1487 = vunpack.c.l.b16 %v463
      %v1488 = vunpack.c.l.b16 %v464
      %v1489 = vunpack.c.l.b16 %v465
      %v1490 = vunpack.c.l.b16 %v466
      %v1491 = vunpack.c.l.b16 %v467
      %v1492 = vunpack.c.l.b16 %v468
      %v1493 = vunpack.c.l.b16 %v469
      %v1494 = vunpack.c.l.b16 %v470
      %v1495 = vunpack.c.l.b16 %v471
      %v1496 = vunpack.c.l.b16 %v472
      %v1497 = vunpack.c.l.b16 %v473
      %v1498 = vunpack.c.l.b16 %v474
      %v1499 = vunpack.c.l.b16 %v475
      %v1500 = vunpack.c.l.b16 %v476
      %v1501 = vunpack.c.l.b16 %v477
      %v1502 = vunpack.c.l.b16 %v478
      %v1503 = vunpack.c.l.b16 %v479
      %v1504 = vunpack.c.l.b16 %v480
      %v1505 = vunpack.c.l.b16 %v481
      %v1506 = vunpack.c.l.b16 %v482
      %v1507 = vunpack.c.l.b16 %v483
      %v1508 = vunpack.c.l.b16 %v484
      %v1509 = vunpack.c.l.b16 %v485
      %v1510 = vunpack.c.l.b16 %v486
      %v1511 = vunpack.c.l.b16 %v487
      %v1512 = vunpack.c.l.b16 %v488
      %v1513 = vunpack.c.l.b16 %v489
      %v1514 = vunpack.c.l.b16 %v490
      %v1515 = vunpack.c.l.b16 %v491
      %v1516 = vunpack.c.l.b16 %v492
      %v1517 = vpack.c.b16 %v1374, %v1373
      %v1518 = vpack.c.b16 %v1376, %v1375
      %v1519 = vpack.c.b16 %v1378, %v1377
      %v1520 = vpack.c.b16 %v1380, %v1379
      %v1521 = vpack.c.b16 %v1382, %v1381
      %v1522 = vpack.c.b16 %v1384, %v1383
      %v1523 = vpack.c.b16 %v1386, %v1385
      %v1524 = vpack.c.b16 %v1388, %v1387
      %v1525 = vpack.c.b16 %v1390, %v1389
      %v1526 = vpack.c.b16 %v1392, %v1391
      %v1527 = vpack.c.b16 %v1394, %v1393
      %v1528 = vpack.c.b16 %v1396, %v1395
      %v1529 = vpack.c.b16 %v1398, %v1397
      %v1530 = vpack.c.b16 %v1400, %v1399
      %v1531 = vpack.c.b16 %v1402, %v1401
      %v1532 = vpack.c.b16 %v1404, %v1403
      %v1533 = vpack.c.b16 %v1406, %v1405
      %v1534 = vpack.c.b16 %v1408, %v1407
      %v1535 = vpack.c.b16 %v1410, %v1409
      %v1536 = vpack.c.b16 %v1412, %v1411
      %v1537 = vpack.c.b16 %v1414, %v1413
      %v1538 = vpack.c.b16 %v1416, %v1415
      %v1539 = vpack.c.b16 %v1418, %v1417
      %v1540 = vpack.c.b16 %v1420, %v1419
      %v1541 = vpack.c.b16 %v1422, %v1421
      %v1542 = vpack.c.b16 %v1424, %v1423
      %v1543 = vpack.c.b16 %v1426, %v1425
      %v1544 = vpack.c.b16 %v1428, %v1427
      %v1545 = vpack.c.b16 %v1430, %v1429
      %v1546 = vpack.c.b16 %v1432, %v1431
      %v1547 = vpack.c.b16 %v1434, %v1433
      %v1548 = vpack.c.b16 %v1436, %v1435
      %v1549 = vpack.c.b16 %v1438, %v1437
      %v1550 = vpack.c.b16 %v1440, %v1439
      %v1551 = vpack.c.b16 %v1442, %v1441
      %v1552 = vpack.c.b16 %v1444, %v1443
      %v1553 = vpack.c.b16 %v1446, %v1445
      %v1554 = vpack.c.b16 %v1448, %v1447
      %v1555 = vpack.c.b16 %v1450, %v1449
      %v1556 = vpack.c.b16 %v1452, %v1451
      %v1557 = vpack.c.b16 %v1454, %v1453
      %v1558 = vpack.c.b16 %v1456, %v1455
      %v1559 = vpack.c.b16 %v1458, %v1457
      %v1560 = vpack.c.b16 %v1460, %v1459
      %v1561 = vpack.c.b16 %v1462, %v1461
      %v1562 = vpack.c.b16 %v1464, %v1463
      %v1563 = vpack.c.b16 %v1466, %v1465
      %v1564 = vpack.c.b16 %v1468, %v1467
      %v1565 = vpack.c.b16 %v1470, %v1469
      %v1566 = vpack.c.b16 %v1472, %v1471
      %v1567 = vpack.c.b16 %v1474, %v1473
      %v1568 = vpack.c.b16 %v1476, %v1475
      %v1569 = vpack.c.b16 %v1478, %v1477
      %v1570 = vpack.c.b16 %v1480, %v1479
      %v1571 = vpack.c.b16 %v1482, %v1481
      %v1572 = vpack.c.b16 %v1484, %v1483
      %v1573 = vpack.c.b16 %v1486, %v1485
      %v1574 = vpack.c.b16 %v1488, %v1487
      %v1575 = vpack.c.b16 %v1490, %v1489
      %v1576 = vpack.c.b16 %v1492, %v1491
      %v1577 = vpack.c.b16 %v1494, %v1493
      %v1578 = vpack.c.b16 %v1496, %v1495
      %v1579 = vpack.c.b16 %v1498, %v1497
      %v1580 = vpack.c.b16 %v1500, %v1499
      %v1581 = vpack.c.b16 %v1502, %v1501
      %v1582 = vpack.c.b16 %v1504, %v1503
      %v1583 = vpack.c.b16 %v1506, %v1505
      %v1584 = vpack.c.b16 %v1508, %v1507
      %v1585 = vpack.c.b16 %v1510, %v1509
      %v1586 = vpack.c.b16 %v1512, %v1511
      %v1587 = vpack.c.b16 %v1514, %v1513
      %v1588 = vpack.c.b16 %v1516, %v1515
      %1661 = vmatprep.subr.bf16.mxu0 0
      %1662 = vmatpush1.bf16.msra.mxu0 %v1517
      %1663 = vmatprep.subr.bf16.mxu0 0
      %1664 = vmatpush1.bf16.msra.mxu0 %v1518
      %1665 = vmatprep.subr.bf16.mxu0 0
      %1666 = vmatpush1.bf16.msra.mxu0 %v1519
      %1667 = vmatprep.subr.bf16.mxu0 0
      %1668 = vmatpush1.bf16.msra.mxu0 %v1520
      %1669 = vmatprep.subr.bf16.mxu0 0
      %1670 = vmatpush1.bf16.msra.mxu0 %v1521
      %1671 = vmatprep.subr.bf16.mxu0 0
      %1672 = vmatpush1.bf16.msra.mxu0 %v1522
      %1673 = vmatprep.subr.bf16.mxu0 0
      %1674 = vmatpush1.bf16.msra.mxu0 %v1523
      %1675 = vmatprep.subr.bf16.mxu0 0
      %1676 = vmatpush1.bf16.msra.mxu0 %v1524
      %1677 = vmatprep.subr.bf16.mxu0 0
      %1678 = vmatpush1.bf16.msra.mxu0 %v1525
      %1679 = vmatprep.subr.bf16.mxu0 0
      %1680 = vmatpush1.bf16.msra.mxu0 %v1526
      %1681 = vmatprep.subr.bf16.mxu0 0
      %1682 = vmatpush1.bf16.msra.mxu0 %v1527
      %1683 = vmatprep.subr.bf16.mxu0 0
      %1684 = vmatpush1.bf16.msra.mxu0 %v1528
      %1685 = vmatprep.subr.bf16.mxu0 0
      %1686 = vmatpush1.bf16.msra.mxu0 %v1529
      %1687 = vmatprep.subr.bf16.mxu0 0
      %1688 = vmatpush1.bf16.msra.mxu0 %v1530
      %1689 = vmatprep.subr.bf16.mxu0 0
      %1690 = vmatpush1.bf16.msra.mxu0 %v1531
      %1691 = vmatprep.subr.bf16.mxu0 0
      %1692 = vmatpush1.bf16.msra.mxu0 %v1532
      %1693 = vmatprep.mubr.bf16.mxu0 %v942
      %1694 = vmatmul.mubr.bf16.gmra.mrb[0].mxu0 %v941
      %v1695 = vpop.f32.mrb[0].mxu0
      %v1696 = vadd.f32 0.0, %v1695
      %v1697 = vpop.f32.mrb[0].mxu0
      %v1698 = vpop.f32.mrb[0].mxu0
      %v1699 = vadd.f32 0.0, %v1698
      %v1700 = vpop.f32.mrb[0].mxu0
      %1701 = vmatprep.mubr.bf16.mxu0 %v951
      %1702 = vmatmul.mubr.bf16.gmra.mrb[0].mxu0 %v950
      %v1703 = vpop.f32.mrb[0].mxu0
      %v1704 = vadd.f32 0.0, %v1703
      %v1705 = vpop.f32.mrb[0].mxu0
      %v1706 = vpop.f32.mrb[0].mxu0
      %v1707 = vadd.f32 0.0, %v1706
      %v1708 = vpop.f32.mrb[0].mxu0
      %1709 = vmatprep.mubr.bf16.mxu0 %v960
      %1710 = vmatmul.mubr.bf16.gmra.mrb[0].mxu0 %v959
      %v1711 = vpop.f32.mrb[0].mxu0
      %v1712 = vadd.f32 0.0, %v1711
      %v1713 = vpop.f32.mrb[0].mxu0
      %v1714 = vpop.f32.mrb[0].mxu0
      %v1715 = vadd.f32 0.0, %v1714
      %v1716 = vpop.f32.mrb[0].mxu0
      %1717 = vmatprep.mubr.bf16.mxu0 %v969
      %1718 = vmatmul.mubr.bf16.gmra.mrb[0].mxu0 %v968
      %v1719 = vpop.f32.mrb[0].mxu0
      %v1720 = vadd.f32 0.0, %v1719
      %v1721 = vpop.f32.mrb[0].mxu0
      %v1722 = vpop.f32.mrb[0].mxu0
      %v1723 = vadd.f32 0.0, %v1722
      %v1724 = vpop.f32.mrb[0].mxu0
      %1725 = vmatprep.mubr.bf16.mxu0 %v978
      %1726 = vmatmul.mubr.bf16.gmra.mrb[0].mxu0 %v977
      %v1727 = vpop.f32.mrb[0].mxu0
      %v1728 = vadd.f32 0.0, %v1727
      %v1729 = vpop.f32.mrb[0].mxu0
      %v1730 = vpop.f32.mrb[0].mxu0
      %v1731 = vadd.f32 0.0, %v1730
      %v1732 = vpop.f32.mrb[0].mxu0
      %1733 = vmatprep.mubr.bf16.mxu0 %v987
      %1734 = vmatmul.mubr.bf16.gmra.mrb[0].mxu0 %v986
      %v1735 = vpop.f32.mrb[0].mxu0
      %v1736 = vadd.f32 0.0, %v1735
      %v1737 = vpop.f32.mrb[0].mxu0
      %v1738 = vpop.f32.mrb[0].mxu0
      %v1739 = vadd.f32 0.0, %v1738
      %v1740 = vpop.f32.mrb[0].mxu0
      %1741 = vmatprep.mubr.bf16.mxu0 %v996
      %1742 = vmatmul.mubr.bf16.gmra.mrb[0].mxu0 %v995
      %v1743 = vpop.f32.mrb[0].mxu0
      %v1744 = vadd.f32 0.0, %v1743
      %v1745 = vpop.f32.mrb[0].mxu0
      %v1746 = vpop.f32.mrb[0].mxu0
      %v1747 = vadd.f32 0.0, %v1746
      %v1748 = vpop.f32.mrb[0].mxu0
      %1749 = vmatprep.mubr.bf16.mxu0 %v1005
      %1750 = vmatmul.mubr.bf16.gmra.mrb[0].mxu0 %v1004
      %v1751 = vpop.f32.mrb[0].mxu0
      %v1752 = vadd.f32 0.0, %v1751
      %v1753 = vpop.f32.mrb[0].mxu0
      %v1754 = vpop.f32.mrb[0].mxu0
      %v1755 = vadd.f32 0.0, %v1754
      %v1756 = vpop.f32.mrb[0].mxu0
      %1757 = vmatprep.mubr.bf16.mxu0 %v1014
      %1758 = vmatmul.mubr.bf16.gmra.mrb[0].mxu0 %v1013
      %v1759 = vpop.f32.mrb[0].mxu0
      %v1760 = vadd.f32 0.0, %v1759
      %v1761 = vpop.f32.mrb[0].mxu0
      %v1762 = vpop.f32.mrb[0].mxu0
      %v1763 = vadd.f32 0.0, %v1762
      %v1764 = vpop.f32.mrb[0].mxu0
      %1765 = vmatprep.mubr.bf16.mxu0 %v1023
      %1766 = vmatmul.mubr.bf16.gmra.mrb[0].mxu0 %v1022
      %v1767 = vpop.f32.mrb[0].mxu0
      %v1768 = vadd.f32 0.0, %v1767
      %v1769 = vpop.f32.mrb[0].mxu0
      %v1770 = vpop.f32.mrb[0].mxu0
      %v1771 = vadd.f32 0.0, %v1770
      %v1772 = vpop.f32.mrb[0].mxu0
      %1773 = vmatprep.mubr.bf16.mxu0 %v1032
      %1774 = vmatmul.mubr.bf16.gmra.mrb[0].mxu0 %v1031
      %v1775 = vpop.f32.mrb[0].mxu0
      %v1776 = vadd.f32 0.0, %v1775
      %v1777 = vpop.f32.mrb[0].mxu0
      %v1778 = vpop.f32.mrb[0].mxu0
      %v1779 = vadd.f32 0.0, %v1778
      %v1780 = vpop.f32.mrb[0].mxu0
      %1781 = vmatprep.mubr.bf16.mxu0 %v1041
      %1782 = vmatmul.mubr.bf16.gmra.mrb[0].mxu0 %v1040
      %v1783 = vpop.f32.mrb[0].mxu0
      %v1784 = vadd.f32 0.0, %v1783
      %v1785 = vpop.f32.mrb[0].mxu0
      %v1786 = vpop.f32.mrb[0].mxu0
      %v1787 = vadd.f32 0.0, %v1786
      %v1788 = vpop.f32.mrb[0].mxu0
      %1789 = vmatprep.mubr.bf16.mxu0 %v1050
      %1790 = vmatmul.mubr.bf16.gmra.mrb[0].mxu0 %v1049
      %v1791 = vpop.f32.mrb[0].mxu0
      %v1792 = vadd.f32 0.0, %v1791
      %v1793 = vpop.f32.mrb[0].mxu0
      %v1794 = vpop.f32.mrb[0].mxu0
      %v1795 = vadd.f32 0.0, %v1794
      %v1796 = vpop.f32.mrb[0].mxu0
      %1797 = vmatprep.mubr.bf16.mxu0 %v1059
      %1798 = vmatmul.mubr.bf16.gmra.mrb[0].mxu0 %v1058
      %v1799 = vpop.f32.mrb[0].mxu0
      %v1800 = vadd.f32 0.0, %v1799
      %v1801 = vpop.f32.mrb[0].mxu0
      %v1802 = vpop.f32.mrb[0].mxu0
      %v1803 = vadd.f32 0.0, %v1802
      %v1804 = vpop.f32.mrb[0].mxu0
      %1805 = vmatprep.mubr.bf16.mxu0 %v1068
      %1806 = vmatmul.mubr.bf16.gmra.mrb[0].mxu0 %v1067
      %v1807 = vpop.f32.mrb[0].mxu0
      %v1808 = vadd.f32 0.0, %v1807
      %v1809 = vpop.f32.mrb[0].mxu0
      %v1810 = vpop.f32.mrb[0].mxu0
      %v1811 = vadd.f32 0.0, %v1810
      %v1812 = vpop.f32.mrb[0].mxu0
      %1813 = vmatprep.mubr.bf16.mxu0 %v1077
      %1814 = vmatmul.mubr.bf16.gmra.mrb[0].mxu0 %v1076
      %v1815 = vpop.f32.mrb[0].mxu0
      %v1816 = vadd.f32 0.0, %v1815
      %v1817 = vpop.f32.mrb[0].mxu0
      %v1818 = vpop.f32.mrb[0].mxu0
      %v1819 = vadd.f32 0.0, %v1818
      %v1820 = vpop.f32.mrb[0].mxu0
      %1821 = vdwg.mxu0
      %1822 = vmatprep.subr.bf16.mxu0 0
      %1823 = vmatpush1.bf16.msra.mxu0 %v1533
      %1824 = vmatprep.subr.bf16.mxu0 0
      %1825 = vmatpush1.bf16.msra.mxu0 %v1534
      %1826 = vmatprep.subr.bf16.mxu0 0
      %1827 = vmatpush1.bf16.msra.mxu0 %v1535
      %1828 = vmatprep.subr.bf16.mxu0 0
      %1829 = vmatpush1.bf16.msra.mxu0 %v1536
      %1830 = vmatprep.subr.bf16.mxu0 0
      %1831 = vmatpush1.bf16.msra.mxu0 %v1537
      %1832 = vmatprep.subr.bf16.mxu0 0
      %1833 = vmatpush1.bf16.msra.mxu0 %v1538
      %1834 = vmatprep.subr.bf16.mxu0 0
      %1835 = vmatpush1.bf16.msra.mxu0 %v1539
      %1836 = vmatprep.subr.bf16.mxu0 0
      %1837 = vmatpush1.bf16.msra.mxu0 %v1540
      %1838 = vmatprep.subr.bf16.mxu0 0
      %1839 = vmatpush1.bf16.msra.mxu0 %v1541
      %1840 = vmatprep.subr.bf16.mxu0 0
      %1841 = vmatpush1.bf16.msra.mxu0 %v1542
      %1842 = vmatprep.subr.bf16.mxu0 0
      %1843 = vmatpush1.bf16.msra.mxu0 %v1543
      %1844 = vmatprep.subr.bf16.mxu0 0
      %1845 = vmatpush1.bf16.msra.mxu0 %v1544
      %1846 = vmatprep.subr.bf16.mxu0 0
      %1847 = vmatpush1.bf16.msra.mxu0 %v1545
      %1848 = vmatprep.subr.bf16.mxu0 0
      %1849 = vmatpush1.bf16.msra.mxu0 %v1546
      %1850 = vmatprep.subr.bf16.mxu0 0
      %1851 = vmatpush1.bf16.msra.mxu0 %v1547
      %1852 = vmatprep.subr.bf16.mxu0 0
      %1853 = vmatpush1.bf16.msra.mxu0 %v1548
      %1854 = vmatprep.mubr.bf16.mxu0 %v944
      %1855 = vmatmul.mubr.bf16.gmra.mrb[0].mxu0 %v943
      %v1856 = vpop.f32.mrb[0].mxu0
      %v1857 = vadd.f32 %v1696, %v1856
      %v1858 = vpop.f32.mrb[0].mxu0
      %v1859 = vpop.f32.mrb[0].mxu0
      %v1860 = vadd.f32 %v1699, %v1859
      %v1861 = vpop.f32.mrb[0].mxu0
      %1862 = vmatprep.mubr.bf16.mxu0 %v953
      %1863 = vmatmul.mubr.bf16.gmra.mrb[0].mxu0 %v952
      %v1864 = vpop.f32.mrb[0].mxu0
      %v1865 = vadd.f32 %v1704, %v1864
      %v1866 = vpop.f32.mrb[0].mxu0
      %v1867 = vpop.f32.mrb[0].mxu0
      %v1868 = vadd.f32 %v1707, %v1867
      %v1869 = vpop.f32.mrb[0].mxu0
      %1870 = vmatprep.mubr.bf16.mxu0 %v962
      %1871 = vmatmul.mubr.bf16.gmra.mrb[0].mxu0 %v961
      %v1872 = vpop.f32.mrb[0].mxu0
      %v1873 = vadd.f32 %v1712, %v1872
      %v1874 = vpop.f32.mrb[0].mxu0
      %v1875 = vpop.f32.mrb[0].mxu0
      %v1876 = vadd.f32 %v1715, %v1875
      %v1877 = vpop.f32.mrb[0].mxu0
      %1878 = vmatprep.mubr.bf16.mxu0 %v971
      %1879 = vmatmul.mubr.bf16.gmra.mrb[0].mxu0 %v970
      %v1880 = vpop.f32.mrb[0].mxu0
      %v1881 = vadd.f32 %v1720, %v1880
      %v1882 = vpop.f32.mrb[0].mxu0
      %v1883 = vpop.f32.mrb[0].mxu0
      %v1884 = vadd.f32 %v1723, %v1883
      %v1885 = vpop.f32.mrb[0].mxu0
      %1886 = vmatprep.mubr.bf16.mxu0 %v980
      %1887 = vmatmul.mubr.bf16.gmra.mrb[0].mxu0 %v979
      %v1888 = vpop.f32.mrb[0].mxu0
      %v1889 = vadd.f32 %v1728, %v1888
      %v1890 = vpop.f32.mrb[0].mxu0
      %v1891 = vpop.f32.mrb[0].mxu0
      %v1892 = vadd.f32 %v1731, %v1891
      %v1893 = vpop.f32.mrb[0].mxu0
      %1894 = vmatprep.mubr.bf16.mxu0 %v989
      %1895 = vmatmul.mubr.bf16.gmra.mrb[0].mxu0 %v988
      %v1896 = vpop.f32.mrb[0].mxu0
      %v1897 = vadd.f32 %v1736, %v1896
      %v1898 = vpop.f32.mrb[0].mxu0
      %v1899 = vpop.f32.mrb[0].mxu0
      %v1900 = vadd.f32 %v1739, %v1899
      %v1901 = vpop.f32.mrb[0].mxu0
      %1902 = vmatprep.mubr.bf16.mxu0 %v998
      %1903 = vmatmul.mubr.bf16.gmra.mrb[0].mxu0 %v997
      %v1904 = vpop.f32.mrb[0].mxu0
      %v1905 = vadd.f32 %v1744, %v1904
      %v1906 = vpop.f32.mrb[0].mxu0
      %v1907 = vpop.f32.mrb[0].mxu0
      %v1908 = vadd.f32 %v1747, %v1907
      %v1909 = vpop.f32.mrb[0].mxu0
      %1910 = vmatprep.mubr.bf16.mxu0 %v1007
      %1911 = vmatmul.mubr.bf16.gmra.mrb[0].mxu0 %v1006
      %v1912 = vpop.f32.mrb[0].mxu0
      %v1913 = vadd.f32 %v1752, %v1912
      %v1914 = vpop.f32.mrb[0].mxu0
      %v1915 = vpop.f32.mrb[0].mxu0
      %v1916 = vadd.f32 %v1755, %v1915
      %v1917 = vpop.f32.mrb[0].mxu0
      %1918 = vmatprep.mubr.bf16.mxu0 %v1016
      %1919 = vmatmul.mubr.bf16.gmra.mrb[0].mxu0 %v1015
      %v1920 = vpop.f32.mrb[0].mxu0
      %v1921 = vadd.f32 %v1760, %v1920
      %v1922 = vpop.f32.mrb[0].mxu0
      %v1923 = vpop.f32.mrb[0].mxu0
      %v1924 = vadd.f32 %v1763, %v1923
      %v1925 = vpop.f32.mrb[0].mxu0
      %1926 = vmatprep.mubr.bf16.mxu0 %v1025
      %1927 = vmatmul.mubr.bf16.gmra.mrb[0].mxu0 %v1024
      %v1928 = vpop.f32.mrb[0].mxu0
      %v1929 = vadd.f32 %v1768, %v1928
      %v1930 = vpop.f32.mrb[0].mxu0
      %v1931 = vpop.f32.mrb[0].mxu0
      %v1932 = vadd.f32 %v1771, %v1931
      %v1933 = vpop.f32.mrb[0].mxu0
      %1934 = vmatprep.mubr.bf16.mxu0 %v1034
      %1935 = vmatmul.mubr.bf16.gmra.mrb[0].mxu0 %v1033
      %v1936 = vpop.f32.mrb[0].mxu0
      %v1937 = vadd.f32 %v1776, %v1936
      %v1938 = vpop.f32.mrb[0].mxu0
      %v1939 = vpop.f32.mrb[0].mxu0
      %v1940 = vadd.f32 %v1779, %v1939
      %v1941 = vpop.f32.mrb[0].mxu0
      %1942 = vmatprep.mubr.bf16.mxu0 %v1043
      %1943 = vmatmul.mubr.bf16.gmra.mrb[0].mxu0 %v1042
      %v1944 = vpop.f32.mrb[0].mxu0
      %v1945 = vadd.f32 %v1784, %v1944
      %v1946 = vpop.f32.mrb[0].mxu0
      %v1947 = vpop.f32.mrb[0].mxu0
      %v1948 = vadd.f32 %v1787, %v1947
      %v1949 = vpop.f32.mrb[0].mxu0
      %1950 = vmatprep.mubr.bf16.mxu0 %v1052
      %1951 = vmatmul.mubr.bf16.gmra.mrb[0].mxu0 %v1051
      %v1952 = vpop.f32.mrb[0].mxu0
      %v1953 = vadd.f32 %v1792, %v1952
      %v1954 = vpop.f32.mrb[0].mxu0
      %v1955 = vpop.f32.mrb[0].mxu0
      %v1956 = vadd.f32 %v1795, %v1955
      %v1957 = vpop.f32.mrb[0].mxu0
      %1958 = vmatprep.mubr.bf16.mxu0 %v1061
      %1959 = vmatmul.mubr.bf16.gmra.mrb[0].mxu0 %v1060
      %v1960 = vpop.f32.mrb[0].mxu0
      %v1961 = vadd.f32 %v1800, %v1960
      %v1962 = vpop.f32.mrb[0].mxu0
      %v1963 = vpop.f32.mrb[0].mxu0
      %v1964 = vadd.f32 %v1803, %v1963
      %v1965 = vpop.f32.mrb[0].mxu0
      %1966 = vmatprep.mubr.bf16.mxu0 %v1070
      %1967 = vmatmul.mubr.bf16.gmra.mrb[0].mxu0 %v1069
      %v1968 = vpop.f32.mrb[0].mxu0
      %v1969 = vadd.f32 %v1808, %v1968
      %v1970 = vpop.f32.mrb[0].mxu0
      %v1971 = vpop.f32.mrb[0].mxu0
      %v1972 = vadd.f32 %v1811, %v1971
      %v1973 = vpop.f32.mrb[0].mxu0
      %1974 = vmatprep.mubr.bf16.mxu0 %v1079
      %1975 = vmatmul.mubr.bf16.gmra.mrb[0].mxu0 %v1078
      %v1976 = vpop.f32.mrb[0].mxu0
      %v1977 = vadd.f32 %v1816, %v1976
      %v1978 = vpop.f32.mrb[0].mxu0
      %v1979 = vpop.f32.mrb[0].mxu0
      %v1980 = vadd.f32 %v1819, %v1979
      %v1981 = vpop.f32.mrb[0].mxu0
      %1982 = vdwg.mxu0
      %1983 = vmatprep.subr.bf16.mxu0 0
      %1984 = vmatpush1.bf16.msra.mxu0 %v1549
      %1985 = vmatprep.subr.bf16.mxu0 0
      %1986 = vmatpush1.bf16.msra.mxu0 %v1550
      %1987 = vmatprep.subr.bf16.mxu0 0
      %1988 = vmatpush1.bf16.msra.mxu0 %v1551
      %1989 = vmatprep.subr.bf16.mxu0 0
      %1990 = vmatpush1.bf16.msra.mxu0 %v1552
      %1991 = vmatprep.subr.bf16.mxu0 0
      %1992 = vmatpush1.bf16.msra.mxu0 %v1553
      %1993 = vmatprep.subr.bf16.mxu0 0
      %1994 = vmatpush1.bf16.msra.mxu0 %v1554
      %1995 = vmatprep.subr.bf16.mxu0 0
      %1996 = vmatpush1.bf16.msra.mxu0 %v1555
      %1997 = vmatprep.subr.bf16.mxu0 0
      %1998 = vmatpush1.bf16.msra.mxu0 %v1556
      %1999 = vmatprep.subr.bf16.mxu0 0
      %2000 = vmatpush1.bf16.msra.mxu0 %v1557
      %2001 = vmatprep.subr.bf16.mxu0 0
      %2002 = vmatpush1.bf16.msra.mxu0 %v1558
      %2003 = vmatprep.subr.bf16.mxu0 0
      %2004 = vmatpush1.bf16.msra.mxu0 %v1559
      %2005 = vmatprep.subr.bf16.mxu0 0
      %2006 = vmatpush1.bf16.msra.mxu0 %v1560
      %2007 = vmatprep.subr.bf16.mxu0 0
      %2008 = vmatpush1.bf16.msra.mxu0 %v1561
      %2009 = vmatprep.subr.bf16.mxu0 0
      %2010 = vmatpush1.bf16.msra.mxu0 %v1562
      %2011 = vmatprep.subr.bf16.mxu0 0
      %2012 = vmatpush1.bf16.msra.mxu0 %v1563
      %2013 = vmatprep.subr.bf16.mxu0 0
      %2014 = vmatpush1.bf16.msra.mxu0 %v1564
      %2015 = vmatprep.mubr.bf16.mxu0 %v946
      %2016 = vmatmul.mubr.bf16.gmra.mrb[0].mxu0 %v945
      %v2017 = vpop.f32.mrb[0].mxu0
      %v2018 = vadd.f32 %v1857, %v2017
      %v2019 = vpop.f32.mrb[0].mxu0
      %v2020 = vpop.f32.mrb[0].mxu0
      %v2021 = vadd.f32 %v1860, %v2020
      %v2022 = vpop.f32.mrb[0].mxu0
      %2023 = vmatprep.mubr.bf16.mxu0 %v955
      %2024 = vmatmul.mubr.bf16.gmra.mrb[0].mxu0 %v954
      %v2025 = vpop.f32.mrb[0].mxu0
      %v2026 = vadd.f32 %v1865, %v2025
      %v2027 = vpop.f32.mrb[0].mxu0
      %v2028 = vpop.f32.mrb[0].mxu0
      %v2029 = vadd.f32 %v1868, %v2028
      %v2030 = vpop.f32.mrb[0].mxu0
      %2031 = vmatprep.mubr.bf16.mxu0 %v964
      %2032 = vmatmul.mubr.bf16.gmra.mrb[0].mxu0 %v963
      %v2033 = vpop.f32.mrb[0].mxu0
      %v2034 = vadd.f32 %v1873, %v2033
      %v2035 = vpop.f32.mrb[0].mxu0
      %v2036 = vpop.f32.mrb[0].mxu0
      %v2037 = vadd.f32 %v1876, %v2036
      %v2038 = vpop.f32.mrb[0].mxu0
      %2039 = vmatprep.mubr.bf16.mxu0 %v973
      %2040 = vmatmul.mubr.bf16.gmra.mrb[0].mxu0 %v972
      %v2041 = vpop.f32.mrb[0].mxu0
      %v2042 = vadd.f32 %v1881, %v2041
      %v2043 = vpop.f32.mrb[0].mxu0
      %v2044 = vpop.f32.mrb[0].mxu0
      %v2045 = vadd.f32 %v1884, %v2044
      %v2046 = vpop.f32.mrb[0].mxu0
      %2047 = vmatprep.mubr.bf16.mxu0 %v982
      %2048 = vmatmul.mubr.bf16.gmra.mrb[0].mxu0 %v981
      %v2049 = vpop.f32.mrb[0].mxu0
      %v2050 = vadd.f32 %v1889, %v2049
      %v2051 = vpop.f32.mrb[0].mxu0
      %v2052 = vpop.f32.mrb[0].mxu0
      %v2053 = vadd.f32 %v1892, %v2052
      %v2054 = vpop.f32.mrb[0].mxu0
      %2055 = vmatprep.mubr.bf16.mxu0 %v991
      %2056 = vmatmul.mubr.bf16.gmra.mrb[0].mxu0 %v990
      %v2057 = vpop.f32.mrb[0].mxu0
      %v2058 = vadd.f32 %v1897, %v2057
      %v2059 = vpop.f32.mrb[0].mxu0
      %v2060 = vpop.f32.mrb[0].mxu0
      %v2061 = vadd.f32 %v1900, %v2060
      %v2062 = vpop.f32.mrb[0].mxu0
      %2063 = vmatprep.mubr.bf16.mxu0 %v1000
      %2064 = vmatmul.mubr.bf16.gmra.mrb[0].mxu0 %v999
      %v2065 = vpop.f32.mrb[0].mxu0
      %v2066 = vadd.f32 %v1905, %v2065
      %v2067 = vpop.f32.mrb[0].mxu0
      %v2068 = vpop.f32.mrb[0].mxu0
      %v2069 = vadd.f32 %v1908, %v2068
      %v2070 = vpop.f32.mrb[0].mxu0
      %2071 = vmatprep.mubr.bf16.mxu0 %v1009
      %2072 = vmatmul.mubr.bf16.gmra.mrb[0].mxu0 %v1008
      %v2073 = vpop.f32.mrb[0].mxu0
      %v2074 = vadd.f32 %v1913, %v2073
      %v2075 = vpop.f32.mrb[0].mxu0
      %v2076 = vpop.f32.mrb[0].mxu0
      %v2077 = vadd.f32 %v1916, %v2076
      %v2078 = vpop.f32.mrb[0].mxu0
      %2079 = vmatprep.mubr.bf16.mxu0 %v1018
      %2080 = vmatmul.mubr.bf16.gmra.mrb[0].mxu0 %v1017
      %v2081 = vpop.f32.mrb[0].mxu0
      %v2082 = vadd.f32 %v1921, %v2081
      %v2083 = vpop.f32.mrb[0].mxu0
      %v2084 = vpop.f32.mrb[0].mxu0
      %v2085 = vadd.f32 %v1924, %v2084
      %v2086 = vpop.f32.mrb[0].mxu0
      %2087 = vmatprep.mubr.bf16.mxu0 %v1027
      %2088 = vmatmul.mubr.bf16.gmra.mrb[0].mxu0 %v1026
      %v2089 = vpop.f32.mrb[0].mxu0
      %v2090 = vadd.f32 %v1929, %v2089
      %v2091 = vpop.f32.mrb[0].mxu0
      %v2092 = vpop.f32.mrb[0].mxu0
      %v2093 = vadd.f32 %v1932, %v2092
      %v2094 = vpop.f32.mrb[0].mxu0
      %2095 = vmatprep.mubr.bf16.mxu0 %v1036
      %2096 = vmatmul.mubr.bf16.gmra.mrb[0].mxu0 %v1035
      %v2097 = vpop.f32.mrb[0].mxu0
      %v2098 = vadd.f32 %v1937, %v2097
      %v2099 = vpop.f32.mrb[0].mxu0
      %v2100 = vpop.f32.mrb[0].mxu0
      %v2101 = vadd.f32 %v1940, %v2100
      %v2102 = vpop.f32.mrb[0].mxu0
      %2103 = vmatprep.mubr.bf16.mxu0 %v1045
      %2104 = vmatmul.mubr.bf16.gmra.mrb[0].mxu0 %v1044
      %v2105 = vpop.f32.mrb[0].mxu0
      %v2106 = vadd.f32 %v1945, %v2105
      %v2107 = vpop.f32.mrb[0].mxu0
      %v2108 = vpop.f32.mrb[0].mxu0
      %v2109 = vadd.f32 %v1948, %v2108
      %v2110 = vpop.f32.mrb[0].mxu0
      %2111 = vmatprep.mubr.bf16.mxu0 %v1054
      %2112 = vmatmul.mubr.bf16.gmra.mrb[0].mxu0 %v1053
      %v2113 = vpop.f32.mrb[0].mxu0
      %v2114 = vadd.f32 %v1953, %v2113
      %v2115 = vpop.f32.mrb[0].mxu0
      %v2116 = vpop.f32.mrb[0].mxu0
      %v2117 = vadd.f32 %v1956, %v2116
      %v2118 = vpop.f32.mrb[0].mxu0
      %2119 = vmatprep.mubr.bf16.mxu0 %v1063
      %2120 = vmatmul.mubr.bf16.gmra.mrb[0].mxu0 %v1062
      %v2121 = vpop.f32.mrb[0].mxu0
      %v2122 = vadd.f32 %v1961, %v2121
      %v2123 = vpop.f32.mrb[0].mxu0
      %v2124 = vpop.f32.mrb[0].mxu0
      %v2125 = vadd.f32 %v1964, %v2124
      %v2126 = vpop.f32.mrb[0].mxu0
      %2127 = vmatprep.mubr.bf16.mxu0 %v1072
      %2128 = vmatmul.mubr.bf16.gmra.mrb[0].mxu0 %v1071
      %v2129 = vpop.f32.mrb[0].mxu0
      %v2130 = vadd.f32 %v1969, %v2129
      %v2131 = vpop.f32.mrb[0].mxu0
      %v2132 = vpop.f32.mrb[0].mxu0
      %v2133 = vadd.f32 %v1972, %v2132
      %v2134 = vpop.f32.mrb[0].mxu0
      %2135 = vmatprep.mubr.bf16.mxu0 %v1081
      %2136 = vmatmul.mubr.bf16.gmra.mrb[0].mxu0 %v1080
      %v2137 = vpop.f32.mrb[0].mxu0
      %v2138 = vadd.f32 %v1977, %v2137
      %v2139 = vpop.f32.mrb[0].mxu0
      %v2140 = vpop.f32.mrb[0].mxu0
      %v2141 = vadd.f32 %v1980, %v2140
      %v2142 = vpop.f32.mrb[0].mxu0
      %2143 = vdwg.mxu0
      %2144 = vmatprep.subr.bf16.mxu0 0
      %2145 = vmatpush1.bf16.msra.mxu0 %v1565
      %2146 = vmatprep.subr.bf16.mxu0 0
      %2147 = vmatpush1.bf16.msra.mxu0 %v1566
      %2148 = vmatprep.subr.bf16.mxu0 0
      %2149 = vmatpush1.bf16.msra.mxu0 %v1567
      %2150 = vmatprep.subr.bf16.mxu0 0
      %2151 = vmatpush1.bf16.msra.mxu0 %v1568
      %2152 = vmatprep.subr.bf16.mxu0 0
      %2153 = vmatpush1.bf16.msra.mxu0 %v1569
      %2154 = vmatprep.subr.bf16.mxu0 0
      %2155 = vmatpush1.bf16.msra.mxu0 %v1570
      %2156 = vmatprep.subr.bf16.mxu0 0
      %2157 = vmatpush1.bf16.msra.mxu0 %v1571
      %2158 = vmatprep.subr.bf16.mxu0 0
      %2159 = vmatpush1.bf16.msra.mxu0 %v1572
      %2160 = vmatprep.subr.bf16.mxu0 0
      %2161 = vmatpush1.bf16.msra.mxu0 %v1573
      %2162 = vmatprep.subr.bf16.mxu0 0
      %2163 = vmatpush1.bf16.msra.mxu0 %v1574
      %2164 = vmatprep.subr.bf16.mxu0 0
      %2165 = vmatpush1.bf16.msra.mxu0 %v1575
      %2166 = vmatprep.subr.bf16.mxu0 0
      %2167 = vmatpush1.bf16.msra.mxu0 %v1576
      %2168 = vmatprep.subr.bf16.mxu0 0
      %2169 = vmatpush1.bf16.msra.mxu0 %v1577
      %2170 = vmatprep.subr.bf16.mxu0 0
      %2171 = vmatpush1.bf16.msra.mxu0 %v1578
      %2172 = vmatprep.subr.bf16.mxu0 0
      %2173 = vmatpush1.bf16.msra.mxu0 %v1579
      %2174 = vmatprep.subr.bf16.mxu0 0
      %2175 = vmatpush1.bf16.msra.mxu0 %v1580
      %2176 = vmatprep.mubr.bf16.mxu0 %v948
      %2177 = vmatmul.mubr.bf16.gmra.mrb[0].mxu0 %v947
      %v2178 = vpop.f32.mrb[0].mxu0
      %v2179 = vadd.f32 %v2018, %v2178
      %v2180 = vpop.f32.mrb[0].mxu0
      %v2181 = vpop.f32.mrb[0].mxu0
      %v2182 = vadd.f32 %v2021, %v2181
      %v2183 = vpop.f32.mrb[0].mxu0
      %2184 = vmatprep.mubr.bf16.mxu0 %v957
      %2185 = vmatmul.mubr.bf16.gmra.mrb[0].mxu0 %v956
      %v2186 = vpop.f32.mrb[0].mxu0
      %v2187 = vadd.f32 %v2026, %v2186
      %v2188 = vpop.f32.mrb[0].mxu0
      %v2189 = vpop.f32.mrb[0].mxu0
      %v2190 = vadd.f32 %v2029, %v2189
      %v2191 = vpop.f32.mrb[0].mxu0
      %2192 = vmatprep.mubr.bf16.mxu0 %v966
      %2193 = vmatmul.mubr.bf16.gmra.mrb[0].mxu0 %v965
      %v2194 = vpop.f32.mrb[0].mxu0
      %v2195 = vadd.f32 %v2034, %v2194
      %v2196 = vpop.f32.mrb[0].mxu0
      %v2197 = vpop.f32.mrb[0].mxu0
      %v2198 = vadd.f32 %v2037, %v2197
      %v2199 = vpop.f32.mrb[0].mxu0
      %2200 = vmatprep.mubr.bf16.mxu0 %v975
      %2201 = vmatmul.mubr.bf16.gmra.mrb[0].mxu0 %v974
      %v2202 = vpop.f32.mrb[0].mxu0
      %v2203 = vadd.f32 %v2042, %v2202
      %v2204 = vpop.f32.mrb[0].mxu0
      %v2205 = vpop.f32.mrb[0].mxu0
      %v2206 = vadd.f32 %v2045, %v2205
      %v2207 = vpop.f32.mrb[0].mxu0
      %2208 = vmatprep.mubr.bf16.mxu0 %v984
      %2209 = vmatmul.mubr.bf16.gmra.mrb[0].mxu0 %v983
      %v2210 = vpop.f32.mrb[0].mxu0
      %v2211 = vadd.f32 %v2050, %v2210
      %v2212 = vpop.f32.mrb[0].mxu0
      %v2213 = vpop.f32.mrb[0].mxu0
      %v2214 = vadd.f32 %v2053, %v2213
      %v2215 = vpop.f32.mrb[0].mxu0
      %2216 = vmatprep.mubr.bf16.mxu0 %v993
      %2217 = vmatmul.mubr.bf16.gmra.mrb[0].mxu0 %v992
      %v2218 = vpop.f32.mrb[0].mxu0
      %v2219 = vadd.f32 %v2058, %v2218
      %v2220 = vpop.f32.mrb[0].mxu0
      %v2221 = vpop.f32.mrb[0].mxu0
      %v2222 = vadd.f32 %v2061, %v2221
      %v2223 = vpop.f32.mrb[0].mxu0
      %2224 = vmatprep.mubr.bf16.mxu0 %v1002
      %2225 = vmatmul.mubr.bf16.gmra.mrb[0].mxu0 %v1001
      %v2226 = vpop.f32.mrb[0].mxu0
      %v2227 = vadd.f32 %v2066, %v2226
      %v2228 = vpop.f32.mrb[0].mxu0
      %v2229 = vpop.f32.mrb[0].mxu0
      %v2230 = vadd.f32 %v2069, %v2229
      %v2231 = vpop.f32.mrb[0].mxu0
      %2232 = vmatprep.mubr.bf16.mxu0 %v1011
      %2233 = vmatmul.mubr.bf16.gmra.mrb[0].mxu0 %v1010
      %v2234 = vpop.f32.mrb[0].mxu0
      %v2235 = vadd.f32 %v2074, %v2234
      %v2236 = vpop.f32.mrb[0].mxu0
      %v2237 = vpop.f32.mrb[0].mxu0
      %v2238 = vadd.f32 %v2077, %v2237
      %v2239 = vpop.f32.mrb[0].mxu0
      %2240 = vmatprep.mubr.bf16.mxu0 %v1020
      %2241 = vmatmul.mubr.bf16.gmra.mrb[0].mxu0 %v1019
      %v2242 = vpop.f32.mrb[0].mxu0
      %v2243 = vadd.f32 %v2082, %v2242
      %v2244 = vpop.f32.mrb[0].mxu0
      %v2245 = vpop.f32.mrb[0].mxu0
      %v2246 = vadd.f32 %v2085, %v2245
      %v2247 = vpop.f32.mrb[0].mxu0
      %2248 = vmatprep.mubr.bf16.mxu0 %v1029
      %2249 = vmatmul.mubr.bf16.gmra.mrb[0].mxu0 %v1028
      %v2250 = vpop.f32.mrb[0].mxu0
      %v2251 = vadd.f32 %v2090, %v2250
      %v2252 = vpop.f32.mrb[0].mxu0
      %v2253 = vpop.f32.mrb[0].mxu0
      %v2254 = vadd.f32 %v2093, %v2253
      %v2255 = vpop.f32.mrb[0].mxu0
      %2256 = vmatprep.mubr.bf16.mxu0 %v1038
      %2257 = vmatmul.mubr.bf16.gmra.mrb[0].mxu0 %v1037
      %v2258 = vpop.f32.mrb[0].mxu0
      %v2259 = vadd.f32 %v2098, %v2258
      %v2260 = vpop.f32.mrb[0].mxu0
      %v2261 = vpop.f32.mrb[0].mxu0
      %v2262 = vadd.f32 %v2101, %v2261
      %v2263 = vpop.f32.mrb[0].mxu0
      %2264 = vmatprep.mubr.bf16.mxu0 %v1047
      %2265 = vmatmul.mubr.bf16.gmra.mrb[0].mxu0 %v1046
      %v2266 = vpop.f32.mrb[0].mxu0
      %v2267 = vadd.f32 %v2106, %v2266
      %v2268 = vpop.f32.mrb[0].mxu0
      %v2269 = vpop.f32.mrb[0].mxu0
      %v2270 = vadd.f32 %v2109, %v2269
      %v2271 = vpop.f32.mrb[0].mxu0
      %2272 = vmatprep.mubr.bf16.mxu0 %v1056
      %2273 = vmatmul.mubr.bf16.gmra.mrb[0].mxu0 %v1055
      %v2274 = vpop.f32.mrb[0].mxu0
      %v2275 = vadd.f32 %v2114, %v2274
      %v2276 = vpop.f32.mrb[0].mxu0
      %v2277 = vpop.f32.mrb[0].mxu0
      %v2278 = vadd.f32 %v2117, %v2277
      %v2279 = vpop.f32.mrb[0].mxu0
      %2280 = vmatprep.mubr.bf16.mxu0 %v1065
      %2281 = vmatmul.mubr.bf16.gmra.mrb[0].mxu0 %v1064
      %v2282 = vpop.f32.mrb[0].mxu0
      %v2283 = vadd.f32 %v2122, %v2282
      %v2284 = vpop.f32.mrb[0].mxu0
      %v2285 = vpop.f32.mrb[0].mxu0
      %v2286 = vadd.f32 %v2125, %v2285
      %v2287 = vpop.f32.mrb[0].mxu0
      %2288 = vmatprep.mubr.bf16.mxu0 %v1074
      %2289 = vmatmul.mubr.bf16.gmra.mrb[0].mxu0 %v1073
      %v2290 = vpop.f32.mrb[0].mxu0
      %v2291 = vadd.f32 %v2130, %v2290
      %v2292 = vpop.f32.mrb[0].mxu0
      %v2293 = vpop.f32.mrb[0].mxu0
      %v2294 = vadd.f32 %v2133, %v2293
      %v2295 = vpop.f32.mrb[0].mxu0
      %2296 = vmatprep.mubr.bf16.mxu0 %v1083
      %2297 = vmatmul.mubr.bf16.gmra.mrb[0].mxu0 %v1082
      %v2298 = vpop.f32.mrb[0].mxu0
      %v2299 = vadd.f32 %v2138, %v2298
      %v2300 = vpop.f32.mrb[0].mxu0
      %v2301 = vpop.f32.mrb[0].mxu0
      %v2302 = vadd.f32 %v2141, %v2301
      %v2303 = vpop.f32.mrb[0].mxu0
      %2304 = vdwg.mxu0
      %2305 = vmatprep.subr.bf16.mxu0 0
      %2306 = vmatpush1.bf16.msra.mxu0 %v1581
      %2307 = vmatprep.subr.bf16.mxu0 0
      %2308 = vmatpush1.bf16.msra.mxu0 %v1582
      %2309 = vmatprep.subr.bf16.mxu0 0
      %2310 = vmatpush1.bf16.msra.mxu0 %v1583
      %2311 = vmatprep.subr.bf16.mxu0 0
      %2312 = vmatpush1.bf16.msra.mxu0 %v1584
      %2313 = vmatprep.subr.bf16.mxu0 0
      %2314 = vmatpush1.bf16.msra.mxu0 %v1585
      %2315 = vmatprep.subr.bf16.mxu0 0
      %2316 = vmatpush1.bf16.msra.mxu0 %v1586
      %2317 = vmatprep.subr.bf16.mxu0 0
      %2318 = vmatpush1.bf16.msra.mxu0 %v1587
      %2319 = vmatprep.subr.bf16.mxu0 0
      %2320 = vmatpush1.bf16.msra.mxu0 %v1588
      %2321 = vmatprep.subr.bf16.mxu0 0
      %2322 = vmatpush1.bf16.msra.mxu0 0
      %2323 = vmatprep.subr.bf16.mxu0 0
      %2324 = vmatpush1.bf16.msra.mxu0 0
      %2325 = vmatprep.subr.bf16.mxu0 0
      %2326 = vmatpush1.bf16.msra.mxu0 0
      %2327 = vmatprep.subr.bf16.mxu0 0
      %2328 = vmatpush1.bf16.msra.mxu0 0
      %2329 = vmatprep.subr.bf16.mxu0 0
      %2330 = vmatpush1.bf16.msra.mxu0 0
      %2331 = vmatprep.subr.bf16.mxu0 0
      %2332 = vmatpush1.bf16.msra.mxu0 0
      %2333 = vmatprep.subr.bf16.mxu0 0
      %2334 = vmatpush1.bf16.msra.mxu0 0
      %2335 = vmatprep.subr.bf16.mxu0 0
      %2336 = vmatpush1.bf16.msra.mxu0 0
      %2337 = vmatprep.mubr.bf16.mxu0 0
      %2338 = vmatmul.mubr.bf16.gmra.mrb[0].mxu0 %v949
      %v2339 = vpop.f32.mrb[0].mxu0
      %v2340 = vadd.f32 %v2179, %v2339
      %v2341 = vpop.f32.mrb[0].mxu0
      %v2342 = vpop.f32.mrb[0].mxu0
      %v2343 = vadd.f32 %v2182, %v2342
      %v2344 = vpop.f32.mrb[0].mxu0
      %2345 = vmatprep.mubr.bf16.mxu0 0
      %2346 = vmatmul.mubr.bf16.gmra.mrb[0].mxu0 %v958
      %v2347 = vpop.f32.mrb[0].mxu0
      %v2348 = vadd.f32 %v2187, %v2347
      %v2349 = vpop.f32.mrb[0].mxu0
      %v2350 = vpop.f32.mrb[0].mxu0
      %v2351 = vadd.f32 %v2190, %v2350
      %v2352 = vpop.f32.mrb[0].mxu0
      %2353 = vmatprep.mubr.bf16.mxu0 0
      %2354 = vmatmul.mubr.bf16.gmra.mrb[0].mxu0 %v967
      %v2355 = vpop.f32.mrb[0].mxu0
      %v2356 = vadd.f32 %v2195, %v2355
      %v2357 = vpop.f32.mrb[0].mxu0
      %v2358 = vpop.f32.mrb[0].mxu0
      %v2359 = vadd.f32 %v2198, %v2358
      %v2360 = vpop.f32.mrb[0].mxu0
      %2361 = vmatprep.mubr.bf16.mxu0 0
      %2362 = vmatmul.mubr.bf16.gmra.mrb[0].mxu0 %v976
      %v2363 = vpop.f32.mrb[0].mxu0
      %v2364 = vadd.f32 %v2203, %v2363
      %v2365 = vpop.f32.mrb[0].mxu0
      %v2366 = vpop.f32.mrb[0].mxu0
      %v2367 = vadd.f32 %v2206, %v2366
      %v2368 = vpop.f32.mrb[0].mxu0
      %2369 = vmatprep.mubr.bf16.mxu0 0
      %2370 = vmatmul.mubr.bf16.gmra.mrb[0].mxu0 %v985
      %v2371 = vpop.f32.mrb[0].mxu0
      %v2372 = vadd.f32 %v2211, %v2371
      %v2373 = vpop.f32.mrb[0].mxu0
      %v2374 = vpop.f32.mrb[0].mxu0
      %v2375 = vadd.f32 %v2214, %v2374
      %v2376 = vpop.f32.mrb[0].mxu0
      %2377 = vmatprep.mubr.bf16.mxu0 0
      %2378 = vmatmul.mubr.bf16.gmra.mrb[0].mxu0 %v994
      %v2379 = vpop.f32.mrb[0].mxu0
      %v2380 = vadd.f32 %v2219, %v2379
      %v2381 = vpop.f32.mrb[0].mxu0
      %v2382 = vpop.f32.mrb[0].mxu0
      %v2383 = vadd.f32 %v2222, %v2382
      %v2384 = vpop.f32.mrb[0].mxu0
      %2385 = vmatprep.mubr.bf16.mxu0 0
      %2386 = vmatmul.mubr.bf16.gmra.mrb[0].mxu0 %v1003
      %v2387 = vpop.f32.mrb[0].mxu0
      %v2388 = vadd.f32 %v2227, %v2387
      %v2389 = vpop.f32.mrb[0].mxu0
      %v2390 = vpop.f32.mrb[0].mxu0
      %v2391 = vadd.f32 %v2230, %v2390
      %v2392 = vpop.f32.mrb[0].mxu0
      %2393 = vmatprep.mubr.bf16.mxu0 0
      %2394 = vmatmul.mubr.bf16.gmra.mrb[0].mxu0 %v1012
      %v2395 = vpop.f32.mrb[0].mxu0
      %v2396 = vadd.f32 %v2235, %v2395
      %v2397 = vpop.f32.mrb[0].mxu0
      %v2398 = vpop.f32.mrb[0].mxu0
      %v2399 = vadd.f32 %v2238, %v2398
      %v2400 = vpop.f32.mrb[0].mxu0
      %2401 = vmatprep.mubr.bf16.mxu0 0
      %2402 = vmatmul.mubr.bf16.gmra.mrb[0].mxu0 %v1021
      %v2403 = vpop.f32.mrb[0].mxu0
      %v2404 = vadd.f32 %v2243, %v2403
      %v2405 = vpop.f32.mrb[0].mxu0
      %v2406 = vpop.f32.mrb[0].mxu0
      %v2407 = vadd.f32 %v2246, %v2406
      %v2408 = vpop.f32.mrb[0].mxu0
      %2409 = vmatprep.mubr.bf16.mxu0 0
      %2410 = vmatmul.mubr.bf16.gmra.mrb[0].mxu0 %v1030
      %v2411 = vpop.f32.mrb[0].mxu0
      %v2412 = vadd.f32 %v2251, %v2411
      %v2413 = vpop.f32.mrb[0].mxu0
      %v2414 = vpop.f32.mrb[0].mxu0
      %v2415 = vadd.f32 %v2254, %v2414
      %v2416 = vpop.f32.mrb[0].mxu0
      %2417 = vmatprep.mubr.bf16.mxu0 0
      %2418 = vmatmul.mubr.bf16.gmra.mrb[0].mxu0 %v1039
      %v2419 = vpop.f32.mrb[0].mxu0
      %v2420 = vadd.f32 %v2259, %v2419
      %v2421 = vpop.f32.mrb[0].mxu0
      %v2422 = vpop.f32.mrb[0].mxu0
      %v2423 = vadd.f32 %v2262, %v2422
      %v2424 = vpop.f32.mrb[0].mxu0
      %2425 = vmatprep.mubr.bf16.mxu0 0
      %2426 = vmatmul.mubr.bf16.gmra.mrb[0].mxu0 %v1048
      %v2427 = vpop.f32.mrb[0].mxu0
      %v2428 = vadd.f32 %v2267, %v2427
      %v2429 = vpop.f32.mrb[0].mxu0
      %v2430 = vpop.f32.mrb[0].mxu0
      %v2431 = vadd.f32 %v2270, %v2430
      %v2432 = vpop.f32.mrb[0].mxu0
      %2433 = vmatprep.mubr.bf16.mxu0 0
      %2434 = vmatmul.mubr.bf16.gmra.mrb[0].mxu0 %v1057
      %v2435 = vpop.f32.mrb[0].mxu0
      %v2436 = vadd.f32 %v2275, %v2435
      %v2437 = vpop.f32.mrb[0].mxu0
      %v2438 = vpop.f32.mrb[0].mxu0
      %v2439 = vadd.f32 %v2278, %v2438
      %v2440 = vpop.f32.mrb[0].mxu0
      %2441 = vmatprep.mubr.bf16.mxu0 0
      %2442 = vmatmul.mubr.bf16.gmra.mrb[0].mxu0 %v1066
      %v2443 = vpop.f32.mrb[0].mxu0
      %v2444 = vadd.f32 %v2283, %v2443
      %v2445 = vpop.f32.mrb[0].mxu0
      %v2446 = vpop.f32.mrb[0].mxu0
      %v2447 = vadd.f32 %v2286, %v2446
      %v2448 = vpop.f32.mrb[0].mxu0
      %2449 = vmatprep.mubr.bf16.mxu0 0
      %2450 = vmatmul.mubr.bf16.gmra.mrb[0].mxu0 %v1075
      %v2451 = vpop.f32.mrb[0].mxu0
      %v2452 = vadd.f32 %v2291, %v2451
      %v2453 = vpop.f32.mrb[0].mxu0
      %v2454 = vpop.f32.mrb[0].mxu0
      %v2455 = vadd.f32 %v2294, %v2454
      %v2456 = vpop.f32.mrb[0].mxu0
      %2457 = vmatprep.mubr.bf16.mxu0 0
      %2458 = vmatmul.mubr.bf16.gmra.mrb[0].mxu0 %v1084
      %v2459 = vpop.f32.mrb[0].mxu0
      %v2460 = vadd.f32 %v2299, %v2459
      %v2461 = vpop.f32.mrb[0].mxu0
      %v2462 = vpop.f32.mrb[0].mxu0
      %v2463 = vadd.f32 %v2302, %v2462
      %v2464 = vpop.f32.mrb[0].mxu0
      %2465 = vdwg.mxu0
      %v2466 = vpack.c.bf16 %v2343, %v2340
      %v2467 = vpack.c.bf16 %v2351, %v2348
      %v2468 = vpack.c.bf16 %v2359, %v2356
      %v2469 = vpack.c.bf16 %v2367, %v2364
      %v2470 = vpack.c.bf16 %v2375, %v2372
      %v2471 = vpack.c.bf16 %v2383, %v2380
      %v2472 = vpack.c.bf16 %v2391, %v2388
      %v2473 = vpack.c.bf16 %v2399, %v2396
      %v2474 = vpack.c.bf16 %v2407, %v2404
      %v2475 = vpack.c.bf16 %v2415, %v2412
      %v2476 = vpack.c.bf16 %v2423, %v2420
      %v2477 = vpack.c.bf16 %v2431, %v2428
      %v2478 = vpack.c.bf16 %v2439, %v2436
      %v2479 = vpack.c.bf16 %v2447, %v2444
      %v2480 = vpack.c.bf16 %v2455, %v2452
      %v2481 = vpack.c.bf16 %v2463, %v2460
      %v2498 = vunpack.c.l.b16 %v2466
      %v2499 = vunpack.c.h.b16 %v2466
      %v2500 = vunpack.c.l.b16 %v2467
      %v2501 = vunpack.c.h.b16 %v2467
      %v2502 = vunpack.c.l.b16 %v2468
      %v2503 = vunpack.c.h.b16 %v2468
      %v2504 = vunpack.c.l.b16 %v2469
      %v2505 = vunpack.c.h.b16 %v2469
      %v2506 = vunpack.c.l.b16 %v2470
      %v2507 = vunpack.c.h.b16 %v2470
      %v2508 = vunpack.c.l.b16 %v2471
      %v2509 = vunpack.c.h.b16 %v2471
      %v2510 = vunpack.c.l.b16 %v2472
      %v2511 = vunpack.c.h.b16 %v2472
      %v2512 = vunpack.c.l.b16 %v2473
      %v2513 = vunpack.c.h.b16 %v2473
      %v2514 = vunpack.c.l.b16 %v2474
      %v2515 = vunpack.c.h.b16 %v2474
      %v2516 = vunpack.c.l.b16 %v2475
      %v2517 = vunpack.c.h.b16 %v2475
      %v2518 = vunpack.c.l.b16 %v2476
      %v2519 = vunpack.c.h.b16 %v2476
      %v2520 = vunpack.c.l.b16 %v2477
      %v2521 = vunpack.c.h.b16 %v2477
      %v2522 = vunpack.c.l.b16 %v2478
      %v2523 = vunpack.c.h.b16 %v2478
      %v2524 = vunpack.c.l.b16 %v2479
      %v2525 = vunpack.c.h.b16 %v2479
      %v2526 = vunpack.c.l.b16 %v2480
      %v2527 = vunpack.c.h.b16 %v2480
      %v2528 = vunpack.c.l.b16 %v2481
      %v2529 = vunpack.c.h.b16 %v2481
      %v2530 = vpack.c.b16 %v2498, %v2498
      %v2531 = vpack.c.b16 %v2499, %v2499
      %v2532 = vpack.c.b16 %v2500, %v2500
      %v2533 = vpack.c.b16 %v2501, %v2501
      %v2534 = vpack.c.b16 %v2502, %v2502
      %v2535 = vpack.c.b16 %v2503, %v2503
      %v2536 = vpack.c.b16 %v2504, %v2504
      %v2537 = vpack.c.b16 %v2505, %v2505
      %v2538 = vpack.c.b16 %v2506, %v2506
      %v2539 = vpack.c.b16 %v2507, %v2507
      %v2540 = vpack.c.b16 %v2508, %v2508
      %v2541 = vpack.c.b16 %v2509, %v2509
      %v2542 = vpack.c.b16 %v2510, %v2510
      %v2543 = vpack.c.b16 %v2511, %v2511
      %v2544 = vpack.c.b16 %v2512, %v2512
      %v2545 = vpack.c.b16 %v2513, %v2513
      %v2546 = vpack.c.b16 %v2514, %v2514
      %v2547 = vpack.c.b16 %v2515, %v2515
      %v2548 = vpack.c.b16 %v2516, %v2516
      %v2549 = vpack.c.b16 %v2517, %v2517
      %v2550 = vpack.c.b16 %v2518, %v2518
      %v2551 = vpack.c.b16 %v2519, %v2519
      %v2552 = vpack.c.b16 %v2520, %v2520
      %v2553 = vpack.c.b16 %v2521, %v2521
      %v2554 = vpack.c.b16 %v2522, %v2522
      %v2555 = vpack.c.b16 %v2523, %v2523
      %v2556 = vpack.c.b16 %v2524, %v2524
      %v2557 = vpack.c.b16 %v2525, %v2525
      %v2558 = vpack.c.b16 %v2526, %v2526
      %v2559 = vpack.c.b16 %v2527, %v2527
      %v2560 = vpack.c.b16 %v2528, %v2528
      %v2561 = vpack.c.b16 %v2529, %v2529
      %2594 = vst [vmem:[%s182] sm:$0xf] %v2530
      %2595 = vst [vmem:[%s182 + $0x4] sm:$0xf] %v2531
      %2596 = vst [vmem:[%s182 + $0x8] sm:$0xf] %v2532
      %2597 = vst [vmem:[%s182 + $0xc] sm:$0xf] %v2533
      %2598 = vst [vmem:[%s182 + $0x10] sm:$0xf] %v2534
      %2599 = vst [vmem:[%s182 + $0x14] sm:$0xf] %v2535
      %2600 = vst [vmem:[%s182 + $0x18] sm:$0xf] %v2536
      %2601 = vst [vmem:[%s182 + $0x1c] sm:$0xf] %v2537
      %2602 = vst [vmem:[%s182 + $0x20] sm:$0xf] %v2538
      %2603 = vst [vmem:[%s182 + $0x24] sm:$0xf] %v2539
      %2604 = vst [vmem:[%s182 + $0x28] sm:$0xf] %v2540
      %2605 = vst [vmem:[%s182 + $0x2c] sm:$0xf] %v2541
      %2606 = vst [vmem:[%s182 + $0x30] sm:$0xf] %v2542
      %2607 = vst [vmem:[%s182 + $0x34] sm:$0xf] %v2543
      %2608 = vst [vmem:[%s182 + $0x38] sm:$0xf] %v2544
      %2609 = vst [vmem:[%s182 + $0x3c] sm:$0xf] %v2545
      %2610 = vst [vmem:[%s182 + $0x40] sm:$0xf] %v2546
      %2611 = vst [vmem:[%s182 + $0x44] sm:$0xf] %v2547
      %2612 = vst [vmem:[%s182 + $0x48] sm:$0xf] %v2548
      %2613 = vst [vmem:[%s182 + $0x4c] sm:$0xf] %v2549
      %2614 = vst [vmem:[%s182 + $0x50] sm:$0xf] %v2550
      %2615 = vst [vmem:[%s182 + $0x54] sm:$0xf] %v2551
      %2616 = vst [vmem:[%s182 + $0x58] sm:$0xf] %v2552
      %2617 = vst [vmem:[%s182 + $0x5c] sm:$0xf] %v2553
      %2618 = vst [vmem:[%s182 + $0x60] sm:$0xf] %v2554
      %2619 = vst [vmem:[%s182 + $0x64] sm:$0xf] %v2555
      %2620 = vst [vmem:[%s182 + $0x68] sm:$0xf] %v2556
      %2621 = vst [vmem:[%s182 + $0x6c] sm:$0xf] %v2557
      %2622 = vst [vmem:[%s182 + $0x70] sm:$0xf] %v2558
      %2623 = vst [vmem:[%s182 + $0x74] sm:$0xf] %v2559
      %2624 = vst [vmem:[%s182 + $0x78] sm:$0xf] %v2560
      %2625 = vst [vmem:[%s182 + $0x7c] sm:$0xf] %v2561
      %v2626 = vadd.f32 %v2340, %v2343
      %v2627 = vadd.f32 %v2626, %v2348
      %v2628 = vadd.f32 %v2627, %v2351
      %v2629 = vadd.f32 %v2628, %v2356
      %v2630 = vadd.f32 %v2629, %v2359
      %v2631 = vadd.f32 %v2630, %v2364
      %v2632 = vadd.f32 %v2631, %v2367
      %v2633 = vadd.f32 %v2632, %v2372
      %v2634 = vadd.f32 %v2633, %v2375
      %v2635 = vadd.f32 %v2634, %v2380
      %v2636 = vadd.f32 %v2635, %v2383
      %v2637 = vadd.f32 %v2636, %v2388
      %v2638 = vadd.f32 %v2637, %v2391
      %v2639 = vadd.f32 %v2638, %v2396
      %v2640 = vadd.f32 %v2639, %v2399
      %v2641 = vadd.f32 %v2640, %v2404
      %v2642 = vadd.f32 %v2641, %v2407
      %v2643 = vadd.f32 %v2642, %v2412
      %v2644 = vadd.f32 %v2643, %v2415
      %v2645 = vadd.f32 %v2644, %v2420
      %v2646 = vadd.f32 %v2645, %v2423
      %v2647 = vadd.f32 %v2646, %v2428
      %v2648 = vadd.f32 %v2647, %v2431
      %v2649 = vadd.f32 %v2648, %v2436
      %v2650 = vadd.f32 %v2649, %v2439
      %v2651 = vadd.f32 %v2650, %v2444
      %v2652 = vadd.f32 %v2651, %v2447
      %v2653 = vadd.f32 %v2652, %v2452
      %v2654 = vadd.f32 %v2653, %v2455
      %v2655 = vadd.f32 %v2654, %v2460
      %v2656 = vadd.f32 %v2655, %v2463
      %v2657 = vrot.slane %v2656, 4
      %v2658 = vadd.f32 %v2656, %v2657
      %v2659 = vrot.slane %v2658, 2
      %v2660 = vadd.f32 %v2658, %v2659
      %v2661 = vrot.slane %v2660, 1
      %v2662 = vadd.f32 %v2660, %v2661
      %v2663 = vmul.f32 %v2340, %v2340
      %v2664 = vmul.f32 %v2343, %v2343
      %v2665 = vmul.f32 %v2348, %v2348
      %v2666 = vmul.f32 %v2351, %v2351
      %v2667 = vmul.f32 %v2356, %v2356
      %v2668 = vmul.f32 %v2359, %v2359
      %v2669 = vmul.f32 %v2364, %v2364
      %v2670 = vmul.f32 %v2367, %v2367
      %v2671 = vmul.f32 %v2372, %v2372
      %v2672 = vmul.f32 %v2375, %v2375
      %v2673 = vmul.f32 %v2380, %v2380
      %v2674 = vmul.f32 %v2383, %v2383
      %v2675 = vmul.f32 %v2388, %v2388
      %v2676 = vmul.f32 %v2391, %v2391
      %v2677 = vmul.f32 %v2396, %v2396
      %v2678 = vmul.f32 %v2399, %v2399
      %v2679 = vmul.f32 %v2404, %v2404
      %v2680 = vmul.f32 %v2407, %v2407
      %v2681 = vmul.f32 %v2412, %v2412
      %v2682 = vmul.f32 %v2415, %v2415
      %v2683 = vmul.f32 %v2420, %v2420
      %v2684 = vmul.f32 %v2423, %v2423
      %v2685 = vmul.f32 %v2428, %v2428
      %v2686 = vmul.f32 %v2431, %v2431
      %v2687 = vmul.f32 %v2436, %v2436
      %v2688 = vmul.f32 %v2439, %v2439
      %v2689 = vmul.f32 %v2444, %v2444
      %v2690 = vmul.f32 %v2447, %v2447
      %v2691 = vmul.f32 %v2452, %v2452
      %v2692 = vmul.f32 %v2455, %v2455
      %v2693 = vmul.f32 %v2460, %v2460
      %v2694 = vmul.f32 %v2463, %v2463
      %v2695 = vadd.f32 %v2663, %v2664
      %v2696 = vadd.f32 %v2695, %v2665
      %v2697 = vadd.f32 %v2696, %v2666
      %v2698 = vadd.f32 %v2697, %v2667
      %v2699 = vadd.f32 %v2698, %v2668
      %v2700 = vadd.f32 %v2699, %v2669
      %v2701 = vadd.f32 %v2700, %v2670
      %v2702 = vadd.f32 %v2701, %v2671
      %v2703 = vadd.f32 %v2702, %v2672
      %v2704 = vadd.f32 %v2703, %v2673
      %v2705 = vadd.f32 %v2704, %v2674
      %v2706 = vadd.f32 %v2705, %v2675
      %v2707 = vadd.f32 %v2706, %v2676
      %v2708 = vadd.f32 %v2707, %v2677
      %v2709 = vadd.f32 %v2708, %v2678
      %v2710 = vadd.f32 %v2709, %v2679
      %v2711 = vadd.f32 %v2710, %v2680
      %v2712 = vadd.f32 %v2711, %v2681
      %v2713 = vadd.f32 %v2712, %v2682
      %v2714 = vadd.f32 %v2713, %v2683
      %v2715 = vadd.f32 %v2714, %v2684
      %v2716 = vadd.f32 %v2715, %v2685
      %v2717 = vadd.f32 %v2716, %v2686
      %v2718 = vadd.f32 %v2717, %v2687
      %v2719 = vadd.f32 %v2718, %v2688
      %v2720 = vadd.f32 %v2719, %v2689
      %v2721 = vadd.f32 %v2720, %v2690
      %v2722 = vadd.f32 %v2721, %v2691
      %v2723 = vadd.f32 %v2722, %v2692
      %v2724 = vadd.f32 %v2723, %v2693
      %v2725 = vadd.f32 %v2724, %v2694
      %v2726 = vrot.slane %v2725, 4
      %v2727 = vadd.f32 %v2725, %v2726
      %v2728 = vrot.slane %v2727, 2
      %v2729 = vadd.f32 %v2727, %v2728
      %v2730 = vrot.slane %v2729, 1
      %v2731 = vadd.f32 %v2729, %v2730
      %vm2732 = vcmask 1040384
      %v2733 = vsel %vm2732, %v2662, %v2731
      %vm2734 = vcmask 1041408
      %v2735 = vsel %vm2734, %v2733, 0.0
      %2736 = vst [vmem:[%s187] sm:$0xff] %v2735
      %s2737 = smul.u32 32, %s15
      %p2738 = scmp.lt.s32.totalorder %s2737, 63
      %s2739 = scalar_select %p2738, %s2737, 63
      %s2740 = smul.addr %s2739, 4
      %s2741 = scalar_lea.vmem %s2, %s2740
      %p2742 = scmp.lt.s32.totalorder %s15, 1
      %s2743 = scalar_select %p2742, %s15, 1
      %s2744 = smul.addr %s2743, 8
      %s2745 = scalar_lea.vmem %s3, %s2744
      // Predicated region
      $region29: #{basic_block_rn12.8} parent=27 // pred_check
        %p2746 = pneg %p80
      $region30: #{basic_block_rn12.8} parent=27 // pred_check_branch
        %2748 = sbr.rel (%p2746) target = $region32
      $region31: #{basic_block_rn12.8} parent=27 // pred_region
        %s2749 = smul.u32 32, %s15
      $region32: #{basic_block_rn12.8} parent=27 // pred_fallthru
        _
      // Predicated region
      $region33: #{basic_block_rn12.8} parent=27 // pred_check
        %p2750 = pneg %p106
      $region34: #{basic_block_rn12.8} parent=27 // pred_check_branch
        %2752 = sbr.rel (%p2750) target = $region36
      $region35: #{basic_block_rn12.8} parent=27 // pred_region
        _
      $region36: #{basic_block_rn12.8} parent=27 // pred_fallthru
        _
    $region28: #{basic_block_rn12.8} parent=5 // pred_fallthru
      _
    %p2753 = scmp.le.s32.totalorder 2, %s10
    // Predicated region
    $region37: #{basic_block_rn12.8} parent=5 // pred_check
      %p2754 = pneg %p2753
    $region38: #{basic_block_rn12.8} parent=5 // pred_check_branch
      %2756 = sbr.rel (%p2754) target = $region40
    $region39: #{basic_block_rn12.8} parent=5 // pred_region
      %s2757 = ssub.s32 %s10, 2
      // Predicated region
      $region41: #{basic_block_rn12.8} parent=39 // pred_check
        %p2758 = pneg %p86
      $region42: #{basic_block_rn12.8} parent=39 // pred_check_branch
        %2760 = sbr.rel (%p2758) target = $region44
      $region43: #{basic_block_rn12.8} parent=39 // pred_region
        %s2761 = smul.u32 32, %s16
        %p2762 = scmp.lt.s32.totalorder %s2761, 63
        %s2763 = scalar_select %p2762, %s2761, 63
        %s2764 = smul.addr %s2763, 4
        %s2765 = scalar_lea.vmem %s2, %s2764
      $region44: #{basic_block_rn12.8} parent=39 // pred_fallthru
        _
      // Predicated region
      $region45: #{basic_block_rn12.8} parent=39 // pred_check
        %p2766 = pneg %p112
      $region46: #{basic_block_rn12.8} parent=39 // pred_check_branch
        %2768 = sbr.rel (%p2766) target = $region48
      $region47: #{basic_block_rn12.8} parent=39 // pred_region
        %p2769 = scmp.lt.s32.totalorder %s16, 1
        %s2770 = scalar_select %p2769, %s16, 1
        %s2771 = smul.addr %s2770, 8
        %s2772 = scalar_lea.vmem %s3, %s2771
      $region48: #{basic_block_rn12.8} parent=39 // pred_fallthru
        _
    $region40: #{basic_block_rn12.8} parent=5 // pred_fallthru
      _
  $region6: #{basic_block_rn12.8} parent=0 // loop_footer
    %s14 = sadd.s32 1, %s10
  $region7: #{basic_block_rn12.8} parent=0 // loop_footer_branch
    %9 = sbr.rel target = $region3
  $region8: #{basic_block_rn12.8} parent=0 // loop_exit
    _

// kernel: basic_block_rn12.10
$region0: #{basic_block_rn12.10}
  #allocation0 [shape = 'u32[]', space=smem, size = 0x4, offset = 0x4, fixed_abs, tag = 'smem constant byte address 0x4 - core index']
  #allocation1 [shape = 'u32[144,128]{1,0:T(1,128)}', space=vmem, size = 0x12000, scoped, tag = 'internal scratch']
  %s0 = inlined_call_operand.vmem [shape: bf16[512,1152], index: 0, kind: input, shape index: {}]
  %s1 = inlined_call_operand.vmem [shape: bf16[1152,128], index: 1, kind: input, shape index: {}]
  %s2 = inlined_call_operand.vmem [shape: bf16[512,4], index: 2, kind: input, shape index: {}]
  %s3 = inlined_call_operand.vmem [shape: bf16[4,128], index: 3, kind: input, shape index: {}]
  %s4 = inlined_call_operand.vmem [shape: bf16[512,128], index: 4, kind: output, shape index: {0}]
  %s5 = inlined_call_operand.vmem [shape: f32[16,128], index: 5, kind: output, shape index: {1}]
  %s6 = inlined_call_operand.vmem [shape: bf16[512,128], index: 6, kind: output, shape index: {2}]
  %s7 = inlined_call_operand.vmem [shape: f32[16,128], index: 7, kind: output, shape index: {3}]
  %8 = xla_tuple %s4, %s5, %s6, %s7
  %s9 = sld [smem:[#allocation0]]
  $region73: #{basic_block_rn12.10} parent=0
    _
  %s11 = ssub.s32 1, %s9
  %s12 = scalar_select 0, %s11, %s9
  loop: start=0, step=1, limit=4
  $region2: #{basic_block_rn12.10} parent=0 // loop_pre_header
    _
  $region3: #{basic_block_rn12.10} parent=0 // loop_header
    %s14 = sphi 0, %s18
    %p15 = scmp.ge.s32.totalorder %s14, 4
    %s24 = sphi 0, %s26
    %s27 = sphi 0, %s24
    %s28 = sphi 0, %s27
    %s44 = sphi 0, %s28
    %s48 = sphi 0, %s48
    %s50 = sphi 0, %s48
    %s51 = sphi 0, %s50
    %s65 = sphi 0, %s51
    %s71 = sphi 0, %s73
    %s74 = sphi 0, %s71
    %s75 = sphi 0, %s74
    %s91 = sphi 0, %s75
    %s95 = sphi 0, %s95
    %s97 = sphi 0, %s95
    %s98 = sphi 0, %s97
    %s112 = sphi 0, %s98
    %s118 = sphi 0, %s120
    %s121 = sphi 0, %s118
    %s122 = sphi 0, %s121
    %s138 = sphi 0, %s122
    %s144 = sphi 0, %s146
    %s147 = sphi 0, %s144
    %s148 = sphi 0, %s147
    %s164 = sphi 0, %s148
    %s170 = sphi 0, %s172
    %s173 = sphi 0, %s170
    %s174 = sphi 0, %s173
    %s190 = sphi 0, %s174
    %s196 = sphi 0, %s198
    %s199 = sphi 0, %s196
    %s200 = sphi 0, %s199
    %s216 = sphi 0, %s200
  $region4: #{basic_block_rn12.10} parent=0 // loop_header_branch
    %17 = sbr.rel (%p15) target = $region8
  $region5: #{basic_block_rn12.10} parent=0 // loop_body
    %s19 = ssub.s32 %s14, 1
    %s20 = ssub.s32 %s14, 2
    %s21 = sadd.s32 %s14, 1
    %s22 = ssub.s32 %s14, %s21
    %p23 = scmp.eq.s32.totalorder %s22, 0
    %s25 = sadd.s32 %s24, 1
    %s26 = scalar_select %p23, %s24, %s25
    %p29 = pneg %p23
    %p30 = scmp.eq.s32.totalorder %s14, 1
    %p31 = por %p29, %p30
    %p32 = scmp.ne.s32.totalorder %s24, %s27
    %p33 = scmp.eq.s32.totalorder %s14, 0
    %p34 = por %p32, %p33
    %p35 = scmp.ne.s32.totalorder %s24, %s27
    %p36 = scmp.eq.s32.totalorder %s19, 1
    %p37 = por %p35, %p36
    %p38 = scmp.ne.s32.totalorder %s27, %s28
    %p39 = scmp.eq.s32.totalorder %s19, 0
    %p40 = por %p38, %p39
    %p41 = scmp.ne.s32.totalorder %s27, %s28
    %p42 = scmp.eq.s32.totalorder %s20, 1
    %p43 = por %p41, %p42
    %p45 = scmp.ne.s32.totalorder %s28, %s44
    %p46 = scmp.eq.s32.totalorder %s20, 0
    %p47 = por %p45, %p46
    %s49 = sadd.s32 %s48, 1
    %p52 = scmp.eq.s32.totalorder %s14, 1
    %p53 = scmp.ne.s32.totalorder %s48, %s50
    %p54 = scmp.eq.s32.totalorder %s14, 0
    %p55 = por %p53, %p54
    %p56 = scmp.ne.s32.totalorder %s48, %s50
    %p57 = scmp.eq.s32.totalorder %s19, 1
    %p58 = por %p56, %p57
    %p59 = scmp.ne.s32.totalorder %s50, %s51
    %p60 = scmp.eq.s32.totalorder %s19, 0
    %p61 = por %p59, %p60
    %p62 = scmp.ne.s32.totalorder %s50, %s51
    %p63 = scmp.eq.s32.totalorder %s20, 1
    %p64 = por %p62, %p63
    %p66 = scmp.ne.s32.totalorder %s51, %s65
    %p67 = scmp.eq.s32.totalorder %s20, 0
    %p68 = por %p66, %p67
    %s69 = ssub.s32 %s14, %s21
    %p70 = scmp.eq.s32.totalorder %s69, 0
    %s72 = sadd.s32 %s71, 1
    %s73 = scalar_select %p70, %s71, %s72
    %p76 = pneg %p70
    %p77 = scmp.eq.s32.totalorder %s14, 1
    %p78 = por %p76, %p77
    %p79 = scmp.ne.s32.totalorder %s71, %s74
    %p80 = scmp.eq.s32.totalorder %s14, 0
    %p81 = por %p79, %p80
    %p82 = scmp.ne.s32.totalorder %s71, %s74
    %p83 = scmp.eq.s32.totalorder %s19, 1
    %p84 = por %p82, %p83
    %p85 = scmp.ne.s32.totalorder %s74, %s75
    %p86 = scmp.eq.s32.totalorder %s19, 0
    %p87 = por %p85, %p86
    %p88 = scmp.ne.s32.totalorder %s74, %s75
    %p89 = scmp.eq.s32.totalorder %s20, 1
    %p90 = por %p88, %p89
    %p92 = scmp.ne.s32.totalorder %s75, %s91
    %p93 = scmp.eq.s32.totalorder %s20, 0
    %p94 = por %p92, %p93
    %s96 = sadd.s32 %s95, 1
    %p99 = scmp.eq.s32.totalorder %s14, 1
    %p100 = scmp.ne.s32.totalorder %s95, %s97
    %p101 = scmp.eq.s32.totalorder %s14, 0
    %p102 = por %p100, %p101
    %p103 = scmp.ne.s32.totalorder %s95, %s97
    %p104 = scmp.eq.s32.totalorder %s19, 1
    %p105 = por %p103, %p104
    %p106 = scmp.ne.s32.totalorder %s97, %s98
    %p107 = scmp.eq.s32.totalorder %s19, 0
    %p108 = por %p106, %p107
    %p109 = scmp.ne.s32.totalorder %s97, %s98
    %p110 = scmp.eq.s32.totalorder %s20, 1
    %p111 = por %p109, %p110
    %p113 = scmp.ne.s32.totalorder %s98, %s112
    %p114 = scmp.eq.s32.totalorder %s20, 0
    %p115 = por %p113, %p114
    %s116 = ssub.s32 %s14, %s21
    %p117 = scmp.eq.s32.totalorder %s116, 0
    %s119 = sadd.s32 %s118, 1
    %s120 = scalar_select %p117, %s118, %s119
    %p123 = pneg %p117
    %p124 = scmp.eq.s32.totalorder %s14, 1
    %p125 = por %p123, %p124
    %p126 = scmp.ne.s32.totalorder %s118, %s121
    %p127 = scmp.eq.s32.totalorder %s14, 0
    %p128 = por %p126, %p127
    %p129 = scmp.ne.s32.totalorder %s118, %s121
    %p130 = scmp.eq.s32.totalorder %s19, 1
    %p131 = por %p129, %p130
    %p132 = scmp.ne.s32.totalorder %s121, %s122
    %p133 = scmp.eq.s32.totalorder %s19, 0
    %p134 = por %p132, %p133
    %p135 = scmp.ne.s32.totalorder %s121, %s122
    %p136 = scmp.eq.s32.totalorder %s20, 1
    %p137 = por %p135, %p136
    %p139 = scmp.ne.s32.totalorder %s122, %s138
    %p140 = scmp.eq.s32.totalorder %s20, 0
    %p141 = por %p139, %p140
    %s142 = ssub.s32 %s14, %s21
    %p143 = scmp.eq.s32.totalorder %s142, 0
    %s145 = sadd.s32 %s144, 1
    %s146 = scalar_select %p143, %s144, %s145
    %p149 = pneg %p143
    %p150 = scmp.eq.s32.totalorder %s14, 1
    %p151 = por %p149, %p150
    %p152 = scmp.ne.s32.totalorder %s144, %s147
    %p153 = scmp.eq.s32.totalorder %s14, 0
    %p154 = por %p152, %p153
    %p155 = scmp.ne.s32.totalorder %s144, %s147
    %p156 = scmp.eq.s32.totalorder %s19, 1
    %p157 = por %p155, %p156
    %p158 = scmp.ne.s32.totalorder %s147, %s148
    %p159 = scmp.eq.s32.totalorder %s19, 0
    %p160 = por %p158, %p159
    %p161 = scmp.ne.s32.totalorder %s147, %s148
    %p162 = scmp.eq.s32.totalorder %s20, 1
    %p163 = por %p161, %p162
    %p165 = scmp.ne.s32.totalorder %s148, %s164
    %p166 = scmp.eq.s32.totalorder %s20, 0
    %p167 = por %p165, %p166
    %s168 = ssub.s32 %s14, %s21
    %p169 = scmp.eq.s32.totalorder %s168, 0
    %s171 = sadd.s32 %s170, 1
    %s172 = scalar_select %p169, %s170, %s171
    %p175 = pneg %p169
    %p176 = scmp.eq.s32.totalorder %s14, 1
    %p177 = por %p175, %p176
    %p178 = scmp.ne.s32.totalorder %s170, %s173
    %p179 = scmp.eq.s32.totalorder %s14, 0
    %p180 = por %p178, %p179
    %p181 = scmp.ne.s32.totalorder %s170, %s173
    %p182 = scmp.eq.s32.totalorder %s19, 1
    %p183 = por %p181, %p182
    %p184 = scmp.ne.s32.totalorder %s173, %s174
    %p185 = scmp.eq.s32.totalorder %s19, 0
    %p186 = por %p184, %p185
    %p187 = scmp.ne.s32.totalorder %s173, %s174
    %p188 = scmp.eq.s32.totalorder %s20, 1
    %p189 = por %p187, %p188
    %p191 = scmp.ne.s32.totalorder %s174, %s190
    %p192 = scmp.eq.s32.totalorder %s20, 0
    %p193 = por %p191, %p192
    %s194 = ssub.s32 %s14, %s21
    %p195 = scmp.eq.s32.totalorder %s194, 0
    %s197 = sadd.s32 %s196, 1
    %s198 = scalar_select %p195, %s196, %s197
    %p201 = pneg %p195
    %p202 = scmp.eq.s32.totalorder %s14, 1
    %p203 = por %p201, %p202
    %p204 = scmp.ne.s32.totalorder %s196, %s199
    %p205 = scmp.eq.s32.totalorder %s14, 0
    %p206 = por %p204, %p205
    %p207 = scmp.ne.s32.totalorder %s196, %s199
    %p208 = scmp.eq.s32.totalorder %s19, 1
    %p209 = por %p207, %p208
    %p210 = scmp.ne.s32.totalorder %s199, %s200
    %p211 = scmp.eq.s32.totalorder %s19, 0
    %p212 = por %p210, %p211
    %p213 = scmp.ne.s32.totalorder %s199, %s200
    %p214 = scmp.eq.s32.totalorder %s20, 1
    %p215 = por %p213, %p214
    %p217 = scmp.ne.s32.totalorder %s200, %s216
    %p218 = scmp.eq.s32.totalorder %s20, 0
    %p219 = por %p217, %p218
    %p220 = scmp.le.s32.totalorder 1, %s14
    %p221 = scmp.lt.s32.totalorder %s14, 3
    %p222 = pnand %p220, %p221
    %p223 = pneg %p222
    // Predicated region
    $region9: #{basic_block_rn12.10} parent=5 // pred_check
      _
    $region10: #{basic_block_rn12.10} parent=5 // pred_check_branch
      %225 = sbr.rel (%p222) target = $region12
    $region11: #{basic_block_rn12.10} parent=5 // pred_region
      %s226 = ssub.s32 %s14, 1
      // Predicated region
      $region13: #{basic_block_rn12.10} parent=11 // pred_check
        %p227 = pneg %p61
      $region14: #{basic_block_rn12.10} parent=11 // pred_check_branch
        %229 = sbr.rel (%p227) target = $region16
      $region15: #{basic_block_rn12.10} parent=11 // pred_region
        _
      $region16: #{basic_block_rn12.10} parent=11 // pred_fallthru
        _
      // Predicated region
      $region17: #{basic_block_rn12.10} parent=11 // pred_check
        %p230 = pneg %p108
      $region18: #{basic_block_rn12.10} parent=11 // pred_check_branch
        %232 = sbr.rel (%p230) target = $region20
      $region19: #{basic_block_rn12.10} parent=11 // pred_region
        _
      $region20: #{basic_block_rn12.10} parent=11 // pred_fallthru
        _
    $region12: #{basic_block_rn12.10} parent=5 // pred_fallthru
      _
    %p233 = scmp.lt.s32.totalorder %s14, 2
    // Predicated region
    $region21: #{basic_block_rn12.10} parent=5 // pred_check
      %p234 = pneg %p233
    $region22: #{basic_block_rn12.10} parent=5 // pred_check_branch
      %236 = sbr.rel (%p234) target = $region24
    $region23: #{basic_block_rn12.10} parent=5 // pred_region
      // Predicated region
      $region25: #{basic_block_rn12.10} parent=23 // pred_check
        %p237 = pneg %p34
      $region26: #{basic_block_rn12.10} parent=23 // pred_check_branch
        %239 = sbr.rel (%p237) target = $region28
      $region27: #{basic_block_rn12.10} parent=23 // pred_region
        %s240 = smul.u32 32, %s14
        %p241 = scmp.lt.s32.totalorder %s240, 63
        %s242 = scalar_select %p241, %s240, 63
        %s243 = smul.addr %s242, 9
        %s244 = smul.addr %s243, 4
        %s245 = scalar_lea.vmem %s0, %s244
        %s246 = smul.u32 32, %s14
      $region28: #{basic_block_rn12.10} parent=23 // pred_fallthru
        _
      // Predicated region
      $region29: #{basic_block_rn12.10} parent=23 // pred_check
        %p247 = pneg %p81
      $region30: #{basic_block_rn12.10} parent=23 // pred_check_branch
        %249 = sbr.rel (%p247) target = $region32
      $region31: #{basic_block_rn12.10} parent=23 // pred_region
        %s250 = smul.u32 32, %s14
        %p251 = scmp.lt.s32.totalorder %s250, 63
        %s252 = scalar_select %p251, %s250, 63
        %s253 = smul.addr %s252, 4
        %s254 = scalar_lea.vmem %s2, %s253
        %s255 = smul.u32 32, %s14
      $region32: #{basic_block_rn12.10} parent=23 // pred_fallthru
        _
    $region24: #{basic_block_rn12.10} parent=5 // pred_fallthru
      _
    %p256 = scmp.le.s32.totalorder 1, %s14
    %p257 = scmp.lt.s32.totalorder %s14, 3
    %p258 = pnand %p256, %p257
    %p259 = pneg %p258
    // Predicated region
    $region33: #{basic_block_rn12.10} parent=5 // pred_check
      _
    $region34: #{basic_block_rn12.10} parent=5 // pred_check_branch
      %261 = sbr.rel (%p258) target = $region36
    $region35: #{basic_block_rn12.10} parent=5 // pred_region
      %s262 = ssub.s32 %s14, 1
      %s263 = smul.u32 32, %s19
      %p264 = scmp.lt.s32.totalorder %s263, 63
      %s265 = scalar_select %p264, %s263, 63
      %s266 = smul.addr %s265, 9
      %s267 = smul.addr %s266, 4
      %s268 = scalar_lea.vmem %s0, %s267
      %p269 = pneg %p40
      %p270 = pneg %p37
      %p271 = pneg %p61
      %p272 = pneg %p58
      %s273 = smul.u32 32, %s19
      %p274 = scmp.lt.s32.totalorder %s273, 63
      %s275 = scalar_select %p274, %s273, 63
      %s276 = smul.addr %s275, 4
      %s277 = scalar_lea.vmem %s2, %s276
      %p278 = pneg %p87
      %p279 = pneg %p84
      %p280 = pneg %p108
      %p281 = pneg %p105
      %p282 = pneg %p134
      %p283 = pneg %p131
      %s284 = smul.u32 32, %s19
      %p285 = scmp.lt.s32.totalorder %s284, 63
      %s286 = scalar_select %p285, %s284, 63
      %s287 = smul.addr %s286, 4
      %s288 = scalar_lea.vmem %s4, %s287
      %p289 = pneg %p160
      %p290 = pneg %p157
      %p291 = scmp.lt.s32.totalorder %s19, 1
      %s292 = scalar_select %p291, %s19, 1
      %s293 = smul.addr %s292, 8
      %s294 = scalar_lea.vmem %s5, %s293
      %p295 = pneg %p186
      %p296 = pneg %p183
      %s297 = smul.u32 32, %s19
      %p298 = scmp.lt.s32.totalorder %s297, 63
      %s299 = scalar_select %p298, %s297, 63
      %s300 = smul.addr %s299, 4
      %s301 = scalar_lea.vmem %s6, %s300
      %p302 = pneg %p212
      %p303 = pneg %p209
      %p304 = scmp.lt.s32.totalorder %s19, 1
      %s305 = scalar_select %p304, %s19, 1
      %s306 = smul.addr %s305, 8
      %s307 = scalar_lea.vmem %s7, %s306
      %s308 = smul.u32 32, %s19
      %p309 = scmp.lt.s32.totalorder %s308, 63
      %s310 = scalar_select %p309, %s308, 63
      %s311 = smul.addr %s310, 9
      %s312 = smul.addr %s311, 4
      %s313 = scalar_lea.vmem %s0, %s312
      %s314 = smul.u32 32, %s19
      %s315 = smul.u32 32, %s19
      %p316 = scmp.lt.s32.totalorder %s315, 63
      %s317 = scalar_select %p316, %s315, 63
      %s318 = smul.addr %s317, 4
      %s319 = scalar_lea.vmem %s2, %s318
      %s320 = smul.u32 32, %s19
      %s321 = smul.u32 32, %s19
      %p322 = scmp.lt.s32.totalorder %s321, 63
      %s323 = scalar_select %p322, %s321, 63
      %s324 = smul.addr %s323, 4
      %s325 = scalar_lea.vmem %s4, %s324
      %s326 = smul.u32 32, %s19
      %p327 = scmp.lt.s32.totalorder %s19, 1
      %s328 = scalar_select %p327, %s19, 1
      %s329 = smul.addr %s328, 8
      %s330 = scalar_lea.vmem %s5, %s329
      %s331 = smul.u32 32, %s19
      %p332 = scmp.lt.s32.totalorder %s331, 63
      %s333 = scalar_select %p332, %s331, 63
      %s334 = smul.addr %s333, 4
      %s335 = scalar_lea.vmem %s6, %s334
      %s336 = smul.u32 32, %s19
      %p337 = scmp.lt.s32.totalorder %s19, 1
      %s338 = scalar_select %p337, %s19, 1
      %s339 = smul.addr %s338, 8
      %s340 = scalar_lea.vmem %s7, %s339
      %v342 = vld [vmem:[%s313] sm:$0xff]
      %v343 = vld [vmem:[%s313 + $0x8] sm:$0xff]
      %v344 = vld [vmem:[%s313 + $0x10] sm:$0xff]
      %v345 = vld [vmem:[%s313 + $0x18] sm:$0xff]
      %v346 = vld [vmem:[%s313 + $0x20] sm:$0xf]
      %v347 = vld [vmem:[%s313 + $0x24] sm:$0xff]
      %v348 = vld [vmem:[%s313 + $0x2c] sm:$0xff]
      %v349 = vld [vmem:[%s313 + $0x34] sm:$0xff]
      %v350 = vld [vmem:[%s313 + $0x3c] sm:$0xff]
      %v351 = vld [vmem:[%s313 + $0x44] sm:$0xf]
      %v352 = vld [vmem:[%s313 + $0x48] sm:$0xff]
      %v353 = vld [vmem:[%s313 + $0x50] sm:$0xff]
      %v354 = vld [vmem:[%s313 + $0x58] sm:$0xff]
      %v355 = vld [vmem:[%s313 + $0x60] sm:$0xff]
      %v356 = vld [vmem:[%s313 + $0x68] sm:$0xf]
      %v357 = vld [vmem:[%s313 + $0x6c] sm:$0xff]
      %v358 = vld [vmem:[%s313 + $0x74] sm:$0xff]
      %v359 = vld [vmem:[%s313 + $0x7c] sm:$0xff]
      %v360 = vld [vmem:[%s313 + $0x84] sm:$0xff]
      %v361 = vld [vmem:[%s313 + $0x8c] sm:$0xf]
      %v362 = vld [vmem:[%s313 + $0x90] sm:$0xff]
      %v363 = vld [vmem:[%s313 + $0x98] sm:$0xff]
      %v364 = vld [vmem:[%s313 + $0xa0] sm:$0xff]
      %v365 = vld [vmem:[%s313 + $0xa8] sm:$0xff]
      %v366 = vld [vmem:[%s313 + $0xb0] sm:$0xf]
      %v367 = vld [vmem:[%s313 + $0xb4] sm:$0xff]
      %v368 = vld [vmem:[%s313 + $0xbc] sm:$0xff]
      %v369 = vld [vmem:[%s313 + $0xc4] sm:$0xff]
      %v370 = vld [vmem:[%s313 + $0xcc] sm:$0xff]
      %v371 = vld [vmem:[%s313 + $0xd4] sm:$0xf]
      %v372 = vld [vmem:[%s313 + $0xd8] sm:$0xff]
      %v373 = vld [vmem:[%s313 + $0xe0] sm:$0xff]
      %v374 = vld [vmem:[%s313 + $0xe8] sm:$0xff]
      %v375 = vld [vmem:[%s313 + $0xf0] sm:$0xff]
      %v376 = vld [vmem:[%s313 + $0xf8] sm:$0xf]
      %v377 = vld [vmem:[%s313 + $0xfc] sm:$0xff]
      %v378 = vld [vmem:[%s313 + $0x104] sm:$0xff]
      %v379 = vld [vmem:[%s313 + $0x10c] sm:$0xff]
      %v380 = vld [vmem:[%s313 + $0x114] sm:$0xff]
      %v381 = vld [vmem:[%s313 + $0x11c] sm:$0xf]
      %v382 = vld [vmem:[%s313 + $0x120] sm:$0xff]
      %v383 = vld [vmem:[%s313 + $0x128] sm:$0xff]
      %v384 = vld [vmem:[%s313 + $0x130] sm:$0xff]
      %v385 = vld [vmem:[%s313 + $0x138] sm:$0xff]
      %v386 = vld [vmem:[%s313 + $0x140] sm:$0xf]
      %v387 = vld [vmem:[%s313 + $0x144] sm:$0xff]
      %v388 = vld [vmem:[%s313 + $0x14c] sm:$0xff]
      %v389 = vld [vmem:[%s313 + $0x154] sm:$0xff]
      %v390 = vld [vmem:[%s313 + $0x15c] sm:$0xff]
      %v391 = vld [vmem:[%s313 + $0x164] sm:$0xf]
      %v392 = vld [vmem:[%s313 + $0x168] sm:$0xff]
      %v393 = vld [vmem:[%s313 + $0x170] sm:$0xff]
      %v394 = vld [vmem:[%s313 + $0x178] sm:$0xff]
      %v395 = vld [vmem:[%s313 + $0x180] sm:$0xff]
      %v396 = vld [vmem:[%s313 + $0x188] sm:$0xf]
      %v397 = vld [vmem:[%s313 + $0x18c] sm:$0xff]
      %v398 = vld [vmem:[%s313 + $0x194] sm:$0xff]
      %v399 = vld [vmem:[%s313 + $0x19c] sm:$0xff]
      %v400 = vld [vmem:[%s313 + $0x1a4] sm:$0xff]
      %v401 = vld [vmem:[%s313 + $0x1ac] sm:$0xf]
      %v402 = vld [vmem:[%s313 + $0x1b0] sm:$0xff]
      %v403 = vld [vmem:[%s313 + $0x1b8] sm:$0xff]
      %v404 = vld [vmem:[%s313 + $0x1c0] sm:$0xff]
      %v405 = vld [vmem:[%s313 + $0x1c8] sm:$0xff]
      %v406 = vld [vmem:[%s313 + $0x1d0] sm:$0xf]
      %v407 = vld [vmem:[%s313 + $0x1d4] sm:$0xff]
      %v408 = vld [vmem:[%s313 + $0x1dc] sm:$0xff]
      %v409 = vld [vmem:[%s313 + $0x1e4] sm:$0xff]
      %v410 = vld [vmem:[%s313 + $0x1ec] sm:$0xff]
      %v411 = vld [vmem:[%s313 + $0x1f4] sm:$0xf]
      %v412 = vld [vmem:[%s313 + $0x1f8] sm:$0xff]
      %v413 = vld [vmem:[%s313 + $0x200] sm:$0xff]
      %v414 = vld [vmem:[%s313 + $0x208] sm:$0xff]
      %v415 = vld [vmem:[%s313 + $0x210] sm:$0xff]
      %v416 = vld [vmem:[%s313 + $0x218] sm:$0xf]
      %v417 = vld [vmem:[%s313 + $0x21c] sm:$0xff]
      %v418 = vld [vmem:[%s313 + $0x224] sm:$0xff]
      %v419 = vld [vmem:[%s313 + $0x22c] sm:$0xff]
      %v420 = vld [vmem:[%s313 + $0x234] sm:$0xff]
      %v421 = vld [vmem:[%s313 + $0x23c] sm:$0xf]
      %v422 = vld [vmem:[%s313 + $0x240] sm:$0xff]
      %v423 = vld [vmem:[%s313 + $0x248] sm:$0xff]
      %v424 = vld [vmem:[%s313 + $0x250] sm:$0xff]
      %v425 = vld [vmem:[%s313 + $0x258] sm:$0xff]
      %v426 = vld [vmem:[%s313 + $0x260] sm:$0xf]
      %v427 = vld [vmem:[%s313 + $0x264] sm:$0xff]
      %v428 = vld [vmem:[%s313 + $0x26c] sm:$0xff]
      %v429 = vld [vmem:[%s313 + $0x274] sm:$0xff]
      %v430 = vld [vmem:[%s313 + $0x27c] sm:$0xff]
      %v431 = vld [vmem:[%s313 + $0x284] sm:$0xf]
      %v432 = vld [vmem:[%s313 + $0x288] sm:$0xff]
      %v433 = vld [vmem:[%s313 + $0x290] sm:$0xff]
      %v434 = vld [vmem:[%s313 + $0x298] sm:$0xff]
      %v435 = vld [vmem:[%s313 + $0x2a0] sm:$0xff]
      %v436 = vld [vmem:[%s313 + $0x2a8] sm:$0xf]
      %v437 = vld [vmem:[%s313 + $0x2ac] sm:$0xff]
      %v438 = vld [vmem:[%s313 + $0x2b4] sm:$0xff]
      %v439 = vld [vmem:[%s313 + $0x2bc] sm:$0xff]
      %v440 = vld [vmem:[%s313 + $0x2c4] sm:$0xff]
      %v441 = vld [vmem:[%s313 + $0x2cc] sm:$0xf]
      %v442 = vld [vmem:[%s313 + $0x2d0] sm:$0xff]
      %v443 = vld [vmem:[%s313 + $0x2d8] sm:$0xff]
      %v444 = vld [vmem:[%s313 + $0x2e0] sm:$0xff]
      %v445 = vld [vmem:[%s313 + $0x2e8] sm:$0xff]
      %v446 = vld [vmem:[%s313 + $0x2f0] sm:$0xf]
      %v447 = vld [vmem:[%s313 + $0x2f4] sm:$0xff]
      %v448 = vld [vmem:[%s313 + $0x2fc] sm:$0xff]
      %v449 = vld [vmem:[%s313 + $0x304] sm:$0xff]
      %v450 = vld [vmem:[%s313 + $0x30c] sm:$0xff]
      %v451 = vld [vmem:[%s313 + $0x314] sm:$0xf]
      %v452 = vld [vmem:[%s313 + $0x318] sm:$0xff]
      %v453 = vld [vmem:[%s313 + $0x320] sm:$0xff]
      %v454 = vld [vmem:[%s313 + $0x328] sm:$0xff]
      %v455 = vld [vmem:[%s313 + $0x330] sm:$0xff]
      %v456 = vld [vmem:[%s313 + $0x338] sm:$0xf]
      %v457 = vld [vmem:[%s313 + $0x33c] sm:$0xff]
      %v458 = vld [vmem:[%s313 + $0x344] sm:$0xff]
      %v459 = vld [vmem:[%s313 + $0x34c] sm:$0xff]
      %v460 = vld [vmem:[%s313 + $0x354] sm:$0xff]
      %v461 = vld [vmem:[%s313 + $0x35c] sm:$0xf]
      %v462 = vld [vmem:[%s313 + $0x360] sm:$0xff]
      %v463 = vld [vmem:[%s313 + $0x368] sm:$0xff]
      %v464 = vld [vmem:[%s313 + $0x370] sm:$0xff]
      %v465 = vld [vmem:[%s313 + $0x378] sm:$0xff]
      %v466 = vld [vmem:[%s313 + $0x380] sm:$0xf]
      %v467 = vld [vmem:[%s313 + $0x384] sm:$0xff]
      %v468 = vld [vmem:[%s313 + $0x38c] sm:$0xff]
      %v469 = vld [vmem:[%s313 + $0x394] sm:$0xff]
      %v470 = vld [vmem:[%s313 + $0x39c] sm:$0xff]
      %v471 = vld [vmem:[%s313 + $0x3a4] sm:$0xf]
      %v472 = vld [vmem:[%s313 + $0x3a8] sm:$0xff]
      %v473 = vld [vmem:[%s313 + $0x3b0] sm:$0xff]
      %v474 = vld [vmem:[%s313 + $0x3b8] sm:$0xff]
      %v475 = vld [vmem:[%s313 + $0x3c0] sm:$0xff]
      %v476 = vld [vmem:[%s313 + $0x3c8] sm:$0xf]
      %v477 = vld [vmem:[%s313 + $0x3cc] sm:$0xff]
      %v478 = vld [vmem:[%s313 + $0x3d4] sm:$0xff]
      %v479 = vld [vmem:[%s313 + $0x3dc] sm:$0xff]
      %v480 = vld [vmem:[%s313 + $0x3e4] sm:$0xff]
      %v481 = vld [vmem:[%s313 + $0x3ec] sm:$0xf]
      %v482 = vld [vmem:[%s313 + $0x3f0] sm:$0xff]
      %v483 = vld [vmem:[%s313 + $0x3f8] sm:$0xff]
      %v484 = vld [vmem:[%s313 + $0x400] sm:$0xff]
      %v485 = vld [vmem:[%s313 + $0x408] sm:$0xff]
      %v486 = vld [vmem:[%s313 + $0x410] sm:$0xf]
      %v487 = vld [vmem:[%s313 + $0x414] sm:$0xff]
      %v488 = vld [vmem:[%s313 + $0x41c] sm:$0xff]
      %v489 = vld [vmem:[%s313 + $0x424] sm:$0xff]
      %v490 = vld [vmem:[%s313 + $0x42c] sm:$0xff]
      %v491 = vld [vmem:[%s313 + $0x434] sm:$0xf]
      %v492 = vld [vmem:[%s313 + $0x438] sm:$0xff]
      %v493 = vld [vmem:[%s313 + $0x440] sm:$0xff]
      %v494 = vld [vmem:[%s313 + $0x448] sm:$0xff]
      %v495 = vld [vmem:[%s313 + $0x450] sm:$0xff]
      %v496 = vld [vmem:[%s313 + $0x458] sm:$0xf]
      %v497 = vld [vmem:[%s313 + $0x45c] sm:$0xff]
      %v498 = vld [vmem:[%s313 + $0x464] sm:$0xff]
      %v499 = vld [vmem:[%s313 + $0x46c] sm:$0xff]
      %v500 = vld [vmem:[%s313 + $0x474] sm:$0xff]
      %v501 = vld [vmem:[%s313 + $0x47c] sm:$0xf]
      %v502 = vld [vmem:[%s1] sm:$0xf]
      %v503 = vld [vmem:[%s1 + $0x4] sm:$0xf]
      %v504 = vld [vmem:[%s1 + $0x8] sm:$0xf]
      %v505 = vld [vmem:[%s1 + $0xc] sm:$0xf]
      %v506 = vld [vmem:[%s1 + $0x10] sm:$0xf]
      %v507 = vld [vmem:[%s1 + $0x14] sm:$0xf]
      %v508 = vld [vmem:[%s1 + $0x18] sm:$0xf]
      %v509 = vld [vmem:[%s1 + $0x1c] sm:$0xf]
      %v510 = vld [vmem:[%s1 + $0x20] sm:$0xf]
      %v511 = vld [vmem:[%s1 + $0x24] sm:$0xf]
      %v512 = vld [vmem:[%s1 + $0x28] sm:$0xf]
      %v513 = vld [vmem:[%s1 + $0x2c] sm:$0xf]
      %v514 = vld [vmem:[%s1 + $0x30] sm:$0xf]
      %v515 = vld [vmem:[%s1 + $0x34] sm:$0xf]
      %v516 = vld [vmem:[%s1 + $0x38] sm:$0xf]
      %v517 = vld [vmem:[%s1 + $0x3c] sm:$0xf]
      %v518 = vld [vmem:[%s1 + $0x40] sm:$0xf]
      %v519 = vld [vmem:[%s1 + $0x44] sm:$0xf]
      %v520 = vld [vmem:[%s1 + $0x48] sm:$0xf]
      %v521 = vld [vmem:[%s1 + $0x4c] sm:$0xf]
      %v522 = vld [vmem:[%s1 + $0x50] sm:$0xf]
      %v523 = vld [vmem:[%s1 + $0x54] sm:$0xf]
      %v524 = vld [vmem:[%s1 + $0x58] sm:$0xf]
      %v525 = vld [vmem:[%s1 + $0x5c] sm:$0xf]
      %v526 = vld [vmem:[%s1 + $0x60] sm:$0xf]
      %v527 = vld [vmem:[%s1 + $0x64] sm:$0xf]
      %v528 = vld [vmem:[%s1 + $0x68] sm:$0xf]
      %v529 = vld [vmem:[%s1 + $0x6c] sm:$0xf]
      %v530 = vld [vmem:[%s1 + $0x70] sm:$0xf]
      %v531 = vld [vmem:[%s1 + $0x74] sm:$0xf]
      %v532 = vld [vmem:[%s1 + $0x78] sm:$0xf]
      %v533 = vld [vmem:[%s1 + $0x7c] sm:$0xf]
      %v534 = vld [vmem:[%s1 + $0x80] sm:$0xf]
      %v535 = vld [vmem:[%s1 + $0x84] sm:$0xf]
      %v536 = vld [vmem:[%s1 + $0x88] sm:$0xf]
      %v537 = vld [vmem:[%s1 + $0x8c] sm:$0xf]
      %v538 = vld [vmem:[%s1 + $0x90] sm:$0xf]
      %v539 = vld [vmem:[%s1 + $0x94] sm:$0xf]
      %v540 = vld [vmem:[%s1 + $0x98] sm:$0xf]
      %v541 = vld [vmem:[%s1 + $0x9c] sm:$0xf]
      %v542 = vld [vmem:[%s1 + $0xa0] sm:$0xf]
      %v543 = vld [vmem:[%s1 + $0xa4] sm:$0xf]
      %v544 = vld [vmem:[%s1 + $0xa8] sm:$0xf]
      %v545 = vld [vmem:[%s1 + $0xac] sm:$0xf]
      %v546 = vld [vmem:[%s1 + $0xb0] sm:$0xf]
      %v547 = vld [vmem:[%s1 + $0xb4] sm:$0xf]
      %v548 = vld [vmem:[%s1 + $0xb8] sm:$0xf]
      %v549 = vld [vmem:[%s1 + $0xbc] sm:$0xf]
      %v550 = vld [vmem:[%s1 + $0xc0] sm:$0xf]
      %v551 = vld [vmem:[%s1 + $0xc4] sm:$0xf]
      %v552 = vld [vmem:[%s1 + $0xc8] sm:$0xf]
      %v553 = vld [vmem:[%s1 + $0xcc] sm:$0xf]
      %v554 = vld [vmem:[%s1 + $0xd0] sm:$0xf]
      %v555 = vld [vmem:[%s1 + $0xd4] sm:$0xf]
      %v556 = vld [vmem:[%s1 + $0xd8] sm:$0xf]
      %v557 = vld [vmem:[%s1 + $0xdc] sm:$0xf]
      %v558 = vld [vmem:[%s1 + $0xe0] sm:$0xf]
      %v559 = vld [vmem:[%s1 + $0xe4] sm:$0xf]
      %v560 = vld [vmem:[%s1 + $0xe8] sm:$0xf]
      %v561 = vld [vmem:[%s1 + $0xec] sm:$0xf]
      %v562 = vld [vmem:[%s1 + $0xf0] sm:$0xf]
      %v563 = vld [vmem:[%s1 + $0xf4] sm:$0xf]
      %v564 = vld [vmem:[%s1 + $0xf8] sm:$0xf]
      %v565 = vld [vmem:[%s1 + $0xfc] sm:$0xf]
      %v566 = vld [vmem:[%s1 + $0x100] sm:$0xf]
      %v567 = vld [vmem:[%s1 + $0x104] sm:$0xf]
      %v568 = vld [vmem:[%s1 + $0x108] sm:$0xf]
      %v569 = vld [vmem:[%s1 + $0x10c] sm:$0xf]
      %v570 = vld [vmem:[%s1 + $0x110] sm:$0xf]
      %v571 = vld [vmem:[%s1 + $0x114] sm:$0xf]
      %v572 = vld [vmem:[%s1 + $0x118] sm:$0xf]
      %v573 = vld [vmem:[%s1 + $0x11c] sm:$0xf]
      %v574 = vld [vmem:[%s1 + $0x120] sm:$0xf]
      %v575 = vld [vmem:[%s1 + $0x124] sm:$0xf]
      %v576 = vld [vmem:[%s1 + $0x128] sm:$0xf]
      %v577 = vld [vmem:[%s1 + $0x12c] sm:$0xf]
      %v578 = vld [vmem:[%s1 + $0x130] sm:$0xf]
      %v579 = vld [vmem:[%s1 + $0x134] sm:$0xf]
      %v580 = vld [vmem:[%s1 + $0x138] sm:$0xf]
      %v581 = vld [vmem:[%s1 + $0x13c] sm:$0xf]
      %v582 = vld [vmem:[%s1 + $0x140] sm:$0xf]
      %v583 = vld [vmem:[%s1 + $0x144] sm:$0xf]
      %v584 = vld [vmem:[%s1 + $0x148] sm:$0xf]
      %v585 = vld [vmem:[%s1 + $0x14c] sm:$0xf]
      %v586 = vld [vmem:[%s1 + $0x150] sm:$0xf]
      %v587 = vld [vmem:[%s1 + $0x154] sm:$0xf]
      %v588 = vld [vmem:[%s1 + $0x158] sm:$0xf]
      %v589 = vld [vmem:[%s1 + $0x15c] sm:$0xf]
      %v590 = vld [vmem:[%s1 + $0x160] sm:$0xf]
      %v591 = vld [vmem:[%s1 + $0x164] sm:$0xf]
      %v592 = vld [vmem:[%s1 + $0x168] sm:$0xf]
      %v593 = vld [vmem:[%s1 + $0x16c] sm:$0xf]
      %v594 = vld [vmem:[%s1 + $0x170] sm:$0xf]
      %v595 = vld [vmem:[%s1 + $0x174] sm:$0xf]
      %v596 = vld [vmem:[%s1 + $0x178] sm:$0xf]
      %v597 = vld [vmem:[%s1 + $0x17c] sm:$0xf]
      %v598 = vld [vmem:[%s1 + $0x180] sm:$0xf]
      %v599 = vld [vmem:[%s1 + $0x184] sm:$0xf]
      %v600 = vld [vmem:[%s1 + $0x188] sm:$0xf]
      %v601 = vld [vmem:[%s1 + $0x18c] sm:$0xf]
      %v602 = vld [vmem:[%s1 + $0x190] sm:$0xf]
      %v603 = vld [vmem:[%s1 + $0x194] sm:$0xf]
      %v604 = vld [vmem:[%s1 + $0x198] sm:$0xf]
      %v605 = vld [vmem:[%s1 + $0x19c] sm:$0xf]
      %v606 = vld [vmem:[%s1 + $0x1a0] sm:$0xf]
      %v607 = vld [vmem:[%s1 + $0x1a4] sm:$0xf]
      %v608 = vld [vmem:[%s1 + $0x1a8] sm:$0xf]
      %v609 = vld [vmem:[%s1 + $0x1ac] sm:$0xf]
      %v610 = vld [vmem:[%s1 + $0x1b0] sm:$0xf]
      %v611 = vld [vmem:[%s1 + $0x1b4] sm:$0xf]
      %v612 = vld [vmem:[%s1 + $0x1b8] sm:$0xf]
      %v613 = vld [vmem:[%s1 + $0x1bc] sm:$0xf]
      %v614 = vld [vmem:[%s1 + $0x1c0] sm:$0xf]
      %v615 = vld [vmem:[%s1 + $0x1c4] sm:$0xf]
      %v616 = vld [vmem:[%s1 + $0x1c8] sm:$0xf]
      %v617 = vld [vmem:[%s1 + $0x1cc] sm:$0xf]
      %v618 = vld [vmem:[%s1 + $0x1d0] sm:$0xf]
      %v619 = vld [vmem:[%s1 + $0x1d4] sm:$0xf]
      %v620 = vld [vmem:[%s1 + $0x1d8] sm:$0xf]
      %v621 = vld [vmem:[%s1 + $0x1dc] sm:$0xf]
      %v622 = vld [vmem:[%s1 + $0x1e0] sm:$0xf]
      %v623 = vld [vmem:[%s1 + $0x1e4] sm:$0xf]
      %v624 = vld [vmem:[%s1 + $0x1e8] sm:$0xf]
      %v625 = vld [vmem:[%s1 + $0x1ec] sm:$0xf]
      %v626 = vld [vmem:[%s1 + $0x1f0] sm:$0xf]
      %v627 = vld [vmem:[%s1 + $0x1f4] sm:$0xf]
      %v628 = vld [vmem:[%s1 + $0x1f8] sm:$0xf]
      %v629 = vld [vmem:[%s1 + $0x1fc] sm:$0xf]
      %v630 = vld [vmem:[%s1 + $0x200] sm:$0xf]
      %v631 = vld [vmem:[%s1 + $0x204] sm:$0xf]
      %v632 = vld [vmem:[%s1 + $0x208] sm:$0xf]
      %v633 = vld [vmem:[%s1 + $0x20c] sm:$0xf]
      %v634 = vld [vmem:[%s1 + $0x210] sm:$0xf]
      %v635 = vld [vmem:[%s1 + $0x214] sm:$0xf]
      %v636 = vld [vmem:[%s1 + $0x218] sm:$0xf]
      %v637 = vld [vmem:[%s1 + $0x21c] sm:$0xf]
      %v638 = vld [vmem:[%s1 + $0x220] sm:$0xf]
      %v639 = vld [vmem:[%s1 + $0x224] sm:$0xf]
      %v640 = vld [vmem:[%s1 + $0x228] sm:$0xf]
      %v641 = vld [vmem:[%s1 + $0x22c] sm:$0xf]
      %v642 = vld [vmem:[%s1 + $0x230] sm:$0xf]
      %v643 = vld [vmem:[%s1 + $0x234] sm:$0xf]
      %v644 = vld [vmem:[%s1 + $0x238] sm:$0xf]
      %v645 = vld [vmem:[%s1 + $0x23c] sm:$0xf]
      %v806 = vunpack.c.l.b16 %v342
      %v807 = vunpack.c.h.b16 %v342
      %v808 = vunpack.c.l.b16 %v343
      %v809 = vunpack.c.h.b16 %v343
      %v810 = vunpack.c.l.b16 %v344
      %v811 = vunpack.c.h.b16 %v344
      %v812 = vunpack.c.l.b16 %v345
      %v813 = vunpack.c.h.b16 %v345
      %v814 = vunpack.c.l.b16 %v346
      %v815 = vunpack.c.l.b16 %v347
      %v816 = vunpack.c.h.b16 %v347
      %v817 = vunpack.c.l.b16 %v348
      %v818 = vunpack.c.h.b16 %v348
      %v819 = vunpack.c.l.b16 %v349
      %v820 = vunpack.c.h.b16 %v349
      %v821 = vunpack.c.l.b16 %v350
      %v822 = vunpack.c.h.b16 %v350
      %v823 = vunpack.c.l.b16 %v351
      %v824 = vunpack.c.l.b16 %v352
      %v825 = vunpack.c.h.b16 %v352
      %v826 = vunpack.c.l.b16 %v353
      %v827 = vunpack.c.h.b16 %v353
      %v828 = vunpack.c.l.b16 %v354
      %v829 = vunpack.c.h.b16 %v354
      %v830 = vunpack.c.l.b16 %v355
      %v831 = vunpack.c.h.b16 %v355
      %v832 = vunpack.c.l.b16 %v356
      %v833 = vunpack.c.l.b16 %v357
      %v834 = vunpack.c.h.b16 %v357
      %v835 = vunpack.c.l.b16 %v358
      %v836 = vunpack.c.h.b16 %v358
      %v837 = vunpack.c.l.b16 %v359
      %v838 = vunpack.c.h.b16 %v359
      %v839 = vunpack.c.l.b16 %v360
      %v840 = vunpack.c.h.b16 %v360
      %v841 = vunpack.c.l.b16 %v361
      %v842 = vunpack.c.l.b16 %v362
      %v843 = vunpack.c.h.b16 %v362
      %v844 = vunpack.c.l.b16 %v363
      %v845 = vunpack.c.h.b16 %v363
      %v846 = vunpack.c.l.b16 %v364
      %v847 = vunpack.c.h.b16 %v364
      %v848 = vunpack.c.l.b16 %v365
      %v849 = vunpack.c.h.b16 %v365
      %v850 = vunpack.c.l.b16 %v366
      %v851 = vunpack.c.l.b16 %v367
      %v852 = vunpack.c.h.b16 %v367
      %v853 = vunpack.c.l.b16 %v368
      %v854 = vunpack.c.h.b16 %v368
      %v855 = vunpack.c.l.b16 %v369
      %v856 = vunpack.c.h.b16 %v369
      %v857 = vunpack.c.l.b16 %v370
      %v858 = vunpack.c.h.b16 %v370
      %v859 = vunpack.c.l.b16 %v371
      %v860 = vunpack.c.l.b16 %v372
      %v861 = vunpack.c.h.b16 %v372
      %v862 = vunpack.c.l.b16 %v373
      %v863 = vunpack.c.h.b16 %v373
      %v864 = vunpack.c.l.b16 %v374
      %v865 = vunpack.c.h.b16 %v374
      %v866 = vunpack.c.l.b16 %v375
      %v867 = vunpack.c.h.b16 %v375
      %v868 = vunpack.c.l.b16 %v376
      %v869 = vunpack.c.l.b16 %v377
      %v870 = vunpack.c.h.b16 %v377
      %v871 = vunpack.c.l.b16 %v378
      %v872 = vunpack.c.h.b16 %v378
      %v873 = vunpack.c.l.b16 %v379
      %v874 = vunpack.c.h.b16 %v379
      %v875 = vunpack.c.l.b16 %v380
      %v876 = vunpack.c.h.b16 %v380
      %v877 = vunpack.c.l.b16 %v381
      %v878 = vunpack.c.l.b16 %v382
      %v879 = vunpack.c.h.b16 %v382
      %v880 = vunpack.c.l.b16 %v383
      %v881 = vunpack.c.h.b16 %v383
      %v882 = vunpack.c.l.b16 %v384
      %v883 = vunpack.c.h.b16 %v384
      %v884 = vunpack.c.l.b16 %v385
      %v885 = vunpack.c.h.b16 %v385
      %v886 = vunpack.c.l.b16 %v386
      %v887 = vunpack.c.l.b16 %v387
      %v888 = vunpack.c.h.b16 %v387
      %v889 = vunpack.c.l.b16 %v388
      %v890 = vunpack.c.h.b16 %v388
      %v891 = vunpack.c.l.b16 %v389
      %v892 = vunpack.c.h.b16 %v389
      %v893 = vunpack.c.l.b16 %v390
      %v894 = vunpack.c.h.b16 %v390
      %v895 = vunpack.c.l.b16 %v391
      %v896 = vunpack.c.l.b16 %v392
      %v897 = vunpack.c.h.b16 %v392
      %v898 = vunpack.c.l.b16 %v393
      %v899 = vunpack.c.h.b16 %v393
      %v900 = vunpack.c.l.b16 %v394
      %v901 = vunpack.c.h.b16 %v394
      %v902 = vunpack.c.l.b16 %v395
      %v903 = vunpack.c.h.b16 %v395
      %v904 = vunpack.c.l.b16 %v396
      %v905 = vunpack.c.l.b16 %v397
      %v906 = vunpack.c.h.b16 %v397
      %v907 = vunpack.c.l.b16 %v398
      %v908 = vunpack.c.h.b16 %v398
      %v909 = vunpack.c.l.b16 %v399
      %v910 = vunpack.c.h.b16 %v399
      %v911 = vunpack.c.l.b16 %v400
      %v912 = vunpack.c.h.b16 %v400
      %v913 = vunpack.c.l.b16 %v401
      %v914 = vunpack.c.l.b16 %v402
      %v915 = vunpack.c.h.b16 %v402
      %v916 = vunpack.c.l.b16 %v403
      %v917 = vunpack.c.h.b16 %v403
      %v918 = vunpack.c.l.b16 %v404
      %v919 = vunpack.c.h.b16 %v404
      %v920 = vunpack.c.l.b16 %v405
      %v921 = vunpack.c.h.b16 %v405
      %v922 = vunpack.c.l.b16 %v406
      %v923 = vunpack.c.l.b16 %v407
      %v924 = vunpack.c.h.b16 %v407
      %v925 = vunpack.c.l.b16 %v408
      %v926 = vunpack.c.h.b16 %v408
      %v927 = vunpack.c.l.b16 %v409
      %v928 = vunpack.c.h.b16 %v409
      %v929 = vunpack.c.l.b16 %v410
      %v930 = vunpack.c.h.b16 %v410
      %v931 = vunpack.c.l.b16 %v411
      %v932 = vunpack.c.l.b16 %v412
      %v933 = vunpack.c.h.b16 %v412
      %v934 = vunpack.c.l.b16 %v413
      %v935 = vunpack.c.h.b16 %v413
      %v936 = vunpack.c.l.b16 %v414
      %v937 = vunpack.c.h.b16 %v414
      %v938 = vunpack.c.l.b16 %v415
      %v939 = vunpack.c.h.b16 %v415
      %v940 = vunpack.c.l.b16 %v416
      %v941 = vunpack.c.l.b16 %v417
      %v942 = vunpack.c.h.b16 %v417
      %v943 = vunpack.c.l.b16 %v418
      %v944 = vunpack.c.h.b16 %v418
      %v945 = vunpack.c.l.b16 %v419
      %v946 = vunpack.c.h.b16 %v419
      %v947 = vunpack.c.l.b16 %v420
      %v948 = vunpack.c.h.b16 %v420
      %v949 = vunpack.c.l.b16 %v421
      %v950 = vunpack.c.l.b16 %v422
      %v951 = vunpack.c.h.b16 %v422
      %v952 = vunpack.c.l.b16 %v423
      %v953 = vunpack.c.h.b16 %v423
      %v954 = vunpack.c.l.b16 %v424
      %v955 = vunpack.c.h.b16 %v424
      %v956 = vunpack.c.l.b16 %v425
      %v957 = vunpack.c.h.b16 %v425
      %v958 = vunpack.c.l.b16 %v426
      %v959 = vunpack.c.l.b16 %v427
      %v960 = vunpack.c.h.b16 %v427
      %v961 = vunpack.c.l.b16 %v428
      %v962 = vunpack.c.h.b16 %v428
      %v963 = vunpack.c.l.b16 %v429
      %v964 = vunpack.c.h.b16 %v429
      %v965 = vunpack.c.l.b16 %v430
      %v966 = vunpack.c.h.b16 %v430
      %v967 = vunpack.c.l.b16 %v431
      %v968 = vunpack.c.l.b16 %v432
      %v969 = vunpack.c.h.b16 %v432
      %v970 = vunpack.c.l.b16 %v433
      %v971 = vunpack.c.h.b16 %v433
      %v972 = vunpack.c.l.b16 %v434
      %v973 = vunpack.c.h.b16 %v434
      %v974 = vunpack.c.l.b16 %v435
      %v975 = vunpack.c.h.b16 %v435
      %v976 = vunpack.c.l.b16 %v436
      %v977 = vunpack.c.l.b16 %v437
      %v978 = vunpack.c.h.b16 %v437
      %v979 = vunpack.c.l.b16 %v438
      %v980 = vunpack.c.h.b16 %v438
      %v981 = vunpack.c.l.b16 %v439
      %v982 = vunpack.c.h.b16 %v439
      %v983 = vunpack.c.l.b16 %v440
      %v984 = vunpack.c.h.b16 %v440
      %v985 = vunpack.c.l.b16 %v441
      %v986 = vunpack.c.l.b16 %v442
      %v987 = vunpack.c.h.b16 %v442
      %v988 = vunpack.c.l.b16 %v443
      %v989 = vunpack.c.h.b16 %v443
      %v990 = vunpack.c.l.b16 %v444
      %v991 = vunpack.c.h.b16 %v444
      %v992 = vunpack.c.l.b16 %v445
      %v993 = vunpack.c.h.b16 %v445
      %v994 = vunpack.c.l.b16 %v446
      %v995 = vunpack.c.l.b16 %v447
      %v996 = vunpack.c.h.b16 %v447
      %v997 = vunpack.c.l.b16 %v448
      %v998 = vunpack.c.h.b16 %v448
      %v999 = vunpack.c.l.b16 %v449
      %v1000 = vunpack.c.h.b16 %v449
      %v1001 = vunpack.c.l.b16 %v450
      %v1002 = vunpack.c.h.b16 %v450
      %v1003 = vunpack.c.l.b16 %v451
      %v1004 = vunpack.c.l.b16 %v452
      %v1005 = vunpack.c.h.b16 %v452
      %v1006 = vunpack.c.l.b16 %v453
      %v1007 = vunpack.c.h.b16 %v453
      %v1008 = vunpack.c.l.b16 %v454
      %v1009 = vunpack.c.h.b16 %v454
      %v1010 = vunpack.c.l.b16 %v455
      %v1011 = vunpack.c.h.b16 %v455
      %v1012 = vunpack.c.l.b16 %v456
      %v1013 = vunpack.c.l.b16 %v457
      %v1014 = vunpack.c.h.b16 %v457
      %v1015 = vunpack.c.l.b16 %v458
      %v1016 = vunpack.c.h.b16 %v458
      %v1017 = vunpack.c.l.b16 %v459
      %v1018 = vunpack.c.h.b16 %v459
      %v1019 = vunpack.c.l.b16 %v460
      %v1020 = vunpack.c.h.b16 %v460
      %v1021 = vunpack.c.l.b16 %v461
      %v1022 = vunpack.c.l.b16 %v462
      %v1023 = vunpack.c.h.b16 %v462
      %v1024 = vunpack.c.l.b16 %v463
      %v1025 = vunpack.c.h.b16 %v463
      %v1026 = vunpack.c.l.b16 %v464
      %v1027 = vunpack.c.h.b16 %v464
      %v1028 = vunpack.c.l.b16 %v465
      %v1029 = vunpack.c.h.b16 %v465
      %v1030 = vunpack.c.l.b16 %v466
      %v1031 = vunpack.c.l.b16 %v467
      %v1032 = vunpack.c.h.b16 %v467
      %v1033 = vunpack.c.l.b16 %v468
      %v1034 = vunpack.c.h.b16 %v468
      %v1035 = vunpack.c.l.b16 %v469
      %v1036 = vunpack.c.h.b16 %v469
      %v1037 = vunpack.c.l.b16 %v470
      %v1038 = vunpack.c.h.b16 %v470
      %v1039 = vunpack.c.l.b16 %v471
      %v1040 = vunpack.c.l.b16 %v472
      %v1041 = vunpack.c.h.b16 %v472
      %v1042 = vunpack.c.l.b16 %v473
      %v1043 = vunpack.c.h.b16 %v473
      %v1044 = vunpack.c.l.b16 %v474
      %v1045 = vunpack.c.h.b16 %v474
      %v1046 = vunpack.c.l.b16 %v475
      %v1047 = vunpack.c.h.b16 %v475
      %v1048 = vunpack.c.l.b16 %v476
      %v1049 = vunpack.c.l.b16 %v477
      %v1050 = vunpack.c.h.b16 %v477
      %v1051 = vunpack.c.l.b16 %v478
      %v1052 = vunpack.c.h.b16 %v478
      %v1053 = vunpack.c.l.b16 %v479
      %v1054 = vunpack.c.h.b16 %v479
      %v1055 = vunpack.c.l.b16 %v480
      %v1056 = vunpack.c.h.b16 %v480
      %v1057 = vunpack.c.l.b16 %v481
      %v1058 = vunpack.c.l.b16 %v482
      %v1059 = vunpack.c.h.b16 %v482
      %v1060 = vunpack.c.l.b16 %v483
      %v1061 = vunpack.c.h.b16 %v483
      %v1062 = vunpack.c.l.b16 %v484
      %v1063 = vunpack.c.h.b16 %v484
      %v1064 = vunpack.c.l.b16 %v485
      %v1065 = vunpack.c.h.b16 %v485
      %v1066 = vunpack.c.l.b16 %v486
      %v1067 = vunpack.c.l.b16 %v487
      %v1068 = vunpack.c.h.b16 %v487
      %v1069 = vunpack.c.l.b16 %v488
      %v1070 = vunpack.c.h.b16 %v488
      %v1071 = vunpack.c.l.b16 %v489
      %v1072 = vunpack.c.h.b16 %v489
      %v1073 = vunpack.c.l.b16 %v490
      %v1074 = vunpack.c.h.b16 %v490
      %v1075 = vunpack.c.l.b16 %v491
      %v1076 = vunpack.c.l.b16 %v492
      %v1077 = vunpack.c.h.b16 %v492
      %v1078 = vunpack.c.l.b16 %v493
      %v1079 = vunpack.c.h.b16 %v493
      %v1080 = vunpack.c.l.b16 %v494
      %v1081 = vunpack.c.h.b16 %v494
      %v1082 = vunpack.c.l.b16 %v495
      %v1083 = vunpack.c.h.b16 %v495
      %v1084 = vunpack.c.l.b16 %v496
      %v1085 = vunpack.c.l.b16 %v497
      %v1086 = vunpack.c.h.b16 %v497
      %v1087 = vunpack.c.l.b16 %v498
      %v1088 = vunpack.c.h.b16 %v498
      %v1089 = vunpack.c.l.b16 %v499
      %v1090 = vunpack.c.h.b16 %v499
      %v1091 = vunpack.c.l.b16 %v500
      %v1092 = vunpack.c.h.b16 %v500
      %v1093 = vunpack.c.l.b16 %v501
      %v1094 = vpack.c.b16 %v815, %v806
      %v1095 = vpack.c.b16 %v816, %v807
      %v1096 = vpack.c.b16 %v817, %v808
      %v1097 = vpack.c.b16 %v818, %v809
      %v1098 = vpack.c.b16 %v819, %v810
      %v1099 = vpack.c.b16 %v820, %v811
      %v1100 = vpack.c.b16 %v821, %v812
      %v1101 = vpack.c.b16 %v822, %v813
      %v1102 = vpack.c.b16 %v823, %v814
      %v1103 = vpack.c.b16 %v833, %v824
      %v1104 = vpack.c.b16 %v834, %v825
      %v1105 = vpack.c.b16 %v835, %v826
      %v1106 = vpack.c.b16 %v836, %v827
      %v1107 = vpack.c.b16 %v837, %v828
      %v1108 = vpack.c.b16 %v838, %v829
      %v1109 = vpack.c.b16 %v839, %v830
      %v1110 = vpack.c.b16 %v840, %v831
      %v1111 = vpack.c.b16 %v841, %v832
      %v1112 = vpack.c.b16 %v851, %v842
      %v1113 = vpack.c.b16 %v852, %v843
      %v1114 = vpack.c.b16 %v853, %v844
      %v1115 = vpack.c.b16 %v854, %v845
      %v1116 = vpack.c.b16 %v855, %v846
      %v1117 = vpack.c.b16 %v856, %v847
      %v1118 = vpack.c.b16 %v857, %v848
      %v1119 = vpack.c.b16 %v858, %v849
      %v1120 = vpack.c.b16 %v859, %v850
      %v1121 = vpack.c.b16 %v869, %v860
      %v1122 = vpack.c.b16 %v870, %v861
      %v1123 = vpack.c.b16 %v871, %v862
      %v1124 = vpack.c.b16 %v872, %v863
      %v1125 = vpack.c.b16 %v873, %v864
      %v1126 = vpack.c.b16 %v874, %v865
      %v1127 = vpack.c.b16 %v875, %v866
      %v1128 = vpack.c.b16 %v876, %v867
      %v1129 = vpack.c.b16 %v877, %v868
      %v1130 = vpack.c.b16 %v887, %v878
      %v1131 = vpack.c.b16 %v888, %v879
      %v1132 = vpack.c.b16 %v889, %v880
      %v1133 = vpack.c.b16 %v890, %v881
      %v1134 = vpack.c.b16 %v891, %v882
      %v1135 = vpack.c.b16 %v892, %v883
      %v1136 = vpack.c.b16 %v893, %v884
      %v1137 = vpack.c.b16 %v894, %v885
      %v1138 = vpack.c.b16 %v895, %v886
      %v1139 = vpack.c.b16 %v905, %v896
      %v1140 = vpack.c.b16 %v906, %v897
      %v1141 = vpack.c.b16 %v907, %v898
      %v1142 = vpack.c.b16 %v908, %v899
      %v1143 = vpack.c.b16 %v909, %v900
      %v1144 = vpack.c.b16 %v910, %v901
      %v1145 = vpack.c.b16 %v911, %v902
      %v1146 = vpack.c.b16 %v912, %v903
      %v1147 = vpack.c.b16 %v913, %v904
      %v1148 = vpack.c.b16 %v923, %v914
      %v1149 = vpack.c.b16 %v924, %v915
      %v1150 = vpack.c.b16 %v925, %v916
      %v1151 = vpack.c.b16 %v926, %v917
      %v1152 = vpack.c.b16 %v927, %v918
      %v1153 = vpack.c.b16 %v928, %v919
      %v1154 = vpack.c.b16 %v929, %v920
      %v1155 = vpack.c.b16 %v930, %v921
      %v1156 = vpack.c.b16 %v931, %v922
      %v1157 = vpack.c.b16 %v941, %v932
      %v1158 = vpack.c.b16 %v942, %v933
      %v1159 = vpack.c.b16 %v943, %v934
      %v1160 = vpack.c.b16 %v944, %v935
      %v1161 = vpack.c.b16 %v945, %v936
      %v1162 = vpack.c.b16 %v946, %v937
      %v1163 = vpack.c.b16 %v947, %v938
      %v1164 = vpack.c.b16 %v948, %v939
      %v1165 = vpack.c.b16 %v949, %v940
      %v1166 = vpack.c.b16 %v959, %v950
      %v1167 = vpack.c.b16 %v960, %v951
      %v1168 = vpack.c.b16 %v961, %v952
      %v1169 = vpack.c.b16 %v962, %v953
      %v1170 = vpack.c.b16 %v963, %v954
      %v1171 = vpack.c.b16 %v964, %v955
      %v1172 = vpack.c.b16 %v965, %v956
      %v1173 = vpack.c.b16 %v966, %v957
      %v1174 = vpack.c.b16 %v967, %v958
      %v1175 = vpack.c.b16 %v977, %v968
      %v1176 = vpack.c.b16 %v978, %v969
      %v1177 = vpack.c.b16 %v979, %v970
      %v1178 = vpack.c.b16 %v980, %v971
      %v1179 = vpack.c.b16 %v981, %v972
      %v1180 = vpack.c.b16 %v982, %v973
      %v1181 = vpack.c.b16 %v983, %v974
      %v1182 = vpack.c.b16 %v984, %v975
      %v1183 = vpack.c.b16 %v985, %v976
      %v1184 = vpack.c.b16 %v995, %v986
      %v1185 = vpack.c.b16 %v996, %v987
      %v1186 = vpack.c.b16 %v997, %v988
      %v1187 = vpack.c.b16 %v998, %v989
      %v1188 = vpack.c.b16 %v999, %v990
      %v1189 = vpack.c.b16 %v1000, %v991
      %v1190 = vpack.c.b16 %v1001, %v992
      %v1191 = vpack.c.b16 %v1002, %v993
      %v1192 = vpack.c.b16 %v1003, %v994
      %v1193 = vpack.c.b16 %v1013, %v1004
      %v1194 = vpack.c.b16 %v1014, %v1005
      %v1195 = vpack.c.b16 %v1015, %v1006
      %v1196 = vpack.c.b16 %v1016, %v1007
      %v1197 = vpack.c.b16 %v1017, %v1008
      %v1198 = vpack.c.b16 %v1018, %v1009
      %v1199 = vpack.c.b16 %v1019, %v1010
      %v1200 = vpack.c.b16 %v1020, %v1011
      %v1201 = vpack.c.b16 %v1021, %v1012
      %v1202 = vpack.c.b16 %v1031, %v1022
      %v1203 = vpack.c.b16 %v1032, %v1023
      %v1204 = vpack.c.b16 %v1033, %v1024
      %v1205 = vpack.c.b16 %v1034, %v1025
      %v1206 = vpack.c.b16 %v1035, %v1026
      %v1207 = vpack.c.b16 %v1036, %v1027
      %v1208 = vpack.c.b16 %v1037, %v1028
      %v1209 = vpack.c.b16 %v1038, %v1029
      %v1210 = vpack.c.b16 %v1039, %v1030
      %v1211 = vpack.c.b16 %v1049, %v1040
      %v1212 = vpack.c.b16 %v1050, %v1041
      %v1213 = vpack.c.b16 %v1051, %v1042
      %v1214 = vpack.c.b16 %v1052, %v1043
      %v1215 = vpack.c.b16 %v1053, %v1044
      %v1216 = vpack.c.b16 %v1054, %v1045
      %v1217 = vpack.c.b16 %v1055, %v1046
      %v1218 = vpack.c.b16 %v1056, %v1047
      %v1219 = vpack.c.b16 %v1057, %v1048
      %v1220 = vpack.c.b16 %v1067, %v1058
      %v1221 = vpack.c.b16 %v1068, %v1059
      %v1222 = vpack.c.b16 %v1069, %v1060
      %v1223 = vpack.c.b16 %v1070, %v1061
      %v1224 = vpack.c.b16 %v1071, %v1062
      %v1225 = vpack.c.b16 %v1072, %v1063
      %v1226 = vpack.c.b16 %v1073, %v1064
      %v1227 = vpack.c.b16 %v1074, %v1065
      %v1228 = vpack.c.b16 %v1075, %v1066
      %v1229 = vpack.c.b16 %v1085, %v1076
      %v1230 = vpack.c.b16 %v1086, %v1077
      %v1231 = vpack.c.b16 %v1087, %v1078
      %v1232 = vpack.c.b16 %v1088, %v1079
      %v1233 = vpack.c.b16 %v1089, %v1080
      %v1234 = vpack.c.b16 %v1090, %v1081
      %v1235 = vpack.c.b16 %v1091, %v1082
      %v1236 = vpack.c.b16 %v1092, %v1083
      %v1237 = vpack.c.b16 %v1093, %v1084
      %v1526 = vunpack.c.l.b16 %v502
      %v1527 = vunpack.c.l.b16 %v503
      %v1528 = vunpack.c.l.b16 %v504
      %v1529 = vunpack.c.l.b16 %v505
      %v1530 = vunpack.c.l.b16 %v506
      %v1531 = vunpack.c.l.b16 %v507
      %v1532 = vunpack.c.l.b16 %v508
      %v1533 = vunpack.c.l.b16 %v509
      %v1534 = vunpack.c.l.b16 %v510
      %v1535 = vunpack.c.l.b16 %v511
      %v1536 = vunpack.c.l.b16 %v512
      %v1537 = vunpack.c.l.b16 %v513
      %v1538 = vunpack.c.l.b16 %v514
      %v1539 = vunpack.c.l.b16 %v515
      %v1540 = vunpack.c.l.b16 %v516
      %v1541 = vunpack.c.l.b16 %v517
      %v1542 = vunpack.c.l.b16 %v518
      %v1543 = vunpack.c.l.b16 %v519
      %v1544 = vunpack.c.l.b16 %v520
      %v1545 = vunpack.c.l.b16 %v521
      %v1546 = vunpack.c.l.b16 %v522
      %v1547 = vunpack.c.l.b16 %v523
      %v1548 = vunpack.c.l.b16 %v524
      %v1549 = vunpack.c.l.b16 %v525
      %v1550 = vunpack.c.l.b16 %v526
      %v1551 = vunpack.c.l.b16 %v527
      %v1552 = vunpack.c.l.b16 %v528
      %v1553 = vunpack.c.l.b16 %v529
      %v1554 = vunpack.c.l.b16 %v530
      %v1555 = vunpack.c.l.b16 %v531
      %v1556 = vunpack.c.l.b16 %v532
      %v1557 = vunpack.c.l.b16 %v533
      %v1558 = vunpack.c.l.b16 %v534
      %v1559 = vunpack.c.l.b16 %v535
      %v1560 = vunpack.c.l.b16 %v536
      %v1561 = vunpack.c.l.b16 %v537
      %v1562 = vunpack.c.l.b16 %v538
      %v1563 = vunpack.c.l.b16 %v539
      %v1564 = vunpack.c.l.b16 %v540
      %v1565 = vunpack.c.l.b16 %v541
      %v1566 = vunpack.c.l.b16 %v542
      %v1567 = vunpack.c.l.b16 %v543
      %v1568 = vunpack.c.l.b16 %v544
      %v1569 = vunpack.c.l.b16 %v545
      %v1570 = vunpack.c.l.b16 %v546
      %v1571 = vunpack.c.l.b16 %v547
      %v1572 = vunpack.c.l.b16 %v548
      %v1573 = vunpack.c.l.b16 %v549
      %v1574 = vunpack.c.l.b16 %v550
      %v1575 = vunpack.c.l.b16 %v551
      %v1576 = vunpack.c.l.b16 %v552
      %v1577 = vunpack.c.l.b16 %v553
      %v1578 = vunpack.c.l.b16 %v554
      %v1579 = vunpack.c.l.b16 %v555
      %v1580 = vunpack.c.l.b16 %v556
      %v1581 = vunpack.c.l.b16 %v557
      %v1582 = vunpack.c.l.b16 %v558
      %v1583 = vunpack.c.l.b16 %v559
      %v1584 = vunpack.c.l.b16 %v560
      %v1585 = vunpack.c.l.b16 %v561
      %v1586 = vunpack.c.l.b16 %v562
      %v1587 = vunpack.c.l.b16 %v563
      %v1588 = vunpack.c.l.b16 %v564
      %v1589 = vunpack.c.l.b16 %v565
      %v1590 = vunpack.c.l.b16 %v566
      %v1591 = vunpack.c.l.b16 %v567
      %v1592 = vunpack.c.l.b16 %v568
      %v1593 = vunpack.c.l.b16 %v569
      %v1594 = vunpack.c.l.b16 %v570
      %v1595 = vunpack.c.l.b16 %v571
      %v1596 = vunpack.c.l.b16 %v572
      %v1597 = vunpack.c.l.b16 %v573
      %v1598 = vunpack.c.l.b16 %v574
      %v1599 = vunpack.c.l.b16 %v575
      %v1600 = vunpack.c.l.b16 %v576
      %v1601 = vunpack.c.l.b16 %v577
      %v1602 = vunpack.c.l.b16 %v578
      %v1603 = vunpack.c.l.b16 %v579
      %v1604 = vunpack.c.l.b16 %v580
      %v1605 = vunpack.c.l.b16 %v581
      %v1606 = vunpack.c.l.b16 %v582
      %v1607 = vunpack.c.l.b16 %v583
      %v1608 = vunpack.c.l.b16 %v584
      %v1609 = vunpack.c.l.b16 %v585
      %v1610 = vunpack.c.l.b16 %v586
      %v1611 = vunpack.c.l.b16 %v587
      %v1612 = vunpack.c.l.b16 %v588
      %v1613 = vunpack.c.l.b16 %v589
      %v1614 = vunpack.c.l.b16 %v590
      %v1615 = vunpack.c.l.b16 %v591
      %v1616 = vunpack.c.l.b16 %v592
      %v1617 = vunpack.c.l.b16 %v593
      %v1618 = vunpack.c.l.b16 %v594
      %v1619 = vunpack.c.l.b16 %v595
      %v1620 = vunpack.c.l.b16 %v596
      %v1621 = vunpack.c.l.b16 %v597
      %v1622 = vunpack.c.l.b16 %v598
      %v1623 = vunpack.c.l.b16 %v599
      %v1624 = vunpack.c.l.b16 %v600
      %v1625 = vunpack.c.l.b16 %v601
      %v1626 = vunpack.c.l.b16 %v602
      %v1627 = vunpack.c.l.b16 %v603
      %v1628 = vunpack.c.l.b16 %v604
      %v1629 = vunpack.c.l.b16 %v605
      %v1630 = vunpack.c.l.b16 %v606
      %v1631 = vunpack.c.l.b16 %v607
      %v1632 = vunpack.c.l.b16 %v608
      %v1633 = vunpack.c.l.b16 %v609
      %v1634 = vunpack.c.l.b16 %v610
      %v1635 = vunpack.c.l.b16 %v611
      %v1636 = vunpack.c.l.b16 %v612
      %v1637 = vunpack.c.l.b16 %v613
      %v1638 = vunpack.c.l.b16 %v614
      %v1639 = vunpack.c.l.b16 %v615
      %v1640 = vunpack.c.l.b16 %v616
      %v1641 = vunpack.c.l.b16 %v617
      %v1642 = vunpack.c.l.b16 %v618
      %v1643 = vunpack.c.l.b16 %v619
      %v1644 = vunpack.c.l.b16 %v620
      %v1645 = vunpack.c.l.b16 %v621
      %v1646 = vunpack.c.l.b16 %v622
      %v1647 = vunpack.c.l.b16 %v623
      %v1648 = vunpack.c.l.b16 %v624
      %v1649 = vunpack.c.l.b16 %v625
      %v1650 = vunpack.c.l.b16 %v626
      %v1651 = vunpack.c.l.b16 %v627
      %v1652 = vunpack.c.l.b16 %v628
      %v1653 = vunpack.c.l.b16 %v629
      %v1654 = vunpack.c.l.b16 %v630
      %v1655 = vunpack.c.l.b16 %v631
      %v1656 = vunpack.c.l.b16 %v632
      %v1657 = vunpack.c.l.b16 %v633
      %v1658 = vunpack.c.l.b16 %v634
      %v1659 = vunpack.c.l.b16 %v635
      %v1660 = vunpack.c.l.b16 %v636
      %v1661 = vunpack.c.l.b16 %v637
      %v1662 = vunpack.c.l.b16 %v638
      %v1663 = vunpack.c.l.b16 %v639
      %v1664 = vunpack.c.l.b16 %v640
      %v1665 = vunpack.c.l.b16 %v641
      %v1666 = vunpack.c.l.b16 %v642
      %v1667 = vunpack.c.l.b16 %v643
      %v1668 = vunpack.c.l.b16 %v644
      %v1669 = vunpack.c.l.b16 %v645
      %v1670 = vpack.c.b16 %v1527, %v1526
      %v1671 = vpack.c.b16 %v1529, %v1528
      %v1672 = vpack.c.b16 %v1531, %v1530
      %v1673 = vpack.c.b16 %v1533, %v1532
      %v1674 = vpack.c.b16 %v1535, %v1534
      %v1675 = vpack.c.b16 %v1537, %v1536
      %v1676 = vpack.c.b16 %v1539, %v1538
      %v1677 = vpack.c.b16 %v1541, %v1540
      %v1678 = vpack.c.b16 %v1543, %v1542
      %v1679 = vpack.c.b16 %v1545, %v1544
      %v1680 = vpack.c.b16 %v1547, %v1546
      %v1681 = vpack.c.b16 %v1549, %v1548
      %v1682 = vpack.c.b16 %v1551, %v1550
      %v1683 = vpack.c.b16 %v1553, %v1552
      %v1684 = vpack.c.b16 %v1555, %v1554
      %v1685 = vpack.c.b16 %v1557, %v1556
      %v1686 = vpack.c.b16 %v1559, %v1558
      %v1687 = vpack.c.b16 %v1561, %v1560
      %v1688 = vpack.c.b16 %v1563, %v1562
      %v1689 = vpack.c.b16 %v1565, %v1564
      %v1690 = vpack.c.b16 %v1567, %v1566
      %v1691 = vpack.c.b16 %v1569, %v1568
      %v1692 = vpack.c.b16 %v1571, %v1570
      %v1693 = vpack.c.b16 %v1573, %v1572
      %v1694 = vpack.c.b16 %v1575, %v1574
      %v1695 = vpack.c.b16 %v1577, %v1576
      %v1696 = vpack.c.b16 %v1579, %v1578
      %v1697 = vpack.c.b16 %v1581, %v1580
      %v1698 = vpack.c.b16 %v1583, %v1582
      %v1699 = vpack.c.b16 %v1585, %v1584
      %v1700 = vpack.c.b16 %v1587, %v1586
      %v1701 = vpack.c.b16 %v1589, %v1588
      %v1702 = vpack.c.b16 %v1591, %v1590
      %v1703 = vpack.c.b16 %v1593, %v1592
      %v1704 = vpack.c.b16 %v1595, %v1594
      %v1705 = vpack.c.b16 %v1597, %v1596
      %v1706 = vpack.c.b16 %v1599, %v1598
      %v1707 = vpack.c.b16 %v1601, %v1600
      %v1708 = vpack.c.b16 %v1603, %v1602
      %v1709 = vpack.c.b16 %v1605, %v1604
      %v1710 = vpack.c.b16 %v1607, %v1606
      %v1711 = vpack.c.b16 %v1609, %v1608
      %v1712 = vpack.c.b16 %v1611, %v1610
      %v1713 = vpack.c.b16 %v1613, %v1612
      %v1714 = vpack.c.b16 %v1615, %v1614
      %v1715 = vpack.c.b16 %v1617, %v1616
      %v1716 = vpack.c.b16 %v1619, %v1618
      %v1717 = vpack.c.b16 %v1621, %v1620
      %v1718 = vpack.c.b16 %v1623, %v1622
      %v1719 = vpack.c.b16 %v1625, %v1624
      %v1720 = vpack.c.b16 %v1627, %v1626
      %v1721 = vpack.c.b16 %v1629, %v1628
      %v1722 = vpack.c.b16 %v1631, %v1630
      %v1723 = vpack.c.b16 %v1633, %v1632
      %v1724 = vpack.c.b16 %v1635, %v1634
      %v1725 = vpack.c.b16 %v1637, %v1636
      %v1726 = vpack.c.b16 %v1639, %v1638
      %v1727 = vpack.c.b16 %v1641, %v1640
      %v1728 = vpack.c.b16 %v1643, %v1642
      %v1729 = vpack.c.b16 %v1645, %v1644
      %v1730 = vpack.c.b16 %v1647, %v1646
      %v1731 = vpack.c.b16 %v1649, %v1648
      %v1732 = vpack.c.b16 %v1651, %v1650
      %v1733 = vpack.c.b16 %v1653, %v1652
      %v1734 = vpack.c.b16 %v1655, %v1654
      %v1735 = vpack.c.b16 %v1657, %v1656
      %v1736 = vpack.c.b16 %v1659, %v1658
      %v1737 = vpack.c.b16 %v1661, %v1660
      %v1738 = vpack.c.b16 %v1663, %v1662
      %v1739 = vpack.c.b16 %v1665, %v1664
      %v1740 = vpack.c.b16 %v1667, %v1666
      %v1741 = vpack.c.b16 %v1669, %v1668
      %1814 = vmatprep.subr.bf16.mxu0 0
      %1815 = vmatpush1.bf16.msra.mxu0 %v1670
      %1816 = vmatprep.subr.bf16.mxu0 0
      %1817 = vmatpush1.bf16.msra.mxu0 %v1671
      %1818 = vmatprep.subr.bf16.mxu0 0
      %1819 = vmatpush1.bf16.msra.mxu0 %v1672
      %1820 = vmatprep.subr.bf16.mxu0 0
      %1821 = vmatpush1.bf16.msra.mxu0 %v1673
      %1822 = vmatprep.subr.bf16.mxu0 0
      %1823 = vmatpush1.bf16.msra.mxu0 %v1674
      %1824 = vmatprep.subr.bf16.mxu0 0
      %1825 = vmatpush1.bf16.msra.mxu0 %v1675
      %1826 = vmatprep.subr.bf16.mxu0 0
      %1827 = vmatpush1.bf16.msra.mxu0 %v1676
      %1828 = vmatprep.subr.bf16.mxu0 0
      %1829 = vmatpush1.bf16.msra.mxu0 %v1677
      %1830 = vmatprep.subr.bf16.mxu0 0
      %1831 = vmatpush1.bf16.msra.mxu0 %v1678
      %1832 = vmatprep.subr.bf16.mxu0 0
      %1833 = vmatpush1.bf16.msra.mxu0 %v1679
      %1834 = vmatprep.subr.bf16.mxu0 0
      %1835 = vmatpush1.bf16.msra.mxu0 %v1680
      %1836 = vmatprep.subr.bf16.mxu0 0
      %1837 = vmatpush1.bf16.msra.mxu0 %v1681
      %1838 = vmatprep.subr.bf16.mxu0 0
      %1839 = vmatpush1.bf16.msra.mxu0 %v1682
      %1840 = vmatprep.subr.bf16.mxu0 0
      %1841 = vmatpush1.bf16.msra.mxu0 %v1683
      %1842 = vmatprep.subr.bf16.mxu0 0
      %1843 = vmatpush1.bf16.msra.mxu0 %v1684
      %1844 = vmatprep.subr.bf16.mxu0 0
      %1845 = vmatpush1.bf16.msra.mxu0 %v1685
      %1846 = vmatprep.mubr.bf16.mxu0 %v1095
      %1847 = vmatmul.mubr.bf16.gmra.mrb[0].mxu0 %v1094
      %v1848 = vpop.f32.mrb[0].mxu0
      %v1849 = vadd.f32 0.0, %v1848
      %v1850 = vpop.f32.mrb[0].mxu0
      %v1851 = vpop.f32.mrb[0].mxu0
      %v1852 = vadd.f32 0.0, %v1851
      %v1853 = vpop.f32.mrb[0].mxu0
      %1854 = vmatprep.mubr.bf16.mxu0 %v1104
      %1855 = vmatmul.mubr.bf16.gmra.mrb[0].mxu0 %v1103
      %v1856 = vpop.f32.mrb[0].mxu0
      %v1857 = vadd.f32 0.0, %v1856
      %v1858 = vpop.f32.mrb[0].mxu0
      %v1859 = vpop.f32.mrb[0].mxu0
      %v1860 = vadd.f32 0.0, %v1859
      %v1861 = vpop.f32.mrb[0].mxu0
      %1862 = vmatprep.mubr.bf16.mxu0 %v1113
      %1863 = vmatmul.mubr.bf16.gmra.mrb[0].mxu0 %v1112
      %v1864 = vpop.f32.mrb[0].mxu0
      %v1865 = vadd.f32 0.0, %v1864
      %v1866 = vpop.f32.mrb[0].mxu0
      %v1867 = vpop.f32.mrb[0].mxu0
      %v1868 = vadd.f32 0.0, %v1867
      %v1869 = vpop.f32.mrb[0].mxu0
      %1870 = vmatprep.mubr.bf16.mxu0 %v1122
      %1871 = vmatmul.mubr.bf16.gmra.mrb[0].mxu0 %v1121
      %v1872 = vpop.f32.mrb[0].mxu0
      %v1873 = vadd.f32 0.0, %v1872
      %v1874 = vpop.f32.mrb[0].mxu0
      %v1875 = vpop.f32.mrb[0].mxu0
      %v1876 = vadd.f32 0.0, %v1875
      %v1877 = vpop.f32.mrb[0].mxu0
      %1878 = vmatprep.mubr.bf16.mxu0 %v1131
      %1879 = vmatmul.mubr.bf16.gmra.mrb[0].mxu0 %v1130
      %v1880 = vpop.f32.mrb[0].mxu0
      %v1881 = vadd.f32 0.0, %v1880
      %v1882 = vpop.f32.mrb[0].mxu0
      %v1883 = vpop.f32.mrb[0].mxu0
      %v1884 = vadd.f32 0.0, %v1883
      %v1885 = vpop.f32.mrb[0].mxu0
      %1886 = vmatprep.mubr.bf16.mxu0 %v1140
      %1887 = vmatmul.mubr.bf16.gmra.mrb[0].mxu0 %v1139
      %v1888 = vpop.f32.mrb[0].mxu0
      %v1889 = vadd.f32 0.0, %v1888
      %v1890 = vpop.f32.mrb[0].mxu0
      %v1891 = vpop.f32.mrb[0].mxu0
      %v1892 = vadd.f32 0.0, %v1891
      %v1893 = vpop.f32.mrb[0].mxu0
      %1894 = vmatprep.mubr.bf16.mxu0 %v1149
      %1895 = vmatmul.mubr.bf16.gmra.mrb[0].mxu0 %v1148
      %v1896 = vpop.f32.mrb[0].mxu0
      %v1897 = vadd.f32 0.0, %v1896
      %v1898 = vpop.f32.mrb[0].mxu0
      %v1899 = vpop.f32.mrb[0].mxu0
      %v1900 = vadd.f32 0.0, %v1899
      %v1901 = vpop.f32.mrb[0].mxu0
      %1902 = vmatprep.mubr.bf16.mxu0 %v1158
      %1903 = vmatmul.mubr.bf16.gmra.mrb[0].mxu0 %v1157
      %v1904 = vpop.f32.mrb[0].mxu0
      %v1905 = vadd.f32 0.0, %v1904
      %v1906 = vpop.f32.mrb[0].mxu0
      %v1907 = vpop.f32.mrb[0].mxu0
      %v1908 = vadd.f32 0.0, %v1907
      %v1909 = vpop.f32.mrb[0].mxu0
      %1910 = vmatprep.mubr.bf16.mxu0 %v1167
      %1911 = vmatmul.mubr.bf16.gmra.mrb[0].mxu0 %v1166
      %v1912 = vpop.f32.mrb[0].mxu0
      %v1913 = vadd.f32 0.0, %v1912
      %v1914 = vpop.f32.mrb[0].mxu0
      %v1915 = vpop.f32.mrb[0].mxu0
      %v1916 = vadd.f32 0.0, %v1915
      %v1917 = vpop.f32.mrb[0].mxu0
      %1918 = vmatprep.mubr.bf16.mxu0 %v1176
      %1919 = vmatmul.mubr.bf16.gmra.mrb[0].mxu0 %v1175
      %v1920 = vpop.f32.mrb[0].mxu0
      %v1921 = vadd.f32 0.0, %v1920
      %v1922 = vpop.f32.mrb[0].mxu0
      %v1923 = vpop.f32.mrb[0].mxu0
      %v1924 = vadd.f32 0.0, %v1923
      %v1925 = vpop.f32.mrb[0].mxu0
      %1926 = vmatprep.mubr.bf16.mxu0 %v1185
      %1927 = vmatmul.mubr.bf16.gmra.mrb[0].mxu0 %v1184
      %v1928 = vpop.f32.mrb[0].mxu0
      %v1929 = vadd.f32 0.0, %v1928
      %v1930 = vpop.f32.mrb[0].mxu0
      %v1931 = vpop.f32.mrb[0].mxu0
      %v1932 = vadd.f32 0.0, %v1931
      %v1933 = vpop.f32.mrb[0].mxu0
      %1934 = vmatprep.mubr.bf16.mxu0 %v1194
      %1935 = vmatmul.mubr.bf16.gmra.mrb[0].mxu0 %v1193
      %v1936 = vpop.f32.mrb[0].mxu0
      %v1937 = vadd.f32 0.0, %v1936
      %v1938 = vpop.f32.mrb[0].mxu0
      %v1939 = vpop.f32.mrb[0].mxu0
      %v1940 = vadd.f32 0.0, %v1939
      %v1941 = vpop.f32.mrb[0].mxu0
      %1942 = vmatprep.mubr.bf16.mxu0 %v1203
      %1943 = vmatmul.mubr.bf16.gmra.mrb[0].mxu0 %v1202
      %v1944 = vpop.f32.mrb[0].mxu0
      %v1945 = vadd.f32 0.0, %v1944
      %v1946 = vpop.f32.mrb[0].mxu0
      %v1947 = vpop.f32.mrb[0].mxu0
      %v1948 = vadd.f32 0.0, %v1947
      %v1949 = vpop.f32.mrb[0].mxu0
      %1950 = vmatprep.mubr.bf16.mxu0 %v1212
      %1951 = vmatmul.mubr.bf16.gmra.mrb[0].mxu0 %v1211
      %v1952 = vpop.f32.mrb[0].mxu0
      %v1953 = vadd.f32 0.0, %v1952
      %v1954 = vpop.f32.mrb[0].mxu0
      %v1955 = vpop.f32.mrb[0].mxu0
      %v1956 = vadd.f32 0.0, %v1955
      %v1957 = vpop.f32.mrb[0].mxu0
      %1958 = vmatprep.mubr.bf16.mxu0 %v1221
      %1959 = vmatmul.mubr.bf16.gmra.mrb[0].mxu0 %v1220
      %v1960 = vpop.f32.mrb[0].mxu0
      %v1961 = vadd.f32 0.0, %v1960
      %v1962 = vpop.f32.mrb[0].mxu0
      %v1963 = vpop.f32.mrb[0].mxu0
      %v1964 = vadd.f32 0.0, %v1963
      %v1965 = vpop.f32.mrb[0].mxu0
      %1966 = vmatprep.mubr.bf16.mxu0 %v1230
      %1967 = vmatmul.mubr.bf16.gmra.mrb[0].mxu0 %v1229
      %v1968 = vpop.f32.mrb[0].mxu0
      %v1969 = vadd.f32 0.0, %v1968
      %v1970 = vpop.f32.mrb[0].mxu0
      %v1971 = vpop.f32.mrb[0].mxu0
      %v1972 = vadd.f32 0.0, %v1971
      %v1973 = vpop.f32.mrb[0].mxu0
      %1974 = vdwg.mxu0
      %1975 = vmatprep.subr.bf16.mxu0 0
      %1976 = vmatpush1.bf16.msra.mxu0 %v1686
      %1977 = vmatprep.subr.bf16.mxu0 0
      %1978 = vmatpush1.bf16.msra.mxu0 %v1687
      %1979 = vmatprep.subr.bf16.mxu0 0
      %1980 = vmatpush1.bf16.msra.mxu0 %v1688
      %1981 = vmatprep.subr.bf16.mxu0 0
      %1982 = vmatpush1.bf16.msra.mxu0 %v1689
      %1983 = vmatprep.subr.bf16.mxu0 0
      %1984 = vmatpush1.bf16.msra.mxu0 %v1690
      %1985 = vmatprep.subr.bf16.mxu0 0
      %1986 = vmatpush1.bf16.msra.mxu0 %v1691
      %1987 = vmatprep.subr.bf16.mxu0 0
      %1988 = vmatpush1.bf16.msra.mxu0 %v1692
      %1989 = vmatprep.subr.bf16.mxu0 0
      %1990 = vmatpush1.bf16.msra.mxu0 %v1693
      %1991 = vmatprep.subr.bf16.mxu0 0
      %1992 = vmatpush1.bf16.msra.mxu0 %v1694
      %1993 = vmatprep.subr.bf16.mxu0 0
      %1994 = vmatpush1.bf16.msra.mxu0 %v1695
      %1995 = vmatprep.subr.bf16.mxu0 0
      %1996 = vmatpush1.bf16.msra.mxu0 %v1696
      %1997 = vmatprep.subr.bf16.mxu0 0
      %1998 = vmatpush1.bf16.msra.mxu0 %v1697
      %1999 = vmatprep.subr.bf16.mxu0 0
      %2000 = vmatpush1.bf16.msra.mxu0 %v1698
      %2001 = vmatprep.subr.bf16.mxu0 0
      %2002 = vmatpush1.bf16.msra.mxu0 %v1699
      %2003 = vmatprep.subr.bf16.mxu0 0
      %2004 = vmatpush1.bf16.msra.mxu0 %v1700
      %2005 = vmatprep.subr.bf16.mxu0 0
      %2006 = vmatpush1.bf16.msra.mxu0 %v1701
      %2007 = vmatprep.mubr.bf16.mxu0 %v1097
      %2008 = vmatmul.mubr.bf16.gmra.mrb[0].mxu0 %v1096
      %v2009 = vpop.f32.mrb[0].mxu0
      %v2010 = vadd.f32 %v1849, %v2009
      %v2011 = vpop.f32.mrb[0].mxu0
      %v2012 = vpop.f32.mrb[0].mxu0
      %v2013 = vadd.f32 %v1852, %v2012
      %v2014 = vpop.f32.mrb[0].mxu0
      %2015 = vmatprep.mubr.bf16.mxu0 %v1106
      %2016 = vmatmul.mubr.bf16.gmra.mrb[0].mxu0 %v1105
      %v2017 = vpop.f32.mrb[0].mxu0
      %v2018 = vadd.f32 %v1857, %v2017
      %v2019 = vpop.f32.mrb[0].mxu0
      %v2020 = vpop.f32.mrb[0].mxu0
      %v2021 = vadd.f32 %v1860, %v2020
      %v2022 = vpop.f32.mrb[0].mxu0
      %2023 = vmatprep.mubr.bf16.mxu0 %v1115
      %2024 = vmatmul.mubr.bf16.gmra.mrb[0].mxu0 %v1114
      %v2025 = vpop.f32.mrb[0].mxu0
      %v2026 = vadd.f32 %v1865, %v2025
      %v2027 = vpop.f32.mrb[0].mxu0
      %v2028 = vpop.f32.mrb[0].mxu0
      %v2029 = vadd.f32 %v1868, %v2028
      %v2030 = vpop.f32.mrb[0].mxu0
      %2031 = vmatprep.mubr.bf16.mxu0 %v1124
      %2032 = vmatmul.mubr.bf16.gmra.mrb[0].mxu0 %v1123
      %v2033 = vpop.f32.mrb[0].mxu0
      %v2034 = vadd.f32 %v1873, %v2033
      %v2035 = vpop.f32.mrb[0].mxu0
      %v2036 = vpop.f32.mrb[0].mxu0
      %v2037 = vadd.f32 %v1876, %v2036
      %v2038 = vpop.f32.mrb[0].mxu0
      %2039 = vmatprep.mubr.bf16.mxu0 %v1133
      %2040 = vmatmul.mubr.bf16.gmra.mrb[0].mxu0 %v1132
      %v2041 = vpop.f32.mrb[0].mxu0
      %v2042 = vadd.f32 %v1881, %v2041
      %v2043 = vpop.f32.mrb[0].mxu0
      %v2044 = vpop.f32.mrb[0].mxu0
      %v2045 = vadd.f32 %v1884, %v2044
      %v2046 = vpop.f32.mrb[0].mxu0
      %2047 = vmatprep.mubr.bf16.mxu0 %v1142
      %2048 = vmatmul.mubr.bf16.gmra.mrb[0].mxu0 %v1141
      %v2049 = vpop.f32.mrb[0].mxu0
      %v2050 = vadd.f32 %v1889, %v2049
      %v2051 = vpop.f32.mrb[0].mxu0
      %v2052 = vpop.f32.mrb[0].mxu0
      %v2053 = vadd.f32 %v1892, %v2052
      %v2054 = vpop.f32.mrb[0].mxu0
      %2055 = vmatprep.mubr.bf16.mxu0 %v1151
      %2056 = vmatmul.mubr.bf16.gmra.mrb[0].mxu0 %v1150
      %v2057 = vpop.f32.mrb[0].mxu0
      %v2058 = vadd.f32 %v1897, %v2057
      %v2059 = vpop.f32.mrb[0].mxu0
      %v2060 = vpop.f32.mrb[0].mxu0
      %v2061 = vadd.f32 %v1900, %v2060
      %v2062 = vpop.f32.mrb[0].mxu0
      %2063 = vmatprep.mubr.bf16.mxu0 %v1160
      %2064 = vmatmul.mubr.bf16.gmra.mrb[0].mxu0 %v1159
      %v2065 = vpop.f32.mrb[0].mxu0
      %v2066 = vadd.f32 %v1905, %v2065
      %v2067 = vpop.f32.mrb[0].mxu0
      %v2068 = vpop.f32.mrb[0].mxu0
      %v2069 = vadd.f32 %v1908, %v2068
      %v2070 = vpop.f32.mrb[0].mxu0
      %2071 = vmatprep.mubr.bf16.mxu0 %v1169
      %2072 = vmatmul.mubr.bf16.gmra.mrb[0].mxu0 %v1168
      %v2073 = vpop.f32.mrb[0].mxu0
      %v2074 = vadd.f32 %v1913, %v2073
      %v2075 = vpop.f32.mrb[0].mxu0
      %v2076 = vpop.f32.mrb[0].mxu0
      %v2077 = vadd.f32 %v1916, %v2076
      %v2078 = vpop.f32.mrb[0].mxu0
      %2079 = vmatprep.mubr.bf16.mxu0 %v1178
      %2080 = vmatmul.mubr.bf16.gmra.mrb[0].mxu0 %v1177
      %v2081 = vpop.f32.mrb[0].mxu0
      %v2082 = vadd.f32 %v1921, %v2081
      %v2083 = vpop.f32.mrb[0].mxu0
      %v2084 = vpop.f32.mrb[0].mxu0
      %v2085 = vadd.f32 %v1924, %v2084
      %v2086 = vpop.f32.mrb[0].mxu0
      %2087 = vmatprep.mubr.bf16.mxu0 %v1187
      %2088 = vmatmul.mubr.bf16.gmra.mrb[0].mxu0 %v1186
      %v2089 = vpop.f32.mrb[0].mxu0
      %v2090 = vadd.f32 %v1929, %v2089
      %v2091 = vpop.f32.mrb[0].mxu0
      %v2092 = vpop.f32.mrb[0].mxu0
      %v2093 = vadd.f32 %v1932, %v2092
      %v2094 = vpop.f32.mrb[0].mxu0
      %2095 = vmatprep.mubr.bf16.mxu0 %v1196
      %2096 = vmatmul.mubr.bf16.gmra.mrb[0].mxu0 %v1195
      %v2097 = vpop.f32.mrb[0].mxu0
      %v2098 = vadd.f32 %v1937, %v2097
      %v2099 = vpop.f32.mrb[0].mxu0
      %v2100 = vpop.f32.mrb[0].mxu0
      %v2101 = vadd.f32 %v1940, %v2100
      %v2102 = vpop.f32.mrb[0].mxu0
      %2103 = vmatprep.mubr.bf16.mxu0 %v1205
      %2104 = vmatmul.mubr.bf16.gmra.mrb[0].mxu0 %v1204
      %v2105 = vpop.f32.mrb[0].mxu0
      %v2106 = vadd.f32 %v1945, %v2105
      %v2107 = vpop.f32.mrb[0].mxu0
      %v2108 = vpop.f32.mrb[0].mxu0
      %v2109 = vadd.f32 %v1948, %v2108
      %v2110 = vpop.f32.mrb[0].mxu0
      %2111 = vmatprep.mubr.bf16.mxu0 %v1214
      %2112 = vmatmul.mubr.bf16.gmra.mrb[0].mxu0 %v1213
      %v2113 = vpop.f32.mrb[0].mxu0
      %v2114 = vadd.f32 %v1953, %v2113
      %v2115 = vpop.f32.mrb[0].mxu0
      %v2116 = vpop.f32.mrb[0].mxu0
      %v2117 = vadd.f32 %v1956, %v2116
      %v2118 = vpop.f32.mrb[0].mxu0
      %2119 = vmatprep.mubr.bf16.mxu0 %v1223
      %2120 = vmatmul.mubr.bf16.gmra.mrb[0].mxu0 %v1222
      %v2121 = vpop.f32.mrb[0].mxu0
      %v2122 = vadd.f32 %v1961, %v2121
      %v2123 = vpop.f32.mrb[0].mxu0
      %v2124 = vpop.f32.mrb[0].mxu0
      %v2125 = vadd.f32 %v1964, %v2124
      %v2126 = vpop.f32.mrb[0].mxu0
      %2127 = vmatprep.mubr.bf16.mxu0 %v1232
      %2128 = vmatmul.mubr.bf16.gmra.mrb[0].mxu0 %v1231
      %v2129 = vpop.f32.mrb[0].mxu0
      %v2130 = vadd.f32 %v1969, %v2129
      %v2131 = vpop.f32.mrb[0].mxu0
      %v2132 = vpop.f32.mrb[0].mxu0
      %v2133 = vadd.f32 %v1972, %v2132
      %v2134 = vpop.f32.mrb[0].mxu0
      %2135 = vdwg.mxu0
      %2136 = vmatprep.subr.bf16.mxu0 0
      %2137 = vmatpush1.bf16.msra.mxu0 %v1702
      %2138 = vmatprep.subr.bf16.mxu0 0
      %2139 = vmatpush1.bf16.msra.mxu0 %v1703
      %2140 = vmatprep.subr.bf16.mxu0 0
      %2141 = vmatpush1.bf16.msra.mxu0 %v1704
      %2142 = vmatprep.subr.bf16.mxu0 0
      %2143 = vmatpush1.bf16.msra.mxu0 %v1705
      %2144 = vmatprep.subr.bf16.mxu0 0
      %2145 = vmatpush1.bf16.msra.mxu0 %v1706
      %2146 = vmatprep.subr.bf16.mxu0 0
      %2147 = vmatpush1.bf16.msra.mxu0 %v1707
      %2148 = vmatprep.subr.bf16.mxu0 0
      %2149 = vmatpush1.bf16.msra.mxu0 %v1708
      %2150 = vmatprep.subr.bf16.mxu0 0
      %2151 = vmatpush1.bf16.msra.mxu0 %v1709
      %2152 = vmatprep.subr.bf16.mxu0 0
      %2153 = vmatpush1.bf16.msra.mxu0 %v1710
      %2154 = vmatprep.subr.bf16.mxu0 0
      %2155 = vmatpush1.bf16.msra.mxu0 %v1711
      %2156 = vmatprep.subr.bf16.mxu0 0
      %2157 = vmatpush1.bf16.msra.mxu0 %v1712
      %2158 = vmatprep.subr.bf16.mxu0 0
      %2159 = vmatpush1.bf16.msra.mxu0 %v1713
      %2160 = vmatprep.subr.bf16.mxu0 0
      %2161 = vmatpush1.bf16.msra.mxu0 %v1714
      %2162 = vmatprep.subr.bf16.mxu0 0
      %2163 = vmatpush1.bf16.msra.mxu0 %v1715
      %2164 = vmatprep.subr.bf16.mxu0 0
      %2165 = vmatpush1.bf16.msra.mxu0 %v1716
      %2166 = vmatprep.subr.bf16.mxu0 0
      %2167 = vmatpush1.bf16.msra.mxu0 %v1717
      %2168 = vmatprep.mubr.bf16.mxu0 %v1099
      %2169 = vmatmul.mubr.bf16.gmra.mrb[0].mxu0 %v1098
      %v2170 = vpop.f32.mrb[0].mxu0
      %v2171 = vadd.f32 %v2010, %v2170
      %v2172 = vpop.f32.mrb[0].mxu0
      %v2173 = vpop.f32.mrb[0].mxu0
      %v2174 = vadd.f32 %v2013, %v2173
      %v2175 = vpop.f32.mrb[0].mxu0
      %2176 = vmatprep.mubr.bf16.mxu0 %v1108
      %2177 = vmatmul.mubr.bf16.gmra.mrb[0].mxu0 %v1107
      %v2178 = vpop.f32.mrb[0].mxu0
      %v2179 = vadd.f32 %v2018, %v2178
      %v2180 = vpop.f32.mrb[0].mxu0
      %v2181 = vpop.f32.mrb[0].mxu0
      %v2182 = vadd.f32 %v2021, %v2181
      %v2183 = vpop.f32.mrb[0].mxu0
      %2184 = vmatprep.mubr.bf16.mxu0 %v1117
      %2185 = vmatmul.mubr.bf16.gmra.mrb[0].mxu0 %v1116
      %v2186 = vpop.f32.mrb[0].mxu0
      %v2187 = vadd.f32 %v2026, %v2186
      %v2188 = vpop.f32.mrb[0].mxu0
      %v2189 = vpop.f32.mrb[0].mxu0
      %v2190 = vadd.f32 %v2029, %v2189
      %v2191 = vpop.f32.mrb[0].mxu0
      %2192 = vmatprep.mubr.bf16.mxu0 %v1126
      %2193 = vmatmul.mubr.bf16.gmra.mrb[0].mxu0 %v1125
      %v2194 = vpop.f32.mrb[0].mxu0
      %v2195 = vadd.f32 %v2034, %v2194
      %v2196 = vpop.f32.mrb[0].mxu0
      %v2197 = vpop.f32.mrb[0].mxu0
      %v2198 = vadd.f32 %v2037, %v2197
      %v2199 = vpop.f32.mrb[0].mxu0
      %2200 = vmatprep.mubr.bf16.mxu0 %v1135
      %2201 = vmatmul.mubr.bf16.gmra.mrb[0].mxu0 %v1134
      %v2202 = vpop.f32.mrb[0].mxu0
      %v2203 = vadd.f32 %v2042, %v2202
      %v2204 = vpop.f32.mrb[0].mxu0
      %v2205 = vpop.f32.mrb[0].mxu0
      %v2206 = vadd.f32 %v2045, %v2205
      %v2207 = vpop.f32.mrb[0].mxu0
      %2208 = vmatprep.mubr.bf16.mxu0 %v1144
      %2209 = vmatmul.mubr.bf16.gmra.mrb[0].mxu0 %v1143
      %v2210 = vpop.f32.mrb[0].mxu0
      %v2211 = vadd.f32 %v2050, %v2210
      %v2212 = vpop.f32.mrb[0].mxu0
      %v2213 = vpop.f32.mrb[0].mxu0
      %v2214 = vadd.f32 %v2053, %v2213
      %v2215 = vpop.f32.mrb[0].mxu0
      %2216 = vmatprep.mubr.bf16.mxu0 %v1153
      %2217 = vmatmul.mubr.bf16.gmra.mrb[0].mxu0 %v1152
      %v2218 = vpop.f32.mrb[0].mxu0
      %v2219 = vadd.f32 %v2058, %v2218
      %v2220 = vpop.f32.mrb[0].mxu0
      %v2221 = vpop.f32.mrb[0].mxu0
      %v2222 = vadd.f32 %v2061, %v2221
      %v2223 = vpop.f32.mrb[0].mxu0
      %2224 = vmatprep.mubr.bf16.mxu0 %v1162
      %2225 = vmatmul.mubr.bf16.gmra.mrb[0].mxu0 %v1161
      %v2226 = vpop.f32.mrb[0].mxu0
      %v2227 = vadd.f32 %v2066, %v2226
      %v2228 = vpop.f32.mrb[0].mxu0
      %v2229 = vpop.f32.mrb[0].mxu0
      %v2230 = vadd.f32 %v2069, %v2229
      %v2231 = vpop.f32.mrb[0].mxu0
      %2232 = vmatprep.mubr.bf16.mxu0 %v1171
      %2233 = vmatmul.mubr.bf16.gmra.mrb[0].mxu0 %v1170
      %v2234 = vpop.f32.mrb[0].mxu0
      %v2235 = vadd.f32 %v2074, %v2234
      %v2236 = vpop.f32.mrb[0].mxu0
      %v2237 = vpop.f32.mrb[0].mxu0
      %v2238 = vadd.f32 %v2077, %v2237
      %v2239 = vpop.f32.mrb[0].mxu0
      %2240 = vmatprep.mubr.bf16.mxu0 %v1180
      %2241 = vmatmul.mubr.bf16.gmra.mrb[0].mxu0 %v1179
      %v2242 = vpop.f32.mrb[0].mxu0
      %v2243 = vadd.f32 %v2082, %v2242
      %v2244 = vpop.f32.mrb[0].mxu0
      %v2245 = vpop.f32.mrb[0].mxu0
      %v2246 = vadd.f32 %v2085, %v2245
      %v2247 = vpop.f32.mrb[0].mxu0
      %2248 = vmatprep.mubr.bf16.mxu0 %v1189
      %2249 = vmatmul.mubr.bf16.gmra.mrb[0].mxu0 %v1188
      %v2250 = vpop.f32.mrb[0].mxu0
      %v2251 = vadd.f32 %v2090, %v2250
      %v2252 = vpop.f32.mrb[0].mxu0
      %v2253 = vpop.f32.mrb[0].mxu0
      %v2254 = vadd.f32 %v2093, %v2253
      %v2255 = vpop.f32.mrb[0].mxu0
      %2256 = vmatprep.mubr.bf16.mxu0 %v1198
      %2257 = vmatmul.mubr.bf16.gmra.mrb[0].mxu0 %v1197
      %v2258 = vpop.f32.mrb[0].mxu0
      %v2259 = vadd.f32 %v2098, %v2258
      %v2260 = vpop.f32.mrb[0].mxu0
      %v2261 = vpop.f32.mrb[0].mxu0
      %v2262 = vadd.f32 %v2101, %v2261
      %v2263 = vpop.f32.mrb[0].mxu0
      %2264 = vmatprep.mubr.bf16.mxu0 %v1207
      %2265 = vmatmul.mubr.bf16.gmra.mrb[0].mxu0 %v1206
      %v2266 = vpop.f32.mrb[0].mxu0
      %v2267 = vadd.f32 %v2106, %v2266
      %v2268 = vpop.f32.mrb[0].mxu0
      %v2269 = vpop.f32.mrb[0].mxu0
      %v2270 = vadd.f32 %v2109, %v2269
      %v2271 = vpop.f32.mrb[0].mxu0
      %2272 = vmatprep.mubr.bf16.mxu0 %v1216
      %2273 = vmatmul.mubr.bf16.gmra.mrb[0].mxu0 %v1215
      %v2274 = vpop.f32.mrb[0].mxu0
      %v2275 = vadd.f32 %v2114, %v2274
      %v2276 = vpop.f32.mrb[0].mxu0
      %v2277 = vpop.f32.mrb[0].mxu0
      %v2278 = vadd.f32 %v2117, %v2277
      %v2279 = vpop.f32.mrb[0].mxu0
      %2280 = vmatprep.mubr.bf16.mxu0 %v1225
      %2281 = vmatmul.mubr.bf16.gmra.mrb[0].mxu0 %v1224
      %v2282 = vpop.f32.mrb[0].mxu0
      %v2283 = vadd.f32 %v2122, %v2282
      %v2284 = vpop.f32.mrb[0].mxu0
      %v2285 = vpop.f32.mrb[0].mxu0
      %v2286 = vadd.f32 %v2125, %v2285
      %v2287 = vpop.f32.mrb[0].mxu0
      %2288 = vmatprep.mubr.bf16.mxu0 %v1234
      %2289 = vmatmul.mubr.bf16.gmra.mrb[0].mxu0 %v1233
      %v2290 = vpop.f32.mrb[0].mxu0
      %v2291 = vadd.f32 %v2130, %v2290
      %v2292 = vpop.f32.mrb[0].mxu0
      %v2293 = vpop.f32.mrb[0].mxu0
      %v2294 = vadd.f32 %v2133, %v2293
      %v2295 = vpop.f32.mrb[0].mxu0
      %2296 = vdwg.mxu0
      %2297 = vmatprep.subr.bf16.mxu0 0
      %2298 = vmatpush1.bf16.msra.mxu0 %v1718
      %2299 = vmatprep.subr.bf16.mxu0 0
      %2300 = vmatpush1.bf16.msra.mxu0 %v1719
      %2301 = vmatprep.subr.bf16.mxu0 0
      %2302 = vmatpush1.bf16.msra.mxu0 %v1720
      %2303 = vmatprep.subr.bf16.mxu0 0
      %2304 = vmatpush1.bf16.msra.mxu0 %v1721
      %2305 = vmatprep.subr.bf16.mxu0 0
      %2306 = vmatpush1.bf16.msra.mxu0 %v1722
      %2307 = vmatprep.subr.bf16.mxu0 0
      %2308 = vmatpush1.bf16.msra.mxu0 %v1723
      %2309 = vmatprep.subr.bf16.mxu0 0
      %2310 = vmatpush1.bf16.msra.mxu0 %v1724
      %2311 = vmatprep.subr.bf16.mxu0 0
      %2312 = vmatpush1.bf16.msra.mxu0 %v1725
      %2313 = vmatprep.subr.bf16.mxu0 0
      %2314 = vmatpush1.bf16.msra.mxu0 %v1726
      %2315 = vmatprep.subr.bf16.mxu0 0
      %2316 = vmatpush1.bf16.msra.mxu0 %v1727
      %2317 = vmatprep.subr.bf16.mxu0 0
      %2318 = vmatpush1.bf16.msra.mxu0 %v1728
      %2319 = vmatprep.subr.bf16.mxu0 0
      %2320 = vmatpush1.bf16.msra.mxu0 %v1729
      %2321 = vmatprep.subr.bf16.mxu0 0
      %2322 = vmatpush1.bf16.msra.mxu0 %v1730
      %2323 = vmatprep.subr.bf16.mxu0 0
      %2324 = vmatpush1.bf16.msra.mxu0 %v1731
      %2325 = vmatprep.subr.bf16.mxu0 0
      %2326 = vmatpush1.bf16.msra.mxu0 %v1732
      %2327 = vmatprep.subr.bf16.mxu0 0
      %2328 = vmatpush1.bf16.msra.mxu0 %v1733
      %2329 = vmatprep.mubr.bf16.mxu0 %v1101
      %2330 = vmatmul.mubr.bf16.gmra.mrb[0].mxu0 %v1100
      %v2331 = vpop.f32.mrb[0].mxu0
      %v2332 = vadd.f32 %v2171, %v2331
      %v2333 = vpop.f32.mrb[0].mxu0
      %v2334 = vpop.f32.mrb[0].mxu0
      %v2335 = vadd.f32 %v2174, %v2334
      %v2336 = vpop.f32.mrb[0].mxu0
      %2337 = vmatprep.mubr.bf16.mxu0 %v1110
      %2338 = vmatmul.mubr.bf16.gmra.mrb[0].mxu0 %v1109
      %v2339 = vpop.f32.mrb[0].mxu0
      %v2340 = vadd.f32 %v2179, %v2339
      %v2341 = vpop.f32.mrb[0].mxu0
      %v2342 = vpop.f32.mrb[0].mxu0
      %v2343 = vadd.f32 %v2182, %v2342
      %v2344 = vpop.f32.mrb[0].mxu0
      %2345 = vmatprep.mubr.bf16.mxu0 %v1119
      %2346 = vmatmul.mubr.bf16.gmra.mrb[0].mxu0 %v1118
      %v2347 = vpop.f32.mrb[0].mxu0
      %v2348 = vadd.f32 %v2187, %v2347
      %v2349 = vpop.f32.mrb[0].mxu0
      %v2350 = vpop.f32.mrb[0].mxu0
      %v2351 = vadd.f32 %v2190, %v2350
      %v2352 = vpop.f32.mrb[0].mxu0
      %2353 = vmatprep.mubr.bf16.mxu0 %v1128
      %2354 = vmatmul.mubr.bf16.gmra.mrb[0].mxu0 %v1127
      %v2355 = vpop.f32.mrb[0].mxu0
      %v2356 = vadd.f32 %v2195, %v2355
      %v2357 = vpop.f32.mrb[0].mxu0
      %v2358 = vpop.f32.mrb[0].mxu0
      %v2359 = vadd.f32 %v2198, %v2358
      %v2360 = vpop.f32.mrb[0].mxu0
      %2361 = vmatprep.mubr.bf16.mxu0 %v1137
      %2362 = vmatmul.mubr.bf16.gmra.mrb[0].mxu0 %v1136
      %v2363 = vpop.f32.mrb[0].mxu0
      %v2364 = vadd.f32 %v2203, %v2363
      %v2365 = vpop.f32.mrb[0].mxu0
      %v2366 = vpop.f32.mrb[0].mxu0
      %v2367 = vadd.f32 %v2206, %v2366
      %v2368 = vpop.f32.mrb[0].mxu0
      %2369 = vmatprep.mubr.bf16.mxu0 %v1146
      %2370 = vmatmul.mubr.bf16.gmra.mrb[0].mxu0 %v1145
      %v2371 = vpop.f32.mrb[0].mxu0
      %v2372 = vadd.f32 %v2211, %v2371
      %v2373 = vpop.f32.mrb[0].mxu0
      %v2374 = vpop.f32.mrb[0].mxu0
      %v2375 = vadd.f32 %v2214, %v2374
      %v2376 = vpop.f32.mrb[0].mxu0
      %2377 = vmatprep.mubr.bf16.mxu0 %v1155
      %2378 = vmatmul.mubr.bf16.gmra.mrb[0].mxu0 %v1154
      %v2379 = vpop.f32.mrb[0].mxu0
      %v2380 = vadd.f32 %v2219, %v2379
      %v2381 = vpop.f32.mrb[0].mxu0
      %v2382 = vpop.f32.mrb[0].mxu0
      %v2383 = vadd.f32 %v2222, %v2382
      %v2384 = vpop.f32.mrb[0].mxu0
      %2385 = vmatprep.mubr.bf16.mxu0 %v1164
      %2386 = vmatmul.mubr.bf16.gmra.mrb[0].mxu0 %v1163
      %v2387 = vpop.f32.mrb[0].mxu0
      %v2388 = vadd.f32 %v2227, %v2387
      %v2389 = vpop.f32.mrb[0].mxu0
      %v2390 = vpop.f32.mrb[0].mxu0
      %v2391 = vadd.f32 %v2230, %v2390
      %v2392 = vpop.f32.mrb[0].mxu0
      %2393 = vmatprep.mubr.bf16.mxu0 %v1173
      %2394 = vmatmul.mubr.bf16.gmra.mrb[0].mxu0 %v1172
      %v2395 = vpop.f32.mrb[0].mxu0
      %v2396 = vadd.f32 %v2235, %v2395
      %v2397 = vpop.f32.mrb[0].mxu0
      %v2398 = vpop.f32.mrb[0].mxu0
      %v2399 = vadd.f32 %v2238, %v2398
      %v2400 = vpop.f32.mrb[0].mxu0
      %2401 = vmatprep.mubr.bf16.mxu0 %v1182
      %2402 = vmatmul.mubr.bf16.gmra.mrb[0].mxu0 %v1181
      %v2403 = vpop.f32.mrb[0].mxu0
      %v2404 = vadd.f32 %v2243, %v2403
      %v2405 = vpop.f32.mrb[0].mxu0
      %v2406 = vpop.f32.mrb[0].mxu0
      %v2407 = vadd.f32 %v2246, %v2406
      %v2408 = vpop.f32.mrb[0].mxu0
      %2409 = vmatprep.mubr.bf16.mxu0 %v1191
      %2410 = vmatmul.mubr.bf16.gmra.mrb[0].mxu0 %v1190
      %v2411 = vpop.f32.mrb[0].mxu0
      %v2412 = vadd.f32 %v2251, %v2411
      %v2413 = vpop.f32.mrb[0].mxu0
      %v2414 = vpop.f32.mrb[0].mxu0
      %v2415 = vadd.f32 %v2254, %v2414
      %v2416 = vpop.f32.mrb[0].mxu0
      %2417 = vmatprep.mubr.bf16.mxu0 %v1200
      %2418 = vmatmul.mubr.bf16.gmra.mrb[0].mxu0 %v1199
      %v2419 = vpop.f32.mrb[0].mxu0
      %v2420 = vadd.f32 %v2259, %v2419
      %v2421 = vpop.f32.mrb[0].mxu0
      %v2422 = vpop.f32.mrb[0].mxu0
      %v2423 = vadd.f32 %v2262, %v2422
      %v2424 = vpop.f32.mrb[0].mxu0
      %2425 = vmatprep.mubr.bf16.mxu0 %v1209
      %2426 = vmatmul.mubr.bf16.gmra.mrb[0].mxu0 %v1208
      %v2427 = vpop.f32.mrb[0].mxu0
      %v2428 = vadd.f32 %v2267, %v2427
      %v2429 = vpop.f32.mrb[0].mxu0
      %v2430 = vpop.f32.mrb[0].mxu0
      %v2431 = vadd.f32 %v2270, %v2430
      %v2432 = vpop.f32.mrb[0].mxu0
      %2433 = vmatprep.mubr.bf16.mxu0 %v1218
      %2434 = vmatmul.mubr.bf16.gmra.mrb[0].mxu0 %v1217
      %v2435 = vpop.f32.mrb[0].mxu0
      %v2436 = vadd.f32 %v2275, %v2435
      %v2437 = vpop.f32.mrb[0].mxu0
      %v2438 = vpop.f32.mrb[0].mxu0
      %v2439 = vadd.f32 %v2278, %v2438
      %v2440 = vpop.f32.mrb[0].mxu0
      %2441 = vmatprep.mubr.bf16.mxu0 %v1227
      %2442 = vmatmul.mubr.bf16.gmra.mrb[0].mxu0 %v1226
      %v2443 = vpop.f32.mrb[0].mxu0
      %v2444 = vadd.f32 %v2283, %v2443
      %v2445 = vpop.f32.mrb[0].mxu0
      %v2446 = vpop.f32.mrb[0].mxu0
      %v2447 = vadd.f32 %v2286, %v2446
      %v2448 = vpop.f32.mrb[0].mxu0
      %2449 = vmatprep.mubr.bf16.mxu0 %v1236
      %2450 = vmatmul.mubr.bf16.gmra.mrb[0].mxu0 %v1235
      %v2451 = vpop.f32.mrb[0].mxu0
      %v2452 = vadd.f32 %v2291, %v2451
      %v2453 = vpop.f32.mrb[0].mxu0
      %v2454 = vpop.f32.mrb[0].mxu0
      %v2455 = vadd.f32 %v2294, %v2454
      %v2456 = vpop.f32.mrb[0].mxu0
      %2457 = vdwg.mxu0
      %2458 = vmatprep.subr.bf16.mxu0 0
      %2459 = vmatpush1.bf16.msra.mxu0 %v1734
      %2460 = vmatprep.subr.bf16.mxu0 0
      %2461 = vmatpush1.bf16.msra.mxu0 %v1735
      %2462 = vmatprep.subr.bf16.mxu0 0
      %2463 = vmatpush1.bf16.msra.mxu0 %v1736
      %2464 = vmatprep.subr.bf16.mxu0 0
      %2465 = vmatpush1.bf16.msra.mxu0 %v1737
      %2466 = vmatprep.subr.bf16.mxu0 0
      %2467 = vmatpush1.bf16.msra.mxu0 %v1738
      %2468 = vmatprep.subr.bf16.mxu0 0
      %2469 = vmatpush1.bf16.msra.mxu0 %v1739
      %2470 = vmatprep.subr.bf16.mxu0 0
      %2471 = vmatpush1.bf16.msra.mxu0 %v1740
      %2472 = vmatprep.subr.bf16.mxu0 0
      %2473 = vmatpush1.bf16.msra.mxu0 %v1741
      %2474 = vmatprep.subr.bf16.mxu0 0
      %2475 = vmatpush1.bf16.msra.mxu0 0
      %2476 = vmatprep.subr.bf16.mxu0 0
      %2477 = vmatpush1.bf16.msra.mxu0 0
      %2478 = vmatprep.subr.bf16.mxu0 0
      %2479 = vmatpush1.bf16.msra.mxu0 0
      %2480 = vmatprep.subr.bf16.mxu0 0
      %2481 = vmatpush1.bf16.msra.mxu0 0
      %2482 = vmatprep.subr.bf16.mxu0 0
      %2483 = vmatpush1.bf16.msra.mxu0 0
      %2484 = vmatprep.subr.bf16.mxu0 0
      %2485 = vmatpush1.bf16.msra.mxu0 0
      %2486 = vmatprep.subr.bf16.mxu0 0
      %2487 = vmatpush1.bf16.msra.mxu0 0
      %2488 = vmatprep.subr.bf16.mxu0 0
      %2489 = vmatpush1.bf16.msra.mxu0 0
      %2490 = vmatprep.mubr.bf16.mxu0 0
      %2491 = vmatmul.mubr.bf16.gmra.mrb[0].mxu0 %v1102
      %v2492 = vpop.f32.mrb[0].mxu0
      %v2493 = vadd.f32 %v2332, %v2492
      %v2494 = vpop.f32.mrb[0].mxu0
      %v2495 = vpop.f32.mrb[0].mxu0
      %v2496 = vadd.f32 %v2335, %v2495
      %v2497 = vpop.f32.mrb[0].mxu0
      %2498 = vmatprep.mubr.bf16.mxu0 0
      %2499 = vmatmul.mubr.bf16.gmra.mrb[0].mxu0 %v1111
      %v2500 = vpop.f32.mrb[0].mxu0
      %v2501 = vadd.f32 %v2340, %v2500
      %v2502 = vpop.f32.mrb[0].mxu0
      %v2503 = vpop.f32.mrb[0].mxu0
      %v2504 = vadd.f32 %v2343, %v2503
      %v2505 = vpop.f32.mrb[0].mxu0
      %2506 = vmatprep.mubr.bf16.mxu0 0
      %2507 = vmatmul.mubr.bf16.gmra.mrb[0].mxu0 %v1120
      %v2508 = vpop.f32.mrb[0].mxu0
      %v2509 = vadd.f32 %v2348, %v2508
      %v2510 = vpop.f32.mrb[0].mxu0
      %v2511 = vpop.f32.mrb[0].mxu0
      %v2512 = vadd.f32 %v2351, %v2511
      %v2513 = vpop.f32.mrb[0].mxu0
      %2514 = vmatprep.mubr.bf16.mxu0 0
      %2515 = vmatmul.mubr.bf16.gmra.mrb[0].mxu0 %v1129
      %v2516 = vpop.f32.mrb[0].mxu0
      %v2517 = vadd.f32 %v2356, %v2516
      %v2518 = vpop.f32.mrb[0].mxu0
      %v2519 = vpop.f32.mrb[0].mxu0
      %v2520 = vadd.f32 %v2359, %v2519
      %v2521 = vpop.f32.mrb[0].mxu0
      %2522 = vmatprep.mubr.bf16.mxu0 0
      %2523 = vmatmul.mubr.bf16.gmra.mrb[0].mxu0 %v1138
      %v2524 = vpop.f32.mrb[0].mxu0
      %v2525 = vadd.f32 %v2364, %v2524
      %v2526 = vpop.f32.mrb[0].mxu0
      %v2527 = vpop.f32.mrb[0].mxu0
      %v2528 = vadd.f32 %v2367, %v2527
      %v2529 = vpop.f32.mrb[0].mxu0
      %2530 = vmatprep.mubr.bf16.mxu0 0
      %2531 = vmatmul.mubr.bf16.gmra.mrb[0].mxu0 %v1147
      %v2532 = vpop.f32.mrb[0].mxu0
      %v2533 = vadd.f32 %v2372, %v2532
      %v2534 = vpop.f32.mrb[0].mxu0
      %v2535 = vpop.f32.mrb[0].mxu0
      %v2536 = vadd.f32 %v2375, %v2535
      %v2537 = vpop.f32.mrb[0].mxu0
      %2538 = vmatprep.mubr.bf16.mxu0 0
      %2539 = vmatmul.mubr.bf16.gmra.mrb[0].mxu0 %v1156
      %v2540 = vpop.f32.mrb[0].mxu0
      %v2541 = vadd.f32 %v2380, %v2540
      %v2542 = vpop.f32.mrb[0].mxu0
      %v2543 = vpop.f32.mrb[0].mxu0
      %v2544 = vadd.f32 %v2383, %v2543
      %v2545 = vpop.f32.mrb[0].mxu0
      %2546 = vmatprep.mubr.bf16.mxu0 0
      %2547 = vmatmul.mubr.bf16.gmra.mrb[0].mxu0 %v1165
      %v2548 = vpop.f32.mrb[0].mxu0
      %v2549 = vadd.f32 %v2388, %v2548
      %v2550 = vpop.f32.mrb[0].mxu0
      %v2551 = vpop.f32.mrb[0].mxu0
      %v2552 = vadd.f32 %v2391, %v2551
      %v2553 = vpop.f32.mrb[0].mxu0
      %2554 = vmatprep.mubr.bf16.mxu0 0
      %2555 = vmatmul.mubr.bf16.gmra.mrb[0].mxu0 %v1174
      %v2556 = vpop.f32.mrb[0].mxu0
      %v2557 = vadd.f32 %v2396, %v2556
      %v2558 = vpop.f32.mrb[0].mxu0
      %v2559 = vpop.f32.mrb[0].mxu0
      %v2560 = vadd.f32 %v2399, %v2559
      %v2561 = vpop.f32.mrb[0].mxu0
      %2562 = vmatprep.mubr.bf16.mxu0 0
      %2563 = vmatmul.mubr.bf16.gmra.mrb[0].mxu0 %v1183
      %v2564 = vpop.f32.mrb[0].mxu0
      %v2565 = vadd.f32 %v2404, %v2564
      %v2566 = vpop.f32.mrb[0].mxu0
      %v2567 = vpop.f32.mrb[0].mxu0
      %v2568 = vadd.f32 %v2407, %v2567
      %v2569 = vpop.f32.mrb[0].mxu0
      %2570 = vmatprep.mubr.bf16.mxu0 0
      %2571 = vmatmul.mubr.bf16.gmra.mrb[0].mxu0 %v1192
      %v2572 = vpop.f32.mrb[0].mxu0
      %v2573 = vadd.f32 %v2412, %v2572
      %v2574 = vpop.f32.mrb[0].mxu0
      %v2575 = vpop.f32.mrb[0].mxu0
      %v2576 = vadd.f32 %v2415, %v2575
      %v2577 = vpop.f32.mrb[0].mxu0
      %2578 = vmatprep.mubr.bf16.mxu0 0
      %2579 = vmatmul.mubr.bf16.gmra.mrb[0].mxu0 %v1201
      %v2580 = vpop.f32.mrb[0].mxu0
      %v2581 = vadd.f32 %v2420, %v2580
      %v2582 = vpop.f32.mrb[0].mxu0
      %v2583 = vpop.f32.mrb[0].mxu0
      %v2584 = vadd.f32 %v2423, %v2583
      %v2585 = vpop.f32.mrb[0].mxu0
      %2586 = vmatprep.mubr.bf16.mxu0 0
      %2587 = vmatmul.mubr.bf16.gmra.mrb[0].mxu0 %v1210
      %v2588 = vpop.f32.mrb[0].mxu0
      %v2589 = vadd.f32 %v2428, %v2588
      %v2590 = vpop.f32.mrb[0].mxu0
      %v2591 = vpop.f32.mrb[0].mxu0
      %v2592 = vadd.f32 %v2431, %v2591
      %v2593 = vpop.f32.mrb[0].mxu0
      %2594 = vmatprep.mubr.bf16.mxu0 0
      %2595 = vmatmul.mubr.bf16.gmra.mrb[0].mxu0 %v1219
      %v2596 = vpop.f32.mrb[0].mxu0
      %v2597 = vadd.f32 %v2436, %v2596
      %v2598 = vpop.f32.mrb[0].mxu0
      %v2599 = vpop.f32.mrb[0].mxu0
      %v2600 = vadd.f32 %v2439, %v2599
      %v2601 = vpop.f32.mrb[0].mxu0
      %2602 = vmatprep.mubr.bf16.mxu0 0
      %2603 = vmatmul.mubr.bf16.gmra.mrb[0].mxu0 %v1228
      %v2604 = vpop.f32.mrb[0].mxu0
      %v2605 = vadd.f32 %v2444, %v2604
      %v2606 = vpop.f32.mrb[0].mxu0
      %v2607 = vpop.f32.mrb[0].mxu0
      %v2608 = vadd.f32 %v2447, %v2607
      %v2609 = vpop.f32.mrb[0].mxu0
      %2610 = vmatprep.mubr.bf16.mxu0 0
      %2611 = vmatmul.mubr.bf16.gmra.mrb[0].mxu0 %v1237
      %v2612 = vpop.f32.mrb[0].mxu0
      %v2613 = vadd.f32 %v2452, %v2612
      %v2614 = vpop.f32.mrb[0].mxu0
      %v2615 = vpop.f32.mrb[0].mxu0
      %v2616 = vadd.f32 %v2455, %v2615
      %v2617 = vpop.f32.mrb[0].mxu0
      %2618 = vdwg.mxu0
      %v2619 = vpack.c.bf16 %v2496, %v2493
      %v2620 = vpack.c.bf16 %v2504, %v2501
      %v2621 = vpack.c.bf16 %v2512, %v2509
      %v2622 = vpack.c.bf16 %v2520, %v2517
      %v2623 = vpack.c.bf16 %v2528, %v2525
      %v2624 = vpack.c.bf16 %v2536, %v2533
      %v2625 = vpack.c.bf16 %v2544, %v2541
      %v2626 = vpack.c.bf16 %v2552, %v2549
      %v2627 = vpack.c.bf16 %v2560, %v2557
      %v2628 = vpack.c.bf16 %v2568, %v2565
      %v2629 = vpack.c.bf16 %v2576, %v2573
      %v2630 = vpack.c.bf16 %v2584, %v2581
      %v2631 = vpack.c.bf16 %v2592, %v2589
      %v2632 = vpack.c.bf16 %v2600, %v2597
      %v2633 = vpack.c.bf16 %v2608, %v2605
      %v2634 = vpack.c.bf16 %v2616, %v2613
      %v2651 = vunpack.c.l.b16 %v2619
      %v2652 = vunpack.c.h.b16 %v2619
      %v2653 = vunpack.c.l.b16 %v2620
      %v2654 = vunpack.c.h.b16 %v2620
      %v2655 = vunpack.c.l.b16 %v2621
      %v2656 = vunpack.c.h.b16 %v2621
      %v2657 = vunpack.c.l.b16 %v2622
      %v2658 = vunpack.c.h.b16 %v2622
      %v2659 = vunpack.c.l.b16 %v2623
      %v2660 = vunpack.c.h.b16 %v2623
      %v2661 = vunpack.c.l.b16 %v2624
      %v2662 = vunpack.c.h.b16 %v2624
      %v2663 = vunpack.c.l.b16 %v2625
      %v2664 = vunpack.c.h.b16 %v2625
      %v2665 = vunpack.c.l.b16 %v2626
      %v2666 = vunpack.c.h.b16 %v2626
      %v2667 = vunpack.c.l.b16 %v2627
      %v2668 = vunpack.c.h.b16 %v2627
      %v2669 = vunpack.c.l.b16 %v2628
      %v2670 = vunpack.c.h.b16 %v2628
      %v2671 = vunpack.c.l.b16 %v2629
      %v2672 = vunpack.c.h.b16 %v2629
      %v2673 = vunpack.c.l.b16 %v2630
      %v2674 = vunpack.c.h.b16 %v2630
      %v2675 = vunpack.c.l.b16 %v2631
      %v2676 = vunpack.c.h.b16 %v2631
      %v2677 = vunpack.c.l.b16 %v2632
      %v2678 = vunpack.c.h.b16 %v2632
      %v2679 = vunpack.c.l.b16 %v2633
      %v2680 = vunpack.c.h.b16 %v2633
      %v2681 = vunpack.c.l.b16 %v2634
      %v2682 = vunpack.c.h.b16 %v2634
      %v2683 = vpack.c.b16 %v2651, %v2651
      %v2684 = vpack.c.b16 %v2652, %v2652
      %v2685 = vpack.c.b16 %v2653, %v2653
      %v2686 = vpack.c.b16 %v2654, %v2654
      %v2687 = vpack.c.b16 %v2655, %v2655
      %v2688 = vpack.c.b16 %v2656, %v2656
      %v2689 = vpack.c.b16 %v2657, %v2657
      %v2690 = vpack.c.b16 %v2658, %v2658
      %v2691 = vpack.c.b16 %v2659, %v2659
      %v2692 = vpack.c.b16 %v2660, %v2660
      %v2693 = vpack.c.b16 %v2661, %v2661
      %v2694 = vpack.c.b16 %v2662, %v2662
      %v2695 = vpack.c.b16 %v2663, %v2663
      %v2696 = vpack.c.b16 %v2664, %v2664
      %v2697 = vpack.c.b16 %v2665, %v2665
      %v2698 = vpack.c.b16 %v2666, %v2666
      %v2699 = vpack.c.b16 %v2667, %v2667
      %v2700 = vpack.c.b16 %v2668, %v2668
      %v2701 = vpack.c.b16 %v2669, %v2669
      %v2702 = vpack.c.b16 %v2670, %v2670
      %v2703 = vpack.c.b16 %v2671, %v2671
      %v2704 = vpack.c.b16 %v2672, %v2672
      %v2705 = vpack.c.b16 %v2673, %v2673
      %v2706 = vpack.c.b16 %v2674, %v2674
      %v2707 = vpack.c.b16 %v2675, %v2675
      %v2708 = vpack.c.b16 %v2676, %v2676
      %v2709 = vpack.c.b16 %v2677, %v2677
      %v2710 = vpack.c.b16 %v2678, %v2678
      %v2711 = vpack.c.b16 %v2679, %v2679
      %v2712 = vpack.c.b16 %v2680, %v2680
      %v2713 = vpack.c.b16 %v2681, %v2681
      %v2714 = vpack.c.b16 %v2682, %v2682
      %2747 = vst [vmem:[%s325] sm:$0xf] %v2683
      %2748 = vst [vmem:[%s325 + $0x4] sm:$0xf] %v2684
      %2749 = vst [vmem:[%s325 + $0x8] sm:$0xf] %v2685
      %2750 = vst [vmem:[%s325 + $0xc] sm:$0xf] %v2686
      %2751 = vst [vmem:[%s325 + $0x10] sm:$0xf] %v2687
      %2752 = vst [vmem:[%s325 + $0x14] sm:$0xf] %v2688
      %2753 = vst [vmem:[%s325 + $0x18] sm:$0xf] %v2689
      %2754 = vst [vmem:[%s325 + $0x1c] sm:$0xf] %v2690
      %2755 = vst [vmem:[%s325 + $0x20] sm:$0xf] %v2691
      %2756 = vst [vmem:[%s325 + $0x24] sm:$0xf] %v2692
      %2757 = vst [vmem:[%s325 + $0x28] sm:$0xf] %v2693
      %2758 = vst [vmem:[%s325 + $0x2c] sm:$0xf] %v2694
      %2759 = vst [vmem:[%s325 + $0x30] sm:$0xf] %v2695
      %2760 = vst [vmem:[%s325 + $0x34] sm:$0xf] %v2696
      %2761 = vst [vmem:[%s325 + $0x38] sm:$0xf] %v2697
      %2762 = vst [vmem:[%s325 + $0x3c] sm:$0xf] %v2698
      %2763 = vst [vmem:[%s325 + $0x40] sm:$0xf] %v2699
      %2764 = vst [vmem:[%s325 + $0x44] sm:$0xf] %v2700
      %2765 = vst [vmem:[%s325 + $0x48] sm:$0xf] %v2701
      %2766 = vst [vmem:[%s325 + $0x4c] sm:$0xf] %v2702
      %2767 = vst [vmem:[%s325 + $0x50] sm:$0xf] %v2703
      %2768 = vst [vmem:[%s325 + $0x54] sm:$0xf] %v2704
      %2769 = vst [vmem:[%s325 + $0x58] sm:$0xf] %v2705
      %2770 = vst [vmem:[%s325 + $0x5c] sm:$0xf] %v2706
      %2771 = vst [vmem:[%s325 + $0x60] sm:$0xf] %v2707
      %2772 = vst [vmem:[%s325 + $0x64] sm:$0xf] %v2708
      %2773 = vst [vmem:[%s325 + $0x68] sm:$0xf] %v2709
      %2774 = vst [vmem:[%s325 + $0x6c] sm:$0xf] %v2710
      %2775 = vst [vmem:[%s325 + $0x70] sm:$0xf] %v2711
      %2776 = vst [vmem:[%s325 + $0x74] sm:$0xf] %v2712
      %2777 = vst [vmem:[%s325 + $0x78] sm:$0xf] %v2713
      %2778 = vst [vmem:[%s325 + $0x7c] sm:$0xf] %v2714
      %v2779 = vadd.f32 %v2493, %v2496
      %v2780 = vadd.f32 %v2779, %v2501
      %v2781 = vadd.f32 %v2780, %v2504
      %v2782 = vadd.f32 %v2781, %v2509
      %v2783 = vadd.f32 %v2782, %v2512
      %v2784 = vadd.f32 %v2783, %v2517
      %v2785 = vadd.f32 %v2784, %v2520
      %v2786 = vadd.f32 %v2785, %v2525
      %v2787 = vadd.f32 %v2786, %v2528
      %v2788 = vadd.f32 %v2787, %v2533
      %v2789 = vadd.f32 %v2788, %v2536
      %v2790 = vadd.f32 %v2789, %v2541
      %v2791 = vadd.f32 %v2790, %v2544
      %v2792 = vadd.f32 %v2791, %v2549
      %v2793 = vadd.f32 %v2792, %v2552
      %v2794 = vadd.f32 %v2793, %v2557
      %v2795 = vadd.f32 %v2794, %v2560
      %v2796 = vadd.f32 %v2795, %v2565
      %v2797 = vadd.f32 %v2796, %v2568
      %v2798 = vadd.f32 %v2797, %v2573
      %v2799 = vadd.f32 %v2798, %v2576
      %v2800 = vadd.f32 %v2799, %v2581
      %v2801 = vadd.f32 %v2800, %v2584
      %v2802 = vadd.f32 %v2801, %v2589
      %v2803 = vadd.f32 %v2802, %v2592
      %v2804 = vadd.f32 %v2803, %v2597
      %v2805 = vadd.f32 %v2804, %v2600
      %v2806 = vadd.f32 %v2805, %v2605
      %v2807 = vadd.f32 %v2806, %v2608
      %v2808 = vadd.f32 %v2807, %v2613
      %v2809 = vadd.f32 %v2808, %v2616
      %v2810 = vrot.slane %v2809, 4
      %v2811 = vadd.f32 %v2809, %v2810
      %v2812 = vrot.slane %v2811, 2
      %v2813 = vadd.f32 %v2811, %v2812
      %v2814 = vrot.slane %v2813, 1
      %v2815 = vadd.f32 %v2813, %v2814
      %v2816 = vmul.f32 %v2493, %v2493
      %v2817 = vmul.f32 %v2496, %v2496
      %v2818 = vmul.f32 %v2501, %v2501
      %v2819 = vmul.f32 %v2504, %v2504
      %v2820 = vmul.f32 %v2509, %v2509
      %v2821 = vmul.f32 %v2512, %v2512
      %v2822 = vmul.f32 %v2517, %v2517
      %v2823 = vmul.f32 %v2520, %v2520
      %v2824 = vmul.f32 %v2525, %v2525
      %v2825 = vmul.f32 %v2528, %v2528
      %v2826 = vmul.f32 %v2533, %v2533
      %v2827 = vmul.f32 %v2536, %v2536
      %v2828 = vmul.f32 %v2541, %v2541
      %v2829 = vmul.f32 %v2544, %v2544
      %v2830 = vmul.f32 %v2549, %v2549
      %v2831 = vmul.f32 %v2552, %v2552
      %v2832 = vmul.f32 %v2557, %v2557
      %v2833 = vmul.f32 %v2560, %v2560
      %v2834 = vmul.f32 %v2565, %v2565
      %v2835 = vmul.f32 %v2568, %v2568
      %v2836 = vmul.f32 %v2573, %v2573
      %v2837 = vmul.f32 %v2576, %v2576
      %v2838 = vmul.f32 %v2581, %v2581
      %v2839 = vmul.f32 %v2584, %v2584
      %v2840 = vmul.f32 %v2589, %v2589
      %v2841 = vmul.f32 %v2592, %v2592
      %v2842 = vmul.f32 %v2597, %v2597
      %v2843 = vmul.f32 %v2600, %v2600
      %v2844 = vmul.f32 %v2605, %v2605
      %v2845 = vmul.f32 %v2608, %v2608
      %v2846 = vmul.f32 %v2613, %v2613
      %v2847 = vmul.f32 %v2616, %v2616
      %v2848 = vadd.f32 %v2816, %v2817
      %v2849 = vadd.f32 %v2848, %v2818
      %v2850 = vadd.f32 %v2849, %v2819
      %v2851 = vadd.f32 %v2850, %v2820
      %v2852 = vadd.f32 %v2851, %v2821
      %v2853 = vadd.f32 %v2852, %v2822
      %v2854 = vadd.f32 %v2853, %v2823
      %v2855 = vadd.f32 %v2854, %v2824
      %v2856 = vadd.f32 %v2855, %v2825
      %v2857 = vadd.f32 %v2856, %v2826
      %v2858 = vadd.f32 %v2857, %v2827
      %v2859 = vadd.f32 %v2858, %v2828
      %v2860 = vadd.f32 %v2859, %v2829
      %v2861 = vadd.f32 %v2860, %v2830
      %v2862 = vadd.f32 %v2861, %v2831
      %v2863 = vadd.f32 %v2862, %v2832
      %v2864 = vadd.f32 %v2863, %v2833
      %v2865 = vadd.f32 %v2864, %v2834
      %v2866 = vadd.f32 %v2865, %v2835
      %v2867 = vadd.f32 %v2866, %v2836
      %v2868 = vadd.f32 %v2867, %v2837
      %v2869 = vadd.f32 %v2868, %v2838
      %v2870 = vadd.f32 %v2869, %v2839
      %v2871 = vadd.f32 %v2870, %v2840
      %v2872 = vadd.f32 %v2871, %v2841
      %v2873 = vadd.f32 %v2872, %v2842
      %v2874 = vadd.f32 %v2873, %v2843
      %v2875 = vadd.f32 %v2874, %v2844
      %v2876 = vadd.f32 %v2875, %v2845
      %v2877 = vadd.f32 %v2876, %v2846
      %v2878 = vadd.f32 %v2877, %v2847
      %v2879 = vrot.slane %v2878, 4
      %v2880 = vadd.f32 %v2878, %v2879
      %v2881 = vrot.slane %v2880, 2
      %v2882 = vadd.f32 %v2880, %v2881
      %v2883 = vrot.slane %v2882, 1
      %v2884 = vadd.f32 %v2882, %v2883
      %vm2885 = vcmask 1040384
      %v2886 = vsel %vm2885, %v2815, %v2884
      %vm2887 = vcmask 1041408
      %v2888 = vsel %vm2887, %v2886, 0.0
      %2889 = vst [vmem:[%s330] sm:$0xff] %v2888
      %v2890 = vld [vmem:[%s319] sm:$0xf]
      %v2891 = vld [vmem:[%s319 + $0x4] sm:$0xf]
      %v2892 = vld [vmem:[%s319 + $0x8] sm:$0xf]
      %v2893 = vld [vmem:[%s319 + $0xc] sm:$0xf]
      %v2894 = vld [vmem:[%s319 + $0x10] sm:$0xf]
      %v2895 = vld [vmem:[%s319 + $0x14] sm:$0xf]
      %v2896 = vld [vmem:[%s319 + $0x18] sm:$0xf]
      %v2897 = vld [vmem:[%s319 + $0x1c] sm:$0xf]
      %v2898 = vld [vmem:[%s319 + $0x20] sm:$0xf]
      %v2899 = vld [vmem:[%s319 + $0x24] sm:$0xf]
      %v2900 = vld [vmem:[%s319 + $0x28] sm:$0xf]
      %v2901 = vld [vmem:[%s319 + $0x2c] sm:$0xf]
      %v2902 = vld [vmem:[%s319 + $0x30] sm:$0xf]
      %v2903 = vld [vmem:[%s319 + $0x34] sm:$0xf]
      %v2904 = vld [vmem:[%s319 + $0x38] sm:$0xf]
      %v2905 = vld [vmem:[%s319 + $0x3c] sm:$0xf]
      %v2906 = vld [vmem:[%s319 + $0x40] sm:$0xf]
      %v2907 = vld [vmem:[%s319 + $0x44] sm:$0xf]
      %v2908 = vld [vmem:[%s319 + $0x48] sm:$0xf]
      %v2909 = vld [vmem:[%s319 + $0x4c] sm:$0xf]
      %v2910 = vld [vmem:[%s319 + $0x50] sm:$0xf]
      %v2911 = vld [vmem:[%s319 + $0x54] sm:$0xf]
      %v2912 = vld [vmem:[%s319 + $0x58] sm:$0xf]
      %v2913 = vld [vmem:[%s319 + $0x5c] sm:$0xf]
      %v2914 = vld [vmem:[%s319 + $0x60] sm:$0xf]
      %v2915 = vld [vmem:[%s319 + $0x64] sm:$0xf]
      %v2916 = vld [vmem:[%s319 + $0x68] sm:$0xf]
      %v2917 = vld [vmem:[%s319 + $0x6c] sm:$0xf]
      %v2918 = vld [vmem:[%s319 + $0x70] sm:$0xf]
      %v2919 = vld [vmem:[%s319 + $0x74] sm:$0xf]
      %v2920 = vld [vmem:[%s319 + $0x78] sm:$0xf]
      %v2921 = vld [vmem:[%s319 + $0x7c] sm:$0xf]
      %v2922 = vld [vmem:[%s3] sm:$0x3]
      %v2955 = vunpack.c.l.b16 %v2890
      %v2956 = vunpack.c.l.b16 %v2891
      %v2957 = vunpack.c.l.b16 %v2892
      %v2958 = vunpack.c.l.b16 %v2893
      %v2959 = vunpack.c.l.b16 %v2894
      %v2960 = vunpack.c.l.b16 %v2895
      %v2961 = vunpack.c.l.b16 %v2896
      %v2962 = vunpack.c.l.b16 %v2897
      %v2963 = vunpack.c.l.b16 %v2898
      %v2964 = vunpack.c.l.b16 %v2899
      %v2965 = vunpack.c.l.b16 %v2900
      %v2966 = vunpack.c.l.b16 %v2901
      %v2967 = vunpack.c.l.b16 %v2902
      %v2968 = vunpack.c.l.b16 %v2903
      %v2969 = vunpack.c.l.b16 %v2904
      %v2970 = vunpack.c.l.b16 %v2905
      %v2971 = vunpack.c.l.b16 %v2906
      %v2972 = vunpack.c.l.b16 %v2907
      %v2973 = vunpack.c.l.b16 %v2908
      %v2974 = vunpack.c.l.b16 %v2909
      %v2975 = vunpack.c.l.b16 %v2910
      %v2976 = vunpack.c.l.b16 %v2911
      %v2977 = vunpack.c.l.b16 %v2912
      %v2978 = vunpack.c.l.b16 %v2913
      %v2979 = vunpack.c.l.b16 %v2914
      %v2980 = vunpack.c.l.b16 %v2915
      %v2981 = vunpack.c.l.b16 %v2916
      %v2982 = vunpack.c.l.b16 %v2917
      %v2983 = vunpack.c.l.b16 %v2918
      %v2984 = vunpack.c.l.b16 %v2919
      %v2985 = vunpack.c.l.b16 %v2920
      %v2986 = vunpack.c.l.b16 %v2921
      %v2987 = vpack.c.b16 %v2956, %v2955
      %v2988 = vpack.c.b16 %v2958, %v2957
      %v2989 = vpack.c.b16 %v2960, %v2959
      %v2990 = vpack.c.b16 %v2962, %v2961
      %v2991 = vpack.c.b16 %v2964, %v2963
      %v2992 = vpack.c.b16 %v2966, %v2965
      %v2993 = vpack.c.b16 %v2968, %v2967
      %v2994 = vpack.c.b16 %v2970, %v2969
      %v2995 = vpack.c.b16 %v2972, %v2971
      %v2996 = vpack.c.b16 %v2974, %v2973
      %v2997 = vpack.c.b16 %v2976, %v2975
      %v2998 = vpack.c.b16 %v2978, %v2977
      %v2999 = vpack.c.b16 %v2980, %v2979
      %v3000 = vpack.c.b16 %v2982, %v2981
      %v3001 = vpack.c.b16 %v2984, %v2983
      %v3002 = vpack.c.b16 %v2986, %v2985
      %vm3003 = vcmask 31744
      %v3005 = vsel %vm3003, %v2987, 0
      %v3008 = vsel %vm3003, %v2988, 0
      %v3011 = vsel %vm3003, %v2989, 0
      %v3014 = vsel %vm3003, %v2990, 0
      %v3017 = vsel %vm3003, %v2991, 0
      %v3020 = vsel %vm3003, %v2992, 0
      %v3023 = vsel %vm3003, %v2993, 0
      %v3026 = vsel %vm3003, %v2994, 0
      %v3029 = vsel %vm3003, %v2995, 0
      %v3032 = vsel %vm3003, %v2996, 0
      %v3035 = vsel %vm3003, %v2997, 0
      %v3038 = vsel %vm3003, %v2998, 0
      %v3041 = vsel %vm3003, %v2999, 0
      %v3044 = vsel %vm3003, %v3000, 0
      %v3047 = vsel %vm3003, %v3001, 0
      %v3050 = vsel %vm3003, %v3002, 0
      %v3053 = vsel %vm2887, %v2922, 0
      %3055 = vmatprep.subr.bf16.mxu0 0
      %3056 = vmatpush1.bf16.msra.mxu0 %v3053
      %3057 = vmatprep.subr.bf16.mxu0 0
      %3058 = vmatpush1.bf16.msra.mxu0 0
      %3059 = vmatprep.subr.bf16.mxu0 0
      %3060 = vmatpush1.bf16.msra.mxu0 0
      %3061 = vmatprep.subr.bf16.mxu0 0
      %3062 = vmatpush1.bf16.msra.mxu0 0
      %3063 = vmatprep.subr.bf16.mxu0 0
      %3064 = vmatpush1.bf16.msra.mxu0 0
      %3065 = vmatprep.subr.bf16.mxu0 0
      %3066 = vmatpush1.bf16.msra.mxu0 0
      %3067 = vmatprep.subr.bf16.mxu0 0
      %3068 = vmatpush1.bf16.msra.mxu0 0
      %3069 = vmatprep.subr.bf16.mxu0 0
      %3070 = vmatpush1.bf16.msra.mxu0 0
      %3071 = vmatprep.subr.bf16.mxu0 0
      %3072 = vmatpush1.bf16.msra.mxu0 0
      %3073 = vmatprep.subr.bf16.mxu0 0
      %3074 = vmatpush1.bf16.msra.mxu0 0
      %3075 = vmatprep.subr.bf16.mxu0 0
      %3076 = vmatpush1.bf16.msra.mxu0 0
      %3077 = vmatprep.subr.bf16.mxu0 0
      %3078 = vmatpush1.bf16.msra.mxu0 0
      %3079 = vmatprep.subr.bf16.mxu0 0
      %3080 = vmatpush1.bf16.msra.mxu0 0
      %3081 = vmatprep.subr.bf16.mxu0 0
      %3082 = vmatpush1.bf16.msra.mxu0 0
      %3083 = vmatprep.subr.bf16.mxu0 0
      %3084 = vmatpush1.bf16.msra.mxu0 0
      %3085 = vmatprep.subr.bf16.mxu0 0
      %3086 = vmatpush1.bf16.msra.mxu0 0
      %3087 = vmatprep.mubr.bf16.mxu0 0
      %3088 = vmatmul.mubr.bf16.gmra.mrb[0].mxu0 %v3005
      %v3089 = vpop.f32.mrb[0].mxu0
      %v3090 = vadd.f32 0.0, %v3089
      %v3091 = vpop.f32.mrb[0].mxu0
      %v3092 = vpop.f32.mrb[0].mxu0
      %v3093 = vadd.f32 0.0, %v3092
      %v3094 = vpop.f32.mrb[0].mxu0
      %3095 = vmatprep.mubr.bf16.mxu0 0
      %3096 = vmatmul.mubr.bf16.gmra.mrb[0].mxu0 %v3008
      %v3097 = vpop.f32.mrb[0].mxu0
      %v3098 = vadd.f32 0.0, %v3097
      %v3099 = vpop.f32.mrb[0].mxu0
      %v3100 = vpop.f32.mrb[0].mxu0
      %v3101 = vadd.f32 0.0, %v3100
      %v3102 = vpop.f32.mrb[0].mxu0
      %3103 = vmatprep.mubr.bf16.mxu0 0
      %3104 = vmatmul.mubr.bf16.gmra.mrb[0].mxu0 %v3011
      %v3105 = vpop.f32.mrb[0].mxu0
      %v3106 = vadd.f32 0.0, %v3105
      %v3107 = vpop.f32.mrb[0].mxu0
      %v3108 = vpop.f32.mrb[0].mxu0
      %v3109 = vadd.f32 0.0, %v3108
      %v3110 = vpop.f32.mrb[0].mxu0
      %3111 = vmatprep.mubr.bf16.mxu0 0
      %3112 = vmatmul.mubr.bf16.gmra.mrb[0].mxu0 %v3014
      %v3113 = vpop.f32.mrb[0].mxu0
      %v3114 = vadd.f32 0.0, %v3113
      %v3115 = vpop.f32.mrb[0].mxu0
      %v3116 = vpop.f32.mrb[0].mxu0
      %v3117 = vadd.f32 0.0, %v3116
      %v3118 = vpop.f32.mrb[0].mxu0
      %3119 = vmatprep.mubr.bf16.mxu0 0
      %3120 = vmatmul.mubr.bf16.gmra.mrb[0].mxu0 %v3017
      %v3121 = vpop.f32.mrb[0].mxu0
      %v3122 = vadd.f32 0.0, %v3121
      %v3123 = vpop.f32.mrb[0].mxu0
      %v3124 = vpop.f32.mrb[0].mxu0
      %v3125 = vadd.f32 0.0, %v3124
      %v3126 = vpop.f32.mrb[0].mxu0
      %3127 = vmatprep.mubr.bf16.mxu0 0
      %3128 = vmatmul.mubr.bf16.gmra.mrb[0].mxu0 %v3020
      %v3129 = vpop.f32.mrb[0].mxu0
      %v3130 = vadd.f32 0.0, %v3129
      %v3131 = vpop.f32.mrb[0].mxu0
      %v3132 = vpop.f32.mrb[0].mxu0
      %v3133 = vadd.f32 0.0, %v3132
      %v3134 = vpop.f32.mrb[0].mxu0
      %3135 = vmatprep.mubr.bf16.mxu0 0
      %3136 = vmatmul.mubr.bf16.gmra.mrb[0].mxu0 %v3023
      %v3137 = vpop.f32.mrb[0].mxu0
      %v3138 = vadd.f32 0.0, %v3137
      %v3139 = vpop.f32.mrb[0].mxu0
      %v3140 = vpop.f32.mrb[0].mxu0
      %v3141 = vadd.f32 0.0, %v3140
      %v3142 = vpop.f32.mrb[0].mxu0
      %3143 = vmatprep.mubr.bf16.mxu0 0
      %3144 = vmatmul.mubr.bf16.gmra.mrb[0].mxu0 %v3026
      %v3145 = vpop.f32.mrb[0].mxu0
      %v3146 = vadd.f32 0.0, %v3145
      %v3147 = vpop.f32.mrb[0].mxu0
      %v3148 = vpop.f32.mrb[0].mxu0
      %v3149 = vadd.f32 0.0, %v3148
      %v3150 = vpop.f32.mrb[0].mxu0
      %3151 = vmatprep.mubr.bf16.mxu0 0
      %3152 = vmatmul.mubr.bf16.gmra.mrb[0].mxu0 %v3029
      %v3153 = vpop.f32.mrb[0].mxu0
      %v3154 = vadd.f32 0.0, %v3153
      %v3155 = vpop.f32.mrb[0].mxu0
      %v3156 = vpop.f32.mrb[0].mxu0
      %v3157 = vadd.f32 0.0, %v3156
      %v3158 = vpop.f32.mrb[0].mxu0
      %3159 = vmatprep.mubr.bf16.mxu0 0
      %3160 = vmatmul.mubr.bf16.gmra.mrb[0].mxu0 %v3032
      %v3161 = vpop.f32.mrb[0].mxu0
      %v3162 = vadd.f32 0.0, %v3161
      %v3163 = vpop.f32.mrb[0].mxu0
      %v3164 = vpop.f32.mrb[0].mxu0
      %v3165 = vadd.f32 0.0, %v3164
      %v3166 = vpop.f32.mrb[0].mxu0
      %3167 = vmatprep.mubr.bf16.mxu0 0
      %3168 = vmatmul.mubr.bf16.gmra.mrb[0].mxu0 %v3035
      %v3169 = vpop.f32.mrb[0].mxu0
      %v3170 = vadd.f32 0.0, %v3169
      %v3171 = vpop.f32.mrb[0].mxu0
      %v3172 = vpop.f32.mrb[0].mxu0
      %v3173 = vadd.f32 0.0, %v3172
      %v3174 = vpop.f32.mrb[0].mxu0
      %3175 = vmatprep.mubr.bf16.mxu0 0
      %3176 = vmatmul.mubr.bf16.gmra.mrb[0].mxu0 %v3038
      %v3177 = vpop.f32.mrb[0].mxu0
      %v3178 = vadd.f32 0.0, %v3177
      %v3179 = vpop.f32.mrb[0].mxu0
      %v3180 = vpop.f32.mrb[0].mxu0
      %v3181 = vadd.f32 0.0, %v3180
      %v3182 = vpop.f32.mrb[0].mxu0
      %3183 = vmatprep.mubr.bf16.mxu0 0
      %3184 = vmatmul.mubr.bf16.gmra.mrb[0].mxu0 %v3041
      %v3185 = vpop.f32.mrb[0].mxu0
      %v3186 = vadd.f32 0.0, %v3185
      %v3187 = vpop.f32.mrb[0].mxu0
      %v3188 = vpop.f32.mrb[0].mxu0
      %v3189 = vadd.f32 0.0, %v3188
      %v3190 = vpop.f32.mrb[0].mxu0
      %3191 = vmatprep.mubr.bf16.mxu0 0
      %3192 = vmatmul.mubr.bf16.gmra.mrb[0].mxu0 %v3044
      %v3193 = vpop.f32.mrb[0].mxu0
      %v3194 = vadd.f32 0.0, %v3193
      %v3195 = vpop.f32.mrb[0].mxu0
      %v3196 = vpop.f32.mrb[0].mxu0
      %v3197 = vadd.f32 0.0, %v3196
      %v3198 = vpop.f32.mrb[0].mxu0
      %3199 = vmatprep.mubr.bf16.mxu0 0
      %3200 = vmatmul.mubr.bf16.gmra.mrb[0].mxu0 %v3047
      %v3201 = vpop.f32.mrb[0].mxu0
      %v3202 = vadd.f32 0.0, %v3201
      %v3203 = vpop.f32.mrb[0].mxu0
      %v3204 = vpop.f32.mrb[0].mxu0
      %v3205 = vadd.f32 0.0, %v3204
      %v3206 = vpop.f32.mrb[0].mxu0
      %3207 = vmatprep.mubr.bf16.mxu0 0
      %3208 = vmatmul.mubr.bf16.gmra.mrb[0].mxu0 %v3050
      %v3209 = vpop.f32.mrb[0].mxu0
      %v3210 = vadd.f32 0.0, %v3209
      %v3211 = vpop.f32.mrb[0].mxu0
      %v3212 = vpop.f32.mrb[0].mxu0
      %v3213 = vadd.f32 0.0, %v3212
      %v3214 = vpop.f32.mrb[0].mxu0
      %3215 = vdwg.mxu0
      %v3216 = vpack.c.bf16 %v3093, %v3090
      %v3217 = vpack.c.bf16 %v3101, %v3098
      %v3218 = vpack.c.bf16 %v3109, %v3106
      %v3219 = vpack.c.bf16 %v3117, %v3114
      %v3220 = vpack.c.bf16 %v3125, %v3122
      %v3221 = vpack.c.bf16 %v3133, %v3130
      %v3222 = vpack.c.bf16 %v3141, %v3138
      %v3223 = vpack.c.bf16 %v3149, %v3146
      %v3224 = vpack.c.bf16 %v3157, %v3154
      %v3225 = vpack.c.bf16 %v3165, %v3162
      %v3226 = vpack.c.bf16 %v3173, %v3170
      %v3227 = vpack.c.bf16 %v3181, %v3178
      %v3228 = vpack.c.bf16 %v3189, %v3186
      %v3229 = vpack.c.bf16 %v3197, %v3194
      %v3230 = vpack.c.bf16 %v3205, %v3202
      %v3231 = vpack.c.bf16 %v3213, %v3210
      %v3248 = vunpack.c.l.b16 %v3216
      %v3249 = vunpack.c.h.b16 %v3216
      %v3250 = vunpack.c.l.b16 %v3217
      %v3251 = vunpack.c.h.b16 %v3217
      %v3252 = vunpack.c.l.b16 %v3218
      %v3253 = vunpack.c.h.b16 %v3218
      %v3254 = vunpack.c.l.b16 %v3219
      %v3255 = vunpack.c.h.b16 %v3219
      %v3256 = vunpack.c.l.b16 %v3220
      %v3257 = vunpack.c.h.b16 %v3220
      %v3258 = vunpack.c.l.b16 %v3221
      %v3259 = vunpack.c.h.b16 %v3221
      %v3260 = vunpack.c.l.b16 %v3222
      %v3261 = vunpack.c.h.b16 %v3222
      %v3262 = vunpack.c.l.b16 %v3223
      %v3263 = vunpack.c.h.b16 %v3223
      %v3264 = vunpack.c.l.b16 %v3224
      %v3265 = vunpack.c.h.b16 %v3224
      %v3266 = vunpack.c.l.b16 %v3225
      %v3267 = vunpack.c.h.b16 %v3225
      %v3268 = vunpack.c.l.b16 %v3226
      %v3269 = vunpack.c.h.b16 %v3226
      %v3270 = vunpack.c.l.b16 %v3227
      %v3271 = vunpack.c.h.b16 %v3227
      %v3272 = vunpack.c.l.b16 %v3228
      %v3273 = vunpack.c.h.b16 %v3228
      %v3274 = vunpack.c.l.b16 %v3229
      %v3275 = vunpack.c.h.b16 %v3229
      %v3276 = vunpack.c.l.b16 %v3230
      %v3277 = vunpack.c.h.b16 %v3230
      %v3278 = vunpack.c.l.b16 %v3231
      %v3279 = vunpack.c.h.b16 %v3231
      %v3280 = vpack.c.b16 %v3248, %v3248
      %v3281 = vpack.c.b16 %v3249, %v3249
      %v3282 = vpack.c.b16 %v3250, %v3250
      %v3283 = vpack.c.b16 %v3251, %v3251
      %v3284 = vpack.c.b16 %v3252, %v3252
      %v3285 = vpack.c.b16 %v3253, %v3253
      %v3286 = vpack.c.b16 %v3254, %v3254
      %v3287 = vpack.c.b16 %v3255, %v3255
      %v3288 = vpack.c.b16 %v3256, %v3256
      %v3289 = vpack.c.b16 %v3257, %v3257
      %v3290 = vpack.c.b16 %v3258, %v3258
      %v3291 = vpack.c.b16 %v3259, %v3259
      %v3292 = vpack.c.b16 %v3260, %v3260
      %v3293 = vpack.c.b16 %v3261, %v3261
      %v3294 = vpack.c.b16 %v3262, %v3262
      %v3295 = vpack.c.b16 %v3263, %v3263
      %v3296 = vpack.c.b16 %v3264, %v3264
      %v3297 = vpack.c.b16 %v3265, %v3265
      %v3298 = vpack.c.b16 %v3266, %v3266
      %v3299 = vpack.c.b16 %v3267, %v3267
      %v3300 = vpack.c.b16 %v3268, %v3268
      %v3301 = vpack.c.b16 %v3269, %v3269
      %v3302 = vpack.c.b16 %v3270, %v3270
      %v3303 = vpack.c.b16 %v3271, %v3271
      %v3304 = vpack.c.b16 %v3272, %v3272
      %v3305 = vpack.c.b16 %v3273, %v3273
      %v3306 = vpack.c.b16 %v3274, %v3274
      %v3307 = vpack.c.b16 %v3275, %v3275
      %v3308 = vpack.c.b16 %v3276, %v3276
      %v3309 = vpack.c.b16 %v3277, %v3277
      %v3310 = vpack.c.b16 %v3278, %v3278
      %v3311 = vpack.c.b16 %v3279, %v3279
      %3344 = vst [vmem:[%s335] sm:$0xf] %v3280
      %3345 = vst [vmem:[%s335 + $0x4] sm:$0xf] %v3281
      %3346 = vst [vmem:[%s335 + $0x8] sm:$0xf] %v3282
      %3347 = vst [vmem:[%s335 + $0xc] sm:$0xf] %v3283
      %3348 = vst [vmem:[%s335 + $0x10] sm:$0xf] %v3284
      %3349 = vst [vmem:[%s335 + $0x14] sm:$0xf] %v3285
      %3350 = vst [vmem:[%s335 + $0x18] sm:$0xf] %v3286
      %3351 = vst [vmem:[%s335 + $0x1c] sm:$0xf] %v3287
      %3352 = vst [vmem:[%s335 + $0x20] sm:$0xf] %v3288
      %3353 = vst [vmem:[%s335 + $0x24] sm:$0xf] %v3289
      %3354 = vst [vmem:[%s335 + $0x28] sm:$0xf] %v3290
      %3355 = vst [vmem:[%s335 + $0x2c] sm:$0xf] %v3291
      %3356 = vst [vmem:[%s335 + $0x30] sm:$0xf] %v3292
      %3357 = vst [vmem:[%s335 + $0x34] sm:$0xf] %v3293
      %3358 = vst [vmem:[%s335 + $0x38] sm:$0xf] %v3294
      %3359 = vst [vmem:[%s335 + $0x3c] sm:$0xf] %v3295
      %3360 = vst [vmem:[%s335 + $0x40] sm:$0xf] %v3296
      %3361 = vst [vmem:[%s335 + $0x44] sm:$0xf] %v3297
      %3362 = vst [vmem:[%s335 + $0x48] sm:$0xf] %v3298
      %3363 = vst [vmem:[%s335 + $0x4c] sm:$0xf] %v3299
      %3364 = vst [vmem:[%s335 + $0x50] sm:$0xf] %v3300
      %3365 = vst [vmem:[%s335 + $0x54] sm:$0xf] %v3301
      %3366 = vst [vmem:[%s335 + $0x58] sm:$0xf] %v3302
      %3367 = vst [vmem:[%s335 + $0x5c] sm:$0xf] %v3303
      %3368 = vst [vmem:[%s335 + $0x60] sm:$0xf] %v3304
      %3369 = vst [vmem:[%s335 + $0x64] sm:$0xf] %v3305
      %3370 = vst [vmem:[%s335 + $0x68] sm:$0xf] %v3306
      %3371 = vst [vmem:[%s335 + $0x6c] sm:$0xf] %v3307
      %3372 = vst [vmem:[%s335 + $0x70] sm:$0xf] %v3308
      %3373 = vst [vmem:[%s335 + $0x74] sm:$0xf] %v3309
      %3374 = vst [vmem:[%s335 + $0x78] sm:$0xf] %v3310
      %3375 = vst [vmem:[%s335 + $0x7c] sm:$0xf] %v3311
      %v3376 = vadd.f32 %v3090, %v3093
      %v3377 = vadd.f32 %v3376, %v3098
      %v3378 = vadd.f32 %v3377, %v3101
      %v3379 = vadd.f32 %v3378, %v3106
      %v3380 = vadd.f32 %v3379, %v3109
      %v3381 = vadd.f32 %v3380, %v3114
      %v3382 = vadd.f32 %v3381, %v3117
      %v3383 = vadd.f32 %v3382, %v3122
      %v3384 = vadd.f32 %v3383, %v3125
      %v3385 = vadd.f32 %v3384, %v3130
      %v3386 = vadd.f32 %v3385, %v3133
      %v3387 = vadd.f32 %v3386, %v3138
      %v3388 = vadd.f32 %v3387, %v3141
      %v3389 = vadd.f32 %v3388, %v3146
      %v3390 = vadd.f32 %v3389, %v3149
      %v3391 = vadd.f32 %v3390, %v3154
      %v3392 = vadd.f32 %v3391, %v3157
      %v3393 = vadd.f32 %v3392, %v3162
      %v3394 = vadd.f32 %v3393, %v3165
      %v3395 = vadd.f32 %v3394, %v3170
      %v3396 = vadd.f32 %v3395, %v3173
      %v3397 = vadd.f32 %v3396, %v3178
      %v3398 = vadd.f32 %v3397, %v3181
      %v3399 = vadd.f32 %v3398, %v3186
      %v3400 = vadd.f32 %v3399, %v3189
      %v3401 = vadd.f32 %v3400, %v3194
      %v3402 = vadd.f32 %v3401, %v3197
      %v3403 = vadd.f32 %v3402, %v3202
      %v3404 = vadd.f32 %v3403, %v3205
      %v3405 = vadd.f32 %v3404, %v3210
      %v3406 = vadd.f32 %v3405, %v3213
      %v3407 = vrot.slane %v3406, 4
      %v3408 = vadd.f32 %v3406, %v3407
      %v3409 = vrot.slane %v3408, 2
      %v3410 = vadd.f32 %v3408, %v3409
      %v3411 = vrot.slane %v3410, 1
      %v3412 = vadd.f32 %v3410, %v3411
      %v3413 = vmul.f32 %v3090, %v3090
      %v3414 = vmul.f32 %v3093, %v3093
      %v3415 = vmul.f32 %v3098, %v3098
      %v3416 = vmul.f32 %v3101, %v3101
      %v3417 = vmul.f32 %v3106, %v3106
      %v3418 = vmul.f32 %v3109, %v3109
      %v3419 = vmul.f32 %v3114, %v3114
      %v3420 = vmul.f32 %v3117, %v3117
      %v3421 = vmul.f32 %v3122, %v3122
      %v3422 = vmul.f32 %v3125, %v3125
      %v3423 = vmul.f32 %v3130, %v3130
      %v3424 = vmul.f32 %v3133, %v3133
      %v3425 = vmul.f32 %v3138, %v3138
      %v3426 = vmul.f32 %v3141, %v3141
      %v3427 = vmul.f32 %v3146, %v3146
      %v3428 = vmul.f32 %v3149, %v3149
      %v3429 = vmul.f32 %v3154, %v3154
      %v3430 = vmul.f32 %v3157, %v3157
      %v3431 = vmul.f32 %v3162, %v3162
      %v3432 = vmul.f32 %v3165, %v3165
      %v3433 = vmul.f32 %v3170, %v3170
      %v3434 = vmul.f32 %v3173, %v3173
      %v3435 = vmul.f32 %v3178, %v3178
      %v3436 = vmul.f32 %v3181, %v3181
      %v3437 = vmul.f32 %v3186, %v3186
      %v3438 = vmul.f32 %v3189, %v3189
      %v3439 = vmul.f32 %v3194, %v3194
      %v3440 = vmul.f32 %v3197, %v3197
      %v3441 = vmul.f32 %v3202, %v3202
      %v3442 = vmul.f32 %v3205, %v3205
      %v3443 = vmul.f32 %v3210, %v3210
      %v3444 = vmul.f32 %v3213, %v3213
      %v3445 = vadd.f32 %v3413, %v3414
      %v3446 = vadd.f32 %v3445, %v3415
      %v3447 = vadd.f32 %v3446, %v3416
      %v3448 = vadd.f32 %v3447, %v3417
      %v3449 = vadd.f32 %v3448, %v3418
      %v3450 = vadd.f32 %v3449, %v3419
      %v3451 = vadd.f32 %v3450, %v3420
      %v3452 = vadd.f32 %v3451, %v3421
      %v3453 = vadd.f32 %v3452, %v3422
      %v3454 = vadd.f32 %v3453, %v3423
      %v3455 = vadd.f32 %v3454, %v3424
      %v3456 = vadd.f32 %v3455, %v3425
      %v3457 = vadd.f32 %v3456, %v3426
      %v3458 = vadd.f32 %v3457, %v3427
      %v3459 = vadd.f32 %v3458, %v3428
      %v3460 = vadd.f32 %v3459, %v3429
      %v3461 = vadd.f32 %v3460, %v3430
      %v3462 = vadd.f32 %v3461, %v3431
      %v3463 = vadd.f32 %v3462, %v3432
      %v3464 = vadd.f32 %v3463, %v3433
      %v3465 = vadd.f32 %v3464, %v3434
      %v3466 = vadd.f32 %v3465, %v3435
      %v3467 = vadd.f32 %v3466, %v3436
      %v3468 = vadd.f32 %v3467, %v3437
      %v3469 = vadd.f32 %v3468, %v3438
      %v3470 = vadd.f32 %v3469, %v3439
      %v3471 = vadd.f32 %v3470, %v3440
      %v3472 = vadd.f32 %v3471, %v3441
      %v3473 = vadd.f32 %v3472, %v3442
      %v3474 = vadd.f32 %v3473, %v3443
      %v3475 = vadd.f32 %v3474, %v3444
      %v3476 = vrot.slane %v3475, 4
      %v3477 = vadd.f32 %v3475, %v3476
      %v3478 = vrot.slane %v3477, 2
      %v3479 = vadd.f32 %v3477, %v3478
      %v3480 = vrot.slane %v3479, 1
      %v3481 = vadd.f32 %v3479, %v3480
      %v3482 = vsel %vm2885, %v3412, %v3481
      %v3483 = vsel %vm2887, %v3482, 0.0
      %3484 = vst [vmem:[%s340] sm:$0xff] %v3483
      %s3485 = smul.u32 32, %s19
      %p3486 = scmp.lt.s32.totalorder %s3485, 63
      %s3487 = scalar_select %p3486, %s3485, 63
      %s3488 = smul.addr %s3487, 4
      %s3489 = scalar_lea.vmem %s4, %s3488
      %p3490 = scmp.lt.s32.totalorder %s19, 1
      %s3491 = scalar_select %p3490, %s19, 1
      %s3492 = smul.addr %s3491, 8
      %s3493 = scalar_lea.vmem %s5, %s3492
      %s3494 = smul.u32 32, %s19
      %p3495 = scmp.lt.s32.totalorder %s3494, 63
      %s3496 = scalar_select %p3495, %s3494, 63
      %s3497 = smul.addr %s3496, 4
      %s3498 = scalar_lea.vmem %s6, %s3497
      %p3499 = scmp.lt.s32.totalorder %s19, 1
      %s3500 = scalar_select %p3499, %s19, 1
      %s3501 = smul.addr %s3500, 8
      %s3502 = scalar_lea.vmem %s7, %s3501
      // Predicated region
      $region37: #{basic_block_rn12.10} parent=35 // pred_check
        %p3503 = pneg %p131
      $region38: #{basic_block_rn12.10} parent=35 // pred_check_branch
        %3505 = sbr.rel (%p3503) target = $region40
      $region39: #{basic_block_rn12.10} parent=35 // pred_region
        %s3506 = smul.u32 32, %s19
      $region40: #{basic_block_rn12.10} parent=35 // pred_fallthru
        _
      // Predicated region
      $region41: #{basic_block_rn12.10} parent=35 // pred_check
        %p3507 = pneg %p157
      $region42: #{basic_block_rn12.10} parent=35 // pred_check_branch
        %3509 = sbr.rel (%p3507) target = $region44
      $region43: #{basic_block_rn12.10} parent=35 // pred_region
        _
      $region44: #{basic_block_rn12.10} parent=35 // pred_fallthru
        _
      // Predicated region
      $region45: #{basic_block_rn12.10} parent=35 // pred_check
        %p3510 = pneg %p183
      $region46: #{basic_block_rn12.10} parent=35 // pred_check_branch
        %3512 = sbr.rel (%p3510) target = $region48
      $region47: #{basic_block_rn12.10} parent=35 // pred_region
        %s3513 = smul.u32 32, %s19
      $region48: #{basic_block_rn12.10} parent=35 // pred_fallthru
        _
      // Predicated region
      $region49: #{basic_block_rn12.10} parent=35 // pred_check
        %p3514 = pneg %p209
      $region50: #{basic_block_rn12.10} parent=35 // pred_check_branch
        %3516 = sbr.rel (%p3514) target = $region52
      $region51: #{basic_block_rn12.10} parent=35 // pred_region
        _
      $region52: #{basic_block_rn12.10} parent=35 // pred_fallthru
        _
    $region36: #{basic_block_rn12.10} parent=5 // pred_fallthru
      _
    %p3517 = scmp.le.s32.totalorder 2, %s14
    // Predicated region
    $region53: #{basic_block_rn12.10} parent=5 // pred_check
      %p3518 = pneg %p3517
    $region54: #{basic_block_rn12.10} parent=5 // pred_check_branch
      %3520 = sbr.rel (%p3518) target = $region56
    $region55: #{basic_block_rn12.10} parent=5 // pred_region
      %s3521 = ssub.s32 %s14, 2
      // Predicated region
      $region57: #{basic_block_rn12.10} parent=55 // pred_check
        %p3522 = pneg %p137
      $region58: #{basic_block_rn12.10} parent=55 // pred_check_branch
        %3524 = sbr.rel (%p3522) target = $region60
      $region59: #{basic_block_rn12.10} parent=55 // pred_region
        %s3525 = smul.u32 32, %s20
        %p3526 = scmp.lt.s32.totalorder %s3525, 63
        %s3527 = scalar_select %p3526, %s3525, 63
        %s3528 = smul.addr %s3527, 4
        %s3529 = scalar_lea.vmem %s4, %s3528
      $region60: #{basic_block_rn12.10} parent=55 // pred_fallthru
        _
      // Predicated region
      $region61: #{basic_block_rn12.10} parent=55 // pred_check
        %p3530 = pneg %p163
      $region62: #{basic_block_rn12.10} parent=55 // pred_check_branch
        %3532 = sbr.rel (%p3530) target = $region64
      $region63: #{basic_block_rn12.10} parent=55 // pred_region
        %p3533 = scmp.lt.s32.totalorder %s20, 1
        %s3534 = scalar_select %p3533, %s20, 1
        %s3535 = smul.addr %s3534, 8
        %s3536 = scalar_lea.vmem %s5, %s3535
      $region64: #{basic_block_rn12.10} parent=55 // pred_fallthru
        _
      // Predicated region
      $region65: #{basic_block_rn12.10} parent=55 // pred_check
        %p3537 = pneg %p189
      $region66: #{basic_block_rn12.10} parent=55 // pred_check_branch
        %3539 = sbr.rel (%p3537) target = $region68
      $region67: #{basic_block_rn12.10} parent=55 // pred_region
        %s3540 = smul.u32 32, %s20
        %p3541 = scmp.lt.s32.totalorder %s3540, 63
        %s3542 = scalar_select %p3541, %s3540, 63
        %s3543 = smul.addr %s3542, 4
        %s3544 = scalar_lea.vmem %s6, %s3543
      $region68: #{basic_block_rn12.10} parent=55 // pred_fallthru
        _
      // Predicated region
      $region69: #{basic_block_rn12.10} parent=55 // pred_check
        %p3545 = pneg %p215
      $region70: #{basic_block_rn12.10} parent=55 // pred_check_branch
        %3547 = sbr.rel (%p3545) target = $region72
      $region71: #{basic_block_rn12.10} parent=55 // pred_region
        %p3548 = scmp.lt.s32.totalorder %s20, 1
        %s3549 = scalar_select %p3548, %s20, 1
        %s3550 = smul.addr %s3549, 8
        %s3551 = scalar_lea.vmem %s7, %s3550
      $region72: #{basic_block_rn12.10} parent=55 // pred_fallthru
        _
    $region56: #{basic_block_rn12.10} parent=5 // pred_fallthru
      _
  $region6: #{basic_block_rn12.10} parent=0 // loop_footer
    %s18 = sadd.s32 1, %s14
  $region7: #{basic_block_rn12.10} parent=0 // loop_footer_branch
    %13 = sbr.rel target = $region3
  $region8: #{basic_block_rn12.10} parent=0 // loop_exit
    _

</llo_original>
